<compile_context>
chip_gen: v5e
topology: v5e:2x2
jax: 0.10.0
libtpu: 0.0.40
codegen_flags: <defaults>
</compile_context>

<pallas_src>
import functools

import numpy as np
import jax
import jax.numpy as jnp
from jax.experimental import pallas as pl
from jax.experimental.pallas import tpu as pltpu


KH = KW = 4          # conv kernel size
STRIDE = 2           # conv stride
C1_OUT = 16          # conv1 output channels
C2_OUT = 32          # conv2 output channels
FC_WIDTH = 512       # post-FC stack width

_WEIGHT_ORDER = ("w1s", "b1s", "w2f", "b2f", "w0a", "w0b", "b0",
                 "w1", "b1", "w2", "b2", "w3", "b3", "wh", "bh")


# ----------------------------------------------------------------------------
# Fused kernel: CNN (super-patch matmuls) + both FC branches + both heads
# ----------------------------------------------------------------------------
def _a2c_fused_kernel(sp_ref, disc_ref,
                      w1s_ref, b1s_ref, w2f_ref, b2f_ref,
                      w0a_ref, w0b_ref, b0_ref,
                      w1_ref, b1_ref, w2_ref, b2_ref, w3_ref, b3_ref,
                      wh_ref, bh_ref, o_ref):
    f32, bf16 = jnp.float32, jnp.bfloat16
    tb = o_ref.shape[0]                    # samples in this batch tile
    rows = sp_ref.shape[0]                 # tb * n_pos super-patch rows
    n_pos = rows // tb                     # conv2 output positions per sample (4)
    nd = w0b_ref.shape[1]                  # discrete one-hot width

    # --- CNN front-end: conv1 + conv2, plain 2-D MXU matmuls, computed ONCE. --
    sp = sp_ref[...]                                                  # [tb*4, 400] bf16
    h = jnp.dot(sp, w1s_ref[...], preferred_element_type=f32) + b1s_ref[...]
    h = jnp.maximum(h, 0.0)                                           # conv1 + ReLU -> [tb*4, 256]
    h = jnp.dot(h.astype(bf16), w2f_ref[...],
                preferred_element_type=f32) + b2f_ref[...]
    h = jnp.maximum(h, 0.0).astype(bf16)                              # conv2 + ReLU -> [tb*4, 32]

    # --- Regroup rows (b, pos) -> per-sample lanes (pos-major), via 4 tiny
    #     selector matmuls + lane concat (no in-kernel reshape needed). -------
    r_idx = jax.lax.broadcasted_iota(jnp.int32, (tb, rows), 1)
    b_idx = jax.lax.broadcasted_iota(jnp.int32, (tb, rows), 0)
    pieces = []
    for pos in range(n_pos):
        sel = (r_idx == b_idx * n_pos + pos).astype(bf16)             # [tb, tb*4]
        pieces.append(jnp.dot(sel, h, preferred_element_type=f32))    # [tb, 32]
    cnn = jnp.concatenate(pieces, axis=-1).astype(bf16)               # [tb, 128] pos-major

    # --- One-hot of the discrete obs, built in-kernel from int32 ids. --------
    ids = disc_ref[...]                                               # [tb, 1] int32
    oh = (jax.lax.broadcasted_iota(jnp.int32, (tb, nd), 1) == ids).astype(bf16)

    # --- FC stacks (policy = 0, value = 1): 3x Linear+tanh, Linear (FCNet out).
    #     concat([cnn_flat, one_hot]) @ W0  ==  cnn @ W0a + one_hot @ W0b.
    def fc_branch(i):
        a = jnp.dot(cnn, w0a_ref[i], preferred_element_type=f32)
        a = a + jnp.dot(oh, w0b_ref[i], preferred_element_type=f32)
        a = jnp.tanh(a + b0_ref[i])
        a = jnp.tanh(jnp.dot(a.astype(bf16), w1_ref[i],
                             preferred_element_type=f32) + b1_ref[i])
        a = jnp.tanh(jnp.dot(a.astype(bf16), w2_ref[i],
                             preferred_element_type=f32) + b2_ref[i])
        a = jnp.dot(a.astype(bf16), w3_ref[i],
                    preferred_element_type=f32) + b3_ref[i]
        return a.astype(bf16)                                         # [tb, 512]

    pf = fc_branch(0)   # policy trunk
    vf = fc_branch(1)   # value trunk

    # --- Heads, folded into one lane-dense [tb, 128] output:
    #     lanes [0, NO) = logits, lane NO = value.
    out = jnp.dot(pf, wh_ref[0], preferred_element_type=f32)
    out = out + jnp.dot(vf, wh_ref[1], preferred_element_type=f32)
    o_ref[...] = out + bh_ref[...]


def _full_spec(shape):
    nd = len(shape)
    return pl.BlockSpec(tuple(shape), lambda i: (0,) * nd)


def a2c_fused_forward(kp, sp, disc, tb):
    """Single pallas_call for the full forward. Returns [Bp, 128] head output."""
    Bp = disc.shape[0]
    n_pos = sp.shape[0] // Bp
    HP = kp["wh"].shape[-1]
    in_specs = [
        pl.BlockSpec((tb * n_pos, sp.shape[1]), lambda i: (i, 0)),   # super-patches
        pl.BlockSpec((tb, 1), lambda i: (i, 0)),                     # discrete ids
    ] + [_full_spec(kp[name].shape) for name in _WEIGHT_ORDER]
    return pl.pallas_call(
        _a2c_fused_kernel,
        out_shape=jax.ShapeDtypeStruct((Bp, HP), jnp.float32),
        grid=(Bp // tb,),
        in_specs=in_specs,
        out_specs=pl.BlockSpec((tb, HP), lambda i: (i, 0)),
        compiler_params=pltpu.CompilerParams(
            dimension_semantics=("parallel",),       # batch tiles -> 2 TCs on v7x
            vmem_limit_bytes=32 * 1024 * 1024,       # ~4 MiB weights + buffers, fits all gens
        ),
    )(sp, disc, *[kp[name] for name in _WEIGHT_ORDER])


# ----------------------------------------------------------------------------
# Init-time preprocessing
# ----------------------------------------------------------------------------
def conv_to_dense(w, b, H, W, stride):
    """Lower a valid NCHW conv over an HxW window to a dense matmul matrix.

    Rows are (c, h, w) window-flatten order; columns are (oc, oh, ow)
    channel-major order (matches torch NCHW Flatten of the conv output).
    """
    w = np.asarray(w, np.float32)
    b = np.asarray(b, np.float32)
    OC, C, kh_, kw_ = w.shape
    OH = (H - kh_) // stride + 1
    OW = (W - kw_) // stride + 1
    dense = np.zeros((C * H * W, OC * OH * OW), np.float32)
    oc, c, kh, kw, oh, ow = np.meshgrid(
        np.arange(OC), np.arange(C), np.arange(kh_), np.arange(kw_),
        np.arange(OH), np.arange(OW), indexing="ij")
    rows = (c * H + oh * stride + kh) * W + (ow * stride + kw)
    cols = (oc * OH + oh) * OW + ow
    dense[rows.ravel(), cols.ravel()] = w[oc, c, kh, kw].ravel()
    b_dense = np.repeat(b, OH * OW)
    return dense, b_dense, OH, OW


def _uniform_linear(key, fan_in, fan_out):
    kw_, kb = jax.random.split(key)
    lim = float(1.0 / np.sqrt(fan_in))
    w = jax.random.uniform(kw_, (fan_in, fan_out), jnp.float32, -lim, lim)
    b = jax.random.uniform(kb, (fan_out,), jnp.float32, -lim, lim)
    return w, b


def _uniform_conv(key, oc, c, kh, kw_):
    k1, k2 = jax.random.split(key)
    lim = float(1.0 / np.sqrt(c * kh * kw_))
    w = jax.random.uniform(k1, (oc, c, kh, kw_), jnp.float32, -lim, lim)
    b = jax.random.uniform(k2, (oc,), jnp.float32, -lim, lim)
    return w, b


def init_a2c_kernel_params(key, in_channels, H, W, num_discrete, num_outputs):
    keys = jax.random.split(key, 12)
    conv1_w, conv1_b = _uniform_conv(keys[0], C1_OUT, in_channels, KH, KW)
    conv2_w, conv2_b = _uniform_conv(keys[1], C2_OUT, C1_OUT, KH, KW)

    OH1 = (H - KH) // STRIDE + 1
    OW1 = (W - KW) // STRIDE + 1
    OH2 = (OH1 - KH) // STRIDE + 1
    OW2 = (OW1 - KW) // STRIDE + 1
    n_pos = OH2 * OW2                       # conv2 output positions per sample (4)
    win = (KH - 1) * STRIDE + KH            # 10: receptive field edge of one conv2 output
    cnn_flat_dim = C2_OUT * n_pos           # 128 (torch NCHW flatten width)
    concat_dim = cnn_flat_dim + num_discrete

    # conv1 lowered to a dense matmul over ONE 10x10 receptive-field window
    # ([400,256] instead of the old [1024,784] per-image dense matrix).
    w1s, b1s, oh_s, ow_s = conv_to_dense(np.asarray(conv1_w), np.asarray(conv1_b),
                                         win, win, STRIDE)
    assert (oh_s, ow_s) == (KH, KW)
    # conv2 is then a plain reshaped-weight matmul on that (oc1, kh, kw)-ordered patch.
    w2f = np.asarray(conv2_w, np.float32).reshape(C2_OUT, -1).T      # [256, 32]

    # policy_net / value_net FC stacks: 3x Linear(512) tanh + Linear(512) (FCNet out).
    branch = {}
    k_idx = 2
    for name in ("policy", "value"):
        layers = []
        in_dim = concat_dim
        for _ in range(3):
            layers.append(_uniform_linear(keys[k_idx], in_dim, FC_WIDTH))
            in_dim = FC_WIDTH
            k_idx += 1
        layers.append(_uniform_linear(keys[k_idx], FC_WIDTH, FC_WIDTH))
        k_idx += 1
        branch[name] = layers
    logits_w, logits_b = _uniform_linear(keys[k_idx], FC_WIDTH, num_outputs)
    k_idx += 1
    value_w, value_b = _uniform_linear(keys[k_idx], FC_WIDTH, 1)

    # W0 split assumes the reference concatenates [cnn_flatten(NCHW), one_hot]
    # in that order.  Reorder W0's CNN rows from torch flatten order
    # (oc2*n_pos + pos) to the kernel's pos-major order (pos*C2_OUT + oc2).
    perm = np.array([(k % C2_OUT) * n_pos + (k // C2_OUT)
                     for k in range(cnn_flat_dim)])

    bf = jnp.bfloat16
    p, v = branch["policy"], branch["value"]
    kp = {
        "w1s": jnp.asarray(w1s, bf),
        "b1s": jnp.asarray(b1s, jnp.float32).reshape(1, -1),
        "w2f": jnp.asarray(w2f, bf),
        "b2f": jnp.asarray(np.asarray(conv2_b), jnp.float32).reshape(1, -1),
        "w0a": jnp.stack([p[0][0][:cnn_flat_dim][perm],
                          v[0][0][:cnn_flat_dim][perm]]).astype(bf),
        "w0b": jnp.stack([p[0][0][cnn_flat_dim:],
                          v[0][0][cnn_flat_dim:]]).astype(bf),
        "b0": jnp.stack([p[0][1], v[0][1]]).reshape(2, 1, -1),
    }
    for li in (1, 2, 3):
        kp[f"w{li}"] = jnp.stack([p[li][0], v[li][0]]).astype(bf)
        kp[f"b{li}"] = jnp.stack([p[li][1], v[li][1]]).reshape(2, 1, -1)

    # Lane-dense head: logits in lanes [0, NO), value in lane NO of a 128-wide output.
    HP = max(128, ((num_outputs + 1 + 127) // 128) * 128)
    wh_l = jnp.zeros((FC_WIDTH, HP), jnp.float32).at[:, :num_outputs].set(logits_w)
    wh_v = jnp.zeros((FC_WIDTH, HP), jnp.float32).at[:, num_outputs].set(value_w[:, 0])
    bh = (jnp.zeros((HP,), jnp.float32)
          .at[:num_outputs].set(logits_b)
          .at[num_outputs].set(value_b[0]))
    kp["wh"] = jnp.stack([wh_l, wh_v]).astype(bf)
    kp["bh"] = bh.reshape(1, -1)

    meta = dict(num_outputs=num_outputs, num_discrete=num_discrete,
                cnn_flat_dim=cnn_flat_dim, n_oh=OH2, n_ow=OW2, win=win, head_pad=HP)
    return kp, meta


# ----------------------------------------------------------------------------
# Forward wrapper (mirrors A2CNetwork.forward / value_function)
# ----------------------------------------------------------------------------
def _round_up(x, m):
    return ((x + m - 1) // m) * m


def _build_superpatches(img, n_oh, n_ow, win, sstride, dtype=jnp.bfloat16):
    """img [B,C,H,W] (NCHW) -> [B*n_pos, C*win*win] bf16 super-patches.

    Row order: (b, pos=oh2*n_ow+ow2).  Column order: (c, h, w) within the
    window — matches conv_to_dense's row indexing.  Pure data movement; cheap.
    """
    B = img.shape[0]
    wins = []
    for oh2 in range(n_oh):
        for ow2 in range(n_ow):
            r0, c0 = oh2 * sstride, ow2 * sstride
            wins.append(img[:, :, r0:r0 + win, c0:c0 + win].reshape(B, -1))
    sp = jnp.stack(wins, axis=1)                       # [B, n_pos, C*win*win]
    return sp.reshape(B * len(wins), -1).astype(dtype)


def a2c_forward(params, img_obs, discrete_obs, *, num_outputs, n_oh, n_ow, win):
    """Returns (logits [B, num_outputs], value_out [B]) like forward()/value_function()."""
    B = img_obs.shape[0]
    tb = min(128, _round_up(B, 8))          # sublane-aligned batch tile
    Bp = _round_up(B, tb)

    img_p = jnp.pad(img_obs, ((0, Bp - B), (0, 0), (0, 0), (0, 0)))
    disc_p = jnp.pad(discrete_obs.astype(jnp.int32), (0, Bp - B)).reshape(Bp, 1)

    sp = _build_superpatches(img_p, n_oh, n_ow, win, STRIDE * STRIDE)
    heads = a2c_fused_forward(params, sp, disc_p, tb)   # [Bp, 128] f32, lane-dense
    logits = heads[:B, :num_outputs]
    value_out = heads[:B, num_outputs]
    return logits, value_out


# ----------------------------------------------------------------------------
if __name__ == "__main__":
    B, C, H, W = 2, 4, 16, 16
    NUM_DISCRETE = 8
    NUM_OUTPUTS = 6

    key = jax.random.PRNGKey(0)
    k_img, k_disc, k_params = jax.random.split(key, 3)

    img_obs = jax.random.normal(k_img, (B, C, H, W), dtype=jnp.float32)
    discrete_obs = jax.random.randint(k_disc, (B,), 0, NUM_DISCRETE)

    kernel_params, meta = init_a2c_kernel_params(
        k_params, C, H, W, NUM_DISCRETE, NUM_OUTPUTS)
    assert meta["cnn_flat_dim"] == 32 * 2 * 2   # 16 -(k4,s2)-> 7 -(k4,s2)-> 2

    fwd = jax.jit(functools.partial(
        a2c_forward, num_outputs=NUM_OUTPUTS,
        n_oh=meta["n_oh"], n_ow=meta["n_ow"], win=meta["win"]))
    logits, value_out = fwd(kernel_params, img_obs, discrete_obs)
    jax.block_until_ready((logits, value_out))

    assert logits.shape == (B, NUM_OUTPUTS)
    assert value_out.shape == (B,)
    print("KERNEL_OK")
</pallas_src>

<mosaic_0001>
module attributes {stable_mosaic.version = 11 : i64} {
  func.func @_a2c_fused_kernel(%arg0: i32, %arg1: memref<32x400xbf16, #tpu.memory_space<vmem>>, %arg2: memref<8x1xi32, #tpu.memory_space<vmem>>, %arg3: memref<400x256xbf16, #tpu.memory_space<vmem>>, %arg4: memref<1x256xf32, #tpu.memory_space<vmem>>, %arg5: memref<256x32xbf16, #tpu.memory_space<vmem>>, %arg6: memref<1x32xf32, #tpu.memory_space<vmem>>, %arg7: memref<2x128x512xbf16, #tpu.memory_space<vmem>>, %arg8: memref<2x8x512xbf16, #tpu.memory_space<vmem>>, %arg9: memref<2x1x512xf32, #tpu.memory_space<vmem>>, %arg10: memref<2x512x512xbf16, #tpu.memory_space<vmem>>, %arg11: memref<2x1x512xf32, #tpu.memory_space<vmem>>, %arg12: memref<2x512x512xbf16, #tpu.memory_space<vmem>>, %arg13: memref<2x1x512xf32, #tpu.memory_space<vmem>>, %arg14: memref<2x512x512xbf16, #tpu.memory_space<vmem>>, %arg15: memref<2x1x512xf32, #tpu.memory_space<vmem>>, %arg16: memref<2x512x128xbf16, #tpu.memory_space<vmem>>, %arg17: memref<1x128xf32, #tpu.memory_space<vmem>>, %arg18: memref<8x128xf32, #tpu.memory_space<vmem>>) attributes {dimension_semantics = [#tpu.dimension_semantics<parallel>], iteration_bounds = array<i64: 1>, scalar_prefetch = 0 : i64, scratch_operands = 0 : i64, tpu.core_type = #tpu.core_type<tc>, window_params = [{transform_indices = @transform_0, window_bounds = array<i64: 32, 400>}, {transform_indices = @transform_1, window_bounds = array<i64: 8, 1>}, {pipeline_mode = #tpu.pipeline_mode<synchronous>, transform_indices = @transform_2, window_bounds = array<i64: 400, 256>}, {pipeline_mode = #tpu.pipeline_mode<synchronous>, transform_indices = @transform_3, window_bounds = array<i64: 1, 256>}, {pipeline_mode = #tpu.pipeline_mode<synchronous>, transform_indices = @transform_4, window_bounds = array<i64: 256, 32>}, {pipeline_mode = #tpu.pipeline_mode<synchronous>, transform_indices = @transform_5, window_bounds = array<i64: 1, 32>}, {pipeline_mode = #tpu.pipeline_mode<synchronous>, transform_indices = @transform_6, window_bounds = array<i64: 2, 128, 512>}, {pipeline_mode = #tpu.pipeline_mode<synchronous>, transform_indices = @transform_7, window_bounds = array<i64: 2, 8, 512>}, {pipeline_mode = #tpu.pipeline_mode<synchronous>, transform_indices = @transform_8, window_bounds = array<i64: 2, 1, 512>}, {pipeline_mode = #tpu.pipeline_mode<synchronous>, transform_indices = @transform_9, window_bounds = array<i64: 2, 512, 512>}, {pipeline_mode = #tpu.pipeline_mode<synchronous>, transform_indices = @transform_10, window_bounds = array<i64: 2, 1, 512>}, {pipeline_mode = #tpu.pipeline_mode<synchronous>, transform_indices = @transform_11, window_bounds = array<i64: 2, 512, 512>}, {pipeline_mode = #tpu.pipeline_mode<synchronous>, transform_indices = @transform_12, window_bounds = array<i64: 2, 1, 512>}, {pipeline_mode = #tpu.pipeline_mode<synchronous>, transform_indices = @transform_13, window_bounds = array<i64: 2, 512, 512>}, {pipeline_mode = #tpu.pipeline_mode<synchronous>, transform_indices = @transform_14, window_bounds = array<i64: 2, 1, 512>}, {pipeline_mode = #tpu.pipeline_mode<synchronous>, transform_indices = @transform_15, window_bounds = array<i64: 2, 512, 128>}, {pipeline_mode = #tpu.pipeline_mode<synchronous>, transform_indices = @transform_16, window_bounds = array<i64: 1, 128>}, {transform_indices = @transform_17, window_bounds = array<i64: 8, 128>}]} {
    %c0 = arith.constant 0 : index
    %c0_0 = arith.constant 0 : index
    %0 = vector.load %arg1[%c0, %c0_0] : memref<32x400xbf16, #tpu.memory_space<vmem>>, vector<32x400xbf16>
    %c0_1 = arith.constant 0 : index
    %c0_2 = arith.constant 0 : index
    %1 = vector.load %arg3[%c0_1, %c0_2] : memref<400x256xbf16, #tpu.memory_space<vmem>>, vector<400x256xbf16>
    %cst = arith.constant dense<0.000000e+00> : vector<32x256xf32>
    %2 = tpu.matmul %0, %1, %cst {dimension_numbers = #tpu.dot_dimension_numbers<[1], [0], [0], [1], [0, 0, 1, 1], [], []>} : vector<32x400xbf16>, vector<400x256xbf16>, vector<32x256xf32> -> vector<32x256xf32>
    %c0_3 = arith.constant 0 : index
    %c0_4 = arith.constant 0 : index
    %3 = vector.load %arg4[%c0_3, %c0_4] : memref<1x256xf32, #tpu.memory_space<vmem>>, vector<1x256xf32>
    %4 = vector.broadcast %3 : vector<1x256xf32> to vector<32x256xf32>
    %5 = arith.addf %2, %4 : vector<32x256xf32>
    %cst_5 = arith.constant 0.000000e+00 : f32
    %6 = vector.broadcast %cst_5 : f32 to vector<32x256xf32>
    %7 = arith.maximumf %5, %6 : vector<32x256xf32>
    %8 = arith.truncf %7 : vector<32x256xf32> to vector<32x256xbf16>
    %c0_6 = arith.constant 0 : index
    %c0_7 = arith.constant 0 : index
    %9 = vector.load %arg5[%c0_6, %c0_7] : memref<256x32xbf16, #tpu.memory_space<vmem>>, vector<256x32xbf16>
    %cst_8 = arith.constant dense<0.000000e+00> : vector<32x32xf32>
    %10 = tpu.matmul %8, %9, %cst_8 {dimension_numbers = #tpu.dot_dimension_numbers<[1], [0], [0], [1], [0, 0, 1, 1], [], []>} : vector<32x256xbf16>, vector<256x32xbf16>, vector<32x32xf32> -> vector<32x32xf32>
    %c0_9 = arith.constant 0 : index
    %c0_10 = arith.constant 0 : index
    %11 = vector.load %arg6[%c0_9, %c0_10] : memref<1x32xf32, #tpu.memory_space<vmem>>, vector<1x32xf32>
    %12 = vector.broadcast %11 : vector<1x32xf32> to vector<32x32xf32>
    %13 = arith.addf %10, %12 : vector<32x32xf32>
    %cst_11 = arith.constant 0.000000e+00 : f32
    %14 = vector.broadcast %cst_11 : f32 to vector<32x32xf32>
    %15 = arith.maximumf %13, %14 : vector<32x32xf32>
    %16 = arith.truncf %15 : vector<32x32xf32> to vector<32x32xbf16>
    %17 = tpu.iota {dimensions = array<i32: 1>} : vector<8x32xi32>
    %18 = tpu.iota {dimensions = array<i32: 0>} : vector<8x32xi32>
    %c4_i32 = arith.constant 4 : i32
    %19 = vector.broadcast %c4_i32 : i32 to vector<8x32xi32>
    %20 = arith.muli %18, %19 : vector<8x32xi32>
    %c0_i32 = arith.constant 0 : i32
    %21 = vector.broadcast %c0_i32 : i32 to vector<8x32xi32>
    %22 = arith.addi %20, %21 : vector<8x32xi32>
    %23 = arith.cmpi eq, %17, %22 : vector<8x32xi32>
    %24 = arith.extui %23 : vector<8x32xi1> to vector<8x32xi32>
    %25 = arith.sitofp %24 : vector<8x32xi32> to vector<8x32xf32>
    %26 = arith.truncf %25 : vector<8x32xf32> to vector<8x32xbf16>
    %cst_12 = arith.constant dense<0.000000e+00> : vector<8x32xf32>
    %27 = tpu.matmul %26, %16, %cst_12 {dimension_numbers = #tpu.dot_dimension_numbers<[1], [0], [0], [1], [0, 0, 1, 1], [], []>} : vector<8x32xbf16>, vector<32x32xbf16>, vector<8x32xf32> -> vector<8x32xf32>
    %c4_i32_13 = arith.constant 4 : i32
    %28 = vector.broadcast %c4_i32_13 : i32 to vector<8x32xi32>
    %29 = arith.muli %18, %28 : vector<8x32xi32>
    %c1_i32 = arith.constant 1 : i32
    %30 = vector.broadcast %c1_i32 : i32 to vector<8x32xi32>
    %31 = arith.addi %29, %30 : vector<8x32xi32>
    %32 = arith.cmpi eq, %17, %31 : vector<8x32xi32>
    %33 = arith.extui %32 : vector<8x32xi1> to vector<8x32xi32>
    %34 = arith.sitofp %33 : vector<8x32xi32> to vector<8x32xf32>
    %35 = arith.truncf %34 : vector<8x32xf32> to vector<8x32xbf16>
    %cst_14 = arith.constant dense<0.000000e+00> : vector<8x32xf32>
    %36 = tpu.matmul %35, %16, %cst_14 {dimension_numbers = #tpu.dot_dimension_numbers<[1], [0], [0], [1], [0, 0, 1, 1], [], []>} : vector<8x32xbf16>, vector<32x32xbf16>, vector<8x32xf32> -> vector<8x32xf32>
    %c4_i32_15 = arith.constant 4 : i32
    %37 = vector.broadcast %c4_i32_15 : i32 to vector<8x32xi32>
    %38 = arith.muli %18, %37 : vector<8x32xi32>
    %c2_i32 = arith.constant 2 : i32
    %39 = vector.broadcast %c2_i32 : i32 to vector<8x32xi32>
    %40 = arith.addi %38, %39 : vector<8x32xi32>
    %41 = arith.cmpi eq, %17, %40 : vector<8x32xi32>
    %42 = arith.extui %41 : vector<8x32xi1> to vector<8x32xi32>
    %43 = arith.sitofp %42 : vector<8x32xi32> to vector<8x32xf32>
    %44 = arith.truncf %43 : vector<8x32xf32> to vector<8x32xbf16>
    %cst_16 = arith.constant dense<0.000000e+00> : vector<8x32xf32>
    %45 = tpu.matmul %44, %16, %cst_16 {dimension_numbers = #tpu.dot_dimension_numbers<[1], [0], [0], [1], [0, 0, 1, 1], [], []>} : vector<8x32xbf16>, vector<32x32xbf16>, vector<8x32xf32> -> vector<8x32xf32>
    %c4_i32_17 = arith.constant 4 : i32
    %46 = vector.broadcast %c4_i32_17 : i32 to vector<8x32xi32>
    %47 = arith.muli %18, %46 : vector<8x32xi32>
    %c3_i32 = arith.constant 3 : i32
    %48 = vector.broadcast %c3_i32 : i32 to vector<8x32xi32>
    %49 = arith.addi %47, %48 : vector<8x32xi32>
    %50 = arith.cmpi eq, %17, %49 : vector<8x32xi32>
    %51 = arith.extui %50 : vector<8x32xi1> to vector<8x32xi32>
    %52 = arith.sitofp %51 : vector<8x32xi32> to vector<8x32xf32>
    %53 = arith.truncf %52 : vector<8x32xf32> to vector<8x32xbf16>
    %cst_18 = arith.constant dense<0.000000e+00> : vector<8x32xf32>
    %54 = tpu.matmul %53, %16, %cst_18 {dimension_numbers = #tpu.dot_dimension_numbers<[1], [0], [0], [1], [0, 0, 1, 1], [], []>} : vector<8x32xbf16>, vector<32x32xbf16>, vector<8x32xf32> -> vector<8x32xf32>
    %55 = tpu.concatenate %27, %36, %45, %54 in 1 : vector<8x32xf32>, vector<8x32xf32>, vector<8x32xf32>, vector<8x32xf32> -> vector<8x128xf32>
    %56 = arith.truncf %55 : vector<8x128xf32> to vector<8x128xbf16>
    %c0_19 = arith.constant 0 : index
    %c0_20 = arith.constant 0 : index
    %57 = vector.load %arg2[%c0_19, %c0_20] : memref<8x1xi32, #tpu.memory_space<vmem>>, vector<8x1xi32>
    %58 = tpu.iota {dimensions = array<i32: 1>} : vector<8x8xi32>
    %59 = vector.broadcast %57 : vector<8x1xi32> to vector<8x8xi32>
    %60 = arith.cmpi eq, %58, %59 : vector<8x8xi32>
    %61 = arith.extui %60 : vector<8x8xi1> to vector<8x8xi32>
    %62 = arith.sitofp %61 : vector<8x8xi32> to vector<8x8xf32>
    %63 = arith.truncf %62 : vector<8x8xf32> to vector<8x8xbf16>
    %c0_21 = arith.constant 0 : index
    %c0_22 = arith.constant 0 : index
    %c0_23 = arith.constant 0 : index
    %64 = vector.load %arg7[%c0_21, %c0_22, %c0_23] : memref<2x128x512xbf16, #tpu.memory_space<vmem>>, vector<1x128x512xbf16>
    %65 = vector.shape_cast %64 : vector<1x128x512xbf16> to vector<128x512xbf16>
    %cst_24 = arith.constant dense<0.000000e+00> : vector<8x512xf32>
    %66 = tpu.matmul %56, %65, %cst_24 {dimension_numbers = #tpu.dot_dimension_numbers<[1], [0], [0], [1], [0, 0, 1, 1], [], []>} : vector<8x128xbf16>, vector<128x512xbf16>, vector<8x512xf32> -> vector<8x512xf32>
    %c0_25 = arith.constant 0 : index
    %c0_26 = arith.constant 0 : index
    %c0_27 = arith.constant 0 : index
    %67 = vector.load %arg8[%c0_25, %c0_26, %c0_27] : memref<2x8x512xbf16, #tpu.memory_space<vmem>>, vector<1x8x512xbf16>
    %68 = vector.shape_cast %67 : vector<1x8x512xbf16> to vector<8x512xbf16>
    %cst_28 = arith.constant dense<0.000000e+00> : vector<8x512xf32>
    %69 = tpu.matmul %63, %68, %cst_28 {dimension_numbers = #tpu.dot_dimension_numbers<[1], [0], [0], [1], [0, 0, 1, 1], [], []>} : vector<8x8xbf16>, vector<8x512xbf16>, vector<8x512xf32> -> vector<8x512xf32>
    %70 = arith.addf %66, %69 : vector<8x512xf32>
    %c0_29 = arith.constant 0 : index
    %c0_30 = arith.constant 0 : index
    %c0_31 = arith.constant 0 : index
    %71 = vector.load %arg9[%c0_29, %c0_30, %c0_31] : memref<2x1x512xf32, #tpu.memory_space<vmem>>, vector<1x1x512xf32>
    %72 = vector.shape_cast %71 : vector<1x1x512xf32> to vector<1x512xf32>
    %73 = vector.broadcast %72 : vector<1x512xf32> to vector<8x512xf32>
    %74 = arith.addf %70, %73 : vector<8x512xf32>
    %75 = math.tanh %74 : vector<8x512xf32>
    %76 = arith.truncf %75 : vector<8x512xf32> to vector<8x512xbf16>
    %c0_32 = arith.constant 0 : index
    %c0_33 = arith.constant 0 : index
    %c0_34 = arith.constant 0 : index
    %77 = vector.load %arg10[%c0_32, %c0_33, %c0_34] : memref<2x512x512xbf16, #tpu.memory_space<vmem>>, vector<1x512x512xbf16>
    %78 = vector.shape_cast %77 : vector<1x512x512xbf16> to vector<512x512xbf16>
    %cst_35 = arith.constant dense<0.000000e+00> : vector<8x512xf32>
    %79 = tpu.matmul %76, %78, %cst_35 {dimension_numbers = #tpu.dot_dimension_numbers<[1], [0], [0], [1], [0, 0, 1, 1], [], []>} : vector<8x512xbf16>, vector<512x512xbf16>, vector<8x512xf32> -> vector<8x512xf32>
    %c0_36 = arith.constant 0 : index
    %c0_37 = arith.constant 0 : index
    %c0_38 = arith.constant 0 : index
    %80 = vector.load %arg11[%c0_36, %c0_37, %c0_38] : memref<2x1x512xf32, #tpu.memory_space<vmem>>, vector<1x1x512xf32>
    %81 = vector.shape_cast %80 : vector<1x1x512xf32> to vector<1x512xf32>
    %82 = vector.broadcast %81 : vector<1x512xf32> to vector<8x512xf32>
    %83 = arith.addf %79, %82 : vector<8x512xf32>
    %84 = math.tanh %83 : vector<8x512xf32>
    %85 = arith.truncf %84 : vector<8x512xf32> to vector<8x512xbf16>
    %c0_39 = arith.constant 0 : index
    %c0_40 = arith.constant 0 : index
    %c0_41 = arith.constant 0 : index
    %86 = vector.load %arg12[%c0_39, %c0_40, %c0_41] : memref<2x512x512xbf16, #tpu.memory_space<vmem>>, vector<1x512x512xbf16>
    %87 = vector.shape_cast %86 : vector<1x512x512xbf16> to vector<512x512xbf16>
    %cst_42 = arith.constant dense<0.000000e+00> : vector<8x512xf32>
    %88 = tpu.matmul %85, %87, %cst_42 {dimension_numbers = #tpu.dot_dimension_numbers<[1], [0], [0], [1], [0, 0, 1, 1], [], []>} : vector<8x512xbf16>, vector<512x512xbf16>, vector<8x512xf32> -> vector<8x512xf32>
    %c0_43 = arith.constant 0 : index
    %c0_44 = arith.constant 0 : index
    %c0_45 = arith.constant 0 : index
    %89 = vector.load %arg13[%c0_43, %c0_44, %c0_45] : memref<2x1x512xf32, #tpu.memory_space<vmem>>, vector<1x1x512xf32>
    %90 = vector.shape_cast %89 : vector<1x1x512xf32> to vector<1x512xf32>
    %91 = vector.broadcast %90 : vector<1x512xf32> to vector<8x512xf32>
    %92 = arith.addf %88, %91 : vector<8x512xf32>
    %93 = math.tanh %92 : vector<8x512xf32>
    %94 = arith.truncf %93 : vector<8x512xf32> to vector<8x512xbf16>
    %c0_46 = arith.constant 0 : index
    %c0_47 = arith.constant 0 : index
    %c0_48 = arith.constant 0 : index
    %95 = vector.load %arg14[%c0_46, %c0_47, %c0_48] : memref<2x512x512xbf16, #tpu.memory_space<vmem>>, vector<1x512x512xbf16>
    %96 = vector.shape_cast %95 : vector<1x512x512xbf16> to vector<512x512xbf16>
    %cst_49 = arith.constant dense<0.000000e+00> : vector<8x512xf32>
    %97 = tpu.matmul %94, %96, %cst_49 {dimension_numbers = #tpu.dot_dimension_numbers<[1], [0], [0], [1], [0, 0, 1, 1], [], []>} : vector<8x512xbf16>, vector<512x512xbf16>, vector<8x512xf32> -> vector<8x512xf32>
    %c0_50 = arith.constant 0 : index
    %c0_51 = arith.constant 0 : index
    %c0_52 = arith.constant 0 : index
    %98 = vector.load %arg15[%c0_50, %c0_51, %c0_52] : memref<2x1x512xf32, #tpu.memory_space<vmem>>, vector<1x1x512xf32>
    %99 = vector.shape_cast %98 : vector<1x1x512xf32> to vector<1x512xf32>
    %100 = vector.broadcast %99 : vector<1x512xf32> to vector<8x512xf32>
    %101 = arith.addf %97, %100 : vector<8x512xf32>
    %102 = arith.truncf %101 : vector<8x512xf32> to vector<8x512xbf16>
    %c1 = arith.constant 1 : index
    %c0_53 = arith.constant 0 : index
    %c0_54 = arith.constant 0 : index
    %103 = vector.load %arg7[%c1, %c0_53, %c0_54] : memref<2x128x512xbf16, #tpu.memory_space<vmem>>, vector<1x128x512xbf16>
    %104 = vector.shape_cast %103 : vector<1x128x512xbf16> to vector<128x512xbf16>
    %cst_55 = arith.constant dense<0.000000e+00> : vector<8x512xf32>
    %105 = tpu.matmul %56, %104, %cst_55 {dimension_numbers = #tpu.dot_dimension_numbers<[1], [0], [0], [1], [0, 0, 1, 1], [], []>} : vector<8x128xbf16>, vector<128x512xbf16>, vector<8x512xf32> -> vector<8x512xf32>
    %c1_56 = arith.constant 1 : index
    %c0_57 = arith.constant 0 : index
    %c0_58 = arith.constant 0 : index
    %106 = vector.load %arg8[%c1_56, %c0_57, %c0_58] : memref<2x8x512xbf16, #tpu.memory_space<vmem>>, vector<1x8x512xbf16>
    %107 = vector.shape_cast %106 : vector<1x8x512xbf16> to vector<8x512xbf16>
    %cst_59 = arith.constant dense<0.000000e+00> : vector<8x512xf32>
    %108 = tpu.matmul %63, %107, %cst_59 {dimension_numbers = #tpu.dot_dimension_numbers<[1], [0], [0], [1], [0, 0, 1, 1], [], []>} : vector<8x8xbf16>, vector<8x512xbf16>, vector<8x512xf32> -> vector<8x512xf32>
    %109 = arith.addf %105, %108 : vector<8x512xf32>
    %c1_60 = arith.constant 1 : index
    %c0_61 = arith.constant 0 : index
    %c0_62 = arith.constant 0 : index
    %110 = vector.load %arg9[%c1_60, %c0_61, %c0_62] : memref<2x1x512xf32, #tpu.memory_space<vmem>>, vector<1x1x512xf32>
    %111 = vector.shape_cast %110 : vector<1x1x512xf32> to vector<1x512xf32>
    %112 = vector.broadcast %111 : vector<1x512xf32> to vector<8x512xf32>
    %113 = arith.addf %109, %112 : vector<8x512xf32>
    %114 = math.tanh %113 : vector<8x512xf32>
    %115 = arith.truncf %114 : vector<8x512xf32> to vector<8x512xbf16>
    %c1_63 = arith.constant 1 : index
    %c0_64 = arith.constant 0 : index
    %c0_65 = arith.constant 0 : index
    %116 = vector.load %arg10[%c1_63, %c0_64, %c0_65] : memref<2x512x512xbf16, #tpu.memory_space<vmem>>, vector<1x512x512xbf16>
    %117 = vector.shape_cast %116 : vector<1x512x512xbf16> to vector<512x512xbf16>
    %cst_66 = arith.constant dense<0.000000e+00> : vector<8x512xf32>
    %118 = tpu.matmul %115, %117, %cst_66 {dimension_numbers = #tpu.dot_dimension_numbers<[1], [0], [0], [1], [0, 0, 1, 1], [], []>} : vector<8x512xbf16>, vector<512x512xbf16>, vector<8x512xf32> -> vector<8x512xf32>
    %c1_67 = arith.constant 1 : index
    %c0_68 = arith.constant 0 : index
    %c0_69 = arith.constant 0 : index
    %119 = vector.load %arg11[%c1_67, %c0_68, %c0_69] : memref<2x1x512xf32, #tpu.memory_space<vmem>>, vector<1x1x512xf32>
    %120 = vector.shape_cast %119 : vector<1x1x512xf32> to vector<1x512xf32>
    %121 = vector.broadcast %120 : vector<1x512xf32> to vector<8x512xf32>
    %122 = arith.addf %118, %121 : vector<8x512xf32>
    %123 = math.tanh %122 : vector<8x512xf32>
    %124 = arith.truncf %123 : vector<8x512xf32> to vector<8x512xbf16>
    %c1_70 = arith.constant 1 : index
    %c0_71 = arith.constant 0 : index
    %c0_72 = arith.constant 0 : index
    %125 = vector.load %arg12[%c1_70, %c0_71, %c0_72] : memref<2x512x512xbf16, #tpu.memory_space<vmem>>, vector<1x512x512xbf16>
    %126 = vector.shape_cast %125 : vector<1x512x512xbf16> to vector<512x512xbf16>
    %cst_73 = arith.constant dense<0.000000e+00> : vector<8x512xf32>
    %127 = tpu.matmul %124, %126, %cst_73 {dimension_numbers = #tpu.dot_dimension_numbers<[1], [0], [0], [1], [0, 0, 1, 1], [], []>} : vector<8x512xbf16>, vector<512x512xbf16>, vector<8x512xf32> -> vector<8x512xf32>
    %c1_74 = arith.constant 1 : index
    %c0_75 = arith.constant 0 : index
    %c0_76 = arith.constant 0 : index
    %128 = vector.load %arg13[%c1_74, %c0_75, %c0_76] : memref<2x1x512xf32, #tpu.memory_space<vmem>>, vector<1x1x512xf32>
    %129 = vector.shape_cast %128 : vector<1x1x512xf32> to vector<1x512xf32>
    %130 = vector.broadcast %129 : vector<1x512xf32> to vector<8x512xf32>
    %131 = arith.addf %127, %130 : vector<8x512xf32>
    %132 = math.tanh %131 : vector<8x512xf32>
    %133 = arith.truncf %132 : vector<8x512xf32> to vector<8x512xbf16>
    %c1_77 = arith.constant 1 : index
    %c0_78 = arith.constant 0 : index
    %c0_79 = arith.constant 0 : index
    %134 = vector.load %arg14[%c1_77, %c0_78, %c0_79] : memref<2x512x512xbf16, #tpu.memory_space<vmem>>, vector<1x512x512xbf16>
    %135 = vector.shape_cast %134 : vector<1x512x512xbf16> to vector<512x512xbf16>
    %cst_80 = arith.constant dense<0.000000e+00> : vector<8x512xf32>
    %136 = tpu.matmul %133, %135, %cst_80 {dimension_numbers = #tpu.dot_dimension_numbers<[1], [0], [0], [1], [0, 0, 1, 1], [], []>} : vector<8x512xbf16>, vector<512x512xbf16>, vector<8x512xf32> -> vector<8x512xf32>
    %c1_81 = arith.constant 1 : index
    %c0_82 = arith.constant 0 : index
    %c0_83 = arith.constant 0 : index
    %137 = vector.load %arg15[%c1_81, %c0_82, %c0_83] : memref<2x1x512xf32, #tpu.memory_space<vmem>>, vector<1x1x512xf32>
    %138 = vector.shape_cast %137 : vector<1x1x512xf32> to vector<1x512xf32>
    %139 = vector.broadcast %138 : vector<1x512xf32> to vector<8x512xf32>
    %140 = arith.addf %136, %139 : vector<8x512xf32>
    %141 = arith.truncf %140 : vector<8x512xf32> to vector<8x512xbf16>
    %c0_84 = arith.constant 0 : index
    %c0_85 = arith.constant 0 : index
    %c0_86 = arith.constant 0 : index
    %142 = vector.load %arg16[%c0_84, %c0_85, %c0_86] : memref<2x512x128xbf16, #tpu.memory_space<vmem>>, vector<1x512x128xbf16>
    %143 = vector.shape_cast %142 : vector<1x512x128xbf16> to vector<512x128xbf16>
    %cst_87 = arith.constant dense<0.000000e+00> : vector<8x128xf32>
    %144 = tpu.matmul %102, %143, %cst_87 {dimension_numbers = #tpu.dot_dimension_numbers<[1], [0], [0], [1], [0, 0, 1, 1], [], []>} : vector<8x512xbf16>, vector<512x128xbf16>, vector<8x128xf32> -> vector<8x128xf32>
    %c1_88 = arith.constant 1 : index
    %c0_89 = arith.constant 0 : index
    %c0_90 = arith.constant 0 : index
    %145 = vector.load %arg16[%c1_88, %c0_89, %c0_90] : memref<2x512x128xbf16, #tpu.memory_space<vmem>>, vector<1x512x128xbf16>
    %146 = vector.shape_cast %145 : vector<1x512x128xbf16> to vector<512x128xbf16>
    %cst_91 = arith.constant dense<0.000000e+00> : vector<8x128xf32>
    %147 = tpu.matmul %141, %146, %cst_91 {dimension_numbers = #tpu.dot_dimension_numbers<[1], [0], [0], [1], [0, 0, 1, 1], [], []>} : vector<8x512xbf16>, vector<512x128xbf16>, vector<8x128xf32> -> vector<8x128xf32>
    %148 = arith.addf %144, %147 : vector<8x128xf32>
    %c0_92 = arith.constant 0 : index
    %c0_93 = arith.constant 0 : index
    %149 = vector.load %arg17[%c0_92, %c0_93] : memref<1x128xf32, #tpu.memory_space<vmem>>, vector<1x128xf32>
    %150 = vector.broadcast %149 : vector<1x128xf32> to vector<8x128xf32>
    %151 = arith.addf %148, %150 : vector<8x128xf32>
    %c0_94 = arith.constant 0 : index
    %c0_95 = arith.constant 0 : index
    %152 = vector.load %arg18[%c0_94, %c0_95] : memref<8x128xf32, #tpu.memory_space<vmem>>, vector<8x128xf32>
    tpu.vector_store %arg18[%c0_94, %c0_95], %151 {strides = array<i32>} : memref<8x128xf32, #tpu.memory_space<vmem>>, vector<8x128xf32>,
    return
  }
  func.func @transform_0(%arg0: i32) -> (i32, i32) {
    %c0_i32 = arith.constant 0 : i32
    %c0_i32_0 = arith.constant 0 : i32
    return %arg0, %c0_i32 : i32, i32
  }
  func.func @transform_1(%arg0: i32) -> (i32, i32) {
    %c0_i32 = arith.constant 0 : i32
    %c0_i32_0 = arith.constant 0 : i32
    return %arg0, %c0_i32 : i32, i32
  }
  func.func @transform_2(%arg0: i32) -> (i32, i32) {
    %c0_i32 = arith.constant 0 : i32
    %c0_i32_0 = arith.constant 0 : i32
    %c0_i32_1 = arith.constant 0 : i32
    return %c0_i32, %c0_i32_0 : i32, i32
  }
  func.func @transform_3(%arg0: i32) -> (i32, i32) {
    %c0_i32 = arith.constant 0 : i32
    %c0_i32_0 = arith.constant 0 : i32
    %c0_i32_1 = arith.constant 0 : i32
    return %c0_i32, %c0_i32_0 : i32, i32
  }
  func.func @transform_4(%arg0: i32) -> (i32, i32) {
    %c0_i32 = arith.constant 0 : i32
    %c0_i32_0 = arith.constant 0 : i32
    %c0_i32_1 = arith.constant 0 : i32
    return %c0_i32, %c0_i32_0 : i32, i32
  }
  func.func @transform_5(%arg0: i32) -> (i32, i32) {
    %c0_i32 = arith.constant 0 : i32
    %c0_i32_0 = arith.constant 0 : i32
    %c0_i32_1 = arith.constant 0 : i32
    return %c0_i32, %c0_i32_0 : i32, i32
  }
  func.func @transform_6(%arg0: i32) -> (i32, i32, i32) {
    %c0_i32 = arith.constant 0 : i32
    %c0_i32_0 = arith.constant 0 : i32
    %c0_i32_1 = arith.constant 0 : i32
    %c0_i32_2 = arith.constant 0 : i32
    return %c0_i32, %c0_i32_0, %c0_i32_1 : i32, i32, i32
  }
  func.func @transform_7(%arg0: i32) -> (i32, i32, i32) {
    %c0_i32 = arith.constant 0 : i32
    %c0_i32_0 = arith.constant 0 : i32
    %c0_i32_1 = arith.constant 0 : i32
    %c0_i32_2 = arith.constant 0 : i32
    return %c0_i32, %c0_i32_0, %c0_i32_1 : i32, i32, i32
  }
  func.func @transform_8(%arg0: i32) -> (i32, i32, i32) {
    %c0_i32 = arith.constant 0 : i32
    %c0_i32_0 = arith.constant 0 : i32
    %c0_i32_1 = arith.constant 0 : i32
    %c0_i32_2 = arith.constant 0 : i32
    return %c0_i32, %c0_i32_0, %c0_i32_1 : i32, i32, i32
  }
  func.func @transform_9(%arg0: i32) -> (i32, i32, i32) {
    %c0_i32 = arith.constant 0 : i32
    %c0_i32_0 = arith.constant 0 : i32
    %c0_i32_1 = arith.constant 0 : i32
    %c0_i32_2 = arith.constant 0 : i32
    return %c0_i32, %c0_i32_0, %c0_i32_1 : i32, i32, i32
  }
  func.func @transform_10(%arg0: i32) -> (i32, i32, i32) {
    %c0_i32 = arith.constant 0 : i32
    %c0_i32_0 = arith.constant 0 : i32
    %c0_i32_1 = arith.constant 0 : i32
    %c0_i32_2 = arith.constant 0 : i32
    return %c0_i32, %c0_i32_0, %c0_i32_1 : i32, i32, i32
  }
  func.func @transform_11(%arg0: i32) -> (i32, i32, i32) {
    %c0_i32 = arith.constant 0 : i32
    %c0_i32_0 = arith.constant 0 : i32
    %c0_i32_1 = arith.constant 0 : i32
    %c0_i32_2 = arith.constant 0 : i32
    return %c0_i32, %c0_i32_0, %c0_i32_1 : i32, i32, i32
  }
  func.func @transform_12(%arg0: i32) -> (i32, i32, i32) {
    %c0_i32 = arith.constant 0 : i32
    %c0_i32_0 = arith.constant 0 : i32
    %c0_i32_1 = arith.constant 0 : i32
    %c0_i32_2 = arith.constant 0 : i32
    return %c0_i32, %c0_i32_0, %c0_i32_1 : i32, i32, i32
  }
  func.func @transform_13(%arg0: i32) -> (i32, i32, i32) {
    %c0_i32 = arith.constant 0 : i32
    %c0_i32_0 = arith.constant 0 : i32
    %c0_i32_1 = arith.constant 0 : i32
    %c0_i32_2 = arith.constant 0 : i32
    return %c0_i32, %c0_i32_0, %c0_i32_1 : i32, i32, i32
  }
  func.func @transform_14(%arg0: i32) -> (i32, i32, i32) {
    %c0_i32 = arith.constant 0 : i32
    %c0_i32_0 = arith.constant 0 : i32
    %c0_i32_1 = arith.constant 0 : i32
    %c0_i32_2 = arith.constant 0 : i32
    return %c0_i32, %c0_i32_0, %c0_i32_1 : i32, i32, i32
  }
  func.func @transform_15(%arg0: i32) -> (i32, i32, i32) {
    %c0_i32 = arith.constant 0 : i32
    %c0_i32_0 = arith.constant 0 : i32
    %c0_i32_1 = arith.constant 0 : i32
    %c0_i32_2 = arith.constant 0 : i32
    return %c0_i32, %c0_i32_0, %c0_i32_1 : i32, i32, i32
  }
  func.func @transform_16(%arg0: i32) -> (i32, i32) {
    %c0_i32 = arith.constant 0 : i32
    %c0_i32_0 = arith.constant 0 : i32
    %c0_i32_1 = arith.constant 0 : i32
    return %c0_i32, %c0_i32_0 : i32, i32
  }
  func.func @transform_17(%arg0: i32) -> (i32, i32) {
    %c0_i32 = arith.constant 0 : i32
    %c0_i32_0 = arith.constant 0 : i32
    return %arg0, %c0_i32 : i32, i32
  }
}

</mosaic_0001>

<llo_original>
// kernel: a2c_forward.1
$region0: #{a2c_forward.1}
  #allocation0 [shape = 'u32[]', space=smem, size = 0x4, offset = 0x4, fixed_abs, tag = 'smem constant byte address 0x4 - core index']
  #allocation1 [shape = 'u32[72,128]{1,0:T(1,128)}', space=vmem, size = 0x9000, scoped, tag = 'internal scratch']
  %s0 = inlined_call_operand.vmem [shape: bf16[32,400], index: 0, kind: input, shape index: {}]
  %s1 = inlined_call_operand.vmem [shape: s32[8,1], index: 1, kind: input, shape index: {}]
  %s2 = inlined_call_operand.vmem [shape: bf16[400,256], index: 2, kind: input, shape index: {}]
  %s3 = inlined_call_operand.vmem [shape: f32[1,256], index: 3, kind: input, shape index: {}]
  %s4 = inlined_call_operand.vmem [shape: bf16[256,32], index: 4, kind: input, shape index: {}]
  %s5 = inlined_call_operand.vmem [shape: f32[1,32], index: 5, kind: input, shape index: {}]
  %s6 = inlined_call_operand.vmem [shape: bf16[2,128,512], index: 6, kind: input, shape index: {}]
  %s7 = inlined_call_operand.vmem [shape: bf16[2,8,512], index: 7, kind: input, shape index: {}]
  %s8 = inlined_call_operand.vmem [shape: f32[2,1,512], index: 8, kind: input, shape index: {}]
  %s9 = inlined_call_operand.vmem [shape: bf16[2,512,512], index: 9, kind: input, shape index: {}]
  %s10 = inlined_call_operand.vmem [shape: f32[2,1,512], index: 10, kind: input, shape index: {}]
  %s11 = inlined_call_operand.hbm [shape: bf16[2,512,512], index: 11, kind: input, shape index: {}]
  %s12 = inlined_call_operand.vmem [shape: f32[2,1,512], index: 12, kind: input, shape index: {}]
  %s13 = inlined_call_operand.hbm [shape: bf16[2,512,512], index: 13, kind: input, shape index: {}]
  %s14 = inlined_call_operand.vmem [shape: f32[2,1,512], index: 14, kind: input, shape index: {}]
  %s15 = inlined_call_operand.vmem [shape: bf16[2,512,128], index: 15, kind: input, shape index: {}]
  %s16 = inlined_call_operand.vmem [shape: f32[1,128], index: 16, kind: input, shape index: {}]
  %s17 = inlined_call_operand.vmem [shape: f32[8,128], index: 17, kind: output, shape index: {}]
  %s18 = sld [smem:[#allocation0]]
  $region86: #{a2c_forward.1} parent=0
    _
  %s20 = ssub.s32 1, %s18
  %s21 = scalar_select 0, %s20, %s18
  $region1: #{a2c_forward.1} parent=0
    #allocation2 [shape = 'u8[1048576]{0}', space=vmem, size = 0x100000, scoped, tag = 'input window, operand 11, single buffered']
    #allocation3 [shape = 's32[1]{0}', space=sflag, size = 0x4, scoped, tag = 'scoped memory for a2c_forward.1']
    #allocation4 [shape = 'u8[1048576]{0}', space=vmem, size = 0x100000, scoped, tag = 'input window, operand 13, single buffered']
    #allocation5 [shape = 's32[1]{0}', space=sflag, size = 0x4, scoped, tag = 'scoped memory for a2c_forward.1']
    %22 = vsyncpa [#allocation3], 0
    %23 = vsyncpa [#allocation5], 0
    // Predicated region
    $region2: #{a2c_forward.1} parent=1 // pred_check
      _
    $region3: #{a2c_forward.1} parent=1 // pred_check_branch
      %25 = sbr.rel (0) target = $region5
    $region4: #{a2c_forward.1} parent=1 // pred_region
      _
    $region5: #{a2c_forward.1} parent=1 // pred_fallthru
      _
    // Predicated region
    $region6: #{a2c_forward.1} parent=1 // pred_check
      _
    $region7: #{a2c_forward.1} parent=1 // pred_check_branch
      %27 = sbr.rel (0) target = $region9
    $region8: #{a2c_forward.1} parent=1 // pred_region
      _
    $region9: #{a2c_forward.1} parent=1 // pred_fallthru
      _
    // Predicated region
    $region10: #{a2c_forward.1} parent=1 // pred_check
      _
    $region11: #{a2c_forward.1} parent=1 // pred_check_branch
      %29 = sbr.rel (0) target = $region13
    $region12: #{a2c_forward.1} parent=1 // pred_region
      _
    $region13: #{a2c_forward.1} parent=1 // pred_fallthru
      _
    // Predicated region
    $region14: #{a2c_forward.1} parent=1 // pred_check
      _
    $region15: #{a2c_forward.1} parent=1 // pred_check_branch
      %31 = sbr.rel (0) target = $region17
    $region16: #{a2c_forward.1} parent=1 // pred_region
      _
    $region17: #{a2c_forward.1} parent=1 // pred_fallthru
      _
    // Predicated region
    $region18: #{a2c_forward.1} parent=1 // pred_check
      _
    $region19: #{a2c_forward.1} parent=1 // pred_check_branch
      %33 = sbr.rel (0) target = $region21
    $region20: #{a2c_forward.1} parent=1 // pred_region
      _
    $region21: #{a2c_forward.1} parent=1 // pred_fallthru
      _
    // Predicated region
    $region22: #{a2c_forward.1} parent=1 // pred_check
      _
    $region23: #{a2c_forward.1} parent=1 // pred_check_branch
      %35 = sbr.rel (0) target = $region25
    $region24: #{a2c_forward.1} parent=1 // pred_region
      _
    $region25: #{a2c_forward.1} parent=1 // pred_fallthru
      _
    // Predicated region
    $region26: #{a2c_forward.1} parent=1 // pred_check
      _
    $region27: #{a2c_forward.1} parent=1 // pred_check_branch
      %37 = sbr.rel (0) target = $region29
    $region28: #{a2c_forward.1} parent=1 // pred_region
      _
    $region29: #{a2c_forward.1} parent=1 // pred_fallthru
      _
    // Predicated region
    $region30: #{a2c_forward.1} parent=1 // pred_check
      _
    $region31: #{a2c_forward.1} parent=1 // pred_check_branch
      %39 = sbr.rel (0) target = $region33
    $region32: #{a2c_forward.1} parent=1 // pred_region
      _
    $region33: #{a2c_forward.1} parent=1 // pred_fallthru
      _
    // Predicated region
    $region34: #{a2c_forward.1} parent=1 // pred_check
      _
    $region35: #{a2c_forward.1} parent=1 // pred_check_branch
      %41 = sbr.rel (0) target = $region37
    $region36: #{a2c_forward.1} parent=1 // pred_region
      _
    $region37: #{a2c_forward.1} parent=1 // pred_fallthru
      _
    // Predicated region
    $region38: #{a2c_forward.1} parent=1 // pred_check
      _
    $region39: #{a2c_forward.1} parent=1 // pred_check_branch
      %43 = sbr.rel (0) target = $region41
    $region40: #{a2c_forward.1} parent=1 // pred_region
      _
    $region41: #{a2c_forward.1} parent=1 // pred_fallthru
      _
    // Predicated region
    $region42: #{a2c_forward.1} parent=1 // pred_check
      _
    $region43: #{a2c_forward.1} parent=1 // pred_check_branch
      %45 = sbr.rel (0) target = $region45
    $region44: #{a2c_forward.1} parent=1 // pred_region
      _
    $region45: #{a2c_forward.1} parent=1 // pred_fallthru
      _
    // Predicated region
    $region46: #{a2c_forward.1} parent=1 // pred_check
      _
    $region47: #{a2c_forward.1} parent=1 // pred_check_branch
      %47 = sbr.rel (0) target = $region49
    $region48: #{a2c_forward.1} parent=1 // pred_region
      %49 = vsyncadd [#allocation3], 0
      %s50 = sshll.u32 %s11, 4
      %s51 = int_to_ptr.hbm [resolvable:$true] %s50
      %s52 = sshll.u32 [#allocation2], 4
      %s53 = int_to_ptr.vmem [resolvable:$true] %s52
      %58 = dma.hbm_to_vmem [thread:$0]  %s51, 32768, %s53, [#allocation3], 256, 256, 16
    $region49: #{a2c_forward.1} parent=1 // pred_fallthru
      _
    // Predicated region
    $region50: #{a2c_forward.1} parent=1 // pred_check
      _
    $region51: #{a2c_forward.1} parent=1 // pred_check_branch
      %60 = sbr.rel (0) target = $region53
    $region52: #{a2c_forward.1} parent=1 // pred_region
      _
    $region53: #{a2c_forward.1} parent=1 // pred_fallthru
      _
    // Predicated region
    $region54: #{a2c_forward.1} parent=1 // pred_check
      _
    $region55: #{a2c_forward.1} parent=1 // pred_check_branch
      %62 = sbr.rel (0) target = $region57
    $region56: #{a2c_forward.1} parent=1 // pred_region
      %64 = vsyncadd [#allocation5], 0
      %s65 = sshll.u32 %s13, 4
      %s66 = int_to_ptr.hbm [resolvable:$true] %s65
      %s67 = sshll.u32 [#allocation4], 4
      %s68 = int_to_ptr.vmem [resolvable:$true] %s67
      %73 = dma.hbm_to_vmem [thread:$0]  %s66, 32768, %s68, [#allocation5], 256, 256, 16
    $region57: #{a2c_forward.1} parent=1 // pred_fallthru
      _
    // Predicated region
    $region58: #{a2c_forward.1} parent=1 // pred_check
      _
    $region59: #{a2c_forward.1} parent=1 // pred_check_branch
      %75 = sbr.rel (0) target = $region61
    $region60: #{a2c_forward.1} parent=1 // pred_region
      _
    $region61: #{a2c_forward.1} parent=1 // pred_fallthru
      _
    // Predicated region
    $region62: #{a2c_forward.1} parent=1 // pred_check
      _
    $region63: #{a2c_forward.1} parent=1 // pred_check_branch
      %77 = sbr.rel (0) target = $region65
    $region64: #{a2c_forward.1} parent=1 // pred_region
      _
    $region65: #{a2c_forward.1} parent=1 // pred_fallthru
      _
    // Predicated region
    $region66: #{a2c_forward.1} parent=1 // pred_check
      _
    $region67: #{a2c_forward.1} parent=1 // pred_check_branch
      %79 = sbr.rel (0) target = $region69
    $region68: #{a2c_forward.1} parent=1 // pred_region
      _
    $region69: #{a2c_forward.1} parent=1 // pred_fallthru
      _
    // Predicated region
    $region70: #{a2c_forward.1} parent=1 // pred_check
      _
    $region71: #{a2c_forward.1} parent=1 // pred_check_branch
      %81 = sbr.rel (0) target = $region73
    $region72: #{a2c_forward.1} parent=1 // pred_region
      %83 = dma.done [#allocation3], 32768
    $region73: #{a2c_forward.1} parent=1 // pred_fallthru
      _
    // Predicated region
    $region74: #{a2c_forward.1} parent=1 // pred_check
      _
    $region75: #{a2c_forward.1} parent=1 // pred_check_branch
      %85 = sbr.rel (0) target = $region77
    $region76: #{a2c_forward.1} parent=1 // pred_region
      %87 = dma.done [#allocation5], 32768
    $region77: #{a2c_forward.1} parent=1 // pred_fallthru
      _
    %v89 = vld [vmem:[%s0] sm:$0xff]
    %v90 = vld [vmem:[%s0 + $0x8] sm:$0xff]
    %v91 = vld [vmem:[%s0 + $0x10] sm:$0xff]
    %v92 = vld [vmem:[%s0 + $0x18] sm:$0xff]
    %v93 = vld [vmem:[%s0 + $0x20] sm:$0xff]
    %v94 = vld [vmem:[%s0 + $0x28] sm:$0xff]
    %v95 = vld [vmem:[%s0 + $0x30] sm:$0xff]
    %v96 = vld [vmem:[%s0 + $0x38] sm:$0xff]
    %v97 = vld [vmem:[%s2] sm:$0xff]
    %v98 = vld [vmem:[%s2 + $0x8] sm:$0xff]
    %v99 = vld [vmem:[%s2 + $0x10] sm:$0xff]
    %v100 = vld [vmem:[%s2 + $0x18] sm:$0xff]
    %v101 = vld [vmem:[%s2 + $0x20] sm:$0xff]
    %v102 = vld [vmem:[%s2 + $0x28] sm:$0xff]
    %v103 = vld [vmem:[%s2 + $0x30] sm:$0xff]
    %v104 = vld [vmem:[%s2 + $0x38] sm:$0xff]
    %v105 = vld [vmem:[%s2 + $0x40] sm:$0xff]
    %v106 = vld [vmem:[%s2 + $0x48] sm:$0xff]
    %v107 = vld [vmem:[%s2 + $0x50] sm:$0xff]
    %v108 = vld [vmem:[%s2 + $0x58] sm:$0xff]
    %v109 = vld [vmem:[%s2 + $0x60] sm:$0xff]
    %v110 = vld [vmem:[%s2 + $0x68] sm:$0xff]
    %v111 = vld [vmem:[%s2 + $0x70] sm:$0xff]
    %v112 = vld [vmem:[%s2 + $0x78] sm:$0xff]
    %v113 = vld [vmem:[%s2 + $0x80] sm:$0xff]
    %v114 = vld [vmem:[%s2 + $0x88] sm:$0xff]
    %v115 = vld [vmem:[%s2 + $0x90] sm:$0xff]
    %v116 = vld [vmem:[%s2 + $0x98] sm:$0xff]
    %v117 = vld [vmem:[%s2 + $0xa0] sm:$0xff]
    %v118 = vld [vmem:[%s2 + $0xa8] sm:$0xff]
    %v119 = vld [vmem:[%s2 + $0xb0] sm:$0xff]
    %v120 = vld [vmem:[%s2 + $0xb8] sm:$0xff]
    %v121 = vld [vmem:[%s2 + $0xc0] sm:$0xff]
    %v122 = vld [vmem:[%s2 + $0xc8] sm:$0xff]
    %v123 = vld [vmem:[%s2 + $0xd0] sm:$0xff]
    %v124 = vld [vmem:[%s2 + $0xd8] sm:$0xff]
    %v125 = vld [vmem:[%s2 + $0xe0] sm:$0xff]
    %v126 = vld [vmem:[%s2 + $0xe8] sm:$0xff]
    %v127 = vld [vmem:[%s2 + $0xf0] sm:$0xff]
    %v128 = vld [vmem:[%s2 + $0xf8] sm:$0xff]
    %v129 = vld [vmem:[%s2 + $0x100] sm:$0xff]
    %v130 = vld [vmem:[%s2 + $0x108] sm:$0xff]
    %v131 = vld [vmem:[%s2 + $0x110] sm:$0xff]
    %v132 = vld [vmem:[%s2 + $0x118] sm:$0xff]
    %v133 = vld [vmem:[%s2 + $0x120] sm:$0xff]
    %v134 = vld [vmem:[%s2 + $0x128] sm:$0xff]
    %v135 = vld [vmem:[%s2 + $0x130] sm:$0xff]
    %v136 = vld [vmem:[%s2 + $0x138] sm:$0xff]
    %v137 = vld [vmem:[%s2 + $0x140] sm:$0xff]
    %v138 = vld [vmem:[%s2 + $0x148] sm:$0xff]
    %v139 = vld [vmem:[%s2 + $0x150] sm:$0xff]
    %v140 = vld [vmem:[%s2 + $0x158] sm:$0xff]
    %v141 = vld [vmem:[%s2 + $0x160] sm:$0xff]
    %v142 = vld [vmem:[%s2 + $0x168] sm:$0xff]
    %v143 = vld [vmem:[%s2 + $0x170] sm:$0xff]
    %v144 = vld [vmem:[%s2 + $0x178] sm:$0xff]
    %v145 = vld [vmem:[%s2 + $0x180] sm:$0xff]
    %v146 = vld [vmem:[%s2 + $0x188] sm:$0xff]
    %v147 = vld [vmem:[%s3] sm:$0x3]
    %v149 = vperm.slane %v147, 0
    %v150 = vperm.slane %v147, 1
    %v161 = vunpack.c.l.b16 %v89
    %v162 = vunpack.c.h.b16 %v89
    %v163 = vunpack.c.l.b16 %v90
    %v164 = vunpack.c.h.b16 %v90
    %v165 = vunpack.c.l.b16 %v91
    %v166 = vunpack.c.h.b16 %v91
    %v167 = vunpack.c.l.b16 %v92
    %v168 = vunpack.c.h.b16 %v92
    %v169 = vunpack.c.l.b16 %v93
    %v170 = vunpack.c.h.b16 %v93
    %v171 = vunpack.c.l.b16 %v94
    %v172 = vunpack.c.h.b16 %v94
    %v173 = vunpack.c.l.b16 %v95
    %v174 = vunpack.c.h.b16 %v95
    %v175 = vunpack.c.l.b16 %v96
    %v176 = vunpack.c.h.b16 %v96
    %v177 = vpack.c.b16 %v165, %v161
    %v178 = vpack.c.b16 %v166, %v162
    %v179 = vpack.c.b16 %v167, %v163
    %v180 = vpack.c.b16 %v168, %v164
    %v181 = vpack.c.b16 %v173, %v169
    %v182 = vpack.c.b16 %v174, %v170
    %v183 = vpack.c.b16 %v175, %v171
    %v184 = vpack.c.b16 %v176, %v172
    %v241 = vunpack.c.l.b16 %v97
    %v242 = vunpack.c.h.b16 %v97
    %v243 = vunpack.c.l.b16 %v98
    %v244 = vunpack.c.h.b16 %v98
    %v245 = vunpack.c.l.b16 %v99
    %v246 = vunpack.c.h.b16 %v99
    %v247 = vunpack.c.l.b16 %v100
    %v248 = vunpack.c.h.b16 %v100
    %v249 = vunpack.c.l.b16 %v101
    %v250 = vunpack.c.h.b16 %v101
    %v251 = vunpack.c.l.b16 %v102
    %v252 = vunpack.c.h.b16 %v102
    %v253 = vunpack.c.l.b16 %v103
    %v254 = vunpack.c.h.b16 %v103
    %v255 = vunpack.c.l.b16 %v104
    %v256 = vunpack.c.h.b16 %v104
    %v257 = vunpack.c.l.b16 %v105
    %v258 = vunpack.c.h.b16 %v105
    %v259 = vunpack.c.l.b16 %v106
    %v260 = vunpack.c.h.b16 %v106
    %v261 = vunpack.c.l.b16 %v107
    %v262 = vunpack.c.h.b16 %v107
    %v263 = vunpack.c.l.b16 %v108
    %v264 = vunpack.c.h.b16 %v108
    %v265 = vunpack.c.l.b16 %v109
    %v266 = vunpack.c.h.b16 %v109
    %v267 = vunpack.c.l.b16 %v110
    %v268 = vunpack.c.h.b16 %v110
    %v269 = vunpack.c.l.b16 %v111
    %v270 = vunpack.c.h.b16 %v111
    %v271 = vunpack.c.l.b16 %v112
    %v272 = vunpack.c.h.b16 %v112
    %v273 = vunpack.c.l.b16 %v113
    %v274 = vunpack.c.h.b16 %v113
    %v275 = vunpack.c.l.b16 %v114
    %v276 = vunpack.c.h.b16 %v114
    %v277 = vunpack.c.l.b16 %v115
    %v278 = vunpack.c.h.b16 %v115
    %v279 = vunpack.c.l.b16 %v116
    %v280 = vunpack.c.h.b16 %v116
    %v281 = vunpack.c.l.b16 %v117
    %v282 = vunpack.c.h.b16 %v117
    %v283 = vunpack.c.l.b16 %v118
    %v284 = vunpack.c.h.b16 %v118
    %v285 = vunpack.c.l.b16 %v119
    %v286 = vunpack.c.h.b16 %v119
    %v287 = vunpack.c.l.b16 %v120
    %v288 = vunpack.c.h.b16 %v120
    %v289 = vunpack.c.l.b16 %v121
    %v290 = vunpack.c.h.b16 %v121
    %v291 = vunpack.c.l.b16 %v122
    %v292 = vunpack.c.h.b16 %v122
    %v293 = vunpack.c.l.b16 %v123
    %v294 = vunpack.c.h.b16 %v123
    %v295 = vunpack.c.l.b16 %v124
    %v296 = vunpack.c.h.b16 %v124
    %v297 = vunpack.c.l.b16 %v125
    %v298 = vunpack.c.h.b16 %v125
    %v299 = vunpack.c.l.b16 %v126
    %v300 = vunpack.c.h.b16 %v126
    %v301 = vunpack.c.l.b16 %v127
    %v302 = vunpack.c.h.b16 %v127
    %v303 = vunpack.c.l.b16 %v128
    %v304 = vunpack.c.h.b16 %v128
    %v305 = vunpack.c.l.b16 %v129
    %v306 = vunpack.c.h.b16 %v129
    %v307 = vunpack.c.l.b16 %v130
    %v308 = vunpack.c.h.b16 %v130
    %v309 = vunpack.c.l.b16 %v131
    %v310 = vunpack.c.h.b16 %v131
    %v311 = vunpack.c.l.b16 %v132
    %v312 = vunpack.c.h.b16 %v132
    %v313 = vunpack.c.l.b16 %v133
    %v314 = vunpack.c.h.b16 %v133
    %v315 = vunpack.c.l.b16 %v134
    %v316 = vunpack.c.h.b16 %v134
    %v317 = vunpack.c.l.b16 %v135
    %v318 = vunpack.c.h.b16 %v135
    %v319 = vunpack.c.l.b16 %v136
    %v320 = vunpack.c.h.b16 %v136
    %v321 = vunpack.c.l.b16 %v137
    %v322 = vunpack.c.h.b16 %v137
    %v323 = vunpack.c.l.b16 %v138
    %v324 = vunpack.c.h.b16 %v138
    %v325 = vunpack.c.l.b16 %v139
    %v326 = vunpack.c.h.b16 %v139
    %v327 = vunpack.c.l.b16 %v140
    %v328 = vunpack.c.h.b16 %v140
    %v329 = vunpack.c.l.b16 %v141
    %v330 = vunpack.c.h.b16 %v141
    %v331 = vunpack.c.l.b16 %v142
    %v332 = vunpack.c.h.b16 %v142
    %v333 = vunpack.c.l.b16 %v143
    %v334 = vunpack.c.h.b16 %v143
    %v335 = vunpack.c.l.b16 %v144
    %v336 = vunpack.c.h.b16 %v144
    %v337 = vunpack.c.l.b16 %v145
    %v338 = vunpack.c.h.b16 %v145
    %v339 = vunpack.c.l.b16 %v146
    %v340 = vunpack.c.h.b16 %v146
    %v341 = vpack.c.b16 %v243, %v241
    %v342 = vpack.c.b16 %v244, %v242
    %v343 = vpack.c.b16 %v247, %v245
    %v344 = vpack.c.b16 %v248, %v246
    %v345 = vpack.c.b16 %v251, %v249
    %v346 = vpack.c.b16 %v252, %v250
    %v347 = vpack.c.b16 %v255, %v253
    %v348 = vpack.c.b16 %v256, %v254
    %v349 = vpack.c.b16 %v259, %v257
    %v350 = vpack.c.b16 %v260, %v258
    %v351 = vpack.c.b16 %v263, %v261
    %v352 = vpack.c.b16 %v264, %v262
    %v353 = vpack.c.b16 %v267, %v265
    %v354 = vpack.c.b16 %v268, %v266
    %v355 = vpack.c.b16 %v271, %v269
    %v356 = vpack.c.b16 %v272, %v270
    %v357 = vpack.c.b16 %v275, %v273
    %v358 = vpack.c.b16 %v276, %v274
    %v359 = vpack.c.b16 %v279, %v277
    %v360 = vpack.c.b16 %v280, %v278
    %v361 = vpack.c.b16 %v283, %v281
    %v362 = vpack.c.b16 %v284, %v282
    %v363 = vpack.c.b16 %v287, %v285
    %v364 = vpack.c.b16 %v288, %v286
    %v365 = vpack.c.b16 %v291, %v289
    %v366 = vpack.c.b16 %v292, %v290
    %v367 = vpack.c.b16 %v295, %v293
    %v368 = vpack.c.b16 %v296, %v294
    %v369 = vpack.c.b16 %v299, %v297
    %v370 = vpack.c.b16 %v300, %v298
    %v371 = vpack.c.b16 %v303, %v301
    %v372 = vpack.c.b16 %v304, %v302
    %v373 = vpack.c.b16 %v307, %v305
    %v374 = vpack.c.b16 %v308, %v306
    %v375 = vpack.c.b16 %v311, %v309
    %v376 = vpack.c.b16 %v312, %v310
    %v377 = vpack.c.b16 %v315, %v313
    %v378 = vpack.c.b16 %v316, %v314
    %v379 = vpack.c.b16 %v319, %v317
    %v380 = vpack.c.b16 %v320, %v318
    %v381 = vpack.c.b16 %v323, %v321
    %v382 = vpack.c.b16 %v324, %v322
    %v383 = vpack.c.b16 %v327, %v325
    %v384 = vpack.c.b16 %v328, %v326
    %v385 = vpack.c.b16 %v331, %v329
    %v386 = vpack.c.b16 %v332, %v330
    %v387 = vpack.c.b16 %v335, %v333
    %v388 = vpack.c.b16 %v336, %v334
    %v389 = vpack.c.b16 %v339, %v337
    %v390 = vpack.c.b16 %v340, %v338
    %vm441 = vcmask 130048
    %v443 = vsel %vm441, %v180, 0
    %v446 = vsel %vm441, %v184, 0
    %448 = vmatpush.bf16.msra.mxu0 %v355
    %449 = vmatpush.bf16.msra.mxu0 %v353
    %450 = vmatpush.bf16.msra.mxu0 %v351
    %451 = vmatpush.bf16.msra.mxu0 %v349
    %452 = vmatpush.bf16.msra.mxu0 %v347
    %453 = vmatpush.bf16.msra.mxu0 %v345
    %454 = vmatpush.bf16.msra.mxu0 %v343
    %455 = vmatpush.bf16.msra.mxu0 %v341
    %456 = vmatmul.bf16.gmra.mxu0 %v177
    %v457 = vpop.f32.mrf.mxu0
    %v458 = vadd.f32 %v149, %v457
    %v459 = vpop.f32.mrf.mxu0
    %v460 = vadd.f32 %v149, %v459
    %461 = vmatmul.bf16.gmra.mxu0 %v181
    %v462 = vpop.f32.mrf.mxu0
    %v463 = vadd.f32 %v149, %v462
    %v464 = vpop.f32.mrf.mxu0
    %v465 = vadd.f32 %v149, %v464
    %466 = vdwg.mxu0
    %467 = vmatpush.bf16.msra.mxu0 %v371
    %468 = vmatpush.bf16.msra.mxu0 %v369
    %469 = vmatpush.bf16.msra.mxu0 %v367
    %470 = vmatpush.bf16.msra.mxu0 %v365
    %471 = vmatpush.bf16.msra.mxu0 %v363
    %472 = vmatpush.bf16.msra.mxu0 %v361
    %473 = vmatpush.bf16.msra.mxu0 %v359
    %474 = vmatpush.bf16.msra.mxu0 %v357
    %475 = vmatmul.bf16.gmra.mxu0 %v178
    %v476 = vpop.f32.mrf.mxu0
    %v477 = vadd.f32 %v458, %v476
    %v478 = vpop.f32.mrf.mxu0
    %v479 = vadd.f32 %v460, %v478
    %480 = vmatmul.bf16.gmra.mxu0 %v182
    %v481 = vpop.f32.mrf.mxu0
    %v482 = vadd.f32 %v463, %v481
    %v483 = vpop.f32.mrf.mxu0
    %v484 = vadd.f32 %v465, %v483
    %485 = vdwg.mxu0
    %486 = vmatpush.bf16.msra.mxu0 %v387
    %487 = vmatpush.bf16.msra.mxu0 %v385
    %488 = vmatpush.bf16.msra.mxu0 %v383
    %489 = vmatpush.bf16.msra.mxu0 %v381
    %490 = vmatpush.bf16.msra.mxu0 %v379
    %491 = vmatpush.bf16.msra.mxu0 %v377
    %492 = vmatpush.bf16.msra.mxu0 %v375
    %493 = vmatpush.bf16.msra.mxu0 %v373
    %494 = vmatmul.bf16.gmra.mxu0 %v179
    %v495 = vpop.f32.mrf.mxu0
    %v496 = vadd.f32 %v477, %v495
    %v497 = vpop.f32.mrf.mxu0
    %v498 = vadd.f32 %v479, %v497
    %499 = vmatmul.bf16.gmra.mxu0 %v183
    %v500 = vpop.f32.mrf.mxu0
    %v501 = vadd.f32 %v482, %v500
    %v502 = vpop.f32.mrf.mxu0
    %v503 = vadd.f32 %v484, %v502
    %504 = vdwg.mxu0
    %505 = vmatpush.bf16.msra.mxu0 0
    %506 = vmatpush.bf16.msra.mxu0 0
    %507 = vmatpush.bf16.msra.mxu0 0
    %508 = vmatpush.bf16.msra.mxu0 0
    %509 = vmatpush.bf16.msra.mxu0 0
    %510 = vmatpush.bf16.msra.mxu0 0
    %511 = vmatpush.bf16.msra.mxu0 0
    %512 = vmatpush.bf16.msra.mxu0 %v389
    %513 = vmatmul.bf16.gmra.mxu0 %v443
    %v514 = vpop.f32.mrf.mxu0
    %v515 = vadd.f32 %v496, %v514
    %v516 = vpop.f32.mrf.mxu0
    %v517 = vadd.f32 %v498, %v516
    %518 = vmatmul.bf16.gmra.mxu0 %v446
    %v519 = vpop.f32.mrf.mxu0
    %v520 = vadd.f32 %v501, %v519
    %v521 = vpop.f32.mrf.mxu0
    %v522 = vadd.f32 %v503, %v521
    %523 = vdwg.mxu0
    %524 = vmatpush.bf16.msra.mxu0 %v356
    %525 = vmatpush.bf16.msra.mxu0 %v354
    %526 = vmatpush.bf16.msra.mxu0 %v352
    %527 = vmatpush.bf16.msra.mxu0 %v350
    %528 = vmatpush.bf16.msra.mxu0 %v348
    %529 = vmatpush.bf16.msra.mxu0 %v346
    %530 = vmatpush.bf16.msra.mxu0 %v344
    %531 = vmatpush.bf16.msra.mxu0 %v342
    %532 = vmatmul.bf16.gmra.mxu0 %v177
    %v533 = vpop.f32.mrf.mxu0
    %v534 = vadd.f32 %v150, %v533
    %v535 = vpop.f32.mrf.mxu0
    %v536 = vadd.f32 %v150, %v535
    %537 = vmatmul.bf16.gmra.mxu0 %v181
    %v538 = vpop.f32.mrf.mxu0
    %v539 = vadd.f32 %v150, %v538
    %v540 = vpop.f32.mrf.mxu0
    %v541 = vadd.f32 %v150, %v540
    %542 = vdwg.mxu0
    %543 = vmatpush.bf16.msra.mxu0 %v372
    %544 = vmatpush.bf16.msra.mxu0 %v370
    %545 = vmatpush.bf16.msra.mxu0 %v368
    %546 = vmatpush.bf16.msra.mxu0 %v366
    %547 = vmatpush.bf16.msra.mxu0 %v364
    %548 = vmatpush.bf16.msra.mxu0 %v362
    %549 = vmatpush.bf16.msra.mxu0 %v360
    %550 = vmatpush.bf16.msra.mxu0 %v358
    %551 = vmatmul.bf16.gmra.mxu0 %v178
    %v552 = vpop.f32.mrf.mxu0
    %v553 = vadd.f32 %v534, %v552
    %v554 = vpop.f32.mrf.mxu0
    %v555 = vadd.f32 %v536, %v554
    %556 = vmatmul.bf16.gmra.mxu0 %v182
    %v557 = vpop.f32.mrf.mxu0
    %v558 = vadd.f32 %v539, %v557
    %v559 = vpop.f32.mrf.mxu0
    %v560 = vadd.f32 %v541, %v559
    %561 = vdwg.mxu0
    %562 = vmatpush.bf16.msra.mxu0 %v388
    %563 = vmatpush.bf16.msra.mxu0 %v386
    %564 = vmatpush.bf16.msra.mxu0 %v384
    %565 = vmatpush.bf16.msra.mxu0 %v382
    %566 = vmatpush.bf16.msra.mxu0 %v380
    %567 = vmatpush.bf16.msra.mxu0 %v378
    %568 = vmatpush.bf16.msra.mxu0 %v376
    %569 = vmatpush.bf16.msra.mxu0 %v374
    %570 = vmatmul.bf16.gmra.mxu0 %v179
    %v571 = vpop.f32.mrf.mxu0
    %v572 = vadd.f32 %v553, %v571
    %v573 = vpop.f32.mrf.mxu0
    %v574 = vadd.f32 %v555, %v573
    %575 = vmatmul.bf16.gmra.mxu0 %v183
    %v576 = vpop.f32.mrf.mxu0
    %v577 = vadd.f32 %v558, %v576
    %v578 = vpop.f32.mrf.mxu0
    %v579 = vadd.f32 %v560, %v578
    %580 = vdwg.mxu0
    %581 = vmatpush.bf16.msra.mxu0 0
    %582 = vmatpush.bf16.msra.mxu0 0
    %583 = vmatpush.bf16.msra.mxu0 0
    %584 = vmatpush.bf16.msra.mxu0 0
    %585 = vmatpush.bf16.msra.mxu0 0
    %586 = vmatpush.bf16.msra.mxu0 0
    %587 = vmatpush.bf16.msra.mxu0 0
    %588 = vmatpush.bf16.msra.mxu0 %v390
    %589 = vmatmul.bf16.gmra.mxu0 %v443
    %v590 = vpop.f32.mrf.mxu0
    %v591 = vadd.f32 %v572, %v590
    %v592 = vpop.f32.mrf.mxu0
    %v593 = vadd.f32 %v574, %v592
    %594 = vmatmul.bf16.gmra.mxu0 %v446
    %v595 = vpop.f32.mrf.mxu0
    %v596 = vadd.f32 %v577, %v595
    %v597 = vpop.f32.mrf.mxu0
    %v598 = vadd.f32 %v579, %v597
    %599 = vdwg.mxu0
    %v600 = vmax.f32 %v515, 0.0
    %v601 = vmax.f32 %v591, 0.0
    %v602 = vmax.f32 %v517, 0.0
    %v603 = vmax.f32 %v593, 0.0
    %v604 = vmax.f32 %v520, 0.0
    %v605 = vmax.f32 %v596, 0.0
    %v606 = vmax.f32 %v522, 0.0
    %v607 = vmax.f32 %v598, 0.0
    %v608 = vpack.c.bf16 %v602, %v600
    %v609 = vpack.c.bf16 %v603, %v601
    %v610 = vpack.c.bf16 %v606, %v604
    %v611 = vpack.c.bf16 %v607, %v605
    %v612 = vld [vmem:[%s4] sm:$0xf]
    %v613 = vld [vmem:[%s4 + $0x4] sm:$0xf]
    %v614 = vld [vmem:[%s4 + $0x8] sm:$0xf]
    %v615 = vld [vmem:[%s4 + $0xc] sm:$0xf]
    %v616 = vld [vmem:[%s4 + $0x10] sm:$0xf]
    %v617 = vld [vmem:[%s4 + $0x14] sm:$0xf]
    %v618 = vld [vmem:[%s4 + $0x18] sm:$0xf]
    %v619 = vld [vmem:[%s4 + $0x1c] sm:$0xf]
    %v620 = vld [vmem:[%s4 + $0x20] sm:$0xf]
    %v621 = vld [vmem:[%s4 + $0x24] sm:$0xf]
    %v622 = vld [vmem:[%s4 + $0x28] sm:$0xf]
    %v623 = vld [vmem:[%s4 + $0x2c] sm:$0xf]
    %v624 = vld [vmem:[%s4 + $0x30] sm:$0xf]
    %v625 = vld [vmem:[%s4 + $0x34] sm:$0xf]
    %v626 = vld [vmem:[%s4 + $0x38] sm:$0xf]
    %v627 = vld [vmem:[%s4 + $0x3c] sm:$0xf]
    %v628 = vld [vmem:[%s4 + $0x40] sm:$0xf]
    %v629 = vld [vmem:[%s4 + $0x44] sm:$0xf]
    %v630 = vld [vmem:[%s4 + $0x48] sm:$0xf]
    %v631 = vld [vmem:[%s4 + $0x4c] sm:$0xf]
    %v632 = vld [vmem:[%s4 + $0x50] sm:$0xf]
    %v633 = vld [vmem:[%s4 + $0x54] sm:$0xf]
    %v634 = vld [vmem:[%s4 + $0x58] sm:$0xf]
    %v635 = vld [vmem:[%s4 + $0x5c] sm:$0xf]
    %v636 = vld [vmem:[%s4 + $0x60] sm:$0xf]
    %v637 = vld [vmem:[%s4 + $0x64] sm:$0xf]
    %v638 = vld [vmem:[%s4 + $0x68] sm:$0xf]
    %v639 = vld [vmem:[%s4 + $0x6c] sm:$0xf]
    %v640 = vld [vmem:[%s4 + $0x70] sm:$0xf]
    %v641 = vld [vmem:[%s4 + $0x74] sm:$0xf]
    %v642 = vld [vmem:[%s4 + $0x78] sm:$0xf]
    %v643 = vld [vmem:[%s4 + $0x7c] sm:$0xf]
    %v644 = vld [vmem:[%s5] sm:$0x1]
    %v646 = vperm.slane %v644, 0
    %v680 = vunpack.c.l.b16 %v612
    %v681 = vunpack.c.l.b16 %v613
    %v682 = vunpack.c.l.b16 %v614
    %v683 = vunpack.c.l.b16 %v615
    %v684 = vunpack.c.l.b16 %v616
    %v685 = vunpack.c.l.b16 %v617
    %v686 = vunpack.c.l.b16 %v618
    %v687 = vunpack.c.l.b16 %v619
    %v688 = vunpack.c.l.b16 %v620
    %v689 = vunpack.c.l.b16 %v621
    %v690 = vunpack.c.l.b16 %v622
    %v691 = vunpack.c.l.b16 %v623
    %v692 = vunpack.c.l.b16 %v624
    %v693 = vunpack.c.l.b16 %v625
    %v694 = vunpack.c.l.b16 %v626
    %v695 = vunpack.c.l.b16 %v627
    %v696 = vunpack.c.l.b16 %v628
    %v697 = vunpack.c.l.b16 %v629
    %v698 = vunpack.c.l.b16 %v630
    %v699 = vunpack.c.l.b16 %v631
    %v700 = vunpack.c.l.b16 %v632
    %v701 = vunpack.c.l.b16 %v633
    %v702 = vunpack.c.l.b16 %v634
    %v703 = vunpack.c.l.b16 %v635
    %v704 = vunpack.c.l.b16 %v636
    %v705 = vunpack.c.l.b16 %v637
    %v706 = vunpack.c.l.b16 %v638
    %v707 = vunpack.c.l.b16 %v639
    %v708 = vunpack.c.l.b16 %v640
    %v709 = vunpack.c.l.b16 %v641
    %v710 = vunpack.c.l.b16 %v642
    %v711 = vunpack.c.l.b16 %v643
    %v712 = vpack.c.b16 %v681, %v680
    %v713 = vpack.c.b16 %v683, %v682
    %v714 = vpack.c.b16 %v685, %v684
    %v715 = vpack.c.b16 %v687, %v686
    %v716 = vpack.c.b16 %v689, %v688
    %v717 = vpack.c.b16 %v691, %v690
    %v718 = vpack.c.b16 %v693, %v692
    %v719 = vpack.c.b16 %v695, %v694
    %v720 = vpack.c.b16 %v697, %v696
    %v721 = vpack.c.b16 %v699, %v698
    %v722 = vpack.c.b16 %v701, %v700
    %v723 = vpack.c.b16 %v703, %v702
    %v724 = vpack.c.b16 %v705, %v704
    %v725 = vpack.c.b16 %v707, %v706
    %v726 = vpack.c.b16 %v709, %v708
    %v727 = vpack.c.b16 %v711, %v710
    %744 = vmatpush.bf16.msra.mxu0 %v719
    %745 = vmatpush.bf16.msra.mxu0 %v718
    %746 = vmatpush.bf16.msra.mxu0 %v717
    %747 = vmatpush.bf16.msra.mxu0 %v716
    %748 = vmatpush.bf16.msra.mxu0 %v715
    %749 = vmatpush.bf16.msra.mxu0 %v714
    %750 = vmatpush.bf16.msra.mxu0 %v713
    %751 = vmatpush.bf16.msra.mxu0 %v712
    %752 = vmatmul.bf16.gmra.mxu0 %v608
    %v753 = vpop.f32.mrf.mxu0
    %v754 = vadd.f32 %v646, %v753
    %v755 = vpop.f32.mrf.mxu0
    %v756 = vadd.f32 %v646, %v755
    %757 = vmatmul.bf16.gmra.mxu0 %v610
    %v758 = vpop.f32.mrf.mxu0
    %v759 = vadd.f32 %v646, %v758
    %v760 = vpop.f32.mrf.mxu0
    %v761 = vadd.f32 %v646, %v760
    %762 = vdwg.mxu0
    %763 = vmatpush.bf16.msra.mxu0 %v727
    %764 = vmatpush.bf16.msra.mxu0 %v726
    %765 = vmatpush.bf16.msra.mxu0 %v725
    %766 = vmatpush.bf16.msra.mxu0 %v724
    %767 = vmatpush.bf16.msra.mxu0 %v723
    %768 = vmatpush.bf16.msra.mxu0 %v722
    %769 = vmatpush.bf16.msra.mxu0 %v721
    %770 = vmatpush.bf16.msra.mxu0 %v720
    %771 = vmatmul.bf16.gmra.mxu0 %v609
    %v772 = vpop.f32.mrf.mxu0
    %v773 = vadd.f32 %v754, %v772
    %v774 = vpop.f32.mrf.mxu0
    %v775 = vadd.f32 %v756, %v774
    %776 = vmatmul.bf16.gmra.mxu0 %v611
    %v777 = vpop.f32.mrf.mxu0
    %v778 = vadd.f32 %v759, %v777
    %v779 = vpop.f32.mrf.mxu0
    %v780 = vadd.f32 %v761, %v779
    %781 = vdwg.mxu0
    %v782 = vmax.f32 %v773, 0.0
    %v783 = vmax.f32 %v775, 0.0
    %v784 = vmax.f32 %v778, 0.0
    %v785 = vmax.f32 %v780, 0.0
    %v786 = vpack.c.bf16 %v783, %v782
    %v787 = vpack.c.bf16 %v785, %v784
    %v788 = vlaneseq
    %v789 = vand.u32 %v788, 127
    %v790 = vlaneseq
    %v791 = vshrl.u32 %v790, 7
    %v792 = vmul.u32 %v791, 4
    %vm793 = vcmp.eq.s32.totalorder %v789, %v792
    %v794 = vsel %vm793, 1, 0
    %v795 = vcvt.s32.f32 %v794
    %v796 = vpack.c.bf16 %v795, %v795
    %vm797 = vcmask 261120
    %v799 = vsel %vm797, %v796, 0
    %801 = vmatpush.bf16.msra.mxu0 0
    %802 = vmatpush.bf16.msra.mxu0 0
    %803 = vmatpush.bf16.msra.mxu0 0
    %804 = vmatpush.bf16.msra.mxu0 0
    %805 = vmatpush.bf16.msra.mxu0 0
    %806 = vmatpush.bf16.msra.mxu0 0
    %807 = vmatpush.bf16.msra.mxu0 %v787
    %808 = vmatpush.bf16.msra.mxu0 %v786
    %809 = vmatmul.bf16.gmra.mxu0 %v799
    %v810 = vpop.f32.mrf.mxu0
    %v811 = vadd.f32 0.0, %v810
    %v812 = vpop.f32.mrf.mxu0
    %813 = vdwg.mxu0
    %v814 = vadd.s32 %v792, 1
    %vm815 = vcmp.eq.s32.totalorder %v789, %v814
    %v816 = vsel %vm815, 1, 0
    %v817 = vcvt.s32.f32 %v816
    %v818 = vpack.c.bf16 %v817, %v817
    %v820 = vsel %vm797, %v818, 0
    %822 = vmatpush.bf16.msra.mxu0 0
    %823 = vmatpush.bf16.msra.mxu0 0
    %824 = vmatpush.bf16.msra.mxu0 0
    %825 = vmatpush.bf16.msra.mxu0 0
    %826 = vmatpush.bf16.msra.mxu0 0
    %827 = vmatpush.bf16.msra.mxu0 0
    %828 = vmatpush.bf16.msra.mxu0 %v787
    %829 = vmatpush.bf16.msra.mxu0 %v786
    %830 = vmatmul.bf16.gmra.mxu0 %v820
    %v831 = vpop.f32.mrf.mxu0
    %v832 = vadd.f32 0.0, %v831
    %v833 = vpop.f32.mrf.mxu0
    %834 = vdwg.mxu0
    %v835 = vadd.s32 %v792, 2
    %vm836 = vcmp.eq.s32.totalorder %v789, %v835
    %v837 = vsel %vm836, 1, 0
    %v838 = vcvt.s32.f32 %v837
    %v839 = vpack.c.bf16 %v838, %v838
    %v841 = vsel %vm797, %v839, 0
    %843 = vmatpush.bf16.msra.mxu0 0
    %844 = vmatpush.bf16.msra.mxu0 0
    %845 = vmatpush.bf16.msra.mxu0 0
    %846 = vmatpush.bf16.msra.mxu0 0
    %847 = vmatpush.bf16.msra.mxu0 0
    %848 = vmatpush.bf16.msra.mxu0 0
    %849 = vmatpush.bf16.msra.mxu0 %v787
    %850 = vmatpush.bf16.msra.mxu0 %v786
    %851 = vmatmul.bf16.gmra.mxu0 %v841
    %v852 = vpop.f32.mrf.mxu0
    %v853 = vadd.f32 0.0, %v852
    %v854 = vpop.f32.mrf.mxu0
    %855 = vdwg.mxu0
    %v856 = vadd.s32 %v792, 3
    %vm857 = vcmp.eq.s32.totalorder %v789, %v856
    %v858 = vsel %vm857, 1, 0
    %v859 = vcvt.s32.f32 %v858
    %v860 = vpack.c.bf16 %v859, %v859
    %v862 = vsel %vm797, %v860, 0
    %864 = vmatpush.bf16.msra.mxu0 0
    %865 = vmatpush.bf16.msra.mxu0 0
    %866 = vmatpush.bf16.msra.mxu0 0
    %867 = vmatpush.bf16.msra.mxu0 0
    %868 = vmatpush.bf16.msra.mxu0 0
    %869 = vmatpush.bf16.msra.mxu0 0
    %870 = vmatpush.bf16.msra.mxu0 %v787
    %871 = vmatpush.bf16.msra.mxu0 %v786
    %872 = vmatmul.bf16.gmra.mxu0 %v862
    %v873 = vpop.f32.mrf.mxu0
    %v874 = vadd.f32 0.0, %v873
    %v875 = vpop.f32.mrf.mxu0
    %876 = vdwg.mxu0
    %878 = vrot.lane.b32.xlu0 %v832, 32
    %v879 = vpop.permute.xlu0 %878
    %882 = vrot.lane.b32.xlu0 %v853, 64
    %v883 = vpop.permute.xlu0 %882
    %886 = vrot.lane.b32.xlu0 %v874, 96
    %v887 = vpop.permute.xlu0 %886
    %v889 = vsel %vm797, %v811, %v879
    %vm890 = vcmask 523264
    %v891 = vsel %vm890, %v889, %v883
    %vm892 = vcmask 785408
    %v893 = vsel %vm892, %v891, %v887
    %v894 = vpack.c.bf16 %v893, %v893
    %v895 = vld [vmem:[%s1] sm:$0xff]
    %896 = vset.pattern.permute.xlu0 0
    %897 = vperm.xlu0 %896, %v895
    %v898 = vpop.permute.xlu0 %897
    %vm899 = vcmp.eq.s32.totalorder %v789, %v898
    %v900 = vsel %vm899, 1, 0
    %v901 = vcvt.s32.f32 %v900
    %v902 = vpack.c.bf16 %v901, %v901
    %v903 = vld [vmem:[%s6] sm:$0xff]
    %v904 = vld [vmem:[%s6 + $0x8] sm:$0xff]
    %v905 = vld [vmem:[%s6 + $0x10] sm:$0xff]
    %v906 = vld [vmem:[%s6 + $0x18] sm:$0xff]
    %v907 = vld [vmem:[%s6 + $0x20] sm:$0xff]
    %v908 = vld [vmem:[%s6 + $0x28] sm:$0xff]
    %v909 = vld [vmem:[%s6 + $0x30] sm:$0xff]
    %v910 = vld [vmem:[%s6 + $0x38] sm:$0xff]
    %v911 = vld [vmem:[%s6 + $0x40] sm:$0xff]
    %v912 = vld [vmem:[%s6 + $0x48] sm:$0xff]
    %v913 = vld [vmem:[%s6 + $0x50] sm:$0xff]
    %v914 = vld [vmem:[%s6 + $0x58] sm:$0xff]
    %v915 = vld [vmem:[%s6 + $0x60] sm:$0xff]
    %v916 = vld [vmem:[%s6 + $0x68] sm:$0xff]
    %v917 = vld [vmem:[%s6 + $0x70] sm:$0xff]
    %v918 = vld [vmem:[%s6 + $0x78] sm:$0xff]
    %v919 = vld [vmem:[%s6 + $0x80] sm:$0xff]
    %v920 = vld [vmem:[%s6 + $0x88] sm:$0xff]
    %v921 = vld [vmem:[%s6 + $0x90] sm:$0xff]
    %v922 = vld [vmem:[%s6 + $0x98] sm:$0xff]
    %v923 = vld [vmem:[%s6 + $0xa0] sm:$0xff]
    %v924 = vld [vmem:[%s6 + $0xa8] sm:$0xff]
    %v925 = vld [vmem:[%s6 + $0xb0] sm:$0xff]
    %v926 = vld [vmem:[%s6 + $0xb8] sm:$0xff]
    %v927 = vld [vmem:[%s6 + $0xc0] sm:$0xff]
    %v928 = vld [vmem:[%s6 + $0xc8] sm:$0xff]
    %v929 = vld [vmem:[%s6 + $0xd0] sm:$0xff]
    %v930 = vld [vmem:[%s6 + $0xd8] sm:$0xff]
    %v931 = vld [vmem:[%s6 + $0xe0] sm:$0xff]
    %v932 = vld [vmem:[%s6 + $0xe8] sm:$0xff]
    %v933 = vld [vmem:[%s6 + $0xf0] sm:$0xff]
    %v934 = vld [vmem:[%s6 + $0xf8] sm:$0xff]
    %v935 = vld [vmem:[%s7] sm:$0xff]
    %v936 = vld [vmem:[%s7 + $0x8] sm:$0xff]
    %v939 = vunpack.c.l.b16 %v935
    %v940 = vunpack.c.h.b16 %v935
    %v941 = vunpack.c.l.b16 %v936
    %v942 = vunpack.c.h.b16 %v936
    %v943 = vpack.c.b16 %v939, %v939
    %v944 = vpack.c.b16 %v940, %v940
    %v945 = vpack.c.b16 %v941, %v941
    %v946 = vpack.c.b16 %v942, %v942
    %vm947 = vcmask 64512
    %v949 = vsel %vm947, %v902, 0
    %vm951 = vcmask 1043456
    %v953 = vsel %vm951, %v943, 0
    %v956 = vsel %vm951, %v944, 0
    %v959 = vsel %vm951, %v945, 0
    %v962 = vsel %vm951, %v946, 0
    %964 = vmatpush.bf16.msra.mxu0 0
    %965 = vmatpush.bf16.msra.mxu0 0
    %966 = vmatpush.bf16.msra.mxu0 0
    %967 = vmatpush.bf16.msra.mxu0 0
    %968 = vmatpush.bf16.msra.mxu0 0
    %969 = vmatpush.bf16.msra.mxu0 0
    %970 = vmatpush.bf16.msra.mxu0 0
    %971 = vmatpush.bf16.msra.mxu0 %v953
    %972 = vmatmul.bf16.gmra.mxu0 %v949
    %v973 = vpop.f32.mrf.mxu0
    %v974 = vadd.f32 0.0, %v973
    %v975 = vpop.f32.mrf.mxu0
    %976 = vdwg.mxu0
    %977 = vmatpush.bf16.msra.mxu0 0
    %978 = vmatpush.bf16.msra.mxu0 0
    %979 = vmatpush.bf16.msra.mxu0 0
    %980 = vmatpush.bf16.msra.mxu0 0
    %981 = vmatpush.bf16.msra.mxu0 0
    %982 = vmatpush.bf16.msra.mxu0 0
    %983 = vmatpush.bf16.msra.mxu0 0
    %984 = vmatpush.bf16.msra.mxu0 %v956
    %985 = vmatmul.bf16.gmra.mxu0 %v949
    %v986 = vpop.f32.mrf.mxu0
    %v987 = vadd.f32 0.0, %v986
    %v988 = vpop.f32.mrf.mxu0
    %989 = vdwg.mxu0
    %990 = vmatpush.bf16.msra.mxu0 0
    %991 = vmatpush.bf16.msra.mxu0 0
    %992 = vmatpush.bf16.msra.mxu0 0
    %993 = vmatpush.bf16.msra.mxu0 0
    %994 = vmatpush.bf16.msra.mxu0 0
    %995 = vmatpush.bf16.msra.mxu0 0
    %996 = vmatpush.bf16.msra.mxu0 0
    %997 = vmatpush.bf16.msra.mxu0 %v959
    %998 = vmatmul.bf16.gmra.mxu0 %v949
    %v999 = vpop.f32.mrf.mxu0
    %v1000 = vadd.f32 0.0, %v999
    %v1001 = vpop.f32.mrf.mxu0
    %1002 = vdwg.mxu0
    %1003 = vmatpush.bf16.msra.mxu0 0
    %1004 = vmatpush.bf16.msra.mxu0 0
    %1005 = vmatpush.bf16.msra.mxu0 0
    %1006 = vmatpush.bf16.msra.mxu0 0
    %1007 = vmatpush.bf16.msra.mxu0 0
    %1008 = vmatpush.bf16.msra.mxu0 0
    %1009 = vmatpush.bf16.msra.mxu0 0
    %1010 = vmatpush.bf16.msra.mxu0 %v962
    %1011 = vmatmul.bf16.gmra.mxu0 %v949
    %v1012 = vpop.f32.mrf.mxu0
    %v1013 = vadd.f32 0.0, %v1012
    %v1014 = vpop.f32.mrf.mxu0
    %1015 = vdwg.mxu0
    %v1048 = vunpack.c.l.b16 %v903
    %v1049 = vunpack.c.h.b16 %v903
    %v1050 = vunpack.c.l.b16 %v904
    %v1051 = vunpack.c.h.b16 %v904
    %v1052 = vunpack.c.l.b16 %v905
    %v1053 = vunpack.c.h.b16 %v905
    %v1054 = vunpack.c.l.b16 %v906
    %v1055 = vunpack.c.h.b16 %v906
    %v1056 = vunpack.c.l.b16 %v907
    %v1057 = vunpack.c.h.b16 %v907
    %v1058 = vunpack.c.l.b16 %v908
    %v1059 = vunpack.c.h.b16 %v908
    %v1060 = vunpack.c.l.b16 %v909
    %v1061 = vunpack.c.h.b16 %v909
    %v1062 = vunpack.c.l.b16 %v910
    %v1063 = vunpack.c.h.b16 %v910
    %v1064 = vunpack.c.l.b16 %v911
    %v1065 = vunpack.c.h.b16 %v911
    %v1066 = vunpack.c.l.b16 %v912
    %v1067 = vunpack.c.h.b16 %v912
    %v1068 = vunpack.c.l.b16 %v913
    %v1069 = vunpack.c.h.b16 %v913
    %v1070 = vunpack.c.l.b16 %v914
    %v1071 = vunpack.c.h.b16 %v914
    %v1072 = vunpack.c.l.b16 %v915
    %v1073 = vunpack.c.h.b16 %v915
    %v1074 = vunpack.c.l.b16 %v916
    %v1075 = vunpack.c.h.b16 %v916
    %v1076 = vunpack.c.l.b16 %v917
    %v1077 = vunpack.c.h.b16 %v917
    %v1078 = vunpack.c.l.b16 %v918
    %v1079 = vunpack.c.h.b16 %v918
    %v1080 = vunpack.c.l.b16 %v919
    %v1081 = vunpack.c.h.b16 %v919
    %v1082 = vunpack.c.l.b16 %v920
    %v1083 = vunpack.c.h.b16 %v920
    %v1084 = vunpack.c.l.b16 %v921
    %v1085 = vunpack.c.h.b16 %v921
    %v1086 = vunpack.c.l.b16 %v922
    %v1087 = vunpack.c.h.b16 %v922
    %v1088 = vunpack.c.l.b16 %v923
    %v1089 = vunpack.c.h.b16 %v923
    %v1090 = vunpack.c.l.b16 %v924
    %v1091 = vunpack.c.h.b16 %v924
    %v1092 = vunpack.c.l.b16 %v925
    %v1093 = vunpack.c.h.b16 %v925
    %v1094 = vunpack.c.l.b16 %v926
    %v1095 = vunpack.c.h.b16 %v926
    %v1096 = vunpack.c.l.b16 %v927
    %v1097 = vunpack.c.h.b16 %v927
    %v1098 = vunpack.c.l.b16 %v928
    %v1099 = vunpack.c.h.b16 %v928
    %v1100 = vunpack.c.l.b16 %v929
    %v1101 = vunpack.c.h.b16 %v929
    %v1102 = vunpack.c.l.b16 %v930
    %v1103 = vunpack.c.h.b16 %v930
    %v1104 = vunpack.c.l.b16 %v931
    %v1105 = vunpack.c.h.b16 %v931
    %v1106 = vunpack.c.l.b16 %v932
    %v1107 = vunpack.c.h.b16 %v932
    %v1108 = vunpack.c.l.b16 %v933
    %v1109 = vunpack.c.h.b16 %v933
    %v1110 = vunpack.c.l.b16 %v934
    %v1111 = vunpack.c.h.b16 %v934
    %v1112 = vpack.c.b16 %v1052, %v1048
    %v1113 = vpack.c.b16 %v1053, %v1049
    %v1114 = vpack.c.b16 %v1054, %v1050
    %v1115 = vpack.c.b16 %v1055, %v1051
    %v1116 = vpack.c.b16 %v1060, %v1056
    %v1117 = vpack.c.b16 %v1061, %v1057
    %v1118 = vpack.c.b16 %v1062, %v1058
    %v1119 = vpack.c.b16 %v1063, %v1059
    %v1120 = vpack.c.b16 %v1068, %v1064
    %v1121 = vpack.c.b16 %v1069, %v1065
    %v1122 = vpack.c.b16 %v1070, %v1066
    %v1123 = vpack.c.b16 %v1071, %v1067
    %v1124 = vpack.c.b16 %v1076, %v1072
    %v1125 = vpack.c.b16 %v1077, %v1073
    %v1126 = vpack.c.b16 %v1078, %v1074
    %v1127 = vpack.c.b16 %v1079, %v1075
    %v1128 = vpack.c.b16 %v1084, %v1080
    %v1129 = vpack.c.b16 %v1085, %v1081
    %v1130 = vpack.c.b16 %v1086, %v1082
    %v1131 = vpack.c.b16 %v1087, %v1083
    %v1132 = vpack.c.b16 %v1092, %v1088
    %v1133 = vpack.c.b16 %v1093, %v1089
    %v1134 = vpack.c.b16 %v1094, %v1090
    %v1135 = vpack.c.b16 %v1095, %v1091
    %v1136 = vpack.c.b16 %v1100, %v1096
    %v1137 = vpack.c.b16 %v1101, %v1097
    %v1138 = vpack.c.b16 %v1102, %v1098
    %v1139 = vpack.c.b16 %v1103, %v1099
    %v1140 = vpack.c.b16 %v1108, %v1104
    %v1141 = vpack.c.b16 %v1109, %v1105
    %v1142 = vpack.c.b16 %v1110, %v1106
    %v1143 = vpack.c.b16 %v1111, %v1107
    %1176 = vmatpush.bf16.msra.mxu0 %v1140
    %1177 = vmatpush.bf16.msra.mxu0 %v1136
    %1178 = vmatpush.bf16.msra.mxu0 %v1132
    %1179 = vmatpush.bf16.msra.mxu0 %v1128
    %1180 = vmatpush.bf16.msra.mxu0 %v1124
    %1181 = vmatpush.bf16.msra.mxu0 %v1120
    %1182 = vmatpush.bf16.msra.mxu0 %v1116
    %1183 = vmatpush.bf16.msra.mxu0 %v1112
    %1184 = vmatmul.bf16.gmra.mxu0 %v894
    %v1185 = vpop.f32.mrf.mxu0
    %v1186 = vadd.f32 %v974, %v1185
    %v1187 = vpop.f32.mrf.mxu0
    %1188 = vdwg.mxu0
    %1189 = vmatpush.bf16.msra.mxu0 %v1141
    %1190 = vmatpush.bf16.msra.mxu0 %v1137
    %1191 = vmatpush.bf16.msra.mxu0 %v1133
    %1192 = vmatpush.bf16.msra.mxu0 %v1129
    %1193 = vmatpush.bf16.msra.mxu0 %v1125
    %1194 = vmatpush.bf16.msra.mxu0 %v1121
    %1195 = vmatpush.bf16.msra.mxu0 %v1117
    %1196 = vmatpush.bf16.msra.mxu0 %v1113
    %1197 = vmatmul.bf16.gmra.mxu0 %v894
    %v1198 = vpop.f32.mrf.mxu0
    %v1199 = vadd.f32 %v987, %v1198
    %v1200 = vpop.f32.mrf.mxu0
    %1201 = vdwg.mxu0
    %1202 = vmatpush.bf16.msra.mxu0 %v1142
    %1203 = vmatpush.bf16.msra.mxu0 %v1138
    %1204 = vmatpush.bf16.msra.mxu0 %v1134
    %1205 = vmatpush.bf16.msra.mxu0 %v1130
    %1206 = vmatpush.bf16.msra.mxu0 %v1126
    %1207 = vmatpush.bf16.msra.mxu0 %v1122
    %1208 = vmatpush.bf16.msra.mxu0 %v1118
    %1209 = vmatpush.bf16.msra.mxu0 %v1114
    %1210 = vmatmul.bf16.gmra.mxu0 %v894
    %v1211 = vpop.f32.mrf.mxu0
    %v1212 = vadd.f32 %v1000, %v1211
    %v1213 = vpop.f32.mrf.mxu0
    %1214 = vdwg.mxu0
    %1215 = vmatpush.bf16.msra.mxu0 %v1143
    %1216 = vmatpush.bf16.msra.mxu0 %v1139
    %1217 = vmatpush.bf16.msra.mxu0 %v1135
    %1218 = vmatpush.bf16.msra.mxu0 %v1131
    %1219 = vmatpush.bf16.msra.mxu0 %v1127
    %1220 = vmatpush.bf16.msra.mxu0 %v1123
    %1221 = vmatpush.bf16.msra.mxu0 %v1119
    %1222 = vmatpush.bf16.msra.mxu0 %v1115
    %1223 = vmatmul.bf16.gmra.mxu0 %v894
    %v1224 = vpop.f32.mrf.mxu0
    %v1225 = vadd.f32 %v1013, %v1224
    %v1226 = vpop.f32.mrf.mxu0
    %1227 = vdwg.mxu0
    %v1228 = vld [vmem:[%s8] sm:$0xf]
    %v1230 = vperm.slane %v1228, 0
    %v1231 = vperm.slane %v1228, 1
    %v1232 = vperm.slane %v1228, 2
    %v1233 = vperm.slane %v1228, 3
    %v1238 = vadd.f32 %v1186, %v1230
    %v1239 = vadd.f32 %v1199, %v1231
    %v1240 = vadd.f32 %v1212, %v1232
    %v1241 = vadd.f32 %v1225, %v1233
    %v1242 = vtanh.pop %v1238
    %v1243 = vtanh.pop %v1239
    %v1244 = vtanh.pop %v1240
    %v1245 = vtanh.pop %v1241
    %v1246 = vpack.c.bf16 %v1242, %v1242
    %v1247 = vpack.c.bf16 %v1243, %v1243
    %v1248 = vpack.c.bf16 %v1244, %v1244
    %v1249 = vpack.c.bf16 %v1245, %v1245
    %v1250 = vld [vmem:[%s9] sm:$0xff]
    %v1251 = vld [vmem:[%s9 + $0x8] sm:$0xff]
    %v1252 = vld [vmem:[%s9 + $0x10] sm:$0xff]
    %v1253 = vld [vmem:[%s9 + $0x18] sm:$0xff]
    %v1254 = vld [vmem:[%s9 + $0x20] sm:$0xff]
    %v1255 = vld [vmem:[%s9 + $0x28] sm:$0xff]
    %v1256 = vld [vmem:[%s9 + $0x30] sm:$0xff]
    %v1257 = vld [vmem:[%s9 + $0x38] sm:$0xff]
    %v1258 = vld [vmem:[%s9 + $0x40] sm:$0xff]
    %v1259 = vld [vmem:[%s9 + $0x48] sm:$0xff]
    %v1260 = vld [vmem:[%s9 + $0x50] sm:$0xff]
    %v1261 = vld [vmem:[%s9 + $0x58] sm:$0xff]
    %v1262 = vld [vmem:[%s9 + $0x60] sm:$0xff]
    %v1263 = vld [vmem:[%s9 + $0x68] sm:$0xff]
    %v1264 = vld [vmem:[%s9 + $0x70] sm:$0xff]
    %v1265 = vld [vmem:[%s9 + $0x78] sm:$0xff]
    %v1266 = vld [vmem:[%s9 + $0x80] sm:$0xff]
    %v1267 = vld [vmem:[%s9 + $0x88] sm:$0xff]
    %v1268 = vld [vmem:[%s9 + $0x90] sm:$0xff]
    %v1269 = vld [vmem:[%s9 + $0x98] sm:$0xff]
    %v1270 = vld [vmem:[%s9 + $0xa0] sm:$0xff]
    %v1271 = vld [vmem:[%s9 + $0xa8] sm:$0xff]
    %v1272 = vld [vmem:[%s9 + $0xb0] sm:$0xff]
    %v1273 = vld [vmem:[%s9 + $0xb8] sm:$0xff]
    %v1274 = vld [vmem:[%s9 + $0xc0] sm:$0xff]
    %v1275 = vld [vmem:[%s9 + $0xc8] sm:$0xff]
    %v1276 = vld [vmem:[%s9 + $0xd0] sm:$0xff]
    %v1277 = vld [vmem:[%s9 + $0xd8] sm:$0xff]
    %v1278 = vld [vmem:[%s9 + $0xe0] sm:$0xff]
    %v1279 = vld [vmem:[%s9 + $0xe8] sm:$0xff]
    %v1280 = vld [vmem:[%s9 + $0xf0] sm:$0xff]
    %v1281 = vld [vmem:[%s9 + $0xf8] sm:$0xff]
    %v1282 = vld [vmem:[%s9 + $0x100] sm:$0xff]
    %v1283 = vld [vmem:[%s9 + $0x108] sm:$0xff]
    %v1284 = vld [vmem:[%s9 + $0x110] sm:$0xff]
    %v1285 = vld [vmem:[%s9 + $0x118] sm:$0xff]
    %v1286 = vld [vmem:[%s9 + $0x120] sm:$0xff]
    %v1287 = vld [vmem:[%s9 + $0x128] sm:$0xff]
    %v1288 = vld [vmem:[%s9 + $0x130] sm:$0xff]
    %v1289 = vld [vmem:[%s9 + $0x138] sm:$0xff]
    %v1290 = vld [vmem:[%s9 + $0x140] sm:$0xff]
    %v1291 = vld [vmem:[%s9 + $0x148] sm:$0xff]
    %v1292 = vld [vmem:[%s9 + $0x150] sm:$0xff]
    %v1293 = vld [vmem:[%s9 + $0x158] sm:$0xff]
    %v1294 = vld [vmem:[%s9 + $0x160] sm:$0xff]
    %v1295 = vld [vmem:[%s9 + $0x168] sm:$0xff]
    %v1296 = vld [vmem:[%s9 + $0x170] sm:$0xff]
    %v1297 = vld [vmem:[%s9 + $0x178] sm:$0xff]
    %v1298 = vld [vmem:[%s9 + $0x180] sm:$0xff]
    %v1299 = vld [vmem:[%s9 + $0x188] sm:$0xff]
    %v1300 = vld [vmem:[%s9 + $0x190] sm:$0xff]
    %v1301 = vld [vmem:[%s9 + $0x198] sm:$0xff]
    %v1302 = vld [vmem:[%s9 + $0x1a0] sm:$0xff]
    %v1303 = vld [vmem:[%s9 + $0x1a8] sm:$0xff]
    %v1304 = vld [vmem:[%s9 + $0x1b0] sm:$0xff]
    %v1305 = vld [vmem:[%s9 + $0x1b8] sm:$0xff]
    %v1306 = vld [vmem:[%s9 + $0x1c0] sm:$0xff]
    %v1307 = vld [vmem:[%s9 + $0x1c8] sm:$0xff]
    %v1308 = vld [vmem:[%s9 + $0x1d0] sm:$0xff]
    %v1309 = vld [vmem:[%s9 + $0x1d8] sm:$0xff]
    %v1310 = vld [vmem:[%s9 + $0x1e0] sm:$0xff]
    %v1311 = vld [vmem:[%s9 + $0x1e8] sm:$0xff]
    %v1312 = vld [vmem:[%s9 + $0x1f0] sm:$0xff]
    %v1313 = vld [vmem:[%s9 + $0x1f8] sm:$0xff]
    %v1314 = vld [vmem:[%s9 + $0x200] sm:$0xff]
    %v1315 = vld [vmem:[%s9 + $0x208] sm:$0xff]
    %v1316 = vld [vmem:[%s9 + $0x210] sm:$0xff]
    %v1317 = vld [vmem:[%s9 + $0x218] sm:$0xff]
    %v1318 = vld [vmem:[%s9 + $0x220] sm:$0xff]
    %v1319 = vld [vmem:[%s9 + $0x228] sm:$0xff]
    %v1320 = vld [vmem:[%s9 + $0x230] sm:$0xff]
    %v1321 = vld [vmem:[%s9 + $0x238] sm:$0xff]
    %v1322 = vld [vmem:[%s9 + $0x240] sm:$0xff]
    %v1323 = vld [vmem:[%s9 + $0x248] sm:$0xff]
    %v1324 = vld [vmem:[%s9 + $0x250] sm:$0xff]
    %v1325 = vld [vmem:[%s9 + $0x258] sm:$0xff]
    %v1326 = vld [vmem:[%s9 + $0x260] sm:$0xff]
    %v1327 = vld [vmem:[%s9 + $0x268] sm:$0xff]
    %v1328 = vld [vmem:[%s9 + $0x270] sm:$0xff]
    %v1329 = vld [vmem:[%s9 + $0x278] sm:$0xff]
    %v1330 = vld [vmem:[%s9 + $0x280] sm:$0xff]
    %v1331 = vld [vmem:[%s9 + $0x288] sm:$0xff]
    %v1332 = vld [vmem:[%s9 + $0x290] sm:$0xff]
    %v1333 = vld [vmem:[%s9 + $0x298] sm:$0xff]
    %v1334 = vld [vmem:[%s9 + $0x2a0] sm:$0xff]
    %v1335 = vld [vmem:[%s9 + $0x2a8] sm:$0xff]
    %v1336 = vld [vmem:[%s9 + $0x2b0] sm:$0xff]
    %v1337 = vld [vmem:[%s9 + $0x2b8] sm:$0xff]
    %v1338 = vld [vmem:[%s9 + $0x2c0] sm:$0xff]
    %v1339 = vld [vmem:[%s9 + $0x2c8] sm:$0xff]
    %v1340 = vld [vmem:[%s9 + $0x2d0] sm:$0xff]
    %v1341 = vld [vmem:[%s9 + $0x2d8] sm:$0xff]
    %v1342 = vld [vmem:[%s9 + $0x2e0] sm:$0xff]
    %v1343 = vld [vmem:[%s9 + $0x2e8] sm:$0xff]
    %v1344 = vld [vmem:[%s9 + $0x2f0] sm:$0xff]
    %v1345 = vld [vmem:[%s9 + $0x2f8] sm:$0xff]
    %v1346 = vld [vmem:[%s9 + $0x300] sm:$0xff]
    %v1347 = vld [vmem:[%s9 + $0x308] sm:$0xff]
    %v1348 = vld [vmem:[%s9 + $0x310] sm:$0xff]
    %v1349 = vld [vmem:[%s9 + $0x318] sm:$0xff]
    %v1350 = vld [vmem:[%s9 + $0x320] sm:$0xff]
    %v1351 = vld [vmem:[%s9 + $0x328] sm:$0xff]
    %v1352 = vld [vmem:[%s9 + $0x330] sm:$0xff]
    %v1353 = vld [vmem:[%s9 + $0x338] sm:$0xff]
    %v1354 = vld [vmem:[%s9 + $0x340] sm:$0xff]
    %v1355 = vld [vmem:[%s9 + $0x348] sm:$0xff]
    %v1356 = vld [vmem:[%s9 + $0x350] sm:$0xff]
    %v1357 = vld [vmem:[%s9 + $0x358] sm:$0xff]
    %v1358 = vld [vmem:[%s9 + $0x360] sm:$0xff]
    %v1359 = vld [vmem:[%s9 + $0x368] sm:$0xff]
    %v1360 = vld [vmem:[%s9 + $0x370] sm:$0xff]
    %v1361 = vld [vmem:[%s9 + $0x378] sm:$0xff]
    %v1362 = vld [vmem:[%s9 + $0x380] sm:$0xff]
    %v1363 = vld [vmem:[%s9 + $0x388] sm:$0xff]
    %v1364 = vld [vmem:[%s9 + $0x390] sm:$0xff]
    %v1365 = vld [vmem:[%s9 + $0x398] sm:$0xff]
    %v1366 = vld [vmem:[%s9 + $0x3a0] sm:$0xff]
    %v1367 = vld [vmem:[%s9 + $0x3a8] sm:$0xff]
    %v1368 = vld [vmem:[%s9 + $0x3b0] sm:$0xff]
    %v1369 = vld [vmem:[%s9 + $0x3b8] sm:$0xff]
    %v1370 = vld [vmem:[%s9 + $0x3c0] sm:$0xff]
    %v1371 = vld [vmem:[%s9 + $0x3c8] sm:$0xff]
    %v1372 = vld [vmem:[%s9 + $0x3d0] sm:$0xff]
    %v1373 = vld [vmem:[%s9 + $0x3d8] sm:$0xff]
    %v1374 = vld [vmem:[%s9 + $0x3e0] sm:$0xff]
    %v1375 = vld [vmem:[%s9 + $0x3e8] sm:$0xff]
    %v1376 = vld [vmem:[%s9 + $0x3f0] sm:$0xff]
    %v1377 = vld [vmem:[%s9 + $0x3f8] sm:$0xff]
    %v1378 = vld [vmem:[%s10] sm:$0xf]
    %v1380 = vperm.slane %v1378, 0
    %v1381 = vperm.slane %v1378, 1
    %v1382 = vperm.slane %v1378, 2
    %v1383 = vperm.slane %v1378, 3
    %v1516 = vunpack.c.l.b16 %v1250
    %v1517 = vunpack.c.h.b16 %v1250
    %v1518 = vunpack.c.l.b16 %v1251
    %v1519 = vunpack.c.h.b16 %v1251
    %v1520 = vunpack.c.l.b16 %v1252
    %v1521 = vunpack.c.h.b16 %v1252
    %v1522 = vunpack.c.l.b16 %v1253
    %v1523 = vunpack.c.h.b16 %v1253
    %v1524 = vunpack.c.l.b16 %v1254
    %v1525 = vunpack.c.h.b16 %v1254
    %v1526 = vunpack.c.l.b16 %v1255
    %v1527 = vunpack.c.h.b16 %v1255
    %v1528 = vunpack.c.l.b16 %v1256
    %v1529 = vunpack.c.h.b16 %v1256
    %v1530 = vunpack.c.l.b16 %v1257
    %v1531 = vunpack.c.h.b16 %v1257
    %v1532 = vunpack.c.l.b16 %v1258
    %v1533 = vunpack.c.h.b16 %v1258
    %v1534 = vunpack.c.l.b16 %v1259
    %v1535 = vunpack.c.h.b16 %v1259
    %v1536 = vunpack.c.l.b16 %v1260
    %v1537 = vunpack.c.h.b16 %v1260
    %v1538 = vunpack.c.l.b16 %v1261
    %v1539 = vunpack.c.h.b16 %v1261
    %v1540 = vunpack.c.l.b16 %v1262
    %v1541 = vunpack.c.h.b16 %v1262
    %v1542 = vunpack.c.l.b16 %v1263
    %v1543 = vunpack.c.h.b16 %v1263
    %v1544 = vunpack.c.l.b16 %v1264
    %v1545 = vunpack.c.h.b16 %v1264
    %v1546 = vunpack.c.l.b16 %v1265
    %v1547 = vunpack.c.h.b16 %v1265
    %v1548 = vunpack.c.l.b16 %v1266
    %v1549 = vunpack.c.h.b16 %v1266
    %v1550 = vunpack.c.l.b16 %v1267
    %v1551 = vunpack.c.h.b16 %v1267
    %v1552 = vunpack.c.l.b16 %v1268
    %v1553 = vunpack.c.h.b16 %v1268
    %v1554 = vunpack.c.l.b16 %v1269
    %v1555 = vunpack.c.h.b16 %v1269
    %v1556 = vunpack.c.l.b16 %v1270
    %v1557 = vunpack.c.h.b16 %v1270
    %v1558 = vunpack.c.l.b16 %v1271
    %v1559 = vunpack.c.h.b16 %v1271
    %v1560 = vunpack.c.l.b16 %v1272
    %v1561 = vunpack.c.h.b16 %v1272
    %v1562 = vunpack.c.l.b16 %v1273
    %v1563 = vunpack.c.h.b16 %v1273
    %v1564 = vunpack.c.l.b16 %v1274
    %v1565 = vunpack.c.h.b16 %v1274
    %v1566 = vunpack.c.l.b16 %v1275
    %v1567 = vunpack.c.h.b16 %v1275
    %v1568 = vunpack.c.l.b16 %v1276
    %v1569 = vunpack.c.h.b16 %v1276
    %v1570 = vunpack.c.l.b16 %v1277
    %v1571 = vunpack.c.h.b16 %v1277
    %v1572 = vunpack.c.l.b16 %v1278
    %v1573 = vunpack.c.h.b16 %v1278
    %v1574 = vunpack.c.l.b16 %v1279
    %v1575 = vunpack.c.h.b16 %v1279
    %v1576 = vunpack.c.l.b16 %v1280
    %v1577 = vunpack.c.h.b16 %v1280
    %v1578 = vunpack.c.l.b16 %v1281
    %v1579 = vunpack.c.h.b16 %v1281
    %v1580 = vunpack.c.l.b16 %v1282
    %v1581 = vunpack.c.h.b16 %v1282
    %v1582 = vunpack.c.l.b16 %v1283
    %v1583 = vunpack.c.h.b16 %v1283
    %v1584 = vunpack.c.l.b16 %v1284
    %v1585 = vunpack.c.h.b16 %v1284
    %v1586 = vunpack.c.l.b16 %v1285
    %v1587 = vunpack.c.h.b16 %v1285
    %v1588 = vunpack.c.l.b16 %v1286
    %v1589 = vunpack.c.h.b16 %v1286
    %v1590 = vunpack.c.l.b16 %v1287
    %v1591 = vunpack.c.h.b16 %v1287
    %v1592 = vunpack.c.l.b16 %v1288
    %v1593 = vunpack.c.h.b16 %v1288
    %v1594 = vunpack.c.l.b16 %v1289
    %v1595 = vunpack.c.h.b16 %v1289
    %v1596 = vunpack.c.l.b16 %v1290
    %v1597 = vunpack.c.h.b16 %v1290
    %v1598 = vunpack.c.l.b16 %v1291
    %v1599 = vunpack.c.h.b16 %v1291
    %v1600 = vunpack.c.l.b16 %v1292
    %v1601 = vunpack.c.h.b16 %v1292
    %v1602 = vunpack.c.l.b16 %v1293
    %v1603 = vunpack.c.h.b16 %v1293
    %v1604 = vunpack.c.l.b16 %v1294
    %v1605 = vunpack.c.h.b16 %v1294
    %v1606 = vunpack.c.l.b16 %v1295
    %v1607 = vunpack.c.h.b16 %v1295
    %v1608 = vunpack.c.l.b16 %v1296
    %v1609 = vunpack.c.h.b16 %v1296
    %v1610 = vunpack.c.l.b16 %v1297
    %v1611 = vunpack.c.h.b16 %v1297
    %v1612 = vunpack.c.l.b16 %v1298
    %v1613 = vunpack.c.h.b16 %v1298
    %v1614 = vunpack.c.l.b16 %v1299
    %v1615 = vunpack.c.h.b16 %v1299
    %v1616 = vunpack.c.l.b16 %v1300
    %v1617 = vunpack.c.h.b16 %v1300
    %v1618 = vunpack.c.l.b16 %v1301
    %v1619 = vunpack.c.h.b16 %v1301
    %v1620 = vunpack.c.l.b16 %v1302
    %v1621 = vunpack.c.h.b16 %v1302
    %v1622 = vunpack.c.l.b16 %v1303
    %v1623 = vunpack.c.h.b16 %v1303
    %v1624 = vunpack.c.l.b16 %v1304
    %v1625 = vunpack.c.h.b16 %v1304
    %v1626 = vunpack.c.l.b16 %v1305
    %v1627 = vunpack.c.h.b16 %v1305
    %v1628 = vunpack.c.l.b16 %v1306
    %v1629 = vunpack.c.h.b16 %v1306
    %v1630 = vunpack.c.l.b16 %v1307
    %v1631 = vunpack.c.h.b16 %v1307
    %v1632 = vunpack.c.l.b16 %v1308
    %v1633 = vunpack.c.h.b16 %v1308
    %v1634 = vunpack.c.l.b16 %v1309
    %v1635 = vunpack.c.h.b16 %v1309
    %v1636 = vunpack.c.l.b16 %v1310
    %v1637 = vunpack.c.h.b16 %v1310
    %v1638 = vunpack.c.l.b16 %v1311
    %v1639 = vunpack.c.h.b16 %v1311
    %v1640 = vunpack.c.l.b16 %v1312
    %v1641 = vunpack.c.h.b16 %v1312
    %v1642 = vunpack.c.l.b16 %v1313
    %v1643 = vunpack.c.h.b16 %v1313
    %v1644 = vunpack.c.l.b16 %v1314
    %v1645 = vunpack.c.h.b16 %v1314
    %v1646 = vunpack.c.l.b16 %v1315
    %v1647 = vunpack.c.h.b16 %v1315
    %v1648 = vunpack.c.l.b16 %v1316
    %v1649 = vunpack.c.h.b16 %v1316
    %v1650 = vunpack.c.l.b16 %v1317
    %v1651 = vunpack.c.h.b16 %v1317
    %v1652 = vunpack.c.l.b16 %v1318
    %v1653 = vunpack.c.h.b16 %v1318
    %v1654 = vunpack.c.l.b16 %v1319
    %v1655 = vunpack.c.h.b16 %v1319
    %v1656 = vunpack.c.l.b16 %v1320
    %v1657 = vunpack.c.h.b16 %v1320
    %v1658 = vunpack.c.l.b16 %v1321
    %v1659 = vunpack.c.h.b16 %v1321
    %v1660 = vunpack.c.l.b16 %v1322
    %v1661 = vunpack.c.h.b16 %v1322
    %v1662 = vunpack.c.l.b16 %v1323
    %v1663 = vunpack.c.h.b16 %v1323
    %v1664 = vunpack.c.l.b16 %v1324
    %v1665 = vunpack.c.h.b16 %v1324
    %v1666 = vunpack.c.l.b16 %v1325
    %v1667 = vunpack.c.h.b16 %v1325
    %v1668 = vunpack.c.l.b16 %v1326
    %v1669 = vunpack.c.h.b16 %v1326
    %v1670 = vunpack.c.l.b16 %v1327
    %v1671 = vunpack.c.h.b16 %v1327
    %v1672 = vunpack.c.l.b16 %v1328
    %v1673 = vunpack.c.h.b16 %v1328
    %v1674 = vunpack.c.l.b16 %v1329
    %v1675 = vunpack.c.h.b16 %v1329
    %v1676 = vunpack.c.l.b16 %v1330
    %v1677 = vunpack.c.h.b16 %v1330
    %v1678 = vunpack.c.l.b16 %v1331
    %v1679 = vunpack.c.h.b16 %v1331
    %v1680 = vunpack.c.l.b16 %v1332
    %v1681 = vunpack.c.h.b16 %v1332
    %v1682 = vunpack.c.l.b16 %v1333
    %v1683 = vunpack.c.h.b16 %v1333
    %v1684 = vunpack.c.l.b16 %v1334
    %v1685 = vunpack.c.h.b16 %v1334
    %v1686 = vunpack.c.l.b16 %v1335
    %v1687 = vunpack.c.h.b16 %v1335
    %v1688 = vunpack.c.l.b16 %v1336
    %v1689 = vunpack.c.h.b16 %v1336
    %v1690 = vunpack.c.l.b16 %v1337
    %v1691 = vunpack.c.h.b16 %v1337
    %v1692 = vunpack.c.l.b16 %v1338
    %v1693 = vunpack.c.h.b16 %v1338
    %v1694 = vunpack.c.l.b16 %v1339
    %v1695 = vunpack.c.h.b16 %v1339
    %v1696 = vunpack.c.l.b16 %v1340
    %v1697 = vunpack.c.h.b16 %v1340
    %v1698 = vunpack.c.l.b16 %v1341
    %v1699 = vunpack.c.h.b16 %v1341
    %v1700 = vunpack.c.l.b16 %v1342
    %v1701 = vunpack.c.h.b16 %v1342
    %v1702 = vunpack.c.l.b16 %v1343
    %v1703 = vunpack.c.h.b16 %v1343
    %v1704 = vunpack.c.l.b16 %v1344
    %v1705 = vunpack.c.h.b16 %v1344
    %v1706 = vunpack.c.l.b16 %v1345
    %v1707 = vunpack.c.h.b16 %v1345
    %v1708 = vunpack.c.l.b16 %v1346
    %v1709 = vunpack.c.h.b16 %v1346
    %v1710 = vunpack.c.l.b16 %v1347
    %v1711 = vunpack.c.h.b16 %v1347
    %v1712 = vunpack.c.l.b16 %v1348
    %v1713 = vunpack.c.h.b16 %v1348
    %v1714 = vunpack.c.l.b16 %v1349
    %v1715 = vunpack.c.h.b16 %v1349
    %v1716 = vunpack.c.l.b16 %v1350
    %v1717 = vunpack.c.h.b16 %v1350
    %v1718 = vunpack.c.l.b16 %v1351
    %v1719 = vunpack.c.h.b16 %v1351
    %v1720 = vunpack.c.l.b16 %v1352
    %v1721 = vunpack.c.h.b16 %v1352
    %v1722 = vunpack.c.l.b16 %v1353
    %v1723 = vunpack.c.h.b16 %v1353
    %v1724 = vunpack.c.l.b16 %v1354
    %v1725 = vunpack.c.h.b16 %v1354
    %v1726 = vunpack.c.l.b16 %v1355
    %v1727 = vunpack.c.h.b16 %v1355
    %v1728 = vunpack.c.l.b16 %v1356
    %v1729 = vunpack.c.h.b16 %v1356
    %v1730 = vunpack.c.l.b16 %v1357
    %v1731 = vunpack.c.h.b16 %v1357
    %v1732 = vunpack.c.l.b16 %v1358
    %v1733 = vunpack.c.h.b16 %v1358
    %v1734 = vunpack.c.l.b16 %v1359
    %v1735 = vunpack.c.h.b16 %v1359
    %v1736 = vunpack.c.l.b16 %v1360
    %v1737 = vunpack.c.h.b16 %v1360
    %v1738 = vunpack.c.l.b16 %v1361
    %v1739 = vunpack.c.h.b16 %v1361
    %v1740 = vunpack.c.l.b16 %v1362
    %v1741 = vunpack.c.h.b16 %v1362
    %v1742 = vunpack.c.l.b16 %v1363
    %v1743 = vunpack.c.h.b16 %v1363
    %v1744 = vunpack.c.l.b16 %v1364
    %v1745 = vunpack.c.h.b16 %v1364
    %v1746 = vunpack.c.l.b16 %v1365
    %v1747 = vunpack.c.h.b16 %v1365
    %v1748 = vunpack.c.l.b16 %v1366
    %v1749 = vunpack.c.h.b16 %v1366
    %v1750 = vunpack.c.l.b16 %v1367
    %v1751 = vunpack.c.h.b16 %v1367
    %v1752 = vunpack.c.l.b16 %v1368
    %v1753 = vunpack.c.h.b16 %v1368
    %v1754 = vunpack.c.l.b16 %v1369
    %v1755 = vunpack.c.h.b16 %v1369
    %v1756 = vunpack.c.l.b16 %v1370
    %v1757 = vunpack.c.h.b16 %v1370
    %v1758 = vunpack.c.l.b16 %v1371
    %v1759 = vunpack.c.h.b16 %v1371
    %v1760 = vunpack.c.l.b16 %v1372
    %v1761 = vunpack.c.h.b16 %v1372
    %v1762 = vunpack.c.l.b16 %v1373
    %v1763 = vunpack.c.h.b16 %v1373
    %v1764 = vunpack.c.l.b16 %v1374
    %v1765 = vunpack.c.h.b16 %v1374
    %v1766 = vunpack.c.l.b16 %v1375
    %v1767 = vunpack.c.h.b16 %v1375
    %v1768 = vunpack.c.l.b16 %v1376
    %v1769 = vunpack.c.h.b16 %v1376
    %v1770 = vunpack.c.l.b16 %v1377
    %v1771 = vunpack.c.h.b16 %v1377
    %v1772 = vpack.c.b16 %v1520, %v1516
    %v1773 = vpack.c.b16 %v1521, %v1517
    %v1774 = vpack.c.b16 %v1522, %v1518
    %v1775 = vpack.c.b16 %v1523, %v1519
    %v1776 = vpack.c.b16 %v1528, %v1524
    %v1777 = vpack.c.b16 %v1529, %v1525
    %v1778 = vpack.c.b16 %v1530, %v1526
    %v1779 = vpack.c.b16 %v1531, %v1527
    %v1780 = vpack.c.b16 %v1536, %v1532
    %v1781 = vpack.c.b16 %v1537, %v1533
    %v1782 = vpack.c.b16 %v1538, %v1534
    %v1783 = vpack.c.b16 %v1539, %v1535
    %v1784 = vpack.c.b16 %v1544, %v1540
    %v1785 = vpack.c.b16 %v1545, %v1541
    %v1786 = vpack.c.b16 %v1546, %v1542
    %v1787 = vpack.c.b16 %v1547, %v1543
    %v1788 = vpack.c.b16 %v1552, %v1548
    %v1789 = vpack.c.b16 %v1553, %v1549
    %v1790 = vpack.c.b16 %v1554, %v1550
    %v1791 = vpack.c.b16 %v1555, %v1551
    %v1792 = vpack.c.b16 %v1560, %v1556
    %v1793 = vpack.c.b16 %v1561, %v1557
    %v1794 = vpack.c.b16 %v1562, %v1558
    %v1795 = vpack.c.b16 %v1563, %v1559
    %v1796 = vpack.c.b16 %v1568, %v1564
    %v1797 = vpack.c.b16 %v1569, %v1565
    %v1798 = vpack.c.b16 %v1570, %v1566
    %v1799 = vpack.c.b16 %v1571, %v1567
    %v1800 = vpack.c.b16 %v1576, %v1572
    %v1801 = vpack.c.b16 %v1577, %v1573
    %v1802 = vpack.c.b16 %v1578, %v1574
    %v1803 = vpack.c.b16 %v1579, %v1575
    %v1804 = vpack.c.b16 %v1584, %v1580
    %v1805 = vpack.c.b16 %v1585, %v1581
    %v1806 = vpack.c.b16 %v1586, %v1582
    %v1807 = vpack.c.b16 %v1587, %v1583
    %v1808 = vpack.c.b16 %v1592, %v1588
    %v1809 = vpack.c.b16 %v1593, %v1589
    %v1810 = vpack.c.b16 %v1594, %v1590
    %v1811 = vpack.c.b16 %v1595, %v1591
    %v1812 = vpack.c.b16 %v1600, %v1596
    %v1813 = vpack.c.b16 %v1601, %v1597
    %v1814 = vpack.c.b16 %v1602, %v1598
    %v1815 = vpack.c.b16 %v1603, %v1599
    %v1816 = vpack.c.b16 %v1608, %v1604
    %v1817 = vpack.c.b16 %v1609, %v1605
    %v1818 = vpack.c.b16 %v1610, %v1606
    %v1819 = vpack.c.b16 %v1611, %v1607
    %v1820 = vpack.c.b16 %v1616, %v1612
    %v1821 = vpack.c.b16 %v1617, %v1613
    %v1822 = vpack.c.b16 %v1618, %v1614
    %v1823 = vpack.c.b16 %v1619, %v1615
    %v1824 = vpack.c.b16 %v1624, %v1620
    %v1825 = vpack.c.b16 %v1625, %v1621
    %v1826 = vpack.c.b16 %v1626, %v1622
    %v1827 = vpack.c.b16 %v1627, %v1623
    %v1828 = vpack.c.b16 %v1632, %v1628
    %v1829 = vpack.c.b16 %v1633, %v1629
    %v1830 = vpack.c.b16 %v1634, %v1630
    %v1831 = vpack.c.b16 %v1635, %v1631
    %v1832 = vpack.c.b16 %v1640, %v1636
    %v1833 = vpack.c.b16 %v1641, %v1637
    %v1834 = vpack.c.b16 %v1642, %v1638
    %v1835 = vpack.c.b16 %v1643, %v1639
    %v1836 = vpack.c.b16 %v1648, %v1644
    %v1837 = vpack.c.b16 %v1649, %v1645
    %v1838 = vpack.c.b16 %v1650, %v1646
    %v1839 = vpack.c.b16 %v1651, %v1647
    %v1840 = vpack.c.b16 %v1656, %v1652
    %v1841 = vpack.c.b16 %v1657, %v1653
    %v1842 = vpack.c.b16 %v1658, %v1654
    %v1843 = vpack.c.b16 %v1659, %v1655
    %v1844 = vpack.c.b16 %v1664, %v1660
    %v1845 = vpack.c.b16 %v1665, %v1661
    %v1846 = vpack.c.b16 %v1666, %v1662
    %v1847 = vpack.c.b16 %v1667, %v1663
    %v1848 = vpack.c.b16 %v1672, %v1668
    %v1849 = vpack.c.b16 %v1673, %v1669
    %v1850 = vpack.c.b16 %v1674, %v1670
    %v1851 = vpack.c.b16 %v1675, %v1671
    %v1852 = vpack.c.b16 %v1680, %v1676
    %v1853 = vpack.c.b16 %v1681, %v1677
    %v1854 = vpack.c.b16 %v1682, %v1678
    %v1855 = vpack.c.b16 %v1683, %v1679
    %v1856 = vpack.c.b16 %v1688, %v1684
    %v1857 = vpack.c.b16 %v1689, %v1685
    %v1858 = vpack.c.b16 %v1690, %v1686
    %v1859 = vpack.c.b16 %v1691, %v1687
    %v1860 = vpack.c.b16 %v1696, %v1692
    %v1861 = vpack.c.b16 %v1697, %v1693
    %v1862 = vpack.c.b16 %v1698, %v1694
    %v1863 = vpack.c.b16 %v1699, %v1695
    %v1864 = vpack.c.b16 %v1704, %v1700
    %v1865 = vpack.c.b16 %v1705, %v1701
    %v1866 = vpack.c.b16 %v1706, %v1702
    %v1867 = vpack.c.b16 %v1707, %v1703
    %v1868 = vpack.c.b16 %v1712, %v1708
    %v1869 = vpack.c.b16 %v1713, %v1709
    %v1870 = vpack.c.b16 %v1714, %v1710
    %v1871 = vpack.c.b16 %v1715, %v1711
    %v1872 = vpack.c.b16 %v1720, %v1716
    %v1873 = vpack.c.b16 %v1721, %v1717
    %v1874 = vpack.c.b16 %v1722, %v1718
    %v1875 = vpack.c.b16 %v1723, %v1719
    %v1876 = vpack.c.b16 %v1728, %v1724
    %v1877 = vpack.c.b16 %v1729, %v1725
    %v1878 = vpack.c.b16 %v1730, %v1726
    %v1879 = vpack.c.b16 %v1731, %v1727
    %v1880 = vpack.c.b16 %v1736, %v1732
    %v1881 = vpack.c.b16 %v1737, %v1733
    %v1882 = vpack.c.b16 %v1738, %v1734
    %v1883 = vpack.c.b16 %v1739, %v1735
    %v1884 = vpack.c.b16 %v1744, %v1740
    %v1885 = vpack.c.b16 %v1745, %v1741
    %v1886 = vpack.c.b16 %v1746, %v1742
    %v1887 = vpack.c.b16 %v1747, %v1743
    %v1888 = vpack.c.b16 %v1752, %v1748
    %v1889 = vpack.c.b16 %v1753, %v1749
    %v1890 = vpack.c.b16 %v1754, %v1750
    %v1891 = vpack.c.b16 %v1755, %v1751
    %v1892 = vpack.c.b16 %v1760, %v1756
    %v1893 = vpack.c.b16 %v1761, %v1757
    %v1894 = vpack.c.b16 %v1762, %v1758
    %v1895 = vpack.c.b16 %v1763, %v1759
    %v1896 = vpack.c.b16 %v1768, %v1764
    %v1897 = vpack.c.b16 %v1769, %v1765
    %v1898 = vpack.c.b16 %v1770, %v1766
    %v1899 = vpack.c.b16 %v1771, %v1767
    %2028 = vmatpush.bf16.msra.mxu0 %v1800
    %2029 = vmatpush.bf16.msra.mxu0 %v1796
    %2030 = vmatpush.bf16.msra.mxu0 %v1792
    %2031 = vmatpush.bf16.msra.mxu0 %v1788
    %2032 = vmatpush.bf16.msra.mxu0 %v1784
    %2033 = vmatpush.bf16.msra.mxu0 %v1780
    %2034 = vmatpush.bf16.msra.mxu0 %v1776
    %2035 = vmatpush.bf16.msra.mxu0 %v1772
    %2036 = vmatmul.bf16.gmra.mxu0 %v1246
    %v2037 = vpop.f32.mrf.mxu0
    %v2038 = vadd.f32 %v1380, %v2037
    %v2039 = vpop.f32.mrf.mxu0
    %2040 = vdwg.mxu0
    %2041 = vmatpush.bf16.msra.mxu0 %v1832
    %2042 = vmatpush.bf16.msra.mxu0 %v1828
    %2043 = vmatpush.bf16.msra.mxu0 %v1824
    %2044 = vmatpush.bf16.msra.mxu0 %v1820
    %2045 = vmatpush.bf16.msra.mxu0 %v1816
    %2046 = vmatpush.bf16.msra.mxu0 %v1812
    %2047 = vmatpush.bf16.msra.mxu0 %v1808
    %2048 = vmatpush.bf16.msra.mxu0 %v1804
    %2049 = vmatmul.bf16.gmra.mxu0 %v1247
    %v2050 = vpop.f32.mrf.mxu0
    %v2051 = vadd.f32 %v2038, %v2050
    %v2052 = vpop.f32.mrf.mxu0
    %2053 = vdwg.mxu0
    %2054 = vmatpush.bf16.msra.mxu0 %v1864
    %2055 = vmatpush.bf16.msra.mxu0 %v1860
    %2056 = vmatpush.bf16.msra.mxu0 %v1856
    %2057 = vmatpush.bf16.msra.mxu0 %v1852
    %2058 = vmatpush.bf16.msra.mxu0 %v1848
    %2059 = vmatpush.bf16.msra.mxu0 %v1844
    %2060 = vmatpush.bf16.msra.mxu0 %v1840
    %2061 = vmatpush.bf16.msra.mxu0 %v1836
    %2062 = vmatmul.bf16.gmra.mxu0 %v1248
    %v2063 = vpop.f32.mrf.mxu0
    %v2064 = vadd.f32 %v2051, %v2063
    %v2065 = vpop.f32.mrf.mxu0
    %2066 = vdwg.mxu0
    %2067 = vmatpush.bf16.msra.mxu0 %v1896
    %2068 = vmatpush.bf16.msra.mxu0 %v1892
    %2069 = vmatpush.bf16.msra.mxu0 %v1888
    %2070 = vmatpush.bf16.msra.mxu0 %v1884
    %2071 = vmatpush.bf16.msra.mxu0 %v1880
    %2072 = vmatpush.bf16.msra.mxu0 %v1876
    %2073 = vmatpush.bf16.msra.mxu0 %v1872
    %2074 = vmatpush.bf16.msra.mxu0 %v1868
    %2075 = vmatmul.bf16.gmra.mxu0 %v1249
    %v2076 = vpop.f32.mrf.mxu0
    %v2077 = vadd.f32 %v2064, %v2076
    %v2078 = vpop.f32.mrf.mxu0
    %2079 = vdwg.mxu0
    %2080 = vmatpush.bf16.msra.mxu0 %v1801
    %2081 = vmatpush.bf16.msra.mxu0 %v1797
    %2082 = vmatpush.bf16.msra.mxu0 %v1793
    %2083 = vmatpush.bf16.msra.mxu0 %v1789
    %2084 = vmatpush.bf16.msra.mxu0 %v1785
    %2085 = vmatpush.bf16.msra.mxu0 %v1781
    %2086 = vmatpush.bf16.msra.mxu0 %v1777
    %2087 = vmatpush.bf16.msra.mxu0 %v1773
    %2088 = vmatmul.bf16.gmra.mxu0 %v1246
    %v2089 = vpop.f32.mrf.mxu0
    %v2090 = vadd.f32 %v1381, %v2089
    %v2091 = vpop.f32.mrf.mxu0
    %2092 = vdwg.mxu0
    %2093 = vmatpush.bf16.msra.mxu0 %v1833
    %2094 = vmatpush.bf16.msra.mxu0 %v1829
    %2095 = vmatpush.bf16.msra.mxu0 %v1825
    %2096 = vmatpush.bf16.msra.mxu0 %v1821
    %2097 = vmatpush.bf16.msra.mxu0 %v1817
    %2098 = vmatpush.bf16.msra.mxu0 %v1813
    %2099 = vmatpush.bf16.msra.mxu0 %v1809
    %2100 = vmatpush.bf16.msra.mxu0 %v1805
    %2101 = vmatmul.bf16.gmra.mxu0 %v1247
    %v2102 = vpop.f32.mrf.mxu0
    %v2103 = vadd.f32 %v2090, %v2102
    %v2104 = vpop.f32.mrf.mxu0
    %2105 = vdwg.mxu0
    %2106 = vmatpush.bf16.msra.mxu0 %v1865
    %2107 = vmatpush.bf16.msra.mxu0 %v1861
    %2108 = vmatpush.bf16.msra.mxu0 %v1857
    %2109 = vmatpush.bf16.msra.mxu0 %v1853
    %2110 = vmatpush.bf16.msra.mxu0 %v1849
    %2111 = vmatpush.bf16.msra.mxu0 %v1845
    %2112 = vmatpush.bf16.msra.mxu0 %v1841
    %2113 = vmatpush.bf16.msra.mxu0 %v1837
    %2114 = vmatmul.bf16.gmra.mxu0 %v1248
    %v2115 = vpop.f32.mrf.mxu0
    %v2116 = vadd.f32 %v2103, %v2115
    %v2117 = vpop.f32.mrf.mxu0
    %2118 = vdwg.mxu0
    %2119 = vmatpush.bf16.msra.mxu0 %v1897
    %2120 = vmatpush.bf16.msra.mxu0 %v1893
    %2121 = vmatpush.bf16.msra.mxu0 %v1889
    %2122 = vmatpush.bf16.msra.mxu0 %v1885
    %2123 = vmatpush.bf16.msra.mxu0 %v1881
    %2124 = vmatpush.bf16.msra.mxu0 %v1877
    %2125 = vmatpush.bf16.msra.mxu0 %v1873
    %2126 = vmatpush.bf16.msra.mxu0 %v1869
    %2127 = vmatmul.bf16.gmra.mxu0 %v1249
    %v2128 = vpop.f32.mrf.mxu0
    %v2129 = vadd.f32 %v2116, %v2128
    %v2130 = vpop.f32.mrf.mxu0
    %2131 = vdwg.mxu0
    %2132 = vmatpush.bf16.msra.mxu0 %v1802
    %2133 = vmatpush.bf16.msra.mxu0 %v1798
    %2134 = vmatpush.bf16.msra.mxu0 %v1794
    %2135 = vmatpush.bf16.msra.mxu0 %v1790
    %2136 = vmatpush.bf16.msra.mxu0 %v1786
    %2137 = vmatpush.bf16.msra.mxu0 %v1782
    %2138 = vmatpush.bf16.msra.mxu0 %v1778
    %2139 = vmatpush.bf16.msra.mxu0 %v1774
    %2140 = vmatmul.bf16.gmra.mxu0 %v1246
    %v2141 = vpop.f32.mrf.mxu0
    %v2142 = vadd.f32 %v1382, %v2141
    %v2143 = vpop.f32.mrf.mxu0
    %2144 = vdwg.mxu0
    %2145 = vmatpush.bf16.msra.mxu0 %v1834
    %2146 = vmatpush.bf16.msra.mxu0 %v1830
    %2147 = vmatpush.bf16.msra.mxu0 %v1826
    %2148 = vmatpush.bf16.msra.mxu0 %v1822
    %2149 = vmatpush.bf16.msra.mxu0 %v1818
    %2150 = vmatpush.bf16.msra.mxu0 %v1814
    %2151 = vmatpush.bf16.msra.mxu0 %v1810
    %2152 = vmatpush.bf16.msra.mxu0 %v1806
    %2153 = vmatmul.bf16.gmra.mxu0 %v1247
    %v2154 = vpop.f32.mrf.mxu0
    %v2155 = vadd.f32 %v2142, %v2154
    %v2156 = vpop.f32.mrf.mxu0
    %2157 = vdwg.mxu0
    %2158 = vmatpush.bf16.msra.mxu0 %v1866
    %2159 = vmatpush.bf16.msra.mxu0 %v1862
    %2160 = vmatpush.bf16.msra.mxu0 %v1858
    %2161 = vmatpush.bf16.msra.mxu0 %v1854
    %2162 = vmatpush.bf16.msra.mxu0 %v1850
    %2163 = vmatpush.bf16.msra.mxu0 %v1846
    %2164 = vmatpush.bf16.msra.mxu0 %v1842
    %2165 = vmatpush.bf16.msra.mxu0 %v1838
    %2166 = vmatmul.bf16.gmra.mxu0 %v1248
    %v2167 = vpop.f32.mrf.mxu0
    %v2168 = vadd.f32 %v2155, %v2167
    %v2169 = vpop.f32.mrf.mxu0
    %2170 = vdwg.mxu0
    %2171 = vmatpush.bf16.msra.mxu0 %v1898
    %2172 = vmatpush.bf16.msra.mxu0 %v1894
    %2173 = vmatpush.bf16.msra.mxu0 %v1890
    %2174 = vmatpush.bf16.msra.mxu0 %v1886
    %2175 = vmatpush.bf16.msra.mxu0 %v1882
    %2176 = vmatpush.bf16.msra.mxu0 %v1878
    %2177 = vmatpush.bf16.msra.mxu0 %v1874
    %2178 = vmatpush.bf16.msra.mxu0 %v1870
    %2179 = vmatmul.bf16.gmra.mxu0 %v1249
    %v2180 = vpop.f32.mrf.mxu0
    %v2181 = vadd.f32 %v2168, %v2180
    %v2182 = vpop.f32.mrf.mxu0
    %2183 = vdwg.mxu0
    %2184 = vmatpush.bf16.msra.mxu0 %v1803
    %2185 = vmatpush.bf16.msra.mxu0 %v1799
    %2186 = vmatpush.bf16.msra.mxu0 %v1795
    %2187 = vmatpush.bf16.msra.mxu0 %v1791
    %2188 = vmatpush.bf16.msra.mxu0 %v1787
    %2189 = vmatpush.bf16.msra.mxu0 %v1783
    %2190 = vmatpush.bf16.msra.mxu0 %v1779
    %2191 = vmatpush.bf16.msra.mxu0 %v1775
    %2192 = vmatmul.bf16.gmra.mxu0 %v1246
    %v2193 = vpop.f32.mrf.mxu0
    %v2194 = vadd.f32 %v1383, %v2193
    %v2195 = vpop.f32.mrf.mxu0
    %2196 = vdwg.mxu0
    %2197 = vmatpush.bf16.msra.mxu0 %v1835
    %2198 = vmatpush.bf16.msra.mxu0 %v1831
    %2199 = vmatpush.bf16.msra.mxu0 %v1827
    %2200 = vmatpush.bf16.msra.mxu0 %v1823
    %2201 = vmatpush.bf16.msra.mxu0 %v1819
    %2202 = vmatpush.bf16.msra.mxu0 %v1815
    %2203 = vmatpush.bf16.msra.mxu0 %v1811
    %2204 = vmatpush.bf16.msra.mxu0 %v1807
    %2205 = vmatmul.bf16.gmra.mxu0 %v1247
    %v2206 = vpop.f32.mrf.mxu0
    %v2207 = vadd.f32 %v2194, %v2206
    %v2208 = vpop.f32.mrf.mxu0
    %2209 = vdwg.mxu0
    %2210 = vmatpush.bf16.msra.mxu0 %v1867
    %2211 = vmatpush.bf16.msra.mxu0 %v1863
    %2212 = vmatpush.bf16.msra.mxu0 %v1859
    %2213 = vmatpush.bf16.msra.mxu0 %v1855
    %2214 = vmatpush.bf16.msra.mxu0 %v1851
    %2215 = vmatpush.bf16.msra.mxu0 %v1847
    %2216 = vmatpush.bf16.msra.mxu0 %v1843
    %2217 = vmatpush.bf16.msra.mxu0 %v1839
    %2218 = vmatmul.bf16.gmra.mxu0 %v1248
    %v2219 = vpop.f32.mrf.mxu0
    %v2220 = vadd.f32 %v2207, %v2219
    %v2221 = vpop.f32.mrf.mxu0
    %2222 = vdwg.mxu0
    %2223 = vmatpush.bf16.msra.mxu0 %v1899
    %2224 = vmatpush.bf16.msra.mxu0 %v1895
    %2225 = vmatpush.bf16.msra.mxu0 %v1891
    %2226 = vmatpush.bf16.msra.mxu0 %v1887
    %2227 = vmatpush.bf16.msra.mxu0 %v1883
    %2228 = vmatpush.bf16.msra.mxu0 %v1879
    %2229 = vmatpush.bf16.msra.mxu0 %v1875
    %2230 = vmatpush.bf16.msra.mxu0 %v1871
    %2231 = vmatmul.bf16.gmra.mxu0 %v1249
    %v2232 = vpop.f32.mrf.mxu0
    %v2233 = vadd.f32 %v2220, %v2232
    %v2234 = vpop.f32.mrf.mxu0
    %2235 = vdwg.mxu0
    %v2236 = vtanh.pop %v2077
    %v2237 = vtanh.pop %v2129
    %v2238 = vtanh.pop %v2181
    %v2239 = vtanh.pop %v2233
    %v2240 = vpack.c.bf16 %v2236, %v2236
    %v2241 = vpack.c.bf16 %v2237, %v2237
    %v2242 = vpack.c.bf16 %v2238, %v2238
    %v2243 = vpack.c.bf16 %v2239, %v2239
    %v2244 = vld [vmem:[#allocation2] sm:$0xff]
    %v2245 = vld [vmem:[#allocation2 + $0x8] sm:$0xff]
    %v2246 = vld [vmem:[#allocation2 + $0x10] sm:$0xff]
    %v2247 = vld [vmem:[#allocation2 + $0x18] sm:$0xff]
    %v2248 = vld [vmem:[#allocation2 + $0x20] sm:$0xff]
    %v2249 = vld [vmem:[#allocation2 + $0x28] sm:$0xff]
    %v2250 = vld [vmem:[#allocation2 + $0x30] sm:$0xff]
    %v2251 = vld [vmem:[#allocation2 + $0x38] sm:$0xff]
    %v2252 = vld [vmem:[#allocation2 + $0x40] sm:$0xff]
    %v2253 = vld [vmem:[#allocation2 + $0x48] sm:$0xff]
    %v2254 = vld [vmem:[#allocation2 + $0x50] sm:$0xff]
    %v2255 = vld [vmem:[#allocation2 + $0x58] sm:$0xff]
    %v2256 = vld [vmem:[#allocation2 + $0x60] sm:$0xff]
    %v2257 = vld [vmem:[#allocation2 + $0x68] sm:$0xff]
    %v2258 = vld [vmem:[#allocation2 + $0x70] sm:$0xff]
    %v2259 = vld [vmem:[#allocation2 + $0x78] sm:$0xff]
    %v2260 = vld [vmem:[#allocation2 + $0x80] sm:$0xff]
    %v2261 = vld [vmem:[#allocation2 + $0x88] sm:$0xff]
    %v2262 = vld [vmem:[#allocation2 + $0x90] sm:$0xff]
    %v2263 = vld [vmem:[#allocation2 + $0x98] sm:$0xff]
    %v2264 = vld [vmem:[#allocation2 + $0xa0] sm:$0xff]
    %v2265 = vld [vmem:[#allocation2 + $0xa8] sm:$0xff]
    %v2266 = vld [vmem:[#allocation2 + $0xb0] sm:$0xff]
    %v2267 = vld [vmem:[#allocation2 + $0xb8] sm:$0xff]
    %v2268 = vld [vmem:[#allocation2 + $0xc0] sm:$0xff]
    %v2269 = vld [vmem:[#allocation2 + $0xc8] sm:$0xff]
    %v2270 = vld [vmem:[#allocation2 + $0xd0] sm:$0xff]
    %v2271 = vld [vmem:[#allocation2 + $0xd8] sm:$0xff]
    %v2272 = vld [vmem:[#allocation2 + $0xe0] sm:$0xff]
    %v2273 = vld [vmem:[#allocation2 + $0xe8] sm:$0xff]
    %v2274 = vld [vmem:[#allocation2 + $0xf0] sm:$0xff]
    %v2275 = vld [vmem:[#allocation2 + $0xf8] sm:$0xff]
    %v2276 = vld [vmem:[#allocation2 + $0x100] sm:$0xff]
    %v2277 = vld [vmem:[#allocation2 + $0x108] sm:$0xff]
    %v2278 = vld [vmem:[#allocation2 + $0x110] sm:$0xff]
    %v2279 = vld [vmem:[#allocation2 + $0x118] sm:$0xff]
    %v2280 = vld [vmem:[#allocation2 + $0x120] sm:$0xff]
    %v2281 = vld [vmem:[#allocation2 + $0x128] sm:$0xff]
    %v2282 = vld [vmem:[#allocation2 + $0x130] sm:$0xff]
    %v2283 = vld [vmem:[#allocation2 + $0x138] sm:$0xff]
    %v2284 = vld [vmem:[#allocation2 + $0x140] sm:$0xff]
    %v2285 = vld [vmem:[#allocation2 + $0x148] sm:$0xff]
    %v2286 = vld [vmem:[#allocation2 + $0x150] sm:$0xff]
    %v2287 = vld [vmem:[#allocation2 + $0x158] sm:$0xff]
    %v2288 = vld [vmem:[#allocation2 + $0x160] sm:$0xff]
    %v2289 = vld [vmem:[#allocation2 + $0x168] sm:$0xff]
    %v2290 = vld [vmem:[#allocation2 + $0x170] sm:$0xff]
    %v2291 = vld [vmem:[#allocation2 + $0x178] sm:$0xff]
    %v2292 = vld [vmem:[#allocation2 + $0x180] sm:$0xff]
    %v2293 = vld [vmem:[#allocation2 + $0x188] sm:$0xff]
    %v2294 = vld [vmem:[#allocation2 + $0x190] sm:$0xff]
    %v2295 = vld [vmem:[#allocation2 + $0x198] sm:$0xff]
    %v2296 = vld [vmem:[#allocation2 + $0x1a0] sm:$0xff]
    %v2297 = vld [vmem:[#allocation2 + $0x1a8] sm:$0xff]
    %v2298 = vld [vmem:[#allocation2 + $0x1b0] sm:$0xff]
    %v2299 = vld [vmem:[#allocation2 + $0x1b8] sm:$0xff]
    %v2300 = vld [vmem:[#allocation2 + $0x1c0] sm:$0xff]
    %v2301 = vld [vmem:[#allocation2 + $0x1c8] sm:$0xff]
    %v2302 = vld [vmem:[#allocation2 + $0x1d0] sm:$0xff]
    %v2303 = vld [vmem:[#allocation2 + $0x1d8] sm:$0xff]
    %v2304 = vld [vmem:[#allocation2 + $0x1e0] sm:$0xff]
    %v2305 = vld [vmem:[#allocation2 + $0x1e8] sm:$0xff]
    %v2306 = vld [vmem:[#allocation2 + $0x1f0] sm:$0xff]
    %v2307 = vld [vmem:[#allocation2 + $0x1f8] sm:$0xff]
    %v2308 = vld [vmem:[#allocation2 + $0x200] sm:$0xff]
    %v2309 = vld [vmem:[#allocation2 + $0x208] sm:$0xff]
    %v2310 = vld [vmem:[#allocation2 + $0x210] sm:$0xff]
    %v2311 = vld [vmem:[#allocation2 + $0x218] sm:$0xff]
    %v2312 = vld [vmem:[#allocation2 + $0x220] sm:$0xff]
    %v2313 = vld [vmem:[#allocation2 + $0x228] sm:$0xff]
    %v2314 = vld [vmem:[#allocation2 + $0x230] sm:$0xff]
    %v2315 = vld [vmem:[#allocation2 + $0x238] sm:$0xff]
    %v2316 = vld [vmem:[#allocation2 + $0x240] sm:$0xff]
    %v2317 = vld [vmem:[#allocation2 + $0x248] sm:$0xff]
    %v2318 = vld [vmem:[#allocation2 + $0x250] sm:$0xff]
    %v2319 = vld [vmem:[#allocation2 + $0x258] sm:$0xff]
    %v2320 = vld [vmem:[#allocation2 + $0x260] sm:$0xff]
    %v2321 = vld [vmem:[#allocation2 + $0x268] sm:$0xff]
    %v2322 = vld [vmem:[#allocation2 + $0x270] sm:$0xff]
    %v2323 = vld [vmem:[#allocation2 + $0x278] sm:$0xff]
    %v2324 = vld [vmem:[#allocation2 + $0x280] sm:$0xff]
    %v2325 = vld [vmem:[#allocation2 + $0x288] sm:$0xff]
    %v2326 = vld [vmem:[#allocation2 + $0x290] sm:$0xff]
    %v2327 = vld [vmem:[#allocation2 + $0x298] sm:$0xff]
    %v2328 = vld [vmem:[#allocation2 + $0x2a0] sm:$0xff]
    %v2329 = vld [vmem:[#allocation2 + $0x2a8] sm:$0xff]
    %v2330 = vld [vmem:[#allocation2 + $0x2b0] sm:$0xff]
    %v2331 = vld [vmem:[#allocation2 + $0x2b8] sm:$0xff]
    %v2332 = vld [vmem:[#allocation2 + $0x2c0] sm:$0xff]
    %v2333 = vld [vmem:[#allocation2 + $0x2c8] sm:$0xff]
    %v2334 = vld [vmem:[#allocation2 + $0x2d0] sm:$0xff]
    %v2335 = vld [vmem:[#allocation2 + $0x2d8] sm:$0xff]
    %v2336 = vld [vmem:[#allocation2 + $0x2e0] sm:$0xff]
    %v2337 = vld [vmem:[#allocation2 + $0x2e8] sm:$0xff]
    %v2338 = vld [vmem:[#allocation2 + $0x2f0] sm:$0xff]
    %v2339 = vld [vmem:[#allocation2 + $0x2f8] sm:$0xff]
    %v2340 = vld [vmem:[#allocation2 + $0x300] sm:$0xff]
    %v2341 = vld [vmem:[#allocation2 + $0x308] sm:$0xff]
    %v2342 = vld [vmem:[#allocation2 + $0x310] sm:$0xff]
    %v2343 = vld [vmem:[#allocation2 + $0x318] sm:$0xff]
    %v2344 = vld [vmem:[#allocation2 + $0x320] sm:$0xff]
    %v2345 = vld [vmem:[#allocation2 + $0x328] sm:$0xff]
    %v2346 = vld [vmem:[#allocation2 + $0x330] sm:$0xff]
    %v2347 = vld [vmem:[#allocation2 + $0x338] sm:$0xff]
    %v2348 = vld [vmem:[#allocation2 + $0x340] sm:$0xff]
    %v2349 = vld [vmem:[#allocation2 + $0x348] sm:$0xff]
    %v2350 = vld [vmem:[#allocation2 + $0x350] sm:$0xff]
    %v2351 = vld [vmem:[#allocation2 + $0x358] sm:$0xff]
    %v2352 = vld [vmem:[#allocation2 + $0x360] sm:$0xff]
    %v2353 = vld [vmem:[#allocation2 + $0x368] sm:$0xff]
    %v2354 = vld [vmem:[#allocation2 + $0x370] sm:$0xff]
    %v2355 = vld [vmem:[#allocation2 + $0x378] sm:$0xff]
    %v2356 = vld [vmem:[#allocation2 + $0x380] sm:$0xff]
    %v2357 = vld [vmem:[#allocation2 + $0x388] sm:$0xff]
    %v2358 = vld [vmem:[#allocation2 + $0x390] sm:$0xff]
    %v2359 = vld [vmem:[#allocation2 + $0x398] sm:$0xff]
    %v2360 = vld [vmem:[#allocation2 + $0x3a0] sm:$0xff]
    %v2361 = vld [vmem:[#allocation2 + $0x3a8] sm:$0xff]
    %v2362 = vld [vmem:[#allocation2 + $0x3b0] sm:$0xff]
    %v2363 = vld [vmem:[#allocation2 + $0x3b8] sm:$0xff]
    %v2364 = vld [vmem:[#allocation2 + $0x3c0] sm:$0xff]
    %v2365 = vld [vmem:[#allocation2 + $0x3c8] sm:$0xff]
    %v2366 = vld [vmem:[#allocation2 + $0x3d0] sm:$0xff]
    %v2367 = vld [vmem:[#allocation2 + $0x3d8] sm:$0xff]
    %v2368 = vld [vmem:[#allocation2 + $0x3e0] sm:$0xff]
    %v2369 = vld [vmem:[#allocation2 + $0x3e8] sm:$0xff]
    %v2370 = vld [vmem:[#allocation2 + $0x3f0] sm:$0xff]
    %v2371 = vld [vmem:[#allocation2 + $0x3f8] sm:$0xff]
    %v2372 = vld [vmem:[%s12] sm:$0xf]
    %v2374 = vperm.slane %v2372, 0
    %v2375 = vperm.slane %v2372, 1
    %v2376 = vperm.slane %v2372, 2
    %v2377 = vperm.slane %v2372, 3
    %v2510 = vunpack.c.l.b16 %v2244
    %v2511 = vunpack.c.h.b16 %v2244
    %v2512 = vunpack.c.l.b16 %v2245
    %v2513 = vunpack.c.h.b16 %v2245
    %v2514 = vunpack.c.l.b16 %v2246
    %v2515 = vunpack.c.h.b16 %v2246
    %v2516 = vunpack.c.l.b16 %v2247
    %v2517 = vunpack.c.h.b16 %v2247
    %v2518 = vunpack.c.l.b16 %v2248
    %v2519 = vunpack.c.h.b16 %v2248
    %v2520 = vunpack.c.l.b16 %v2249
    %v2521 = vunpack.c.h.b16 %v2249
    %v2522 = vunpack.c.l.b16 %v2250
    %v2523 = vunpack.c.h.b16 %v2250
    %v2524 = vunpack.c.l.b16 %v2251
    %v2525 = vunpack.c.h.b16 %v2251
    %v2526 = vunpack.c.l.b16 %v2252
    %v2527 = vunpack.c.h.b16 %v2252
    %v2528 = vunpack.c.l.b16 %v2253
    %v2529 = vunpack.c.h.b16 %v2253
    %v2530 = vunpack.c.l.b16 %v2254
    %v2531 = vunpack.c.h.b16 %v2254
    %v2532 = vunpack.c.l.b16 %v2255
    %v2533 = vunpack.c.h.b16 %v2255
    %v2534 = vunpack.c.l.b16 %v2256
    %v2535 = vunpack.c.h.b16 %v2256
    %v2536 = vunpack.c.l.b16 %v2257
    %v2537 = vunpack.c.h.b16 %v2257
    %v2538 = vunpack.c.l.b16 %v2258
    %v2539 = vunpack.c.h.b16 %v2258
    %v2540 = vunpack.c.l.b16 %v2259
    %v2541 = vunpack.c.h.b16 %v2259
    %v2542 = vunpack.c.l.b16 %v2260
    %v2543 = vunpack.c.h.b16 %v2260
    %v2544 = vunpack.c.l.b16 %v2261
    %v2545 = vunpack.c.h.b16 %v2261
    %v2546 = vunpack.c.l.b16 %v2262
    %v2547 = vunpack.c.h.b16 %v2262
    %v2548 = vunpack.c.l.b16 %v2263
    %v2549 = vunpack.c.h.b16 %v2263
    %v2550 = vunpack.c.l.b16 %v2264
    %v2551 = vunpack.c.h.b16 %v2264
    %v2552 = vunpack.c.l.b16 %v2265
    %v2553 = vunpack.c.h.b16 %v2265
    %v2554 = vunpack.c.l.b16 %v2266
    %v2555 = vunpack.c.h.b16 %v2266
    %v2556 = vunpack.c.l.b16 %v2267
    %v2557 = vunpack.c.h.b16 %v2267
    %v2558 = vunpack.c.l.b16 %v2268
    %v2559 = vunpack.c.h.b16 %v2268
    %v2560 = vunpack.c.l.b16 %v2269
    %v2561 = vunpack.c.h.b16 %v2269
    %v2562 = vunpack.c.l.b16 %v2270
    %v2563 = vunpack.c.h.b16 %v2270
    %v2564 = vunpack.c.l.b16 %v2271
    %v2565 = vunpack.c.h.b16 %v2271
    %v2566 = vunpack.c.l.b16 %v2272
    %v2567 = vunpack.c.h.b16 %v2272
    %v2568 = vunpack.c.l.b16 %v2273
    %v2569 = vunpack.c.h.b16 %v2273
    %v2570 = vunpack.c.l.b16 %v2274
    %v2571 = vunpack.c.h.b16 %v2274
    %v2572 = vunpack.c.l.b16 %v2275
    %v2573 = vunpack.c.h.b16 %v2275
    %v2574 = vunpack.c.l.b16 %v2276
    %v2575 = vunpack.c.h.b16 %v2276
    %v2576 = vunpack.c.l.b16 %v2277
    %v2577 = vunpack.c.h.b16 %v2277
    %v2578 = vunpack.c.l.b16 %v2278
    %v2579 = vunpack.c.h.b16 %v2278
    %v2580 = vunpack.c.l.b16 %v2279
    %v2581 = vunpack.c.h.b16 %v2279
    %v2582 = vunpack.c.l.b16 %v2280
    %v2583 = vunpack.c.h.b16 %v2280
    %v2584 = vunpack.c.l.b16 %v2281
    %v2585 = vunpack.c.h.b16 %v2281
    %v2586 = vunpack.c.l.b16 %v2282
    %v2587 = vunpack.c.h.b16 %v2282
    %v2588 = vunpack.c.l.b16 %v2283
    %v2589 = vunpack.c.h.b16 %v2283
    %v2590 = vunpack.c.l.b16 %v2284
    %v2591 = vunpack.c.h.b16 %v2284
    %v2592 = vunpack.c.l.b16 %v2285
    %v2593 = vunpack.c.h.b16 %v2285
    %v2594 = vunpack.c.l.b16 %v2286
    %v2595 = vunpack.c.h.b16 %v2286
    %v2596 = vunpack.c.l.b16 %v2287
    %v2597 = vunpack.c.h.b16 %v2287
    %v2598 = vunpack.c.l.b16 %v2288
    %v2599 = vunpack.c.h.b16 %v2288
    %v2600 = vunpack.c.l.b16 %v2289
    %v2601 = vunpack.c.h.b16 %v2289
    %v2602 = vunpack.c.l.b16 %v2290
    %v2603 = vunpack.c.h.b16 %v2290
    %v2604 = vunpack.c.l.b16 %v2291
    %v2605 = vunpack.c.h.b16 %v2291
    %v2606 = vunpack.c.l.b16 %v2292
    %v2607 = vunpack.c.h.b16 %v2292
    %v2608 = vunpack.c.l.b16 %v2293
    %v2609 = vunpack.c.h.b16 %v2293
    %v2610 = vunpack.c.l.b16 %v2294
    %v2611 = vunpack.c.h.b16 %v2294
    %v2612 = vunpack.c.l.b16 %v2295
    %v2613 = vunpack.c.h.b16 %v2295
    %v2614 = vunpack.c.l.b16 %v2296
    %v2615 = vunpack.c.h.b16 %v2296
    %v2616 = vunpack.c.l.b16 %v2297
    %v2617 = vunpack.c.h.b16 %v2297
    %v2618 = vunpack.c.l.b16 %v2298
    %v2619 = vunpack.c.h.b16 %v2298
    %v2620 = vunpack.c.l.b16 %v2299
    %v2621 = vunpack.c.h.b16 %v2299
    %v2622 = vunpack.c.l.b16 %v2300
    %v2623 = vunpack.c.h.b16 %v2300
    %v2624 = vunpack.c.l.b16 %v2301
    %v2625 = vunpack.c.h.b16 %v2301
    %v2626 = vunpack.c.l.b16 %v2302
    %v2627 = vunpack.c.h.b16 %v2302
    %v2628 = vunpack.c.l.b16 %v2303
    %v2629 = vunpack.c.h.b16 %v2303
    %v2630 = vunpack.c.l.b16 %v2304
    %v2631 = vunpack.c.h.b16 %v2304
    %v2632 = vunpack.c.l.b16 %v2305
    %v2633 = vunpack.c.h.b16 %v2305
    %v2634 = vunpack.c.l.b16 %v2306
    %v2635 = vunpack.c.h.b16 %v2306
    %v2636 = vunpack.c.l.b16 %v2307
    %v2637 = vunpack.c.h.b16 %v2307
    %v2638 = vunpack.c.l.b16 %v2308
    %v2639 = vunpack.c.h.b16 %v2308
    %v2640 = vunpack.c.l.b16 %v2309
    %v2641 = vunpack.c.h.b16 %v2309
    %v2642 = vunpack.c.l.b16 %v2310
    %v2643 = vunpack.c.h.b16 %v2310
    %v2644 = vunpack.c.l.b16 %v2311
    %v2645 = vunpack.c.h.b16 %v2311
    %v2646 = vunpack.c.l.b16 %v2312
    %v2647 = vunpack.c.h.b16 %v2312
    %v2648 = vunpack.c.l.b16 %v2313
    %v2649 = vunpack.c.h.b16 %v2313
    %v2650 = vunpack.c.l.b16 %v2314
    %v2651 = vunpack.c.h.b16 %v2314
    %v2652 = vunpack.c.l.b16 %v2315
    %v2653 = vunpack.c.h.b16 %v2315
    %v2654 = vunpack.c.l.b16 %v2316
    %v2655 = vunpack.c.h.b16 %v2316
    %v2656 = vunpack.c.l.b16 %v2317
    %v2657 = vunpack.c.h.b16 %v2317
    %v2658 = vunpack.c.l.b16 %v2318
    %v2659 = vunpack.c.h.b16 %v2318
    %v2660 = vunpack.c.l.b16 %v2319
    %v2661 = vunpack.c.h.b16 %v2319
    %v2662 = vunpack.c.l.b16 %v2320
    %v2663 = vunpack.c.h.b16 %v2320
    %v2664 = vunpack.c.l.b16 %v2321
    %v2665 = vunpack.c.h.b16 %v2321
    %v2666 = vunpack.c.l.b16 %v2322
    %v2667 = vunpack.c.h.b16 %v2322
    %v2668 = vunpack.c.l.b16 %v2323
    %v2669 = vunpack.c.h.b16 %v2323
    %v2670 = vunpack.c.l.b16 %v2324
    %v2671 = vunpack.c.h.b16 %v2324
    %v2672 = vunpack.c.l.b16 %v2325
    %v2673 = vunpack.c.h.b16 %v2325
    %v2674 = vunpack.c.l.b16 %v2326
    %v2675 = vunpack.c.h.b16 %v2326
    %v2676 = vunpack.c.l.b16 %v2327
    %v2677 = vunpack.c.h.b16 %v2327
    %v2678 = vunpack.c.l.b16 %v2328
    %v2679 = vunpack.c.h.b16 %v2328
    %v2680 = vunpack.c.l.b16 %v2329
    %v2681 = vunpack.c.h.b16 %v2329
    %v2682 = vunpack.c.l.b16 %v2330
    %v2683 = vunpack.c.h.b16 %v2330
    %v2684 = vunpack.c.l.b16 %v2331
    %v2685 = vunpack.c.h.b16 %v2331
    %v2686 = vunpack.c.l.b16 %v2332
    %v2687 = vunpack.c.h.b16 %v2332
    %v2688 = vunpack.c.l.b16 %v2333
    %v2689 = vunpack.c.h.b16 %v2333
    %v2690 = vunpack.c.l.b16 %v2334
    %v2691 = vunpack.c.h.b16 %v2334
    %v2692 = vunpack.c.l.b16 %v2335
    %v2693 = vunpack.c.h.b16 %v2335
    %v2694 = vunpack.c.l.b16 %v2336
    %v2695 = vunpack.c.h.b16 %v2336
    %v2696 = vunpack.c.l.b16 %v2337
    %v2697 = vunpack.c.h.b16 %v2337
    %v2698 = vunpack.c.l.b16 %v2338
    %v2699 = vunpack.c.h.b16 %v2338
    %v2700 = vunpack.c.l.b16 %v2339
    %v2701 = vunpack.c.h.b16 %v2339
    %v2702 = vunpack.c.l.b16 %v2340
    %v2703 = vunpack.c.h.b16 %v2340
    %v2704 = vunpack.c.l.b16 %v2341
    %v2705 = vunpack.c.h.b16 %v2341
    %v2706 = vunpack.c.l.b16 %v2342
    %v2707 = vunpack.c.h.b16 %v2342
    %v2708 = vunpack.c.l.b16 %v2343
    %v2709 = vunpack.c.h.b16 %v2343
    %v2710 = vunpack.c.l.b16 %v2344
    %v2711 = vunpack.c.h.b16 %v2344
    %v2712 = vunpack.c.l.b16 %v2345
    %v2713 = vunpack.c.h.b16 %v2345
    %v2714 = vunpack.c.l.b16 %v2346
    %v2715 = vunpack.c.h.b16 %v2346
    %v2716 = vunpack.c.l.b16 %v2347
    %v2717 = vunpack.c.h.b16 %v2347
    %v2718 = vunpack.c.l.b16 %v2348
    %v2719 = vunpack.c.h.b16 %v2348
    %v2720 = vunpack.c.l.b16 %v2349
    %v2721 = vunpack.c.h.b16 %v2349
    %v2722 = vunpack.c.l.b16 %v2350
    %v2723 = vunpack.c.h.b16 %v2350
    %v2724 = vunpack.c.l.b16 %v2351
    %v2725 = vunpack.c.h.b16 %v2351
    %v2726 = vunpack.c.l.b16 %v2352
    %v2727 = vunpack.c.h.b16 %v2352
    %v2728 = vunpack.c.l.b16 %v2353
    %v2729 = vunpack.c.h.b16 %v2353
    %v2730 = vunpack.c.l.b16 %v2354
    %v2731 = vunpack.c.h.b16 %v2354
    %v2732 = vunpack.c.l.b16 %v2355
    %v2733 = vunpack.c.h.b16 %v2355
    %v2734 = vunpack.c.l.b16 %v2356
    %v2735 = vunpack.c.h.b16 %v2356
    %v2736 = vunpack.c.l.b16 %v2357
    %v2737 = vunpack.c.h.b16 %v2357
    %v2738 = vunpack.c.l.b16 %v2358
    %v2739 = vunpack.c.h.b16 %v2358
    %v2740 = vunpack.c.l.b16 %v2359
    %v2741 = vunpack.c.h.b16 %v2359
    %v2742 = vunpack.c.l.b16 %v2360
    %v2743 = vunpack.c.h.b16 %v2360
    %v2744 = vunpack.c.l.b16 %v2361
    %v2745 = vunpack.c.h.b16 %v2361
    %v2746 = vunpack.c.l.b16 %v2362
    %v2747 = vunpack.c.h.b16 %v2362
    %v2748 = vunpack.c.l.b16 %v2363
    %v2749 = vunpack.c.h.b16 %v2363
    %v2750 = vunpack.c.l.b16 %v2364
    %v2751 = vunpack.c.h.b16 %v2364
    %v2752 = vunpack.c.l.b16 %v2365
    %v2753 = vunpack.c.h.b16 %v2365
    %v2754 = vunpack.c.l.b16 %v2366
    %v2755 = vunpack.c.h.b16 %v2366
    %v2756 = vunpack.c.l.b16 %v2367
    %v2757 = vunpack.c.h.b16 %v2367
    %v2758 = vunpack.c.l.b16 %v2368
    %v2759 = vunpack.c.h.b16 %v2368
    %v2760 = vunpack.c.l.b16 %v2369
    %v2761 = vunpack.c.h.b16 %v2369
    %v2762 = vunpack.c.l.b16 %v2370
    %v2763 = vunpack.c.h.b16 %v2370
    %v2764 = vunpack.c.l.b16 %v2371
    %v2765 = vunpack.c.h.b16 %v2371
    %v2766 = vpack.c.b16 %v2514, %v2510
    %v2767 = vpack.c.b16 %v2515, %v2511
    %v2768 = vpack.c.b16 %v2516, %v2512
    %v2769 = vpack.c.b16 %v2517, %v2513
    %v2770 = vpack.c.b16 %v2522, %v2518
    %v2771 = vpack.c.b16 %v2523, %v2519
    %v2772 = vpack.c.b16 %v2524, %v2520
    %v2773 = vpack.c.b16 %v2525, %v2521
    %v2774 = vpack.c.b16 %v2530, %v2526
    %v2775 = vpack.c.b16 %v2531, %v2527
    %v2776 = vpack.c.b16 %v2532, %v2528
    %v2777 = vpack.c.b16 %v2533, %v2529
    %v2778 = vpack.c.b16 %v2538, %v2534
    %v2779 = vpack.c.b16 %v2539, %v2535
    %v2780 = vpack.c.b16 %v2540, %v2536
    %v2781 = vpack.c.b16 %v2541, %v2537
    %v2782 = vpack.c.b16 %v2546, %v2542
    %v2783 = vpack.c.b16 %v2547, %v2543
    %v2784 = vpack.c.b16 %v2548, %v2544
    %v2785 = vpack.c.b16 %v2549, %v2545
    %v2786 = vpack.c.b16 %v2554, %v2550
    %v2787 = vpack.c.b16 %v2555, %v2551
    %v2788 = vpack.c.b16 %v2556, %v2552
    %v2789 = vpack.c.b16 %v2557, %v2553
    %v2790 = vpack.c.b16 %v2562, %v2558
    %v2791 = vpack.c.b16 %v2563, %v2559
    %v2792 = vpack.c.b16 %v2564, %v2560
    %v2793 = vpack.c.b16 %v2565, %v2561
    %v2794 = vpack.c.b16 %v2570, %v2566
    %v2795 = vpack.c.b16 %v2571, %v2567
    %v2796 = vpack.c.b16 %v2572, %v2568
    %v2797 = vpack.c.b16 %v2573, %v2569
    %v2798 = vpack.c.b16 %v2578, %v2574
    %v2799 = vpack.c.b16 %v2579, %v2575
    %v2800 = vpack.c.b16 %v2580, %v2576
    %v2801 = vpack.c.b16 %v2581, %v2577
    %v2802 = vpack.c.b16 %v2586, %v2582
    %v2803 = vpack.c.b16 %v2587, %v2583
    %v2804 = vpack.c.b16 %v2588, %v2584
    %v2805 = vpack.c.b16 %v2589, %v2585
    %v2806 = vpack.c.b16 %v2594, %v2590
    %v2807 = vpack.c.b16 %v2595, %v2591
    %v2808 = vpack.c.b16 %v2596, %v2592
    %v2809 = vpack.c.b16 %v2597, %v2593
    %v2810 = vpack.c.b16 %v2602, %v2598
    %v2811 = vpack.c.b16 %v2603, %v2599
    %v2812 = vpack.c.b16 %v2604, %v2600
    %v2813 = vpack.c.b16 %v2605, %v2601
    %v2814 = vpack.c.b16 %v2610, %v2606
    %v2815 = vpack.c.b16 %v2611, %v2607
    %v2816 = vpack.c.b16 %v2612, %v2608
    %v2817 = vpack.c.b16 %v2613, %v2609
    %v2818 = vpack.c.b16 %v2618, %v2614
    %v2819 = vpack.c.b16 %v2619, %v2615
    %v2820 = vpack.c.b16 %v2620, %v2616
    %v2821 = vpack.c.b16 %v2621, %v2617
    %v2822 = vpack.c.b16 %v2626, %v2622
    %v2823 = vpack.c.b16 %v2627, %v2623
    %v2824 = vpack.c.b16 %v2628, %v2624
    %v2825 = vpack.c.b16 %v2629, %v2625
    %v2826 = vpack.c.b16 %v2634, %v2630
    %v2827 = vpack.c.b16 %v2635, %v2631
    %v2828 = vpack.c.b16 %v2636, %v2632
    %v2829 = vpack.c.b16 %v2637, %v2633
    %v2830 = vpack.c.b16 %v2642, %v2638
    %v2831 = vpack.c.b16 %v2643, %v2639
    %v2832 = vpack.c.b16 %v2644, %v2640
    %v2833 = vpack.c.b16 %v2645, %v2641
    %v2834 = vpack.c.b16 %v2650, %v2646
    %v2835 = vpack.c.b16 %v2651, %v2647
    %v2836 = vpack.c.b16 %v2652, %v2648
    %v2837 = vpack.c.b16 %v2653, %v2649
    %v2838 = vpack.c.b16 %v2658, %v2654
    %v2839 = vpack.c.b16 %v2659, %v2655
    %v2840 = vpack.c.b16 %v2660, %v2656
    %v2841 = vpack.c.b16 %v2661, %v2657
    %v2842 = vpack.c.b16 %v2666, %v2662
    %v2843 = vpack.c.b16 %v2667, %v2663
    %v2844 = vpack.c.b16 %v2668, %v2664
    %v2845 = vpack.c.b16 %v2669, %v2665
    %v2846 = vpack.c.b16 %v2674, %v2670
    %v2847 = vpack.c.b16 %v2675, %v2671
    %v2848 = vpack.c.b16 %v2676, %v2672
    %v2849 = vpack.c.b16 %v2677, %v2673
    %v2850 = vpack.c.b16 %v2682, %v2678
    %v2851 = vpack.c.b16 %v2683, %v2679
    %v2852 = vpack.c.b16 %v2684, %v2680
    %v2853 = vpack.c.b16 %v2685, %v2681
    %v2854 = vpack.c.b16 %v2690, %v2686
    %v2855 = vpack.c.b16 %v2691, %v2687
    %v2856 = vpack.c.b16 %v2692, %v2688
    %v2857 = vpack.c.b16 %v2693, %v2689
    %v2858 = vpack.c.b16 %v2698, %v2694
    %v2859 = vpack.c.b16 %v2699, %v2695
    %v2860 = vpack.c.b16 %v2700, %v2696
    %v2861 = vpack.c.b16 %v2701, %v2697
    %v2862 = vpack.c.b16 %v2706, %v2702
    %v2863 = vpack.c.b16 %v2707, %v2703
    %v2864 = vpack.c.b16 %v2708, %v2704
    %v2865 = vpack.c.b16 %v2709, %v2705
    %v2866 = vpack.c.b16 %v2714, %v2710
    %v2867 = vpack.c.b16 %v2715, %v2711
    %v2868 = vpack.c.b16 %v2716, %v2712
    %v2869 = vpack.c.b16 %v2717, %v2713
    %v2870 = vpack.c.b16 %v2722, %v2718
    %v2871 = vpack.c.b16 %v2723, %v2719
    %v2872 = vpack.c.b16 %v2724, %v2720
    %v2873 = vpack.c.b16 %v2725, %v2721
    %v2874 = vpack.c.b16 %v2730, %v2726
    %v2875 = vpack.c.b16 %v2731, %v2727
    %v2876 = vpack.c.b16 %v2732, %v2728
    %v2877 = vpack.c.b16 %v2733, %v2729
    %v2878 = vpack.c.b16 %v2738, %v2734
    %v2879 = vpack.c.b16 %v2739, %v2735
    %v2880 = vpack.c.b16 %v2740, %v2736
    %v2881 = vpack.c.b16 %v2741, %v2737
    %v2882 = vpack.c.b16 %v2746, %v2742
    %v2883 = vpack.c.b16 %v2747, %v2743
    %v2884 = vpack.c.b16 %v2748, %v2744
    %v2885 = vpack.c.b16 %v2749, %v2745
    %v2886 = vpack.c.b16 %v2754, %v2750
    %v2887 = vpack.c.b16 %v2755, %v2751
    %v2888 = vpack.c.b16 %v2756, %v2752
    %v2889 = vpack.c.b16 %v2757, %v2753
    %v2890 = vpack.c.b16 %v2762, %v2758
    %v2891 = vpack.c.b16 %v2763, %v2759
    %v2892 = vpack.c.b16 %v2764, %v2760
    %v2893 = vpack.c.b16 %v2765, %v2761
    %3022 = vmatpush.bf16.msra.mxu0 %v2794
    %3023 = vmatpush.bf16.msra.mxu0 %v2790
    %3024 = vmatpush.bf16.msra.mxu0 %v2786
    %3025 = vmatpush.bf16.msra.mxu0 %v2782
    %3026 = vmatpush.bf16.msra.mxu0 %v2778
    %3027 = vmatpush.bf16.msra.mxu0 %v2774
    %3028 = vmatpush.bf16.msra.mxu0 %v2770
    %3029 = vmatpush.bf16.msra.mxu0 %v2766
    %3030 = vmatmul.bf16.gmra.mxu0 %v2240
    %v3031 = vpop.f32.mrf.mxu0
    %v3032 = vadd.f32 %v2374, %v3031
    %v3033 = vpop.f32.mrf.mxu0
    %3034 = vdwg.mxu0
    %3035 = vmatpush.bf16.msra.mxu0 %v2826
    %3036 = vmatpush.bf16.msra.mxu0 %v2822
    %3037 = vmatpush.bf16.msra.mxu0 %v2818
    %3038 = vmatpush.bf16.msra.mxu0 %v2814
    %3039 = vmatpush.bf16.msra.mxu0 %v2810
    %3040 = vmatpush.bf16.msra.mxu0 %v2806
    %3041 = vmatpush.bf16.msra.mxu0 %v2802
    %3042 = vmatpush.bf16.msra.mxu0 %v2798
    %3043 = vmatmul.bf16.gmra.mxu0 %v2241
    %v3044 = vpop.f32.mrf.mxu0
    %v3045 = vadd.f32 %v3032, %v3044
    %v3046 = vpop.f32.mrf.mxu0
    %3047 = vdwg.mxu0
    %3048 = vmatpush.bf16.msra.mxu0 %v2858
    %3049 = vmatpush.bf16.msra.mxu0 %v2854
    %3050 = vmatpush.bf16.msra.mxu0 %v2850
    %3051 = vmatpush.bf16.msra.mxu0 %v2846
    %3052 = vmatpush.bf16.msra.mxu0 %v2842
    %3053 = vmatpush.bf16.msra.mxu0 %v2838
    %3054 = vmatpush.bf16.msra.mxu0 %v2834
    %3055 = vmatpush.bf16.msra.mxu0 %v2830
    %3056 = vmatmul.bf16.gmra.mxu0 %v2242
    %v3057 = vpop.f32.mrf.mxu0
    %v3058 = vadd.f32 %v3045, %v3057
    %v3059 = vpop.f32.mrf.mxu0
    %3060 = vdwg.mxu0
    %3061 = vmatpush.bf16.msra.mxu0 %v2890
    %3062 = vmatpush.bf16.msra.mxu0 %v2886
    %3063 = vmatpush.bf16.msra.mxu0 %v2882
    %3064 = vmatpush.bf16.msra.mxu0 %v2878
    %3065 = vmatpush.bf16.msra.mxu0 %v2874
    %3066 = vmatpush.bf16.msra.mxu0 %v2870
    %3067 = vmatpush.bf16.msra.mxu0 %v2866
    %3068 = vmatpush.bf16.msra.mxu0 %v2862
    %3069 = vmatmul.bf16.gmra.mxu0 %v2243
    %v3070 = vpop.f32.mrf.mxu0
    %v3071 = vadd.f32 %v3058, %v3070
    %v3072 = vpop.f32.mrf.mxu0
    %3073 = vdwg.mxu0
    %3074 = vmatpush.bf16.msra.mxu0 %v2795
    %3075 = vmatpush.bf16.msra.mxu0 %v2791
    %3076 = vmatpush.bf16.msra.mxu0 %v2787
    %3077 = vmatpush.bf16.msra.mxu0 %v2783
    %3078 = vmatpush.bf16.msra.mxu0 %v2779
    %3079 = vmatpush.bf16.msra.mxu0 %v2775
    %3080 = vmatpush.bf16.msra.mxu0 %v2771
    %3081 = vmatpush.bf16.msra.mxu0 %v2767
    %3082 = vmatmul.bf16.gmra.mxu0 %v2240
    %v3083 = vpop.f32.mrf.mxu0
    %v3084 = vadd.f32 %v2375, %v3083
    %v3085 = vpop.f32.mrf.mxu0
    %3086 = vdwg.mxu0
    %3087 = vmatpush.bf16.msra.mxu0 %v2827
    %3088 = vmatpush.bf16.msra.mxu0 %v2823
    %3089 = vmatpush.bf16.msra.mxu0 %v2819
    %3090 = vmatpush.bf16.msra.mxu0 %v2815
    %3091 = vmatpush.bf16.msra.mxu0 %v2811
    %3092 = vmatpush.bf16.msra.mxu0 %v2807
    %3093 = vmatpush.bf16.msra.mxu0 %v2803
    %3094 = vmatpush.bf16.msra.mxu0 %v2799
    %3095 = vmatmul.bf16.gmra.mxu0 %v2241
    %v3096 = vpop.f32.mrf.mxu0
    %v3097 = vadd.f32 %v3084, %v3096
    %v3098 = vpop.f32.mrf.mxu0
    %3099 = vdwg.mxu0
    %3100 = vmatpush.bf16.msra.mxu0 %v2859
    %3101 = vmatpush.bf16.msra.mxu0 %v2855
    %3102 = vmatpush.bf16.msra.mxu0 %v2851
    %3103 = vmatpush.bf16.msra.mxu0 %v2847
    %3104 = vmatpush.bf16.msra.mxu0 %v2843
    %3105 = vmatpush.bf16.msra.mxu0 %v2839
    %3106 = vmatpush.bf16.msra.mxu0 %v2835
    %3107 = vmatpush.bf16.msra.mxu0 %v2831
    %3108 = vmatmul.bf16.gmra.mxu0 %v2242
    %v3109 = vpop.f32.mrf.mxu0
    %v3110 = vadd.f32 %v3097, %v3109
    %v3111 = vpop.f32.mrf.mxu0
    %3112 = vdwg.mxu0
    %3113 = vmatpush.bf16.msra.mxu0 %v2891
    %3114 = vmatpush.bf16.msra.mxu0 %v2887
    %3115 = vmatpush.bf16.msra.mxu0 %v2883
    %3116 = vmatpush.bf16.msra.mxu0 %v2879
    %3117 = vmatpush.bf16.msra.mxu0 %v2875
    %3118 = vmatpush.bf16.msra.mxu0 %v2871
    %3119 = vmatpush.bf16.msra.mxu0 %v2867
    %3120 = vmatpush.bf16.msra.mxu0 %v2863
    %3121 = vmatmul.bf16.gmra.mxu0 %v2243
    %v3122 = vpop.f32.mrf.mxu0
    %v3123 = vadd.f32 %v3110, %v3122
    %v3124 = vpop.f32.mrf.mxu0
    %3125 = vdwg.mxu0
    %3126 = vmatpush.bf16.msra.mxu0 %v2796
    %3127 = vmatpush.bf16.msra.mxu0 %v2792
    %3128 = vmatpush.bf16.msra.mxu0 %v2788
    %3129 = vmatpush.bf16.msra.mxu0 %v2784
    %3130 = vmatpush.bf16.msra.mxu0 %v2780
    %3131 = vmatpush.bf16.msra.mxu0 %v2776
    %3132 = vmatpush.bf16.msra.mxu0 %v2772
    %3133 = vmatpush.bf16.msra.mxu0 %v2768
    %3134 = vmatmul.bf16.gmra.mxu0 %v2240
    %v3135 = vpop.f32.mrf.mxu0
    %v3136 = vadd.f32 %v2376, %v3135
    %v3137 = vpop.f32.mrf.mxu0
    %3138 = vdwg.mxu0
    %3139 = vmatpush.bf16.msra.mxu0 %v2828
    %3140 = vmatpush.bf16.msra.mxu0 %v2824
    %3141 = vmatpush.bf16.msra.mxu0 %v2820
    %3142 = vmatpush.bf16.msra.mxu0 %v2816
    %3143 = vmatpush.bf16.msra.mxu0 %v2812
    %3144 = vmatpush.bf16.msra.mxu0 %v2808
    %3145 = vmatpush.bf16.msra.mxu0 %v2804
    %3146 = vmatpush.bf16.msra.mxu0 %v2800
    %3147 = vmatmul.bf16.gmra.mxu0 %v2241
    %v3148 = vpop.f32.mrf.mxu0
    %v3149 = vadd.f32 %v3136, %v3148
    %v3150 = vpop.f32.mrf.mxu0
    %3151 = vdwg.mxu0
    %3152 = vmatpush.bf16.msra.mxu0 %v2860
    %3153 = vmatpush.bf16.msra.mxu0 %v2856
    %3154 = vmatpush.bf16.msra.mxu0 %v2852
    %3155 = vmatpush.bf16.msra.mxu0 %v2848
    %3156 = vmatpush.bf16.msra.mxu0 %v2844
    %3157 = vmatpush.bf16.msra.mxu0 %v2840
    %3158 = vmatpush.bf16.msra.mxu0 %v2836
    %3159 = vmatpush.bf16.msra.mxu0 %v2832
    %3160 = vmatmul.bf16.gmra.mxu0 %v2242
    %v3161 = vpop.f32.mrf.mxu0
    %v3162 = vadd.f32 %v3149, %v3161
    %v3163 = vpop.f32.mrf.mxu0
    %3164 = vdwg.mxu0
    %3165 = vmatpush.bf16.msra.mxu0 %v2892
    %3166 = vmatpush.bf16.msra.mxu0 %v2888
    %3167 = vmatpush.bf16.msra.mxu0 %v2884
    %3168 = vmatpush.bf16.msra.mxu0 %v2880
    %3169 = vmatpush.bf16.msra.mxu0 %v2876
    %3170 = vmatpush.bf16.msra.mxu0 %v2872
    %3171 = vmatpush.bf16.msra.mxu0 %v2868
    %3172 = vmatpush.bf16.msra.mxu0 %v2864
    %3173 = vmatmul.bf16.gmra.mxu0 %v2243
    %v3174 = vpop.f32.mrf.mxu0
    %v3175 = vadd.f32 %v3162, %v3174
    %v3176 = vpop.f32.mrf.mxu0
    %3177 = vdwg.mxu0
    %3178 = vmatpush.bf16.msra.mxu0 %v2797
    %3179 = vmatpush.bf16.msra.mxu0 %v2793
    %3180 = vmatpush.bf16.msra.mxu0 %v2789
    %3181 = vmatpush.bf16.msra.mxu0 %v2785
    %3182 = vmatpush.bf16.msra.mxu0 %v2781
    %3183 = vmatpush.bf16.msra.mxu0 %v2777
    %3184 = vmatpush.bf16.msra.mxu0 %v2773
    %3185 = vmatpush.bf16.msra.mxu0 %v2769
    %3186 = vmatmul.bf16.gmra.mxu0 %v2240
    %v3187 = vpop.f32.mrf.mxu0
    %v3188 = vadd.f32 %v2377, %v3187
    %v3189 = vpop.f32.mrf.mxu0
    %3190 = vdwg.mxu0
    %3191 = vmatpush.bf16.msra.mxu0 %v2829
    %3192 = vmatpush.bf16.msra.mxu0 %v2825
    %3193 = vmatpush.bf16.msra.mxu0 %v2821
    %3194 = vmatpush.bf16.msra.mxu0 %v2817
    %3195 = vmatpush.bf16.msra.mxu0 %v2813
    %3196 = vmatpush.bf16.msra.mxu0 %v2809
    %3197 = vmatpush.bf16.msra.mxu0 %v2805
    %3198 = vmatpush.bf16.msra.mxu0 %v2801
    %3199 = vmatmul.bf16.gmra.mxu0 %v2241
    %v3200 = vpop.f32.mrf.mxu0
    %v3201 = vadd.f32 %v3188, %v3200
    %v3202 = vpop.f32.mrf.mxu0
    %3203 = vdwg.mxu0
    %3204 = vmatpush.bf16.msra.mxu0 %v2861
    %3205 = vmatpush.bf16.msra.mxu0 %v2857
    %3206 = vmatpush.bf16.msra.mxu0 %v2853
    %3207 = vmatpush.bf16.msra.mxu0 %v2849
    %3208 = vmatpush.bf16.msra.mxu0 %v2845
    %3209 = vmatpush.bf16.msra.mxu0 %v2841
    %3210 = vmatpush.bf16.msra.mxu0 %v2837
    %3211 = vmatpush.bf16.msra.mxu0 %v2833
    %3212 = vmatmul.bf16.gmra.mxu0 %v2242
    %v3213 = vpop.f32.mrf.mxu0
    %v3214 = vadd.f32 %v3201, %v3213
    %v3215 = vpop.f32.mrf.mxu0
    %3216 = vdwg.mxu0
    %3217 = vmatpush.bf16.msra.mxu0 %v2893
    %3218 = vmatpush.bf16.msra.mxu0 %v2889
    %3219 = vmatpush.bf16.msra.mxu0 %v2885
    %3220 = vmatpush.bf16.msra.mxu0 %v2881
    %3221 = vmatpush.bf16.msra.mxu0 %v2877
    %3222 = vmatpush.bf16.msra.mxu0 %v2873
    %3223 = vmatpush.bf16.msra.mxu0 %v2869
    %3224 = vmatpush.bf16.msra.mxu0 %v2865
    %3225 = vmatmul.bf16.gmra.mxu0 %v2243
    %v3226 = vpop.f32.mrf.mxu0
    %v3227 = vadd.f32 %v3214, %v3226
    %v3228 = vpop.f32.mrf.mxu0
    %3229 = vdwg.mxu0
    %v3230 = vtanh.pop %v3071
    %v3231 = vtanh.pop %v3123
    %v3232 = vtanh.pop %v3175
    %v3233 = vtanh.pop %v3227
    %v3234 = vpack.c.bf16 %v3230, %v3230
    %v3235 = vpack.c.bf16 %v3231, %v3231
    %v3236 = vpack.c.bf16 %v3232, %v3232
    %v3237 = vpack.c.bf16 %v3233, %v3233
    %v3238 = vld [vmem:[#allocation4] sm:$0xff]
    %v3239 = vld [vmem:[#allocation4 + $0x8] sm:$0xff]
    %v3240 = vld [vmem:[#allocation4 + $0x10] sm:$0xff]
    %v3241 = vld [vmem:[#allocation4 + $0x18] sm:$0xff]
    %v3242 = vld [vmem:[#allocation4 + $0x20] sm:$0xff]
    %v3243 = vld [vmem:[#allocation4 + $0x28] sm:$0xff]
    %v3244 = vld [vmem:[#allocation4 + $0x30] sm:$0xff]
    %v3245 = vld [vmem:[#allocation4 + $0x38] sm:$0xff]
    %v3246 = vld [vmem:[#allocation4 + $0x40] sm:$0xff]
    %v3247 = vld [vmem:[#allocation4 + $0x48] sm:$0xff]
    %v3248 = vld [vmem:[#allocation4 + $0x50] sm:$0xff]
    %v3249 = vld [vmem:[#allocation4 + $0x58] sm:$0xff]
    %v3250 = vld [vmem:[#allocation4 + $0x60] sm:$0xff]
    %v3251 = vld [vmem:[#allocation4 + $0x68] sm:$0xff]
    %v3252 = vld [vmem:[#allocation4 + $0x70] sm:$0xff]
    %v3253 = vld [vmem:[#allocation4 + $0x78] sm:$0xff]
    %v3254 = vld [vmem:[#allocation4 + $0x80] sm:$0xff]
    %v3255 = vld [vmem:[#allocation4 + $0x88] sm:$0xff]
    %v3256 = vld [vmem:[#allocation4 + $0x90] sm:$0xff]
    %v3257 = vld [vmem:[#allocation4 + $0x98] sm:$0xff]
    %v3258 = vld [vmem:[#allocation4 + $0xa0] sm:$0xff]
    %v3259 = vld [vmem:[#allocation4 + $0xa8] sm:$0xff]
    %v3260 = vld [vmem:[#allocation4 + $0xb0] sm:$0xff]
    %v3261 = vld [vmem:[#allocation4 + $0xb8] sm:$0xff]
    %v3262 = vld [vmem:[#allocation4 + $0xc0] sm:$0xff]
    %v3263 = vld [vmem:[#allocation4 + $0xc8] sm:$0xff]
    %v3264 = vld [vmem:[#allocation4 + $0xd0] sm:$0xff]
    %v3265 = vld [vmem:[#allocation4 + $0xd8] sm:$0xff]
    %v3266 = vld [vmem:[#allocation4 + $0xe0] sm:$0xff]
    %v3267 = vld [vmem:[#allocation4 + $0xe8] sm:$0xff]
    %v3268 = vld [vmem:[#allocation4 + $0xf0] sm:$0xff]
    %v3269 = vld [vmem:[#allocation4 + $0xf8] sm:$0xff]
    %v3270 = vld [vmem:[#allocation4 + $0x100] sm:$0xff]
    %v3271 = vld [vmem:[#allocation4 + $0x108] sm:$0xff]
    %v3272 = vld [vmem:[#allocation4 + $0x110] sm:$0xff]
    %v3273 = vld [vmem:[#allocation4 + $0x118] sm:$0xff]
    %v3274 = vld [vmem:[#allocation4 + $0x120] sm:$0xff]
    %v3275 = vld [vmem:[#allocation4 + $0x128] sm:$0xff]
    %v3276 = vld [vmem:[#allocation4 + $0x130] sm:$0xff]
    %v3277 = vld [vmem:[#allocation4 + $0x138] sm:$0xff]
    %v3278 = vld [vmem:[#allocation4 + $0x140] sm:$0xff]
    %v3279 = vld [vmem:[#allocation4 + $0x148] sm:$0xff]
    %v3280 = vld [vmem:[#allocation4 + $0x150] sm:$0xff]
    %v3281 = vld [vmem:[#allocation4 + $0x158] sm:$0xff]
    %v3282 = vld [vmem:[#allocation4 + $0x160] sm:$0xff]
    %v3283 = vld [vmem:[#allocation4 + $0x168] sm:$0xff]
    %v3284 = vld [vmem:[#allocation4 + $0x170] sm:$0xff]
    %v3285 = vld [vmem:[#allocation4 + $0x178] sm:$0xff]
    %v3286 = vld [vmem:[#allocation4 + $0x180] sm:$0xff]
    %v3287 = vld [vmem:[#allocation4 + $0x188] sm:$0xff]
    %v3288 = vld [vmem:[#allocation4 + $0x190] sm:$0xff]
    %v3289 = vld [vmem:[#allocation4 + $0x198] sm:$0xff]
    %v3290 = vld [vmem:[#allocation4 + $0x1a0] sm:$0xff]
    %v3291 = vld [vmem:[#allocation4 + $0x1a8] sm:$0xff]
    %v3292 = vld [vmem:[#allocation4 + $0x1b0] sm:$0xff]
    %v3293 = vld [vmem:[#allocation4 + $0x1b8] sm:$0xff]
    %v3294 = vld [vmem:[#allocation4 + $0x1c0] sm:$0xff]
    %v3295 = vld [vmem:[#allocation4 + $0x1c8] sm:$0xff]
    %v3296 = vld [vmem:[#allocation4 + $0x1d0] sm:$0xff]
    %v3297 = vld [vmem:[#allocation4 + $0x1d8] sm:$0xff]
    %v3298 = vld [vmem:[#allocation4 + $0x1e0] sm:$0xff]
    %v3299 = vld [vmem:[#allocation4 + $0x1e8] sm:$0xff]
    %v3300 = vld [vmem:[#allocation4 + $0x1f0] sm:$0xff]
    %v3301 = vld [vmem:[#allocation4 + $0x1f8] sm:$0xff]
    %v3302 = vld [vmem:[#allocation4 + $0x200] sm:$0xff]
    %v3303 = vld [vmem:[#allocation4 + $0x208] sm:$0xff]
    %v3304 = vld [vmem:[#allocation4 + $0x210] sm:$0xff]
    %v3305 = vld [vmem:[#allocation4 + $0x218] sm:$0xff]
    %v3306 = vld [vmem:[#allocation4 + $0x220] sm:$0xff]
    %v3307 = vld [vmem:[#allocation4 + $0x228] sm:$0xff]
    %v3308 = vld [vmem:[#allocation4 + $0x230] sm:$0xff]
    %v3309 = vld [vmem:[#allocation4 + $0x238] sm:$0xff]
    %v3310 = vld [vmem:[#allocation4 + $0x240] sm:$0xff]
    %v3311 = vld [vmem:[#allocation4 + $0x248] sm:$0xff]
    %v3312 = vld [vmem:[#allocation4 + $0x250] sm:$0xff]
    %v3313 = vld [vmem:[#allocation4 + $0x258] sm:$0xff]
    %v3314 = vld [vmem:[#allocation4 + $0x260] sm:$0xff]
    %v3315 = vld [vmem:[#allocation4 + $0x268] sm:$0xff]
    %v3316 = vld [vmem:[#allocation4 + $0x270] sm:$0xff]
    %v3317 = vld [vmem:[#allocation4 + $0x278] sm:$0xff]
    %v3318 = vld [vmem:[#allocation4 + $0x280] sm:$0xff]
    %v3319 = vld [vmem:[#allocation4 + $0x288] sm:$0xff]
    %v3320 = vld [vmem:[#allocation4 + $0x290] sm:$0xff]
    %v3321 = vld [vmem:[#allocation4 + $0x298] sm:$0xff]
    %v3322 = vld [vmem:[#allocation4 + $0x2a0] sm:$0xff]
    %v3323 = vld [vmem:[#allocation4 + $0x2a8] sm:$0xff]
    %v3324 = vld [vmem:[#allocation4 + $0x2b0] sm:$0xff]
    %v3325 = vld [vmem:[#allocation4 + $0x2b8] sm:$0xff]
    %v3326 = vld [vmem:[#allocation4 + $0x2c0] sm:$0xff]
    %v3327 = vld [vmem:[#allocation4 + $0x2c8] sm:$0xff]
    %v3328 = vld [vmem:[#allocation4 + $0x2d0] sm:$0xff]
    %v3329 = vld [vmem:[#allocation4 + $0x2d8] sm:$0xff]
    %v3330 = vld [vmem:[#allocation4 + $0x2e0] sm:$0xff]
    %v3331 = vld [vmem:[#allocation4 + $0x2e8] sm:$0xff]
    %v3332 = vld [vmem:[#allocation4 + $0x2f0] sm:$0xff]
    %v3333 = vld [vmem:[#allocation4 + $0x2f8] sm:$0xff]
    %v3334 = vld [vmem:[#allocation4 + $0x300] sm:$0xff]
    %v3335 = vld [vmem:[#allocation4 + $0x308] sm:$0xff]
    %v3336 = vld [vmem:[#allocation4 + $0x310] sm:$0xff]
    %v3337 = vld [vmem:[#allocation4 + $0x318] sm:$0xff]
    %v3338 = vld [vmem:[#allocation4 + $0x320] sm:$0xff]
    %v3339 = vld [vmem:[#allocation4 + $0x328] sm:$0xff]
    %v3340 = vld [vmem:[#allocation4 + $0x330] sm:$0xff]
    %v3341 = vld [vmem:[#allocation4 + $0x338] sm:$0xff]
    %v3342 = vld [vmem:[#allocation4 + $0x340] sm:$0xff]
    %v3343 = vld [vmem:[#allocation4 + $0x348] sm:$0xff]
    %v3344 = vld [vmem:[#allocation4 + $0x350] sm:$0xff]
    %v3345 = vld [vmem:[#allocation4 + $0x358] sm:$0xff]
    %v3346 = vld [vmem:[#allocation4 + $0x360] sm:$0xff]
    %v3347 = vld [vmem:[#allocation4 + $0x368] sm:$0xff]
    %v3348 = vld [vmem:[#allocation4 + $0x370] sm:$0xff]
    %v3349 = vld [vmem:[#allocation4 + $0x378] sm:$0xff]
    %v3350 = vld [vmem:[#allocation4 + $0x380] sm:$0xff]
    %v3351 = vld [vmem:[#allocation4 + $0x388] sm:$0xff]
    %v3352 = vld [vmem:[#allocation4 + $0x390] sm:$0xff]
    %v3353 = vld [vmem:[#allocation4 + $0x398] sm:$0xff]
    %v3354 = vld [vmem:[#allocation4 + $0x3a0] sm:$0xff]
    %v3355 = vld [vmem:[#allocation4 + $0x3a8] sm:$0xff]
    %v3356 = vld [vmem:[#allocation4 + $0x3b0] sm:$0xff]
    %v3357 = vld [vmem:[#allocation4 + $0x3b8] sm:$0xff]
    %v3358 = vld [vmem:[#allocation4 + $0x3c0] sm:$0xff]
    %v3359 = vld [vmem:[#allocation4 + $0x3c8] sm:$0xff]
    %v3360 = vld [vmem:[#allocation4 + $0x3d0] sm:$0xff]
    %v3361 = vld [vmem:[#allocation4 + $0x3d8] sm:$0xff]
    %v3362 = vld [vmem:[#allocation4 + $0x3e0] sm:$0xff]
    %v3363 = vld [vmem:[#allocation4 + $0x3e8] sm:$0xff]
    %v3364 = vld [vmem:[#allocation4 + $0x3f0] sm:$0xff]
    %v3365 = vld [vmem:[#allocation4 + $0x3f8] sm:$0xff]
    %v3366 = vld [vmem:[%s14] sm:$0xf]
    %v3368 = vperm.slane %v3366, 0
    %v3369 = vperm.slane %v3366, 1
    %v3370 = vperm.slane %v3366, 2
    %v3371 = vperm.slane %v3366, 3
    %v3504 = vunpack.c.l.b16 %v3238
    %v3505 = vunpack.c.h.b16 %v3238
    %v3506 = vunpack.c.l.b16 %v3239
    %v3507 = vunpack.c.h.b16 %v3239
    %v3508 = vunpack.c.l.b16 %v3240
    %v3509 = vunpack.c.h.b16 %v3240
    %v3510 = vunpack.c.l.b16 %v3241
    %v3511 = vunpack.c.h.b16 %v3241
    %v3512 = vunpack.c.l.b16 %v3242
    %v3513 = vunpack.c.h.b16 %v3242
    %v3514 = vunpack.c.l.b16 %v3243
    %v3515 = vunpack.c.h.b16 %v3243
    %v3516 = vunpack.c.l.b16 %v3244
    %v3517 = vunpack.c.h.b16 %v3244
    %v3518 = vunpack.c.l.b16 %v3245
    %v3519 = vunpack.c.h.b16 %v3245
    %v3520 = vunpack.c.l.b16 %v3246
    %v3521 = vunpack.c.h.b16 %v3246
    %v3522 = vunpack.c.l.b16 %v3247
    %v3523 = vunpack.c.h.b16 %v3247
    %v3524 = vunpack.c.l.b16 %v3248
    %v3525 = vunpack.c.h.b16 %v3248
    %v3526 = vunpack.c.l.b16 %v3249
    %v3527 = vunpack.c.h.b16 %v3249
    %v3528 = vunpack.c.l.b16 %v3250
    %v3529 = vunpack.c.h.b16 %v3250
    %v3530 = vunpack.c.l.b16 %v3251
    %v3531 = vunpack.c.h.b16 %v3251
    %v3532 = vunpack.c.l.b16 %v3252
    %v3533 = vunpack.c.h.b16 %v3252
    %v3534 = vunpack.c.l.b16 %v3253
    %v3535 = vunpack.c.h.b16 %v3253
    %v3536 = vunpack.c.l.b16 %v3254
    %v3537 = vunpack.c.h.b16 %v3254
    %v3538 = vunpack.c.l.b16 %v3255
    %v3539 = vunpack.c.h.b16 %v3255
    %v3540 = vunpack.c.l.b16 %v3256
    %v3541 = vunpack.c.h.b16 %v3256
    %v3542 = vunpack.c.l.b16 %v3257
    %v3543 = vunpack.c.h.b16 %v3257
    %v3544 = vunpack.c.l.b16 %v3258
    %v3545 = vunpack.c.h.b16 %v3258
    %v3546 = vunpack.c.l.b16 %v3259
    %v3547 = vunpack.c.h.b16 %v3259
    %v3548 = vunpack.c.l.b16 %v3260
    %v3549 = vunpack.c.h.b16 %v3260
    %v3550 = vunpack.c.l.b16 %v3261
    %v3551 = vunpack.c.h.b16 %v3261
    %v3552 = vunpack.c.l.b16 %v3262
    %v3553 = vunpack.c.h.b16 %v3262
    %v3554 = vunpack.c.l.b16 %v3263
    %v3555 = vunpack.c.h.b16 %v3263
    %v3556 = vunpack.c.l.b16 %v3264
    %v3557 = vunpack.c.h.b16 %v3264
    %v3558 = vunpack.c.l.b16 %v3265
    %v3559 = vunpack.c.h.b16 %v3265
    %v3560 = vunpack.c.l.b16 %v3266
    %v3561 = vunpack.c.h.b16 %v3266
    %v3562 = vunpack.c.l.b16 %v3267
    %v3563 = vunpack.c.h.b16 %v3267
    %v3564 = vunpack.c.l.b16 %v3268
    %v3565 = vunpack.c.h.b16 %v3268
    %v3566 = vunpack.c.l.b16 %v3269
    %v3567 = vunpack.c.h.b16 %v3269
    %v3568 = vunpack.c.l.b16 %v3270
    %v3569 = vunpack.c.h.b16 %v3270
    %v3570 = vunpack.c.l.b16 %v3271
    %v3571 = vunpack.c.h.b16 %v3271
    %v3572 = vunpack.c.l.b16 %v3272
    %v3573 = vunpack.c.h.b16 %v3272
    %v3574 = vunpack.c.l.b16 %v3273
    %v3575 = vunpack.c.h.b16 %v3273
    %v3576 = vunpack.c.l.b16 %v3274
    %v3577 = vunpack.c.h.b16 %v3274
    %v3578 = vunpack.c.l.b16 %v3275
    %v3579 = vunpack.c.h.b16 %v3275
    %v3580 = vunpack.c.l.b16 %v3276
    %v3581 = vunpack.c.h.b16 %v3276
    %v3582 = vunpack.c.l.b16 %v3277
    %v3583 = vunpack.c.h.b16 %v3277
    %v3584 = vunpack.c.l.b16 %v3278
    %v3585 = vunpack.c.h.b16 %v3278
    %v3586 = vunpack.c.l.b16 %v3279
    %v3587 = vunpack.c.h.b16 %v3279
    %v3588 = vunpack.c.l.b16 %v3280
    %v3589 = vunpack.c.h.b16 %v3280
    %v3590 = vunpack.c.l.b16 %v3281
    %v3591 = vunpack.c.h.b16 %v3281
    %v3592 = vunpack.c.l.b16 %v3282
    %v3593 = vunpack.c.h.b16 %v3282
    %v3594 = vunpack.c.l.b16 %v3283
    %v3595 = vunpack.c.h.b16 %v3283
    %v3596 = vunpack.c.l.b16 %v3284
    %v3597 = vunpack.c.h.b16 %v3284
    %v3598 = vunpack.c.l.b16 %v3285
    %v3599 = vunpack.c.h.b16 %v3285
    %v3600 = vunpack.c.l.b16 %v3286
    %v3601 = vunpack.c.h.b16 %v3286
    %v3602 = vunpack.c.l.b16 %v3287
    %v3603 = vunpack.c.h.b16 %v3287
    %v3604 = vunpack.c.l.b16 %v3288
    %v3605 = vunpack.c.h.b16 %v3288
    %v3606 = vunpack.c.l.b16 %v3289
    %v3607 = vunpack.c.h.b16 %v3289
    %v3608 = vunpack.c.l.b16 %v3290
    %v3609 = vunpack.c.h.b16 %v3290
    %v3610 = vunpack.c.l.b16 %v3291
    %v3611 = vunpack.c.h.b16 %v3291
    %v3612 = vunpack.c.l.b16 %v3292
    %v3613 = vunpack.c.h.b16 %v3292
    %v3614 = vunpack.c.l.b16 %v3293
    %v3615 = vunpack.c.h.b16 %v3293
    %v3616 = vunpack.c.l.b16 %v3294
    %v3617 = vunpack.c.h.b16 %v3294
    %v3618 = vunpack.c.l.b16 %v3295
    %v3619 = vunpack.c.h.b16 %v3295
    %v3620 = vunpack.c.l.b16 %v3296
    %v3621 = vunpack.c.h.b16 %v3296
    %v3622 = vunpack.c.l.b16 %v3297
    %v3623 = vunpack.c.h.b16 %v3297
    %v3624 = vunpack.c.l.b16 %v3298
    %v3625 = vunpack.c.h.b16 %v3298
    %v3626 = vunpack.c.l.b16 %v3299
    %v3627 = vunpack.c.h.b16 %v3299
    %v3628 = vunpack.c.l.b16 %v3300
    %v3629 = vunpack.c.h.b16 %v3300
    %v3630 = vunpack.c.l.b16 %v3301
    %v3631 = vunpack.c.h.b16 %v3301
    %v3632 = vunpack.c.l.b16 %v3302
    %v3633 = vunpack.c.h.b16 %v3302
    %v3634 = vunpack.c.l.b16 %v3303
    %v3635 = vunpack.c.h.b16 %v3303
    %v3636 = vunpack.c.l.b16 %v3304
    %v3637 = vunpack.c.h.b16 %v3304
    %v3638 = vunpack.c.l.b16 %v3305
    %v3639 = vunpack.c.h.b16 %v3305
    %v3640 = vunpack.c.l.b16 %v3306
    %v3641 = vunpack.c.h.b16 %v3306
    %v3642 = vunpack.c.l.b16 %v3307
    %v3643 = vunpack.c.h.b16 %v3307
    %v3644 = vunpack.c.l.b16 %v3308
    %v3645 = vunpack.c.h.b16 %v3308
    %v3646 = vunpack.c.l.b16 %v3309
    %v3647 = vunpack.c.h.b16 %v3309
    %v3648 = vunpack.c.l.b16 %v3310
    %v3649 = vunpack.c.h.b16 %v3310
    %v3650 = vunpack.c.l.b16 %v3311
    %v3651 = vunpack.c.h.b16 %v3311
    %v3652 = vunpack.c.l.b16 %v3312
    %v3653 = vunpack.c.h.b16 %v3312
    %v3654 = vunpack.c.l.b16 %v3313
    %v3655 = vunpack.c.h.b16 %v3313
    %v3656 = vunpack.c.l.b16 %v3314
    %v3657 = vunpack.c.h.b16 %v3314
    %v3658 = vunpack.c.l.b16 %v3315
    %v3659 = vunpack.c.h.b16 %v3315
    %v3660 = vunpack.c.l.b16 %v3316
    %v3661 = vunpack.c.h.b16 %v3316
    %v3662 = vunpack.c.l.b16 %v3317
    %v3663 = vunpack.c.h.b16 %v3317
    %v3664 = vunpack.c.l.b16 %v3318
    %v3665 = vunpack.c.h.b16 %v3318
    %v3666 = vunpack.c.l.b16 %v3319
    %v3667 = vunpack.c.h.b16 %v3319
    %v3668 = vunpack.c.l.b16 %v3320
    %v3669 = vunpack.c.h.b16 %v3320
    %v3670 = vunpack.c.l.b16 %v3321
    %v3671 = vunpack.c.h.b16 %v3321
    %v3672 = vunpack.c.l.b16 %v3322
    %v3673 = vunpack.c.h.b16 %v3322
    %v3674 = vunpack.c.l.b16 %v3323
    %v3675 = vunpack.c.h.b16 %v3323
    %v3676 = vunpack.c.l.b16 %v3324
    %v3677 = vunpack.c.h.b16 %v3324
    %v3678 = vunpack.c.l.b16 %v3325
    %v3679 = vunpack.c.h.b16 %v3325
    %v3680 = vunpack.c.l.b16 %v3326
    %v3681 = vunpack.c.h.b16 %v3326
    %v3682 = vunpack.c.l.b16 %v3327
    %v3683 = vunpack.c.h.b16 %v3327
    %v3684 = vunpack.c.l.b16 %v3328
    %v3685 = vunpack.c.h.b16 %v3328
    %v3686 = vunpack.c.l.b16 %v3329
    %v3687 = vunpack.c.h.b16 %v3329
    %v3688 = vunpack.c.l.b16 %v3330
    %v3689 = vunpack.c.h.b16 %v3330
    %v3690 = vunpack.c.l.b16 %v3331
    %v3691 = vunpack.c.h.b16 %v3331
    %v3692 = vunpack.c.l.b16 %v3332
    %v3693 = vunpack.c.h.b16 %v3332
    %v3694 = vunpack.c.l.b16 %v3333
    %v3695 = vunpack.c.h.b16 %v3333
    %v3696 = vunpack.c.l.b16 %v3334
    %v3697 = vunpack.c.h.b16 %v3334
    %v3698 = vunpack.c.l.b16 %v3335
    %v3699 = vunpack.c.h.b16 %v3335
    %v3700 = vunpack.c.l.b16 %v3336
    %v3701 = vunpack.c.h.b16 %v3336
    %v3702 = vunpack.c.l.b16 %v3337
    %v3703 = vunpack.c.h.b16 %v3337
    %v3704 = vunpack.c.l.b16 %v3338
    %v3705 = vunpack.c.h.b16 %v3338
    %v3706 = vunpack.c.l.b16 %v3339
    %v3707 = vunpack.c.h.b16 %v3339
    %v3708 = vunpack.c.l.b16 %v3340
    %v3709 = vunpack.c.h.b16 %v3340
    %v3710 = vunpack.c.l.b16 %v3341
    %v3711 = vunpack.c.h.b16 %v3341
    %v3712 = vunpack.c.l.b16 %v3342
    %v3713 = vunpack.c.h.b16 %v3342
    %v3714 = vunpack.c.l.b16 %v3343
    %v3715 = vunpack.c.h.b16 %v3343
    %v3716 = vunpack.c.l.b16 %v3344
    %v3717 = vunpack.c.h.b16 %v3344
    %v3718 = vunpack.c.l.b16 %v3345
    %v3719 = vunpack.c.h.b16 %v3345
    %v3720 = vunpack.c.l.b16 %v3346
    %v3721 = vunpack.c.h.b16 %v3346
    %v3722 = vunpack.c.l.b16 %v3347
    %v3723 = vunpack.c.h.b16 %v3347
    %v3724 = vunpack.c.l.b16 %v3348
    %v3725 = vunpack.c.h.b16 %v3348
    %v3726 = vunpack.c.l.b16 %v3349
    %v3727 = vunpack.c.h.b16 %v3349
    %v3728 = vunpack.c.l.b16 %v3350
    %v3729 = vunpack.c.h.b16 %v3350
    %v3730 = vunpack.c.l.b16 %v3351
    %v3731 = vunpack.c.h.b16 %v3351
    %v3732 = vunpack.c.l.b16 %v3352
    %v3733 = vunpack.c.h.b16 %v3352
    %v3734 = vunpack.c.l.b16 %v3353
    %v3735 = vunpack.c.h.b16 %v3353
    %v3736 = vunpack.c.l.b16 %v3354
    %v3737 = vunpack.c.h.b16 %v3354
    %v3738 = vunpack.c.l.b16 %v3355
    %v3739 = vunpack.c.h.b16 %v3355
    %v3740 = vunpack.c.l.b16 %v3356
    %v3741 = vunpack.c.h.b16 %v3356
    %v3742 = vunpack.c.l.b16 %v3357
    %v3743 = vunpack.c.h.b16 %v3357
    %v3744 = vunpack.c.l.b16 %v3358
    %v3745 = vunpack.c.h.b16 %v3358
    %v3746 = vunpack.c.l.b16 %v3359
    %v3747 = vunpack.c.h.b16 %v3359
    %v3748 = vunpack.c.l.b16 %v3360
    %v3749 = vunpack.c.h.b16 %v3360
    %v3750 = vunpack.c.l.b16 %v3361
    %v3751 = vunpack.c.h.b16 %v3361
    %v3752 = vunpack.c.l.b16 %v3362
    %v3753 = vunpack.c.h.b16 %v3362
    %v3754 = vunpack.c.l.b16 %v3363
    %v3755 = vunpack.c.h.b16 %v3363
    %v3756 = vunpack.c.l.b16 %v3364
    %v3757 = vunpack.c.h.b16 %v3364
    %v3758 = vunpack.c.l.b16 %v3365
    %v3759 = vunpack.c.h.b16 %v3365
    %v3760 = vpack.c.b16 %v3508, %v3504
    %v3761 = vpack.c.b16 %v3509, %v3505
    %v3762 = vpack.c.b16 %v3510, %v3506
    %v3763 = vpack.c.b16 %v3511, %v3507
    %v3764 = vpack.c.b16 %v3516, %v3512
    %v3765 = vpack.c.b16 %v3517, %v3513
    %v3766 = vpack.c.b16 %v3518, %v3514
    %v3767 = vpack.c.b16 %v3519, %v3515
    %v3768 = vpack.c.b16 %v3524, %v3520
    %v3769 = vpack.c.b16 %v3525, %v3521
    %v3770 = vpack.c.b16 %v3526, %v3522
    %v3771 = vpack.c.b16 %v3527, %v3523
    %v3772 = vpack.c.b16 %v3532, %v3528
    %v3773 = vpack.c.b16 %v3533, %v3529
    %v3774 = vpack.c.b16 %v3534, %v3530
    %v3775 = vpack.c.b16 %v3535, %v3531
    %v3776 = vpack.c.b16 %v3540, %v3536
    %v3777 = vpack.c.b16 %v3541, %v3537
    %v3778 = vpack.c.b16 %v3542, %v3538
    %v3779 = vpack.c.b16 %v3543, %v3539
    %v3780 = vpack.c.b16 %v3548, %v3544
    %v3781 = vpack.c.b16 %v3549, %v3545
    %v3782 = vpack.c.b16 %v3550, %v3546
    %v3783 = vpack.c.b16 %v3551, %v3547
    %v3784 = vpack.c.b16 %v3556, %v3552
    %v3785 = vpack.c.b16 %v3557, %v3553
    %v3786 = vpack.c.b16 %v3558, %v3554
    %v3787 = vpack.c.b16 %v3559, %v3555
    %v3788 = vpack.c.b16 %v3564, %v3560
    %v3789 = vpack.c.b16 %v3565, %v3561
    %v3790 = vpack.c.b16 %v3566, %v3562
    %v3791 = vpack.c.b16 %v3567, %v3563
    %v3792 = vpack.c.b16 %v3572, %v3568
    %v3793 = vpack.c.b16 %v3573, %v3569
    %v3794 = vpack.c.b16 %v3574, %v3570
    %v3795 = vpack.c.b16 %v3575, %v3571
    %v3796 = vpack.c.b16 %v3580, %v3576
    %v3797 = vpack.c.b16 %v3581, %v3577
    %v3798 = vpack.c.b16 %v3582, %v3578
    %v3799 = vpack.c.b16 %v3583, %v3579
    %v3800 = vpack.c.b16 %v3588, %v3584
    %v3801 = vpack.c.b16 %v3589, %v3585
    %v3802 = vpack.c.b16 %v3590, %v3586
    %v3803 = vpack.c.b16 %v3591, %v3587
    %v3804 = vpack.c.b16 %v3596, %v3592
    %v3805 = vpack.c.b16 %v3597, %v3593
    %v3806 = vpack.c.b16 %v3598, %v3594
    %v3807 = vpack.c.b16 %v3599, %v3595
    %v3808 = vpack.c.b16 %v3604, %v3600
    %v3809 = vpack.c.b16 %v3605, %v3601
    %v3810 = vpack.c.b16 %v3606, %v3602
    %v3811 = vpack.c.b16 %v3607, %v3603
    %v3812 = vpack.c.b16 %v3612, %v3608
    %v3813 = vpack.c.b16 %v3613, %v3609
    %v3814 = vpack.c.b16 %v3614, %v3610
    %v3815 = vpack.c.b16 %v3615, %v3611
    %v3816 = vpack.c.b16 %v3620, %v3616
    %v3817 = vpack.c.b16 %v3621, %v3617
    %v3818 = vpack.c.b16 %v3622, %v3618
    %v3819 = vpack.c.b16 %v3623, %v3619
    %v3820 = vpack.c.b16 %v3628, %v3624
    %v3821 = vpack.c.b16 %v3629, %v3625
    %v3822 = vpack.c.b16 %v3630, %v3626
    %v3823 = vpack.c.b16 %v3631, %v3627
    %v3824 = vpack.c.b16 %v3636, %v3632
    %v3825 = vpack.c.b16 %v3637, %v3633
    %v3826 = vpack.c.b16 %v3638, %v3634
    %v3827 = vpack.c.b16 %v3639, %v3635
    %v3828 = vpack.c.b16 %v3644, %v3640
    %v3829 = vpack.c.b16 %v3645, %v3641
    %v3830 = vpack.c.b16 %v3646, %v3642
    %v3831 = vpack.c.b16 %v3647, %v3643
    %v3832 = vpack.c.b16 %v3652, %v3648
    %v3833 = vpack.c.b16 %v3653, %v3649
    %v3834 = vpack.c.b16 %v3654, %v3650
    %v3835 = vpack.c.b16 %v3655, %v3651
    %v3836 = vpack.c.b16 %v3660, %v3656
    %v3837 = vpack.c.b16 %v3661, %v3657
    %v3838 = vpack.c.b16 %v3662, %v3658
    %v3839 = vpack.c.b16 %v3663, %v3659
    %v3840 = vpack.c.b16 %v3668, %v3664
    %v3841 = vpack.c.b16 %v3669, %v3665
    %v3842 = vpack.c.b16 %v3670, %v3666
    %v3843 = vpack.c.b16 %v3671, %v3667
    %v3844 = vpack.c.b16 %v3676, %v3672
    %v3845 = vpack.c.b16 %v3677, %v3673
    %v3846 = vpack.c.b16 %v3678, %v3674
    %v3847 = vpack.c.b16 %v3679, %v3675
    %v3848 = vpack.c.b16 %v3684, %v3680
    %v3849 = vpack.c.b16 %v3685, %v3681
    %v3850 = vpack.c.b16 %v3686, %v3682
    %v3851 = vpack.c.b16 %v3687, %v3683
    %v3852 = vpack.c.b16 %v3692, %v3688
    %v3853 = vpack.c.b16 %v3693, %v3689
    %v3854 = vpack.c.b16 %v3694, %v3690
    %v3855 = vpack.c.b16 %v3695, %v3691
    %v3856 = vpack.c.b16 %v3700, %v3696
    %v3857 = vpack.c.b16 %v3701, %v3697
    %v3858 = vpack.c.b16 %v3702, %v3698
    %v3859 = vpack.c.b16 %v3703, %v3699
    %v3860 = vpack.c.b16 %v3708, %v3704
    %v3861 = vpack.c.b16 %v3709, %v3705
    %v3862 = vpack.c.b16 %v3710, %v3706
    %v3863 = vpack.c.b16 %v3711, %v3707
    %v3864 = vpack.c.b16 %v3716, %v3712
    %v3865 = vpack.c.b16 %v3717, %v3713
    %v3866 = vpack.c.b16 %v3718, %v3714
    %v3867 = vpack.c.b16 %v3719, %v3715
    %v3868 = vpack.c.b16 %v3724, %v3720
    %v3869 = vpack.c.b16 %v3725, %v3721
    %v3870 = vpack.c.b16 %v3726, %v3722
    %v3871 = vpack.c.b16 %v3727, %v3723
    %v3872 = vpack.c.b16 %v3732, %v3728
    %v3873 = vpack.c.b16 %v3733, %v3729
    %v3874 = vpack.c.b16 %v3734, %v3730
    %v3875 = vpack.c.b16 %v3735, %v3731
    %v3876 = vpack.c.b16 %v3740, %v3736
    %v3877 = vpack.c.b16 %v3741, %v3737
    %v3878 = vpack.c.b16 %v3742, %v3738
    %v3879 = vpack.c.b16 %v3743, %v3739
    %v3880 = vpack.c.b16 %v3748, %v3744
    %v3881 = vpack.c.b16 %v3749, %v3745
    %v3882 = vpack.c.b16 %v3750, %v3746
    %v3883 = vpack.c.b16 %v3751, %v3747
    %v3884 = vpack.c.b16 %v3756, %v3752
    %v3885 = vpack.c.b16 %v3757, %v3753
    %v3886 = vpack.c.b16 %v3758, %v3754
    %v3887 = vpack.c.b16 %v3759, %v3755
    %4016 = vmatpush.bf16.msra.mxu0 %v3788
    %4017 = vmatpush.bf16.msra.mxu0 %v3784
    %4018 = vmatpush.bf16.msra.mxu0 %v3780
    %4019 = vmatpush.bf16.msra.mxu0 %v3776
    %4020 = vmatpush.bf16.msra.mxu0 %v3772
    %4021 = vmatpush.bf16.msra.mxu0 %v3768
    %4022 = vmatpush.bf16.msra.mxu0 %v3764
    %4023 = vmatpush.bf16.msra.mxu0 %v3760
    %4024 = vmatmul.bf16.gmra.mxu0 %v3234
    %v4025 = vpop.f32.mrf.mxu0
    %v4026 = vadd.f32 %v3368, %v4025
    %v4027 = vpop.f32.mrf.mxu0
    %4028 = vdwg.mxu0
    %4029 = vmatpush.bf16.msra.mxu0 %v3820
    %4030 = vmatpush.bf16.msra.mxu0 %v3816
    %4031 = vmatpush.bf16.msra.mxu0 %v3812
    %4032 = vmatpush.bf16.msra.mxu0 %v3808
    %4033 = vmatpush.bf16.msra.mxu0 %v3804
    %4034 = vmatpush.bf16.msra.mxu0 %v3800
    %4035 = vmatpush.bf16.msra.mxu0 %v3796
    %4036 = vmatpush.bf16.msra.mxu0 %v3792
    %4037 = vmatmul.bf16.gmra.mxu0 %v3235
    %v4038 = vpop.f32.mrf.mxu0
    %v4039 = vadd.f32 %v4026, %v4038
    %v4040 = vpop.f32.mrf.mxu0
    %4041 = vdwg.mxu0
    %4042 = vmatpush.bf16.msra.mxu0 %v3852
    %4043 = vmatpush.bf16.msra.mxu0 %v3848
    %4044 = vmatpush.bf16.msra.mxu0 %v3844
    %4045 = vmatpush.bf16.msra.mxu0 %v3840
    %4046 = vmatpush.bf16.msra.mxu0 %v3836
    %4047 = vmatpush.bf16.msra.mxu0 %v3832
    %4048 = vmatpush.bf16.msra.mxu0 %v3828
    %4049 = vmatpush.bf16.msra.mxu0 %v3824
    %4050 = vmatmul.bf16.gmra.mxu0 %v3236
    %v4051 = vpop.f32.mrf.mxu0
    %v4052 = vadd.f32 %v4039, %v4051
    %v4053 = vpop.f32.mrf.mxu0
    %4054 = vdwg.mxu0
    %4055 = vmatpush.bf16.msra.mxu0 %v3884
    %4056 = vmatpush.bf16.msra.mxu0 %v3880
    %4057 = vmatpush.bf16.msra.mxu0 %v3876
    %4058 = vmatpush.bf16.msra.mxu0 %v3872
    %4059 = vmatpush.bf16.msra.mxu0 %v3868
    %4060 = vmatpush.bf16.msra.mxu0 %v3864
    %4061 = vmatpush.bf16.msra.mxu0 %v3860
    %4062 = vmatpush.bf16.msra.mxu0 %v3856
    %4063 = vmatmul.bf16.gmra.mxu0 %v3237
    %v4064 = vpop.f32.mrf.mxu0
    %v4065 = vadd.f32 %v4052, %v4064
    %v4066 = vpop.f32.mrf.mxu0
    %4067 = vdwg.mxu0
    %4068 = vmatpush.bf16.msra.mxu0 %v3789
    %4069 = vmatpush.bf16.msra.mxu0 %v3785
    %4070 = vmatpush.bf16.msra.mxu0 %v3781
    %4071 = vmatpush.bf16.msra.mxu0 %v3777
    %4072 = vmatpush.bf16.msra.mxu0 %v3773
    %4073 = vmatpush.bf16.msra.mxu0 %v3769
    %4074 = vmatpush.bf16.msra.mxu0 %v3765
    %4075 = vmatpush.bf16.msra.mxu0 %v3761
    %4076 = vmatmul.bf16.gmra.mxu0 %v3234
    %v4077 = vpop.f32.mrf.mxu0
    %v4078 = vadd.f32 %v3369, %v4077
    %v4079 = vpop.f32.mrf.mxu0
    %4080 = vdwg.mxu0
    %4081 = vmatpush.bf16.msra.mxu0 %v3821
    %4082 = vmatpush.bf16.msra.mxu0 %v3817
    %4083 = vmatpush.bf16.msra.mxu0 %v3813
    %4084 = vmatpush.bf16.msra.mxu0 %v3809
    %4085 = vmatpush.bf16.msra.mxu0 %v3805
    %4086 = vmatpush.bf16.msra.mxu0 %v3801
    %4087 = vmatpush.bf16.msra.mxu0 %v3797
    %4088 = vmatpush.bf16.msra.mxu0 %v3793
    %4089 = vmatmul.bf16.gmra.mxu0 %v3235
    %v4090 = vpop.f32.mrf.mxu0
    %v4091 = vadd.f32 %v4078, %v4090
    %v4092 = vpop.f32.mrf.mxu0
    %4093 = vdwg.mxu0
    %4094 = vmatpush.bf16.msra.mxu0 %v3853
    %4095 = vmatpush.bf16.msra.mxu0 %v3849
    %4096 = vmatpush.bf16.msra.mxu0 %v3845
    %4097 = vmatpush.bf16.msra.mxu0 %v3841
    %4098 = vmatpush.bf16.msra.mxu0 %v3837
    %4099 = vmatpush.bf16.msra.mxu0 %v3833
    %4100 = vmatpush.bf16.msra.mxu0 %v3829
    %4101 = vmatpush.bf16.msra.mxu0 %v3825
    %4102 = vmatmul.bf16.gmra.mxu0 %v3236
    %v4103 = vpop.f32.mrf.mxu0
    %v4104 = vadd.f32 %v4091, %v4103
    %v4105 = vpop.f32.mrf.mxu0
    %4106 = vdwg.mxu0
    %4107 = vmatpush.bf16.msra.mxu0 %v3885
    %4108 = vmatpush.bf16.msra.mxu0 %v3881
    %4109 = vmatpush.bf16.msra.mxu0 %v3877
    %4110 = vmatpush.bf16.msra.mxu0 %v3873
    %4111 = vmatpush.bf16.msra.mxu0 %v3869
    %4112 = vmatpush.bf16.msra.mxu0 %v3865
    %4113 = vmatpush.bf16.msra.mxu0 %v3861
    %4114 = vmatpush.bf16.msra.mxu0 %v3857
    %4115 = vmatmul.bf16.gmra.mxu0 %v3237
    %v4116 = vpop.f32.mrf.mxu0
    %v4117 = vadd.f32 %v4104, %v4116
    %v4118 = vpop.f32.mrf.mxu0
    %4119 = vdwg.mxu0
    %4120 = vmatpush.bf16.msra.mxu0 %v3790
    %4121 = vmatpush.bf16.msra.mxu0 %v3786
    %4122 = vmatpush.bf16.msra.mxu0 %v3782
    %4123 = vmatpush.bf16.msra.mxu0 %v3778
    %4124 = vmatpush.bf16.msra.mxu0 %v3774
    %4125 = vmatpush.bf16.msra.mxu0 %v3770
    %4126 = vmatpush.bf16.msra.mxu0 %v3766
    %4127 = vmatpush.bf16.msra.mxu0 %v3762
    %4128 = vmatmul.bf16.gmra.mxu0 %v3234
    %v4129 = vpop.f32.mrf.mxu0
    %v4130 = vadd.f32 %v3370, %v4129
    %v4131 = vpop.f32.mrf.mxu0
    %4132 = vdwg.mxu0
    %4133 = vmatpush.bf16.msra.mxu0 %v3822
    %4134 = vmatpush.bf16.msra.mxu0 %v3818
    %4135 = vmatpush.bf16.msra.mxu0 %v3814
    %4136 = vmatpush.bf16.msra.mxu0 %v3810
    %4137 = vmatpush.bf16.msra.mxu0 %v3806
    %4138 = vmatpush.bf16.msra.mxu0 %v3802
    %4139 = vmatpush.bf16.msra.mxu0 %v3798
    %4140 = vmatpush.bf16.msra.mxu0 %v3794
    %4141 = vmatmul.bf16.gmra.mxu0 %v3235
    %v4142 = vpop.f32.mrf.mxu0
    %v4143 = vadd.f32 %v4130, %v4142
    %v4144 = vpop.f32.mrf.mxu0
    %4145 = vdwg.mxu0
    %4146 = vmatpush.bf16.msra.mxu0 %v3854
    %4147 = vmatpush.bf16.msra.mxu0 %v3850
    %4148 = vmatpush.bf16.msra.mxu0 %v3846
    %4149 = vmatpush.bf16.msra.mxu0 %v3842
    %4150 = vmatpush.bf16.msra.mxu0 %v3838
    %4151 = vmatpush.bf16.msra.mxu0 %v3834
    %4152 = vmatpush.bf16.msra.mxu0 %v3830
    %4153 = vmatpush.bf16.msra.mxu0 %v3826
    %4154 = vmatmul.bf16.gmra.mxu0 %v3236
    %v4155 = vpop.f32.mrf.mxu0
    %v4156 = vadd.f32 %v4143, %v4155
    %v4157 = vpop.f32.mrf.mxu0
    %4158 = vdwg.mxu0
    %4159 = vmatpush.bf16.msra.mxu0 %v3886
    %4160 = vmatpush.bf16.msra.mxu0 %v3882
    %4161 = vmatpush.bf16.msra.mxu0 %v3878
    %4162 = vmatpush.bf16.msra.mxu0 %v3874
    %4163 = vmatpush.bf16.msra.mxu0 %v3870
    %4164 = vmatpush.bf16.msra.mxu0 %v3866
    %4165 = vmatpush.bf16.msra.mxu0 %v3862
    %4166 = vmatpush.bf16.msra.mxu0 %v3858
    %4167 = vmatmul.bf16.gmra.mxu0 %v3237
    %v4168 = vpop.f32.mrf.mxu0
    %v4169 = vadd.f32 %v4156, %v4168
    %v4170 = vpop.f32.mrf.mxu0
    %4171 = vdwg.mxu0
    %4172 = vmatpush.bf16.msra.mxu0 %v3791
    %4173 = vmatpush.bf16.msra.mxu0 %v3787
    %4174 = vmatpush.bf16.msra.mxu0 %v3783
    %4175 = vmatpush.bf16.msra.mxu0 %v3779
    %4176 = vmatpush.bf16.msra.mxu0 %v3775
    %4177 = vmatpush.bf16.msra.mxu0 %v3771
    %4178 = vmatpush.bf16.msra.mxu0 %v3767
    %4179 = vmatpush.bf16.msra.mxu0 %v3763
    %4180 = vmatmul.bf16.gmra.mxu0 %v3234
    %v4181 = vpop.f32.mrf.mxu0
    %v4182 = vadd.f32 %v3371, %v4181
    %v4183 = vpop.f32.mrf.mxu0
    %4184 = vdwg.mxu0
    %4185 = vmatpush.bf16.msra.mxu0 %v3823
    %4186 = vmatpush.bf16.msra.mxu0 %v3819
    %4187 = vmatpush.bf16.msra.mxu0 %v3815
    %4188 = vmatpush.bf16.msra.mxu0 %v3811
    %4189 = vmatpush.bf16.msra.mxu0 %v3807
    %4190 = vmatpush.bf16.msra.mxu0 %v3803
    %4191 = vmatpush.bf16.msra.mxu0 %v3799
    %4192 = vmatpush.bf16.msra.mxu0 %v3795
    %4193 = vmatmul.bf16.gmra.mxu0 %v3235
    %v4194 = vpop.f32.mrf.mxu0
    %v4195 = vadd.f32 %v4182, %v4194
    %v4196 = vpop.f32.mrf.mxu0
    %4197 = vdwg.mxu0
    %4198 = vmatpush.bf16.msra.mxu0 %v3855
    %4199 = vmatpush.bf16.msra.mxu0 %v3851
    %4200 = vmatpush.bf16.msra.mxu0 %v3847
    %4201 = vmatpush.bf16.msra.mxu0 %v3843
    %4202 = vmatpush.bf16.msra.mxu0 %v3839
    %4203 = vmatpush.bf16.msra.mxu0 %v3835
    %4204 = vmatpush.bf16.msra.mxu0 %v3831
    %4205 = vmatpush.bf16.msra.mxu0 %v3827
    %4206 = vmatmul.bf16.gmra.mxu0 %v3236
    %v4207 = vpop.f32.mrf.mxu0
    %v4208 = vadd.f32 %v4195, %v4207
    %v4209 = vpop.f32.mrf.mxu0
    %4210 = vdwg.mxu0
    %4211 = vmatpush.bf16.msra.mxu0 %v3887
    %4212 = vmatpush.bf16.msra.mxu0 %v3883
    %4213 = vmatpush.bf16.msra.mxu0 %v3879
    %4214 = vmatpush.bf16.msra.mxu0 %v3875
    %4215 = vmatpush.bf16.msra.mxu0 %v3871
    %4216 = vmatpush.bf16.msra.mxu0 %v3867
    %4217 = vmatpush.bf16.msra.mxu0 %v3863
    %4218 = vmatpush.bf16.msra.mxu0 %v3859
    %4219 = vmatmul.bf16.gmra.mxu0 %v3237
    %v4220 = vpop.f32.mrf.mxu0
    %v4221 = vadd.f32 %v4208, %v4220
    %v4222 = vpop.f32.mrf.mxu0
    %4223 = vdwg.mxu0
    %v4224 = vpack.c.bf16 %v4065, %v4065
    %v4225 = vpack.c.bf16 %v4117, %v4117
    %v4226 = vpack.c.bf16 %v4169, %v4169
    %v4227 = vpack.c.bf16 %v4221, %v4221
    %s4228 = scalar_lea.vmem %s6, 256
    %v4229 = vld [vmem:[%s4228] sm:$0xff]
    %v4230 = vld [vmem:[%s4228 + $0x8] sm:$0xff]
    %v4231 = vld [vmem:[%s4228 + $0x10] sm:$0xff]
    %v4232 = vld [vmem:[%s4228 + $0x18] sm:$0xff]
    %v4233 = vld [vmem:[%s4228 + $0x20] sm:$0xff]
    %v4234 = vld [vmem:[%s4228 + $0x28] sm:$0xff]
    %v4235 = vld [vmem:[%s4228 + $0x30] sm:$0xff]
    %v4236 = vld [vmem:[%s4228 + $0x38] sm:$0xff]
    %v4237 = vld [vmem:[%s4228 + $0x40] sm:$0xff]
    %v4238 = vld [vmem:[%s4228 + $0x48] sm:$0xff]
    %v4239 = vld [vmem:[%s4228 + $0x50] sm:$0xff]
    %v4240 = vld [vmem:[%s4228 + $0x58] sm:$0xff]
    %v4241 = vld [vmem:[%s4228 + $0x60] sm:$0xff]
    %v4242 = vld [vmem:[%s4228 + $0x68] sm:$0xff]
    %v4243 = vld [vmem:[%s4228 + $0x70] sm:$0xff]
    %v4244 = vld [vmem:[%s4228 + $0x78] sm:$0xff]
    %v4245 = vld [vmem:[%s4228 + $0x80] sm:$0xff]
    %v4246 = vld [vmem:[%s4228 + $0x88] sm:$0xff]
    %v4247 = vld [vmem:[%s4228 + $0x90] sm:$0xff]
    %v4248 = vld [vmem:[%s4228 + $0x98] sm:$0xff]
    %v4249 = vld [vmem:[%s4228 + $0xa0] sm:$0xff]
    %v4250 = vld [vmem:[%s4228 + $0xa8] sm:$0xff]
    %v4251 = vld [vmem:[%s4228 + $0xb0] sm:$0xff]
    %v4252 = vld [vmem:[%s4228 + $0xb8] sm:$0xff]
    %v4253 = vld [vmem:[%s4228 + $0xc0] sm:$0xff]
    %v4254 = vld [vmem:[%s4228 + $0xc8] sm:$0xff]
    %v4255 = vld [vmem:[%s4228 + $0xd0] sm:$0xff]
    %v4256 = vld [vmem:[%s4228 + $0xd8] sm:$0xff]
    %v4257 = vld [vmem:[%s4228 + $0xe0] sm:$0xff]
    %v4258 = vld [vmem:[%s4228 + $0xe8] sm:$0xff]
    %v4259 = vld [vmem:[%s4228 + $0xf0] sm:$0xff]
    %v4260 = vld [vmem:[%s4228 + $0xf8] sm:$0xff]
    %s4261 = scalar_lea.vmem %s7, 16
    %v4262 = vld [vmem:[%s4261] sm:$0xff]
    %v4263 = vld [vmem:[%s4261 + $0x8] sm:$0xff]
    %v4266 = vunpack.c.l.b16 %v4262
    %v4267 = vunpack.c.h.b16 %v4262
    %v4268 = vunpack.c.l.b16 %v4263
    %v4269 = vunpack.c.h.b16 %v4263
    %v4270 = vpack.c.b16 %v4266, %v4266
    %v4271 = vpack.c.b16 %v4267, %v4267
    %v4272 = vpack.c.b16 %v4268, %v4268
    %v4273 = vpack.c.b16 %v4269, %v4269
    %v4275 = vsel %vm951, %v4270, 0
    %v4278 = vsel %vm951, %v4271, 0
    %v4281 = vsel %vm951, %v4272, 0
    %v4284 = vsel %vm951, %v4273, 0
    %4286 = vmatpush.bf16.msra.mxu0 0
    %4287 = vmatpush.bf16.msra.mxu0 0
    %4288 = vmatpush.bf16.msra.mxu0 0
    %4289 = vmatpush.bf16.msra.mxu0 0
    %4290 = vmatpush.bf16.msra.mxu0 0
    %4291 = vmatpush.bf16.msra.mxu0 0
    %4292 = vmatpush.bf16.msra.mxu0 0
    %4293 = vmatpush.bf16.msra.mxu0 %v4275
    %4294 = vmatmul.bf16.gmra.mxu0 %v949
    %v4295 = vpop.f32.mrf.mxu0
    %v4296 = vadd.f32 0.0, %v4295
    %v4297 = vpop.f32.mrf.mxu0
    %4298 = vdwg.mxu0
    %4299 = vmatpush.bf16.msra.mxu0 0
    %4300 = vmatpush.bf16.msra.mxu0 0
    %4301 = vmatpush.bf16.msra.mxu0 0
    %4302 = vmatpush.bf16.msra.mxu0 0
    %4303 = vmatpush.bf16.msra.mxu0 0
    %4304 = vmatpush.bf16.msra.mxu0 0
    %4305 = vmatpush.bf16.msra.mxu0 0
    %4306 = vmatpush.bf16.msra.mxu0 %v4278
    %4307 = vmatmul.bf16.gmra.mxu0 %v949
    %v4308 = vpop.f32.mrf.mxu0
    %v4309 = vadd.f32 0.0, %v4308
    %v4310 = vpop.f32.mrf.mxu0
    %4311 = vdwg.mxu0
    %4312 = vmatpush.bf16.msra.mxu0 0
    %4313 = vmatpush.bf16.msra.mxu0 0
    %4314 = vmatpush.bf16.msra.mxu0 0
    %4315 = vmatpush.bf16.msra.mxu0 0
    %4316 = vmatpush.bf16.msra.mxu0 0
    %4317 = vmatpush.bf16.msra.mxu0 0
    %4318 = vmatpush.bf16.msra.mxu0 0
    %4319 = vmatpush.bf16.msra.mxu0 %v4281
    %4320 = vmatmul.bf16.gmra.mxu0 %v949
    %v4321 = vpop.f32.mrf.mxu0
    %v4322 = vadd.f32 0.0, %v4321
    %v4323 = vpop.f32.mrf.mxu0
    %4324 = vdwg.mxu0
    %4325 = vmatpush.bf16.msra.mxu0 0
    %4326 = vmatpush.bf16.msra.mxu0 0
    %4327 = vmatpush.bf16.msra.mxu0 0
    %4328 = vmatpush.bf16.msra.mxu0 0
    %4329 = vmatpush.bf16.msra.mxu0 0
    %4330 = vmatpush.bf16.msra.mxu0 0
    %4331 = vmatpush.bf16.msra.mxu0 0
    %4332 = vmatpush.bf16.msra.mxu0 %v4284
    %4333 = vmatmul.bf16.gmra.mxu0 %v949
    %v4334 = vpop.f32.mrf.mxu0
    %v4335 = vadd.f32 0.0, %v4334
    %v4336 = vpop.f32.mrf.mxu0
    %4337 = vdwg.mxu0
    %v4370 = vunpack.c.l.b16 %v4229
    %v4371 = vunpack.c.h.b16 %v4229
    %v4372 = vunpack.c.l.b16 %v4230
    %v4373 = vunpack.c.h.b16 %v4230
    %v4374 = vunpack.c.l.b16 %v4231
    %v4375 = vunpack.c.h.b16 %v4231
    %v4376 = vunpack.c.l.b16 %v4232
    %v4377 = vunpack.c.h.b16 %v4232
    %v4378 = vunpack.c.l.b16 %v4233
    %v4379 = vunpack.c.h.b16 %v4233
    %v4380 = vunpack.c.l.b16 %v4234
    %v4381 = vunpack.c.h.b16 %v4234
    %v4382 = vunpack.c.l.b16 %v4235
    %v4383 = vunpack.c.h.b16 %v4235
    %v4384 = vunpack.c.l.b16 %v4236
    %v4385 = vunpack.c.h.b16 %v4236
    %v4386 = vunpack.c.l.b16 %v4237
    %v4387 = vunpack.c.h.b16 %v4237
    %v4388 = vunpack.c.l.b16 %v4238
    %v4389 = vunpack.c.h.b16 %v4238
    %v4390 = vunpack.c.l.b16 %v4239
    %v4391 = vunpack.c.h.b16 %v4239
    %v4392 = vunpack.c.l.b16 %v4240
    %v4393 = vunpack.c.h.b16 %v4240
    %v4394 = vunpack.c.l.b16 %v4241
    %v4395 = vunpack.c.h.b16 %v4241
    %v4396 = vunpack.c.l.b16 %v4242
    %v4397 = vunpack.c.h.b16 %v4242
    %v4398 = vunpack.c.l.b16 %v4243
    %v4399 = vunpack.c.h.b16 %v4243
    %v4400 = vunpack.c.l.b16 %v4244
    %v4401 = vunpack.c.h.b16 %v4244
    %v4402 = vunpack.c.l.b16 %v4245
    %v4403 = vunpack.c.h.b16 %v4245
    %v4404 = vunpack.c.l.b16 %v4246
    %v4405 = vunpack.c.h.b16 %v4246
    %v4406 = vunpack.c.l.b16 %v4247
    %v4407 = vunpack.c.h.b16 %v4247
    %v4408 = vunpack.c.l.b16 %v4248
    %v4409 = vunpack.c.h.b16 %v4248
    %v4410 = vunpack.c.l.b16 %v4249
    %v4411 = vunpack.c.h.b16 %v4249
    %v4412 = vunpack.c.l.b16 %v4250
    %v4413 = vunpack.c.h.b16 %v4250
    %v4414 = vunpack.c.l.b16 %v4251
    %v4415 = vunpack.c.h.b16 %v4251
    %v4416 = vunpack.c.l.b16 %v4252
    %v4417 = vunpack.c.h.b16 %v4252
    %v4418 = vunpack.c.l.b16 %v4253
    %v4419 = vunpack.c.h.b16 %v4253
    %v4420 = vunpack.c.l.b16 %v4254
    %v4421 = vunpack.c.h.b16 %v4254
    %v4422 = vunpack.c.l.b16 %v4255
    %v4423 = vunpack.c.h.b16 %v4255
    %v4424 = vunpack.c.l.b16 %v4256
    %v4425 = vunpack.c.h.b16 %v4256
    %v4426 = vunpack.c.l.b16 %v4257
    %v4427 = vunpack.c.h.b16 %v4257
    %v4428 = vunpack.c.l.b16 %v4258
    %v4429 = vunpack.c.h.b16 %v4258
    %v4430 = vunpack.c.l.b16 %v4259
    %v4431 = vunpack.c.h.b16 %v4259
    %v4432 = vunpack.c.l.b16 %v4260
    %v4433 = vunpack.c.h.b16 %v4260
    %v4434 = vpack.c.b16 %v4374, %v4370
    %v4435 = vpack.c.b16 %v4375, %v4371
    %v4436 = vpack.c.b16 %v4376, %v4372
    %v4437 = vpack.c.b16 %v4377, %v4373
    %v4438 = vpack.c.b16 %v4382, %v4378
    %v4439 = vpack.c.b16 %v4383, %v4379
    %v4440 = vpack.c.b16 %v4384, %v4380
    %v4441 = vpack.c.b16 %v4385, %v4381
    %v4442 = vpack.c.b16 %v4390, %v4386
    %v4443 = vpack.c.b16 %v4391, %v4387
    %v4444 = vpack.c.b16 %v4392, %v4388
    %v4445 = vpack.c.b16 %v4393, %v4389
    %v4446 = vpack.c.b16 %v4398, %v4394
    %v4447 = vpack.c.b16 %v4399, %v4395
    %v4448 = vpack.c.b16 %v4400, %v4396
    %v4449 = vpack.c.b16 %v4401, %v4397
    %v4450 = vpack.c.b16 %v4406, %v4402
    %v4451 = vpack.c.b16 %v4407, %v4403
    %v4452 = vpack.c.b16 %v4408, %v4404
    %v4453 = vpack.c.b16 %v4409, %v4405
    %v4454 = vpack.c.b16 %v4414, %v4410
    %v4455 = vpack.c.b16 %v4415, %v4411
    %v4456 = vpack.c.b16 %v4416, %v4412
    %v4457 = vpack.c.b16 %v4417, %v4413
    %v4458 = vpack.c.b16 %v4422, %v4418
    %v4459 = vpack.c.b16 %v4423, %v4419
    %v4460 = vpack.c.b16 %v4424, %v4420
    %v4461 = vpack.c.b16 %v4425, %v4421
    %v4462 = vpack.c.b16 %v4430, %v4426
    %v4463 = vpack.c.b16 %v4431, %v4427
    %v4464 = vpack.c.b16 %v4432, %v4428
    %v4465 = vpack.c.b16 %v4433, %v4429
    %4498 = vmatpush.bf16.msra.mxu0 %v4462
    %4499 = vmatpush.bf16.msra.mxu0 %v4458
    %4500 = vmatpush.bf16.msra.mxu0 %v4454
    %4501 = vmatpush.bf16.msra.mxu0 %v4450
    %4502 = vmatpush.bf16.msra.mxu0 %v4446
    %4503 = vmatpush.bf16.msra.mxu0 %v4442
    %4504 = vmatpush.bf16.msra.mxu0 %v4438
    %4505 = vmatpush.bf16.msra.mxu0 %v4434
    %4506 = vmatmul.bf16.gmra.mxu0 %v894
    %v4507 = vpop.f32.mrf.mxu0
    %v4508 = vadd.f32 %v4296, %v4507
    %v4509 = vpop.f32.mrf.mxu0
    %4510 = vdwg.mxu0
    %4511 = vmatpush.bf16.msra.mxu0 %v4463
    %4512 = vmatpush.bf16.msra.mxu0 %v4459
    %4513 = vmatpush.bf16.msra.mxu0 %v4455
    %4514 = vmatpush.bf16.msra.mxu0 %v4451
    %4515 = vmatpush.bf16.msra.mxu0 %v4447
    %4516 = vmatpush.bf16.msra.mxu0 %v4443
    %4517 = vmatpush.bf16.msra.mxu0 %v4439
    %4518 = vmatpush.bf16.msra.mxu0 %v4435
    %4519 = vmatmul.bf16.gmra.mxu0 %v894
    %v4520 = vpop.f32.mrf.mxu0
    %v4521 = vadd.f32 %v4309, %v4520
    %v4522 = vpop.f32.mrf.mxu0
    %4523 = vdwg.mxu0
    %4524 = vmatpush.bf16.msra.mxu0 %v4464
    %4525 = vmatpush.bf16.msra.mxu0 %v4460
    %4526 = vmatpush.bf16.msra.mxu0 %v4456
    %4527 = vmatpush.bf16.msra.mxu0 %v4452
    %4528 = vmatpush.bf16.msra.mxu0 %v4448
    %4529 = vmatpush.bf16.msra.mxu0 %v4444
    %4530 = vmatpush.bf16.msra.mxu0 %v4440
    %4531 = vmatpush.bf16.msra.mxu0 %v4436
    %4532 = vmatmul.bf16.gmra.mxu0 %v894
    %v4533 = vpop.f32.mrf.mxu0
    %v4534 = vadd.f32 %v4322, %v4533
    %v4535 = vpop.f32.mrf.mxu0
    %4536 = vdwg.mxu0
    %4537 = vmatpush.bf16.msra.mxu0 %v4465
    %4538 = vmatpush.bf16.msra.mxu0 %v4461
    %4539 = vmatpush.bf16.msra.mxu0 %v4457
    %4540 = vmatpush.bf16.msra.mxu0 %v4453
    %4541 = vmatpush.bf16.msra.mxu0 %v4449
    %4542 = vmatpush.bf16.msra.mxu0 %v4445
    %4543 = vmatpush.bf16.msra.mxu0 %v4441
    %4544 = vmatpush.bf16.msra.mxu0 %v4437
    %4545 = vmatmul.bf16.gmra.mxu0 %v894
    %v4546 = vpop.f32.mrf.mxu0
    %v4547 = vadd.f32 %v4335, %v4546
    %v4548 = vpop.f32.mrf.mxu0
    %4549 = vdwg.mxu0
    %s4550 = scalar_lea.vmem %s8, 4
    %v4551 = vld [vmem:[%s4550] sm:$0xf]
    %v4553 = vperm.slane %v4551, 0
    %v4554 = vperm.slane %v4551, 1
    %v4555 = vperm.slane %v4551, 2
    %v4556 = vperm.slane %v4551, 3
    %v4561 = vadd.f32 %v4508, %v4553
    %v4562 = vadd.f32 %v4521, %v4554
    %v4563 = vadd.f32 %v4534, %v4555
    %v4564 = vadd.f32 %v4547, %v4556
    %v4565 = vtanh.pop %v4561
    %v4566 = vtanh.pop %v4562
    %v4567 = vtanh.pop %v4563
    %v4568 = vtanh.pop %v4564
    %v4569 = vpack.c.bf16 %v4565, %v4565
    %v4570 = vpack.c.bf16 %v4566, %v4566
    %v4571 = vpack.c.bf16 %v4567, %v4567
    %v4572 = vpack.c.bf16 %v4568, %v4568
    %s4573 = scalar_lea.vmem %s9, 1024
    %v4574 = vld [vmem:[%s4573] sm:$0xff]
    %v4575 = vld [vmem:[%s4573 + $0x8] sm:$0xff]
    %v4576 = vld [vmem:[%s4573 + $0x10] sm:$0xff]
    %v4577 = vld [vmem:[%s4573 + $0x18] sm:$0xff]
    %v4578 = vld [vmem:[%s4573 + $0x20] sm:$0xff]
    %v4579 = vld [vmem:[%s4573 + $0x28] sm:$0xff]
    %v4580 = vld [vmem:[%s4573 + $0x30] sm:$0xff]
    %v4581 = vld [vmem:[%s4573 + $0x38] sm:$0xff]
    %v4582 = vld [vmem:[%s4573 + $0x40] sm:$0xff]
    %v4583 = vld [vmem:[%s4573 + $0x48] sm:$0xff]
    %v4584 = vld [vmem:[%s4573 + $0x50] sm:$0xff]
    %v4585 = vld [vmem:[%s4573 + $0x58] sm:$0xff]
    %v4586 = vld [vmem:[%s4573 + $0x60] sm:$0xff]
    %v4587 = vld [vmem:[%s4573 + $0x68] sm:$0xff]
    %v4588 = vld [vmem:[%s4573 + $0x70] sm:$0xff]
    %v4589 = vld [vmem:[%s4573 + $0x78] sm:$0xff]
    %v4590 = vld [vmem:[%s4573 + $0x80] sm:$0xff]
    %v4591 = vld [vmem:[%s4573 + $0x88] sm:$0xff]
    %v4592 = vld [vmem:[%s4573 + $0x90] sm:$0xff]
    %v4593 = vld [vmem:[%s4573 + $0x98] sm:$0xff]
    %v4594 = vld [vmem:[%s4573 + $0xa0] sm:$0xff]
    %v4595 = vld [vmem:[%s4573 + $0xa8] sm:$0xff]
    %v4596 = vld [vmem:[%s4573 + $0xb0] sm:$0xff]
    %v4597 = vld [vmem:[%s4573 + $0xb8] sm:$0xff]
    %v4598 = vld [vmem:[%s4573 + $0xc0] sm:$0xff]
    %v4599 = vld [vmem:[%s4573 + $0xc8] sm:$0xff]
    %v4600 = vld [vmem:[%s4573 + $0xd0] sm:$0xff]
    %v4601 = vld [vmem:[%s4573 + $0xd8] sm:$0xff]
    %v4602 = vld [vmem:[%s4573 + $0xe0] sm:$0xff]
    %v4603 = vld [vmem:[%s4573 + $0xe8] sm:$0xff]
    %v4604 = vld [vmem:[%s4573 + $0xf0] sm:$0xff]
    %v4605 = vld [vmem:[%s4573 + $0xf8] sm:$0xff]
    %v4606 = vld [vmem:[%s4573 + $0x100] sm:$0xff]
    %v4607 = vld [vmem:[%s4573 + $0x108] sm:$0xff]
    %v4608 = vld [vmem:[%s4573 + $0x110] sm:$0xff]
    %v4609 = vld [vmem:[%s4573 + $0x118] sm:$0xff]
    %v4610 = vld [vmem:[%s4573 + $0x120] sm:$0xff]
    %v4611 = vld [vmem:[%s4573 + $0x128] sm:$0xff]
    %v4612 = vld [vmem:[%s4573 + $0x130] sm:$0xff]
    %v4613 = vld [vmem:[%s4573 + $0x138] sm:$0xff]
    %v4614 = vld [vmem:[%s4573 + $0x140] sm:$0xff]
    %v4615 = vld [vmem:[%s4573 + $0x148] sm:$0xff]
    %v4616 = vld [vmem:[%s4573 + $0x150] sm:$0xff]
    %v4617 = vld [vmem:[%s4573 + $0x158] sm:$0xff]
    %v4618 = vld [vmem:[%s4573 + $0x160] sm:$0xff]
    %v4619 = vld [vmem:[%s4573 + $0x168] sm:$0xff]
    %v4620 = vld [vmem:[%s4573 + $0x170] sm:$0xff]
    %v4621 = vld [vmem:[%s4573 + $0x178] sm:$0xff]
    %v4622 = vld [vmem:[%s4573 + $0x180] sm:$0xff]
    %v4623 = vld [vmem:[%s4573 + $0x188] sm:$0xff]
    %v4624 = vld [vmem:[%s4573 + $0x190] sm:$0xff]
    %v4625 = vld [vmem:[%s4573 + $0x198] sm:$0xff]
    %v4626 = vld [vmem:[%s4573 + $0x1a0] sm:$0xff]
    %v4627 = vld [vmem:[%s4573 + $0x1a8] sm:$0xff]
    %v4628 = vld [vmem:[%s4573 + $0x1b0] sm:$0xff]
    %v4629 = vld [vmem:[%s4573 + $0x1b8] sm:$0xff]
    %v4630 = vld [vmem:[%s4573 + $0x1c0] sm:$0xff]
    %v4631 = vld [vmem:[%s4573 + $0x1c8] sm:$0xff]
    %v4632 = vld [vmem:[%s4573 + $0x1d0] sm:$0xff]
    %v4633 = vld [vmem:[%s4573 + $0x1d8] sm:$0xff]
    %v4634 = vld [vmem:[%s4573 + $0x1e0] sm:$0xff]
    %v4635 = vld [vmem:[%s4573 + $0x1e8] sm:$0xff]
    %v4636 = vld [vmem:[%s4573 + $0x1f0] sm:$0xff]
    %v4637 = vld [vmem:[%s4573 + $0x1f8] sm:$0xff]
    %v4638 = vld [vmem:[%s4573 + $0x200] sm:$0xff]
    %v4639 = vld [vmem:[%s4573 + $0x208] sm:$0xff]
    %v4640 = vld [vmem:[%s4573 + $0x210] sm:$0xff]
    %v4641 = vld [vmem:[%s4573 + $0x218] sm:$0xff]
    %v4642 = vld [vmem:[%s4573 + $0x220] sm:$0xff]
    %v4643 = vld [vmem:[%s4573 + $0x228] sm:$0xff]
    %v4644 = vld [vmem:[%s4573 + $0x230] sm:$0xff]
    %v4645 = vld [vmem:[%s4573 + $0x238] sm:$0xff]
    %v4646 = vld [vmem:[%s4573 + $0x240] sm:$0xff]
    %v4647 = vld [vmem:[%s4573 + $0x248] sm:$0xff]
    %v4648 = vld [vmem:[%s4573 + $0x250] sm:$0xff]
    %v4649 = vld [vmem:[%s4573 + $0x258] sm:$0xff]
    %v4650 = vld [vmem:[%s4573 + $0x260] sm:$0xff]
    %v4651 = vld [vmem:[%s4573 + $0x268] sm:$0xff]
    %v4652 = vld [vmem:[%s4573 + $0x270] sm:$0xff]
    %v4653 = vld [vmem:[%s4573 + $0x278] sm:$0xff]
    %v4654 = vld [vmem:[%s4573 + $0x280] sm:$0xff]
    %v4655 = vld [vmem:[%s4573 + $0x288] sm:$0xff]
    %v4656 = vld [vmem:[%s4573 + $0x290] sm:$0xff]
    %v4657 = vld [vmem:[%s4573 + $0x298] sm:$0xff]
    %v4658 = vld [vmem:[%s4573 + $0x2a0] sm:$0xff]
    %v4659 = vld [vmem:[%s4573 + $0x2a8] sm:$0xff]
    %v4660 = vld [vmem:[%s4573 + $0x2b0] sm:$0xff]
    %v4661 = vld [vmem:[%s4573 + $0x2b8] sm:$0xff]
    %v4662 = vld [vmem:[%s4573 + $0x2c0] sm:$0xff]
    %v4663 = vld [vmem:[%s4573 + $0x2c8] sm:$0xff]
    %v4664 = vld [vmem:[%s4573 + $0x2d0] sm:$0xff]
    %v4665 = vld [vmem:[%s4573 + $0x2d8] sm:$0xff]
    %v4666 = vld [vmem:[%s4573 + $0x2e0] sm:$0xff]
    %v4667 = vld [vmem:[%s4573 + $0x2e8] sm:$0xff]
    %v4668 = vld [vmem:[%s4573 + $0x2f0] sm:$0xff]
    %v4669 = vld [vmem:[%s4573 + $0x2f8] sm:$0xff]
    %v4670 = vld [vmem:[%s4573 + $0x300] sm:$0xff]
    %v4671 = vld [vmem:[%s4573 + $0x308] sm:$0xff]
    %v4672 = vld [vmem:[%s4573 + $0x310] sm:$0xff]
    %v4673 = vld [vmem:[%s4573 + $0x318] sm:$0xff]
    %v4674 = vld [vmem:[%s4573 + $0x320] sm:$0xff]
    %v4675 = vld [vmem:[%s4573 + $0x328] sm:$0xff]
    %v4676 = vld [vmem:[%s4573 + $0x330] sm:$0xff]
    %v4677 = vld [vmem:[%s4573 + $0x338] sm:$0xff]
    %v4678 = vld [vmem:[%s4573 + $0x340] sm:$0xff]
    %v4679 = vld [vmem:[%s4573 + $0x348] sm:$0xff]
    %v4680 = vld [vmem:[%s4573 + $0x350] sm:$0xff]
    %v4681 = vld [vmem:[%s4573 + $0x358] sm:$0xff]
    %v4682 = vld [vmem:[%s4573 + $0x360] sm:$0xff]
    %v4683 = vld [vmem:[%s4573 + $0x368] sm:$0xff]
    %v4684 = vld [vmem:[%s4573 + $0x370] sm:$0xff]
    %v4685 = vld [vmem:[%s4573 + $0x378] sm:$0xff]
    %v4686 = vld [vmem:[%s4573 + $0x380] sm:$0xff]
    %v4687 = vld [vmem:[%s4573 + $0x388] sm:$0xff]
    %v4688 = vld [vmem:[%s4573 + $0x390] sm:$0xff]
    %v4689 = vld [vmem:[%s4573 + $0x398] sm:$0xff]
    %v4690 = vld [vmem:[%s4573 + $0x3a0] sm:$0xff]
    %v4691 = vld [vmem:[%s4573 + $0x3a8] sm:$0xff]
    %v4692 = vld [vmem:[%s4573 + $0x3b0] sm:$0xff]
    %v4693 = vld [vmem:[%s4573 + $0x3b8] sm:$0xff]
    %v4694 = vld [vmem:[%s4573 + $0x3c0] sm:$0xff]
    %v4695 = vld [vmem:[%s4573 + $0x3c8] sm:$0xff]
    %v4696 = vld [vmem:[%s4573 + $0x3d0] sm:$0xff]
    %v4697 = vld [vmem:[%s4573 + $0x3d8] sm:$0xff]
    %v4698 = vld [vmem:[%s4573 + $0x3e0] sm:$0xff]
    %v4699 = vld [vmem:[%s4573 + $0x3e8] sm:$0xff]
    %v4700 = vld [vmem:[%s4573 + $0x3f0] sm:$0xff]
    %v4701 = vld [vmem:[%s4573 + $0x3f8] sm:$0xff]
    %s4702 = scalar_lea.vmem %s10, 4
    %v4703 = vld [vmem:[%s4702] sm:$0xf]
    %v4705 = vperm.slane %v4703, 0
    %v4706 = vperm.slane %v4703, 1
    %v4707 = vperm.slane %v4703, 2
    %v4708 = vperm.slane %v4703, 3
    %v4841 = vunpack.c.l.b16 %v4574
    %v4842 = vunpack.c.h.b16 %v4574
    %v4843 = vunpack.c.l.b16 %v4575
    %v4844 = vunpack.c.h.b16 %v4575
    %v4845 = vunpack.c.l.b16 %v4576
    %v4846 = vunpack.c.h.b16 %v4576
    %v4847 = vunpack.c.l.b16 %v4577
    %v4848 = vunpack.c.h.b16 %v4577
    %v4849 = vunpack.c.l.b16 %v4578
    %v4850 = vunpack.c.h.b16 %v4578
    %v4851 = vunpack.c.l.b16 %v4579
    %v4852 = vunpack.c.h.b16 %v4579
    %v4853 = vunpack.c.l.b16 %v4580
    %v4854 = vunpack.c.h.b16 %v4580
    %v4855 = vunpack.c.l.b16 %v4581
    %v4856 = vunpack.c.h.b16 %v4581
    %v4857 = vunpack.c.l.b16 %v4582
    %v4858 = vunpack.c.h.b16 %v4582
    %v4859 = vunpack.c.l.b16 %v4583
    %v4860 = vunpack.c.h.b16 %v4583
    %v4861 = vunpack.c.l.b16 %v4584
    %v4862 = vunpack.c.h.b16 %v4584
    %v4863 = vunpack.c.l.b16 %v4585
    %v4864 = vunpack.c.h.b16 %v4585
    %v4865 = vunpack.c.l.b16 %v4586
    %v4866 = vunpack.c.h.b16 %v4586
    %v4867 = vunpack.c.l.b16 %v4587
    %v4868 = vunpack.c.h.b16 %v4587
    %v4869 = vunpack.c.l.b16 %v4588
    %v4870 = vunpack.c.h.b16 %v4588
    %v4871 = vunpack.c.l.b16 %v4589
    %v4872 = vunpack.c.h.b16 %v4589
    %v4873 = vunpack.c.l.b16 %v4590
    %v4874 = vunpack.c.h.b16 %v4590
    %v4875 = vunpack.c.l.b16 %v4591
    %v4876 = vunpack.c.h.b16 %v4591
    %v4877 = vunpack.c.l.b16 %v4592
    %v4878 = vunpack.c.h.b16 %v4592
    %v4879 = vunpack.c.l.b16 %v4593
    %v4880 = vunpack.c.h.b16 %v4593
    %v4881 = vunpack.c.l.b16 %v4594
    %v4882 = vunpack.c.h.b16 %v4594
    %v4883 = vunpack.c.l.b16 %v4595
    %v4884 = vunpack.c.h.b16 %v4595
    %v4885 = vunpack.c.l.b16 %v4596
    %v4886 = vunpack.c.h.b16 %v4596
    %v4887 = vunpack.c.l.b16 %v4597
    %v4888 = vunpack.c.h.b16 %v4597
    %v4889 = vunpack.c.l.b16 %v4598
    %v4890 = vunpack.c.h.b16 %v4598
    %v4891 = vunpack.c.l.b16 %v4599
    %v4892 = vunpack.c.h.b16 %v4599
    %v4893 = vunpack.c.l.b16 %v4600
    %v4894 = vunpack.c.h.b16 %v4600
    %v4895 = vunpack.c.l.b16 %v4601
    %v4896 = vunpack.c.h.b16 %v4601
    %v4897 = vunpack.c.l.b16 %v4602
    %v4898 = vunpack.c.h.b16 %v4602
    %v4899 = vunpack.c.l.b16 %v4603
    %v4900 = vunpack.c.h.b16 %v4603
    %v4901 = vunpack.c.l.b16 %v4604
    %v4902 = vunpack.c.h.b16 %v4604
    %v4903 = vunpack.c.l.b16 %v4605
    %v4904 = vunpack.c.h.b16 %v4605
    %v4905 = vunpack.c.l.b16 %v4606
    %v4906 = vunpack.c.h.b16 %v4606
    %v4907 = vunpack.c.l.b16 %v4607
    %v4908 = vunpack.c.h.b16 %v4607
    %v4909 = vunpack.c.l.b16 %v4608
    %v4910 = vunpack.c.h.b16 %v4608
    %v4911 = vunpack.c.l.b16 %v4609
    %v4912 = vunpack.c.h.b16 %v4609
    %v4913 = vunpack.c.l.b16 %v4610
    %v4914 = vunpack.c.h.b16 %v4610
    %v4915 = vunpack.c.l.b16 %v4611
    %v4916 = vunpack.c.h.b16 %v4611
    %v4917 = vunpack.c.l.b16 %v4612
    %v4918 = vunpack.c.h.b16 %v4612
    %v4919 = vunpack.c.l.b16 %v4613
    %v4920 = vunpack.c.h.b16 %v4613
    %v4921 = vunpack.c.l.b16 %v4614
    %v4922 = vunpack.c.h.b16 %v4614
    %v4923 = vunpack.c.l.b16 %v4615
    %v4924 = vunpack.c.h.b16 %v4615
    %v4925 = vunpack.c.l.b16 %v4616
    %v4926 = vunpack.c.h.b16 %v4616
    %v4927 = vunpack.c.l.b16 %v4617
    %v4928 = vunpack.c.h.b16 %v4617
    %v4929 = vunpack.c.l.b16 %v4618
    %v4930 = vunpack.c.h.b16 %v4618
    %v4931 = vunpack.c.l.b16 %v4619
    %v4932 = vunpack.c.h.b16 %v4619
    %v4933 = vunpack.c.l.b16 %v4620
    %v4934 = vunpack.c.h.b16 %v4620
    %v4935 = vunpack.c.l.b16 %v4621
    %v4936 = vunpack.c.h.b16 %v4621
    %v4937 = vunpack.c.l.b16 %v4622
    %v4938 = vunpack.c.h.b16 %v4622
    %v4939 = vunpack.c.l.b16 %v4623
    %v4940 = vunpack.c.h.b16 %v4623
    %v4941 = vunpack.c.l.b16 %v4624
    %v4942 = vunpack.c.h.b16 %v4624
    %v4943 = vunpack.c.l.b16 %v4625
    %v4944 = vunpack.c.h.b16 %v4625
    %v4945 = vunpack.c.l.b16 %v4626
    %v4946 = vunpack.c.h.b16 %v4626
    %v4947 = vunpack.c.l.b16 %v4627
    %v4948 = vunpack.c.h.b16 %v4627
    %v4949 = vunpack.c.l.b16 %v4628
    %v4950 = vunpack.c.h.b16 %v4628
    %v4951 = vunpack.c.l.b16 %v4629
    %v4952 = vunpack.c.h.b16 %v4629
    %v4953 = vunpack.c.l.b16 %v4630
    %v4954 = vunpack.c.h.b16 %v4630
    %v4955 = vunpack.c.l.b16 %v4631
    %v4956 = vunpack.c.h.b16 %v4631
    %v4957 = vunpack.c.l.b16 %v4632
    %v4958 = vunpack.c.h.b16 %v4632
    %v4959 = vunpack.c.l.b16 %v4633
    %v4960 = vunpack.c.h.b16 %v4633
    %v4961 = vunpack.c.l.b16 %v4634
    %v4962 = vunpack.c.h.b16 %v4634
    %v4963 = vunpack.c.l.b16 %v4635
    %v4964 = vunpack.c.h.b16 %v4635
    %v4965 = vunpack.c.l.b16 %v4636
    %v4966 = vunpack.c.h.b16 %v4636
    %v4967 = vunpack.c.l.b16 %v4637
    %v4968 = vunpack.c.h.b16 %v4637
    %v4969 = vunpack.c.l.b16 %v4638
    %v4970 = vunpack.c.h.b16 %v4638
    %v4971 = vunpack.c.l.b16 %v4639
    %v4972 = vunpack.c.h.b16 %v4639
    %v4973 = vunpack.c.l.b16 %v4640
    %v4974 = vunpack.c.h.b16 %v4640
    %v4975 = vunpack.c.l.b16 %v4641
    %v4976 = vunpack.c.h.b16 %v4641
    %v4977 = vunpack.c.l.b16 %v4642
    %v4978 = vunpack.c.h.b16 %v4642
    %v4979 = vunpack.c.l.b16 %v4643
    %v4980 = vunpack.c.h.b16 %v4643
    %v4981 = vunpack.c.l.b16 %v4644
    %v4982 = vunpack.c.h.b16 %v4644
    %v4983 = vunpack.c.l.b16 %v4645
    %v4984 = vunpack.c.h.b16 %v4645
    %v4985 = vunpack.c.l.b16 %v4646
    %v4986 = vunpack.c.h.b16 %v4646
    %v4987 = vunpack.c.l.b16 %v4647
    %v4988 = vunpack.c.h.b16 %v4647
    %v4989 = vunpack.c.l.b16 %v4648
    %v4990 = vunpack.c.h.b16 %v4648
    %v4991 = vunpack.c.l.b16 %v4649
    %v4992 = vunpack.c.h.b16 %v4649
    %v4993 = vunpack.c.l.b16 %v4650
    %v4994 = vunpack.c.h.b16 %v4650
    %v4995 = vunpack.c.l.b16 %v4651
    %v4996 = vunpack.c.h.b16 %v4651
    %v4997 = vunpack.c.l.b16 %v4652
    %v4998 = vunpack.c.h.b16 %v4652
    %v4999 = vunpack.c.l.b16 %v4653
    %v5000 = vunpack.c.h.b16 %v4653
    %v5001 = vunpack.c.l.b16 %v4654
    %v5002 = vunpack.c.h.b16 %v4654
    %v5003 = vunpack.c.l.b16 %v4655
    %v5004 = vunpack.c.h.b16 %v4655
    %v5005 = vunpack.c.l.b16 %v4656
    %v5006 = vunpack.c.h.b16 %v4656
    %v5007 = vunpack.c.l.b16 %v4657
    %v5008 = vunpack.c.h.b16 %v4657
    %v5009 = vunpack.c.l.b16 %v4658
    %v5010 = vunpack.c.h.b16 %v4658
    %v5011 = vunpack.c.l.b16 %v4659
    %v5012 = vunpack.c.h.b16 %v4659
    %v5013 = vunpack.c.l.b16 %v4660
    %v5014 = vunpack.c.h.b16 %v4660
    %v5015 = vunpack.c.l.b16 %v4661
    %v5016 = vunpack.c.h.b16 %v4661
    %v5017 = vunpack.c.l.b16 %v4662
    %v5018 = vunpack.c.h.b16 %v4662
    %v5019 = vunpack.c.l.b16 %v4663
    %v5020 = vunpack.c.h.b16 %v4663
    %v5021 = vunpack.c.l.b16 %v4664
    %v5022 = vunpack.c.h.b16 %v4664
    %v5023 = vunpack.c.l.b16 %v4665
    %v5024 = vunpack.c.h.b16 %v4665
    %v5025 = vunpack.c.l.b16 %v4666
    %v5026 = vunpack.c.h.b16 %v4666
    %v5027 = vunpack.c.l.b16 %v4667
    %v5028 = vunpack.c.h.b16 %v4667
    %v5029 = vunpack.c.l.b16 %v4668
    %v5030 = vunpack.c.h.b16 %v4668
    %v5031 = vunpack.c.l.b16 %v4669
    %v5032 = vunpack.c.h.b16 %v4669
    %v5033 = vunpack.c.l.b16 %v4670
    %v5034 = vunpack.c.h.b16 %v4670
    %v5035 = vunpack.c.l.b16 %v4671
    %v5036 = vunpack.c.h.b16 %v4671
    %v5037 = vunpack.c.l.b16 %v4672
    %v5038 = vunpack.c.h.b16 %v4672
    %v5039 = vunpack.c.l.b16 %v4673
    %v5040 = vunpack.c.h.b16 %v4673
    %v5041 = vunpack.c.l.b16 %v4674
    %v5042 = vunpack.c.h.b16 %v4674
    %v5043 = vunpack.c.l.b16 %v4675
    %v5044 = vunpack.c.h.b16 %v4675
    %v5045 = vunpack.c.l.b16 %v4676
    %v5046 = vunpack.c.h.b16 %v4676
    %v5047 = vunpack.c.l.b16 %v4677
    %v5048 = vunpack.c.h.b16 %v4677
    %v5049 = vunpack.c.l.b16 %v4678
    %v5050 = vunpack.c.h.b16 %v4678
    %v5051 = vunpack.c.l.b16 %v4679
    %v5052 = vunpack.c.h.b16 %v4679
    %v5053 = vunpack.c.l.b16 %v4680
    %v5054 = vunpack.c.h.b16 %v4680
    %v5055 = vunpack.c.l.b16 %v4681
    %v5056 = vunpack.c.h.b16 %v4681
    %v5057 = vunpack.c.l.b16 %v4682
    %v5058 = vunpack.c.h.b16 %v4682
    %v5059 = vunpack.c.l.b16 %v4683
    %v5060 = vunpack.c.h.b16 %v4683
    %v5061 = vunpack.c.l.b16 %v4684
    %v5062 = vunpack.c.h.b16 %v4684
    %v5063 = vunpack.c.l.b16 %v4685
    %v5064 = vunpack.c.h.b16 %v4685
    %v5065 = vunpack.c.l.b16 %v4686
    %v5066 = vunpack.c.h.b16 %v4686
    %v5067 = vunpack.c.l.b16 %v4687
    %v5068 = vunpack.c.h.b16 %v4687
    %v5069 = vunpack.c.l.b16 %v4688
    %v5070 = vunpack.c.h.b16 %v4688
    %v5071 = vunpack.c.l.b16 %v4689
    %v5072 = vunpack.c.h.b16 %v4689
    %v5073 = vunpack.c.l.b16 %v4690
    %v5074 = vunpack.c.h.b16 %v4690
    %v5075 = vunpack.c.l.b16 %v4691
    %v5076 = vunpack.c.h.b16 %v4691
    %v5077 = vunpack.c.l.b16 %v4692
    %v5078 = vunpack.c.h.b16 %v4692
    %v5079 = vunpack.c.l.b16 %v4693
    %v5080 = vunpack.c.h.b16 %v4693
    %v5081 = vunpack.c.l.b16 %v4694
    %v5082 = vunpack.c.h.b16 %v4694
    %v5083 = vunpack.c.l.b16 %v4695
    %v5084 = vunpack.c.h.b16 %v4695
    %v5085 = vunpack.c.l.b16 %v4696
    %v5086 = vunpack.c.h.b16 %v4696
    %v5087 = vunpack.c.l.b16 %v4697
    %v5088 = vunpack.c.h.b16 %v4697
    %v5089 = vunpack.c.l.b16 %v4698
    %v5090 = vunpack.c.h.b16 %v4698
    %v5091 = vunpack.c.l.b16 %v4699
    %v5092 = vunpack.c.h.b16 %v4699
    %v5093 = vunpack.c.l.b16 %v4700
    %v5094 = vunpack.c.h.b16 %v4700
    %v5095 = vunpack.c.l.b16 %v4701
    %v5096 = vunpack.c.h.b16 %v4701
    %v5097 = vpack.c.b16 %v4845, %v4841
    %v5098 = vpack.c.b16 %v4846, %v4842
    %v5099 = vpack.c.b16 %v4847, %v4843
    %v5100 = vpack.c.b16 %v4848, %v4844
    %v5101 = vpack.c.b16 %v4853, %v4849
    %v5102 = vpack.c.b16 %v4854, %v4850
    %v5103 = vpack.c.b16 %v4855, %v4851
    %v5104 = vpack.c.b16 %v4856, %v4852
    %v5105 = vpack.c.b16 %v4861, %v4857
    %v5106 = vpack.c.b16 %v4862, %v4858
    %v5107 = vpack.c.b16 %v4863, %v4859
    %v5108 = vpack.c.b16 %v4864, %v4860
    %v5109 = vpack.c.b16 %v4869, %v4865
    %v5110 = vpack.c.b16 %v4870, %v4866
    %v5111 = vpack.c.b16 %v4871, %v4867
    %v5112 = vpack.c.b16 %v4872, %v4868
    %v5113 = vpack.c.b16 %v4877, %v4873
    %v5114 = vpack.c.b16 %v4878, %v4874
    %v5115 = vpack.c.b16 %v4879, %v4875
    %v5116 = vpack.c.b16 %v4880, %v4876
    %v5117 = vpack.c.b16 %v4885, %v4881
    %v5118 = vpack.c.b16 %v4886, %v4882
    %v5119 = vpack.c.b16 %v4887, %v4883
    %v5120 = vpack.c.b16 %v4888, %v4884
    %v5121 = vpack.c.b16 %v4893, %v4889
    %v5122 = vpack.c.b16 %v4894, %v4890
    %v5123 = vpack.c.b16 %v4895, %v4891
    %v5124 = vpack.c.b16 %v4896, %v4892
    %v5125 = vpack.c.b16 %v4901, %v4897
    %v5126 = vpack.c.b16 %v4902, %v4898
    %v5127 = vpack.c.b16 %v4903, %v4899
    %v5128 = vpack.c.b16 %v4904, %v4900
    %v5129 = vpack.c.b16 %v4909, %v4905
    %v5130 = vpack.c.b16 %v4910, %v4906
    %v5131 = vpack.c.b16 %v4911, %v4907
    %v5132 = vpack.c.b16 %v4912, %v4908
    %v5133 = vpack.c.b16 %v4917, %v4913
    %v5134 = vpack.c.b16 %v4918, %v4914
    %v5135 = vpack.c.b16 %v4919, %v4915
    %v5136 = vpack.c.b16 %v4920, %v4916
    %v5137 = vpack.c.b16 %v4925, %v4921
    %v5138 = vpack.c.b16 %v4926, %v4922
    %v5139 = vpack.c.b16 %v4927, %v4923
    %v5140 = vpack.c.b16 %v4928, %v4924
    %v5141 = vpack.c.b16 %v4933, %v4929
    %v5142 = vpack.c.b16 %v4934, %v4930
    %v5143 = vpack.c.b16 %v4935, %v4931
    %v5144 = vpack.c.b16 %v4936, %v4932
    %v5145 = vpack.c.b16 %v4941, %v4937
    %v5146 = vpack.c.b16 %v4942, %v4938
    %v5147 = vpack.c.b16 %v4943, %v4939
    %v5148 = vpack.c.b16 %v4944, %v4940
    %v5149 = vpack.c.b16 %v4949, %v4945
    %v5150 = vpack.c.b16 %v4950, %v4946
    %v5151 = vpack.c.b16 %v4951, %v4947
    %v5152 = vpack.c.b16 %v4952, %v4948
    %v5153 = vpack.c.b16 %v4957, %v4953
    %v5154 = vpack.c.b16 %v4958, %v4954
    %v5155 = vpack.c.b16 %v4959, %v4955
    %v5156 = vpack.c.b16 %v4960, %v4956
    %v5157 = vpack.c.b16 %v4965, %v4961
    %v5158 = vpack.c.b16 %v4966, %v4962
    %v5159 = vpack.c.b16 %v4967, %v4963
    %v5160 = vpack.c.b16 %v4968, %v4964
    %v5161 = vpack.c.b16 %v4973, %v4969
    %v5162 = vpack.c.b16 %v4974, %v4970
    %v5163 = vpack.c.b16 %v4975, %v4971
    %v5164 = vpack.c.b16 %v4976, %v4972
    %v5165 = vpack.c.b16 %v4981, %v4977
    %v5166 = vpack.c.b16 %v4982, %v4978
    %v5167 = vpack.c.b16 %v4983, %v4979
    %v5168 = vpack.c.b16 %v4984, %v4980
    %v5169 = vpack.c.b16 %v4989, %v4985
    %v5170 = vpack.c.b16 %v4990, %v4986
    %v5171 = vpack.c.b16 %v4991, %v4987
    %v5172 = vpack.c.b16 %v4992, %v4988
    %v5173 = vpack.c.b16 %v4997, %v4993
    %v5174 = vpack.c.b16 %v4998, %v4994
    %v5175 = vpack.c.b16 %v4999, %v4995
    %v5176 = vpack.c.b16 %v5000, %v4996
    %v5177 = vpack.c.b16 %v5005, %v5001
    %v5178 = vpack.c.b16 %v5006, %v5002
    %v5179 = vpack.c.b16 %v5007, %v5003
    %v5180 = vpack.c.b16 %v5008, %v5004
    %v5181 = vpack.c.b16 %v5013, %v5009
    %v5182 = vpack.c.b16 %v5014, %v5010
    %v5183 = vpack.c.b16 %v5015, %v5011
    %v5184 = vpack.c.b16 %v5016, %v5012
    %v5185 = vpack.c.b16 %v5021, %v5017
    %v5186 = vpack.c.b16 %v5022, %v5018
    %v5187 = vpack.c.b16 %v5023, %v5019
    %v5188 = vpack.c.b16 %v5024, %v5020
    %v5189 = vpack.c.b16 %v5029, %v5025
    %v5190 = vpack.c.b16 %v5030, %v5026
    %v5191 = vpack.c.b16 %v5031, %v5027
    %v5192 = vpack.c.b16 %v5032, %v5028
    %v5193 = vpack.c.b16 %v5037, %v5033
    %v5194 = vpack.c.b16 %v5038, %v5034
    %v5195 = vpack.c.b16 %v5039, %v5035
    %v5196 = vpack.c.b16 %v5040, %v5036
    %v5197 = vpack.c.b16 %v5045, %v5041
    %v5198 = vpack.c.b16 %v5046, %v5042
    %v5199 = vpack.c.b16 %v5047, %v5043
    %v5200 = vpack.c.b16 %v5048, %v5044
    %v5201 = vpack.c.b16 %v5053, %v5049
    %v5202 = vpack.c.b16 %v5054, %v5050
    %v5203 = vpack.c.b16 %v5055, %v5051
    %v5204 = vpack.c.b16 %v5056, %v5052
    %v5205 = vpack.c.b16 %v5061, %v5057
    %v5206 = vpack.c.b16 %v5062, %v5058
    %v5207 = vpack.c.b16 %v5063, %v5059
    %v5208 = vpack.c.b16 %v5064, %v5060
    %v5209 = vpack.c.b16 %v5069, %v5065
    %v5210 = vpack.c.b16 %v5070, %v5066
    %v5211 = vpack.c.b16 %v5071, %v5067
    %v5212 = vpack.c.b16 %v5072, %v5068
    %v5213 = vpack.c.b16 %v5077, %v5073
    %v5214 = vpack.c.b16 %v5078, %v5074
    %v5215 = vpack.c.b16 %v5079, %v5075
    %v5216 = vpack.c.b16 %v5080, %v5076
    %v5217 = vpack.c.b16 %v5085, %v5081
    %v5218 = vpack.c.b16 %v5086, %v5082
    %v5219 = vpack.c.b16 %v5087, %v5083
    %v5220 = vpack.c.b16 %v5088, %v5084
    %v5221 = vpack.c.b16 %v5093, %v5089
    %v5222 = vpack.c.b16 %v5094, %v5090
    %v5223 = vpack.c.b16 %v5095, %v5091
    %v5224 = vpack.c.b16 %v5096, %v5092
    %5353 = vmatpush.bf16.msra.mxu0 %v5125
    %5354 = vmatpush.bf16.msra.mxu0 %v5121
    %5355 = vmatpush.bf16.msra.mxu0 %v5117
    %5356 = vmatpush.bf16.msra.mxu0 %v5113
    %5357 = vmatpush.bf16.msra.mxu0 %v5109
    %5358 = vmatpush.bf16.msra.mxu0 %v5105
    %5359 = vmatpush.bf16.msra.mxu0 %v5101
    %5360 = vmatpush.bf16.msra.mxu0 %v5097
    %5361 = vmatmul.bf16.gmra.mxu0 %v4569
    %v5362 = vpop.f32.mrf.mxu0
    %v5363 = vadd.f32 %v4705, %v5362
    %v5364 = vpop.f32.mrf.mxu0
    %5365 = vdwg.mxu0
    %5366 = vmatpush.bf16.msra.mxu0 %v5157
    %5367 = vmatpush.bf16.msra.mxu0 %v5153
    %5368 = vmatpush.bf16.msra.mxu0 %v5149
    %5369 = vmatpush.bf16.msra.mxu0 %v5145
    %5370 = vmatpush.bf16.msra.mxu0 %v5141
    %5371 = vmatpush.bf16.msra.mxu0 %v5137
    %5372 = vmatpush.bf16.msra.mxu0 %v5133
    %5373 = vmatpush.bf16.msra.mxu0 %v5129
    %5374 = vmatmul.bf16.gmra.mxu0 %v4570
    %v5375 = vpop.f32.mrf.mxu0
    %v5376 = vadd.f32 %v5363, %v5375
    %v5377 = vpop.f32.mrf.mxu0
    %5378 = vdwg.mxu0
    %5379 = vmatpush.bf16.msra.mxu0 %v5189
    %5380 = vmatpush.bf16.msra.mxu0 %v5185
    %5381 = vmatpush.bf16.msra.mxu0 %v5181
    %5382 = vmatpush.bf16.msra.mxu0 %v5177
    %5383 = vmatpush.bf16.msra.mxu0 %v5173
    %5384 = vmatpush.bf16.msra.mxu0 %v5169
    %5385 = vmatpush.bf16.msra.mxu0 %v5165
    %5386 = vmatpush.bf16.msra.mxu0 %v5161
    %5387 = vmatmul.bf16.gmra.mxu0 %v4571
    %v5388 = vpop.f32.mrf.mxu0
    %v5389 = vadd.f32 %v5376, %v5388
    %v5390 = vpop.f32.mrf.mxu0
    %5391 = vdwg.mxu0
    %5392 = vmatpush.bf16.msra.mxu0 %v5221
    %5393 = vmatpush.bf16.msra.mxu0 %v5217
    %5394 = vmatpush.bf16.msra.mxu0 %v5213
    %5395 = vmatpush.bf16.msra.mxu0 %v5209
    %5396 = vmatpush.bf16.msra.mxu0 %v5205
    %5397 = vmatpush.bf16.msra.mxu0 %v5201
    %5398 = vmatpush.bf16.msra.mxu0 %v5197
    %5399 = vmatpush.bf16.msra.mxu0 %v5193
    %5400 = vmatmul.bf16.gmra.mxu0 %v4572
    %v5401 = vpop.f32.mrf.mxu0
    %v5402 = vadd.f32 %v5389, %v5401
    %v5403 = vpop.f32.mrf.mxu0
    %5404 = vdwg.mxu0
    %5405 = vmatpush.bf16.msra.mxu0 %v5126
    %5406 = vmatpush.bf16.msra.mxu0 %v5122
    %5407 = vmatpush.bf16.msra.mxu0 %v5118
    %5408 = vmatpush.bf16.msra.mxu0 %v5114
    %5409 = vmatpush.bf16.msra.mxu0 %v5110
    %5410 = vmatpush.bf16.msra.mxu0 %v5106
    %5411 = vmatpush.bf16.msra.mxu0 %v5102
    %5412 = vmatpush.bf16.msra.mxu0 %v5098
    %5413 = vmatmul.bf16.gmra.mxu0 %v4569
    %v5414 = vpop.f32.mrf.mxu0
    %v5415 = vadd.f32 %v4706, %v5414
    %v5416 = vpop.f32.mrf.mxu0
    %5417 = vdwg.mxu0
    %5418 = vmatpush.bf16.msra.mxu0 %v5158
    %5419 = vmatpush.bf16.msra.mxu0 %v5154
    %5420 = vmatpush.bf16.msra.mxu0 %v5150
    %5421 = vmatpush.bf16.msra.mxu0 %v5146
    %5422 = vmatpush.bf16.msra.mxu0 %v5142
    %5423 = vmatpush.bf16.msra.mxu0 %v5138
    %5424 = vmatpush.bf16.msra.mxu0 %v5134
    %5425 = vmatpush.bf16.msra.mxu0 %v5130
    %5426 = vmatmul.bf16.gmra.mxu0 %v4570
    %v5427 = vpop.f32.mrf.mxu0
    %v5428 = vadd.f32 %v5415, %v5427
    %v5429 = vpop.f32.mrf.mxu0
    %5430 = vdwg.mxu0
    %5431 = vmatpush.bf16.msra.mxu0 %v5190
    %5432 = vmatpush.bf16.msra.mxu0 %v5186
    %5433 = vmatpush.bf16.msra.mxu0 %v5182
    %5434 = vmatpush.bf16.msra.mxu0 %v5178
    %5435 = vmatpush.bf16.msra.mxu0 %v5174
    %5436 = vmatpush.bf16.msra.mxu0 %v5170
    %5437 = vmatpush.bf16.msra.mxu0 %v5166
    %5438 = vmatpush.bf16.msra.mxu0 %v5162
    %5439 = vmatmul.bf16.gmra.mxu0 %v4571
    %v5440 = vpop.f32.mrf.mxu0
    %v5441 = vadd.f32 %v5428, %v5440
    %v5442 = vpop.f32.mrf.mxu0
    %5443 = vdwg.mxu0
    %5444 = vmatpush.bf16.msra.mxu0 %v5222
    %5445 = vmatpush.bf16.msra.mxu0 %v5218
    %5446 = vmatpush.bf16.msra.mxu0 %v5214
    %5447 = vmatpush.bf16.msra.mxu0 %v5210
    %5448 = vmatpush.bf16.msra.mxu0 %v5206
    %5449 = vmatpush.bf16.msra.mxu0 %v5202
    %5450 = vmatpush.bf16.msra.mxu0 %v5198
    %5451 = vmatpush.bf16.msra.mxu0 %v5194
    %5452 = vmatmul.bf16.gmra.mxu0 %v4572
    %v5453 = vpop.f32.mrf.mxu0
    %v5454 = vadd.f32 %v5441, %v5453
    %v5455 = vpop.f32.mrf.mxu0
    %5456 = vdwg.mxu0
    %5457 = vmatpush.bf16.msra.mxu0 %v5127
    %5458 = vmatpush.bf16.msra.mxu0 %v5123
    %5459 = vmatpush.bf16.msra.mxu0 %v5119
    %5460 = vmatpush.bf16.msra.mxu0 %v5115
    %5461 = vmatpush.bf16.msra.mxu0 %v5111
    %5462 = vmatpush.bf16.msra.mxu0 %v5107
    %5463 = vmatpush.bf16.msra.mxu0 %v5103
    %5464 = vmatpush.bf16.msra.mxu0 %v5099
    %5465 = vmatmul.bf16.gmra.mxu0 %v4569
    %v5466 = vpop.f32.mrf.mxu0
    %v5467 = vadd.f32 %v4707, %v5466
    %v5468 = vpop.f32.mrf.mxu0
    %5469 = vdwg.mxu0
    %5470 = vmatpush.bf16.msra.mxu0 %v5159
    %5471 = vmatpush.bf16.msra.mxu0 %v5155
    %5472 = vmatpush.bf16.msra.mxu0 %v5151
    %5473 = vmatpush.bf16.msra.mxu0 %v5147
    %5474 = vmatpush.bf16.msra.mxu0 %v5143
    %5475 = vmatpush.bf16.msra.mxu0 %v5139
    %5476 = vmatpush.bf16.msra.mxu0 %v5135
    %5477 = vmatpush.bf16.msra.mxu0 %v5131
    %5478 = vmatmul.bf16.gmra.mxu0 %v4570
    %v5479 = vpop.f32.mrf.mxu0
    %v5480 = vadd.f32 %v5467, %v5479
    %v5481 = vpop.f32.mrf.mxu0
    %5482 = vdwg.mxu0
    %5483 = vmatpush.bf16.msra.mxu0 %v5191
    %5484 = vmatpush.bf16.msra.mxu0 %v5187
    %5485 = vmatpush.bf16.msra.mxu0 %v5183
    %5486 = vmatpush.bf16.msra.mxu0 %v5179
    %5487 = vmatpush.bf16.msra.mxu0 %v5175
    %5488 = vmatpush.bf16.msra.mxu0 %v5171
    %5489 = vmatpush.bf16.msra.mxu0 %v5167
    %5490 = vmatpush.bf16.msra.mxu0 %v5163
    %5491 = vmatmul.bf16.gmra.mxu0 %v4571
    %v5492 = vpop.f32.mrf.mxu0
    %v5493 = vadd.f32 %v5480, %v5492
    %v5494 = vpop.f32.mrf.mxu0
    %5495 = vdwg.mxu0
    %5496 = vmatpush.bf16.msra.mxu0 %v5223
    %5497 = vmatpush.bf16.msra.mxu0 %v5219
    %5498 = vmatpush.bf16.msra.mxu0 %v5215
    %5499 = vmatpush.bf16.msra.mxu0 %v5211
    %5500 = vmatpush.bf16.msra.mxu0 %v5207
    %5501 = vmatpush.bf16.msra.mxu0 %v5203
    %5502 = vmatpush.bf16.msra.mxu0 %v5199
    %5503 = vmatpush.bf16.msra.mxu0 %v5195
    %5504 = vmatmul.bf16.gmra.mxu0 %v4572
    %v5505 = vpop.f32.mrf.mxu0
    %v5506 = vadd.f32 %v5493, %v5505
    %v5507 = vpop.f32.mrf.mxu0
    %5508 = vdwg.mxu0
    %5509 = vmatpush.bf16.msra.mxu0 %v5128
    %5510 = vmatpush.bf16.msra.mxu0 %v5124
    %5511 = vmatpush.bf16.msra.mxu0 %v5120
    %5512 = vmatpush.bf16.msra.mxu0 %v5116
    %5513 = vmatpush.bf16.msra.mxu0 %v5112
    %5514 = vmatpush.bf16.msra.mxu0 %v5108
    %5515 = vmatpush.bf16.msra.mxu0 %v5104
    %5516 = vmatpush.bf16.msra.mxu0 %v5100
    %5517 = vmatmul.bf16.gmra.mxu0 %v4569
    %v5518 = vpop.f32.mrf.mxu0
    %v5519 = vadd.f32 %v4708, %v5518
    %v5520 = vpop.f32.mrf.mxu0
    %5521 = vdwg.mxu0
    %5522 = vmatpush.bf16.msra.mxu0 %v5160
    %5523 = vmatpush.bf16.msra.mxu0 %v5156
    %5524 = vmatpush.bf16.msra.mxu0 %v5152
    %5525 = vmatpush.bf16.msra.mxu0 %v5148
    %5526 = vmatpush.bf16.msra.mxu0 %v5144
    %5527 = vmatpush.bf16.msra.mxu0 %v5140
    %5528 = vmatpush.bf16.msra.mxu0 %v5136
    %5529 = vmatpush.bf16.msra.mxu0 %v5132
    %5530 = vmatmul.bf16.gmra.mxu0 %v4570
    %v5531 = vpop.f32.mrf.mxu0
    %v5532 = vadd.f32 %v5519, %v5531
    %v5533 = vpop.f32.mrf.mxu0
    %5534 = vdwg.mxu0
    %5535 = vmatpush.bf16.msra.mxu0 %v5192
    %5536 = vmatpush.bf16.msra.mxu0 %v5188
    %5537 = vmatpush.bf16.msra.mxu0 %v5184
    %5538 = vmatpush.bf16.msra.mxu0 %v5180
    %5539 = vmatpush.bf16.msra.mxu0 %v5176
    %5540 = vmatpush.bf16.msra.mxu0 %v5172
    %5541 = vmatpush.bf16.msra.mxu0 %v5168
    %5542 = vmatpush.bf16.msra.mxu0 %v5164
    %5543 = vmatmul.bf16.gmra.mxu0 %v4571
    %v5544 = vpop.f32.mrf.mxu0
    %v5545 = vadd.f32 %v5532, %v5544
    %v5546 = vpop.f32.mrf.mxu0
    %5547 = vdwg.mxu0
    %5548 = vmatpush.bf16.msra.mxu0 %v5224
    %5549 = vmatpush.bf16.msra.mxu0 %v5220
    %5550 = vmatpush.bf16.msra.mxu0 %v5216
    %5551 = vmatpush.bf16.msra.mxu0 %v5212
    %5552 = vmatpush.bf16.msra.mxu0 %v5208
    %5553 = vmatpush.bf16.msra.mxu0 %v5204
    %5554 = vmatpush.bf16.msra.mxu0 %v5200
    %5555 = vmatpush.bf16.msra.mxu0 %v5196
    %5556 = vmatmul.bf16.gmra.mxu0 %v4572
    %v5557 = vpop.f32.mrf.mxu0
    %v5558 = vadd.f32 %v5545, %v5557
    %v5559 = vpop.f32.mrf.mxu0
    %5560 = vdwg.mxu0
    %v5561 = vtanh.pop %v5402
    %v5562 = vtanh.pop %v5454
    %v5563 = vtanh.pop %v5506
    %v5564 = vtanh.pop %v5558
    %v5565 = vpack.c.bf16 %v5561, %v5561
    %v5566 = vpack.c.bf16 %v5562, %v5562
    %v5567 = vpack.c.bf16 %v5563, %v5563
    %v5568 = vpack.c.bf16 %v5564, %v5564
    %s5569 = scalar_lea.vmem [#allocation2], 1024
    %v5570 = vld [vmem:[%s5569] sm:$0xff]
    %v5571 = vld [vmem:[%s5569 + $0x8] sm:$0xff]
    %v5572 = vld [vmem:[%s5569 + $0x10] sm:$0xff]
    %v5573 = vld [vmem:[%s5569 + $0x18] sm:$0xff]
    %v5574 = vld [vmem:[%s5569 + $0x20] sm:$0xff]
    %v5575 = vld [vmem:[%s5569 + $0x28] sm:$0xff]
    %v5576 = vld [vmem:[%s5569 + $0x30] sm:$0xff]
    %v5577 = vld [vmem:[%s5569 + $0x38] sm:$0xff]
    %v5578 = vld [vmem:[%s5569 + $0x40] sm:$0xff]
    %v5579 = vld [vmem:[%s5569 + $0x48] sm:$0xff]
    %v5580 = vld [vmem:[%s5569 + $0x50] sm:$0xff]
    %v5581 = vld [vmem:[%s5569 + $0x58] sm:$0xff]
    %v5582 = vld [vmem:[%s5569 + $0x60] sm:$0xff]
    %v5583 = vld [vmem:[%s5569 + $0x68] sm:$0xff]
    %v5584 = vld [vmem:[%s5569 + $0x70] sm:$0xff]
    %v5585 = vld [vmem:[%s5569 + $0x78] sm:$0xff]
    %v5586 = vld [vmem:[%s5569 + $0x80] sm:$0xff]
    %v5587 = vld [vmem:[%s5569 + $0x88] sm:$0xff]
    %v5588 = vld [vmem:[%s5569 + $0x90] sm:$0xff]
    %v5589 = vld [vmem:[%s5569 + $0x98] sm:$0xff]
    %v5590 = vld [vmem:[%s5569 + $0xa0] sm:$0xff]
    %v5591 = vld [vmem:[%s5569 + $0xa8] sm:$0xff]
    %v5592 = vld [vmem:[%s5569 + $0xb0] sm:$0xff]
    %v5593 = vld [vmem:[%s5569 + $0xb8] sm:$0xff]
    %v5594 = vld [vmem:[%s5569 + $0xc0] sm:$0xff]
    %v5595 = vld [vmem:[%s5569 + $0xc8] sm:$0xff]
    %v5596 = vld [vmem:[%s5569 + $0xd0] sm:$0xff]
    %v5597 = vld [vmem:[%s5569 + $0xd8] sm:$0xff]
    %v5598 = vld [vmem:[%s5569 + $0xe0] sm:$0xff]
    %v5599 = vld [vmem:[%s5569 + $0xe8] sm:$0xff]
    %v5600 = vld [vmem:[%s5569 + $0xf0] sm:$0xff]
    %v5601 = vld [vmem:[%s5569 + $0xf8] sm:$0xff]
    %v5602 = vld [vmem:[%s5569 + $0x100] sm:$0xff]
    %v5603 = vld [vmem:[%s5569 + $0x108] sm:$0xff]
    %v5604 = vld [vmem:[%s5569 + $0x110] sm:$0xff]
    %v5605 = vld [vmem:[%s5569 + $0x118] sm:$0xff]
    %v5606 = vld [vmem:[%s5569 + $0x120] sm:$0xff]
    %v5607 = vld [vmem:[%s5569 + $0x128] sm:$0xff]
    %v5608 = vld [vmem:[%s5569 + $0x130] sm:$0xff]
    %v5609 = vld [vmem:[%s5569 + $0x138] sm:$0xff]
    %v5610 = vld [vmem:[%s5569 + $0x140] sm:$0xff]
    %v5611 = vld [vmem:[%s5569 + $0x148] sm:$0xff]
    %v5612 = vld [vmem:[%s5569 + $0x150] sm:$0xff]
    %v5613 = vld [vmem:[%s5569 + $0x158] sm:$0xff]
    %v5614 = vld [vmem:[%s5569 + $0x160] sm:$0xff]
    %v5615 = vld [vmem:[%s5569 + $0x168] sm:$0xff]
    %v5616 = vld [vmem:[%s5569 + $0x170] sm:$0xff]
    %v5617 = vld [vmem:[%s5569 + $0x178] sm:$0xff]
    %v5618 = vld [vmem:[%s5569 + $0x180] sm:$0xff]
    %v5619 = vld [vmem:[%s5569 + $0x188] sm:$0xff]
    %v5620 = vld [vmem:[%s5569 + $0x190] sm:$0xff]
    %v5621 = vld [vmem:[%s5569 + $0x198] sm:$0xff]
    %v5622 = vld [vmem:[%s5569 + $0x1a0] sm:$0xff]
    %v5623 = vld [vmem:[%s5569 + $0x1a8] sm:$0xff]
    %v5624 = vld [vmem:[%s5569 + $0x1b0] sm:$0xff]
    %v5625 = vld [vmem:[%s5569 + $0x1b8] sm:$0xff]
    %v5626 = vld [vmem:[%s5569 + $0x1c0] sm:$0xff]
    %v5627 = vld [vmem:[%s5569 + $0x1c8] sm:$0xff]
    %v5628 = vld [vmem:[%s5569 + $0x1d0] sm:$0xff]
    %v5629 = vld [vmem:[%s5569 + $0x1d8] sm:$0xff]
    %v5630 = vld [vmem:[%s5569 + $0x1e0] sm:$0xff]
    %v5631 = vld [vmem:[%s5569 + $0x1e8] sm:$0xff]
    %v5632 = vld [vmem:[%s5569 + $0x1f0] sm:$0xff]
    %v5633 = vld [vmem:[%s5569 + $0x1f8] sm:$0xff]
    %v5634 = vld [vmem:[%s5569 + $0x200] sm:$0xff]
    %v5635 = vld [vmem:[%s5569 + $0x208] sm:$0xff]
    %v5636 = vld [vmem:[%s5569 + $0x210] sm:$0xff]
    %v5637 = vld [vmem:[%s5569 + $0x218] sm:$0xff]
    %v5638 = vld [vmem:[%s5569 + $0x220] sm:$0xff]
    %v5639 = vld [vmem:[%s5569 + $0x228] sm:$0xff]
    %v5640 = vld [vmem:[%s5569 + $0x230] sm:$0xff]
    %v5641 = vld [vmem:[%s5569 + $0x238] sm:$0xff]
    %v5642 = vld [vmem:[%s5569 + $0x240] sm:$0xff]
    %v5643 = vld [vmem:[%s5569 + $0x248] sm:$0xff]
    %v5644 = vld [vmem:[%s5569 + $0x250] sm:$0xff]
    %v5645 = vld [vmem:[%s5569 + $0x258] sm:$0xff]
    %v5646 = vld [vmem:[%s5569 + $0x260] sm:$0xff]
    %v5647 = vld [vmem:[%s5569 + $0x268] sm:$0xff]
    %v5648 = vld [vmem:[%s5569 + $0x270] sm:$0xff]
    %v5649 = vld [vmem:[%s5569 + $0x278] sm:$0xff]
    %v5650 = vld [vmem:[%s5569 + $0x280] sm:$0xff]
    %v5651 = vld [vmem:[%s5569 + $0x288] sm:$0xff]
    %v5652 = vld [vmem:[%s5569 + $0x290] sm:$0xff]
    %v5653 = vld [vmem:[%s5569 + $0x298] sm:$0xff]
    %v5654 = vld [vmem:[%s5569 + $0x2a0] sm:$0xff]
    %v5655 = vld [vmem:[%s5569 + $0x2a8] sm:$0xff]
    %v5656 = vld [vmem:[%s5569 + $0x2b0] sm:$0xff]
    %v5657 = vld [vmem:[%s5569 + $0x2b8] sm:$0xff]
    %v5658 = vld [vmem:[%s5569 + $0x2c0] sm:$0xff]
    %v5659 = vld [vmem:[%s5569 + $0x2c8] sm:$0xff]
    %v5660 = vld [vmem:[%s5569 + $0x2d0] sm:$0xff]
    %v5661 = vld [vmem:[%s5569 + $0x2d8] sm:$0xff]
    %v5662 = vld [vmem:[%s5569 + $0x2e0] sm:$0xff]
    %v5663 = vld [vmem:[%s5569 + $0x2e8] sm:$0xff]
    %v5664 = vld [vmem:[%s5569 + $0x2f0] sm:$0xff]
    %v5665 = vld [vmem:[%s5569 + $0x2f8] sm:$0xff]
    %v5666 = vld [vmem:[%s5569 + $0x300] sm:$0xff]
    %v5667 = vld [vmem:[%s5569 + $0x308] sm:$0xff]
    %v5668 = vld [vmem:[%s5569 + $0x310] sm:$0xff]
    %v5669 = vld [vmem:[%s5569 + $0x318] sm:$0xff]
    %v5670 = vld [vmem:[%s5569 + $0x320] sm:$0xff]
    %v5671 = vld [vmem:[%s5569 + $0x328] sm:$0xff]
    %v5672 = vld [vmem:[%s5569 + $0x330] sm:$0xff]
    %v5673 = vld [vmem:[%s5569 + $0x338] sm:$0xff]
    %v5674 = vld [vmem:[%s5569 + $0x340] sm:$0xff]
    %v5675 = vld [vmem:[%s5569 + $0x348] sm:$0xff]
    %v5676 = vld [vmem:[%s5569 + $0x350] sm:$0xff]
    %v5677 = vld [vmem:[%s5569 + $0x358] sm:$0xff]
    %v5678 = vld [vmem:[%s5569 + $0x360] sm:$0xff]
    %v5679 = vld [vmem:[%s5569 + $0x368] sm:$0xff]
    %v5680 = vld [vmem:[%s5569 + $0x370] sm:$0xff]
    %v5681 = vld [vmem:[%s5569 + $0x378] sm:$0xff]
    %v5682 = vld [vmem:[%s5569 + $0x380] sm:$0xff]
    %v5683 = vld [vmem:[%s5569 + $0x388] sm:$0xff]
    %v5684 = vld [vmem:[%s5569 + $0x390] sm:$0xff]
    %v5685 = vld [vmem:[%s5569 + $0x398] sm:$0xff]
    %v5686 = vld [vmem:[%s5569 + $0x3a0] sm:$0xff]
    %v5687 = vld [vmem:[%s5569 + $0x3a8] sm:$0xff]
    %v5688 = vld [vmem:[%s5569 + $0x3b0] sm:$0xff]
    %v5689 = vld [vmem:[%s5569 + $0x3b8] sm:$0xff]
    %v5690 = vld [vmem:[%s5569 + $0x3c0] sm:$0xff]
    %v5691 = vld [vmem:[%s5569 + $0x3c8] sm:$0xff]
    %v5692 = vld [vmem:[%s5569 + $0x3d0] sm:$0xff]
    %v5693 = vld [vmem:[%s5569 + $0x3d8] sm:$0xff]
    %v5694 = vld [vmem:[%s5569 + $0x3e0] sm:$0xff]
    %v5695 = vld [vmem:[%s5569 + $0x3e8] sm:$0xff]
    %v5696 = vld [vmem:[%s5569 + $0x3f0] sm:$0xff]
    %v5697 = vld [vmem:[%s5569 + $0x3f8] sm:$0xff]
    %s5698 = scalar_lea.vmem %s12, 4
    %v5699 = vld [vmem:[%s5698] sm:$0xf]
    %v5701 = vperm.slane %v5699, 0
    %v5702 = vperm.slane %v5699, 1
    %v5703 = vperm.slane %v5699, 2
    %v5704 = vperm.slane %v5699, 3
    %v5837 = vunpack.c.l.b16 %v5570
    %v5838 = vunpack.c.h.b16 %v5570
    %v5839 = vunpack.c.l.b16 %v5571
    %v5840 = vunpack.c.h.b16 %v5571
    %v5841 = vunpack.c.l.b16 %v5572
    %v5842 = vunpack.c.h.b16 %v5572
    %v5843 = vunpack.c.l.b16 %v5573
    %v5844 = vunpack.c.h.b16 %v5573
    %v5845 = vunpack.c.l.b16 %v5574
    %v5846 = vunpack.c.h.b16 %v5574
    %v5847 = vunpack.c.l.b16 %v5575
    %v5848 = vunpack.c.h.b16 %v5575
    %v5849 = vunpack.c.l.b16 %v5576
    %v5850 = vunpack.c.h.b16 %v5576
    %v5851 = vunpack.c.l.b16 %v5577
    %v5852 = vunpack.c.h.b16 %v5577
    %v5853 = vunpack.c.l.b16 %v5578
    %v5854 = vunpack.c.h.b16 %v5578
    %v5855 = vunpack.c.l.b16 %v5579
    %v5856 = vunpack.c.h.b16 %v5579
    %v5857 = vunpack.c.l.b16 %v5580
    %v5858 = vunpack.c.h.b16 %v5580
    %v5859 = vunpack.c.l.b16 %v5581
    %v5860 = vunpack.c.h.b16 %v5581
    %v5861 = vunpack.c.l.b16 %v5582
    %v5862 = vunpack.c.h.b16 %v5582
    %v5863 = vunpack.c.l.b16 %v5583
    %v5864 = vunpack.c.h.b16 %v5583
    %v5865 = vunpack.c.l.b16 %v5584
    %v5866 = vunpack.c.h.b16 %v5584
    %v5867 = vunpack.c.l.b16 %v5585
    %v5868 = vunpack.c.h.b16 %v5585
    %v5869 = vunpack.c.l.b16 %v5586
    %v5870 = vunpack.c.h.b16 %v5586
    %v5871 = vunpack.c.l.b16 %v5587
    %v5872 = vunpack.c.h.b16 %v5587
    %v5873 = vunpack.c.l.b16 %v5588
    %v5874 = vunpack.c.h.b16 %v5588
    %v5875 = vunpack.c.l.b16 %v5589
    %v5876 = vunpack.c.h.b16 %v5589
    %v5877 = vunpack.c.l.b16 %v5590
    %v5878 = vunpack.c.h.b16 %v5590
    %v5879 = vunpack.c.l.b16 %v5591
    %v5880 = vunpack.c.h.b16 %v5591
    %v5881 = vunpack.c.l.b16 %v5592
    %v5882 = vunpack.c.h.b16 %v5592
    %v5883 = vunpack.c.l.b16 %v5593
    %v5884 = vunpack.c.h.b16 %v5593
    %v5885 = vunpack.c.l.b16 %v5594
    %v5886 = vunpack.c.h.b16 %v5594
    %v5887 = vunpack.c.l.b16 %v5595
    %v5888 = vunpack.c.h.b16 %v5595
    %v5889 = vunpack.c.l.b16 %v5596
    %v5890 = vunpack.c.h.b16 %v5596
    %v5891 = vunpack.c.l.b16 %v5597
    %v5892 = vunpack.c.h.b16 %v5597
    %v5893 = vunpack.c.l.b16 %v5598
    %v5894 = vunpack.c.h.b16 %v5598
    %v5895 = vunpack.c.l.b16 %v5599
    %v5896 = vunpack.c.h.b16 %v5599
    %v5897 = vunpack.c.l.b16 %v5600
    %v5898 = vunpack.c.h.b16 %v5600
    %v5899 = vunpack.c.l.b16 %v5601
    %v5900 = vunpack.c.h.b16 %v5601
    %v5901 = vunpack.c.l.b16 %v5602
    %v5902 = vunpack.c.h.b16 %v5602
    %v5903 = vunpack.c.l.b16 %v5603
    %v5904 = vunpack.c.h.b16 %v5603
    %v5905 = vunpack.c.l.b16 %v5604
    %v5906 = vunpack.c.h.b16 %v5604
    %v5907 = vunpack.c.l.b16 %v5605
    %v5908 = vunpack.c.h.b16 %v5605
    %v5909 = vunpack.c.l.b16 %v5606
    %v5910 = vunpack.c.h.b16 %v5606
    %v5911 = vunpack.c.l.b16 %v5607
    %v5912 = vunpack.c.h.b16 %v5607
    %v5913 = vunpack.c.l.b16 %v5608
    %v5914 = vunpack.c.h.b16 %v5608
    %v5915 = vunpack.c.l.b16 %v5609
    %v5916 = vunpack.c.h.b16 %v5609
    %v5917 = vunpack.c.l.b16 %v5610
    %v5918 = vunpack.c.h.b16 %v5610
    %v5919 = vunpack.c.l.b16 %v5611
    %v5920 = vunpack.c.h.b16 %v5611
    %v5921 = vunpack.c.l.b16 %v5612
    %v5922 = vunpack.c.h.b16 %v5612
    %v5923 = vunpack.c.l.b16 %v5613
    %v5924 = vunpack.c.h.b16 %v5613
    %v5925 = vunpack.c.l.b16 %v5614
    %v5926 = vunpack.c.h.b16 %v5614
    %v5927 = vunpack.c.l.b16 %v5615
    %v5928 = vunpack.c.h.b16 %v5615
    %v5929 = vunpack.c.l.b16 %v5616
    %v5930 = vunpack.c.h.b16 %v5616
    %v5931 = vunpack.c.l.b16 %v5617
    %v5932 = vunpack.c.h.b16 %v5617
    %v5933 = vunpack.c.l.b16 %v5618
    %v5934 = vunpack.c.h.b16 %v5618
    %v5935 = vunpack.c.l.b16 %v5619
    %v5936 = vunpack.c.h.b16 %v5619
    %v5937 = vunpack.c.l.b16 %v5620
    %v5938 = vunpack.c.h.b16 %v5620
    %v5939 = vunpack.c.l.b16 %v5621
    %v5940 = vunpack.c.h.b16 %v5621
    %v5941 = vunpack.c.l.b16 %v5622
    %v5942 = vunpack.c.h.b16 %v5622
    %v5943 = vunpack.c.l.b16 %v5623
    %v5944 = vunpack.c.h.b16 %v5623
    %v5945 = vunpack.c.l.b16 %v5624
    %v5946 = vunpack.c.h.b16 %v5624
    %v5947 = vunpack.c.l.b16 %v5625
    %v5948 = vunpack.c.h.b16 %v5625
    %v5949 = vunpack.c.l.b16 %v5626
    %v5950 = vunpack.c.h.b16 %v5626
    %v5951 = vunpack.c.l.b16 %v5627
    %v5952 = vunpack.c.h.b16 %v5627
    %v5953 = vunpack.c.l.b16 %v5628
    %v5954 = vunpack.c.h.b16 %v5628
    %v5955 = vunpack.c.l.b16 %v5629
    %v5956 = vunpack.c.h.b16 %v5629
    %v5957 = vunpack.c.l.b16 %v5630
    %v5958 = vunpack.c.h.b16 %v5630
    %v5959 = vunpack.c.l.b16 %v5631
    %v5960 = vunpack.c.h.b16 %v5631
    %v5961 = vunpack.c.l.b16 %v5632
    %v5962 = vunpack.c.h.b16 %v5632
    %v5963 = vunpack.c.l.b16 %v5633
    %v5964 = vunpack.c.h.b16 %v5633
    %v5965 = vunpack.c.l.b16 %v5634
    %v5966 = vunpack.c.h.b16 %v5634
    %v5967 = vunpack.c.l.b16 %v5635
    %v5968 = vunpack.c.h.b16 %v5635
    %v5969 = vunpack.c.l.b16 %v5636
    %v5970 = vunpack.c.h.b16 %v5636
    %v5971 = vunpack.c.l.b16 %v5637
    %v5972 = vunpack.c.h.b16 %v5637
    %v5973 = vunpack.c.l.b16 %v5638
    %v5974 = vunpack.c.h.b16 %v5638
    %v5975 = vunpack.c.l.b16 %v5639
    %v5976 = vunpack.c.h.b16 %v5639
    %v5977 = vunpack.c.l.b16 %v5640
    %v5978 = vunpack.c.h.b16 %v5640
    %v5979 = vunpack.c.l.b16 %v5641
    %v5980 = vunpack.c.h.b16 %v5641
    %v5981 = vunpack.c.l.b16 %v5642
    %v5982 = vunpack.c.h.b16 %v5642
    %v5983 = vunpack.c.l.b16 %v5643
    %v5984 = vunpack.c.h.b16 %v5643
    %v5985 = vunpack.c.l.b16 %v5644
    %v5986 = vunpack.c.h.b16 %v5644
    %v5987 = vunpack.c.l.b16 %v5645
    %v5988 = vunpack.c.h.b16 %v5645
    %v5989 = vunpack.c.l.b16 %v5646
    %v5990 = vunpack.c.h.b16 %v5646
    %v5991 = vunpack.c.l.b16 %v5647
    %v5992 = vunpack.c.h.b16 %v5647
    %v5993 = vunpack.c.l.b16 %v5648
    %v5994 = vunpack.c.h.b16 %v5648
    %v5995 = vunpack.c.l.b16 %v5649
    %v5996 = vunpack.c.h.b16 %v5649
    %v5997 = vunpack.c.l.b16 %v5650
    %v5998 = vunpack.c.h.b16 %v5650
    %v5999 = vunpack.c.l.b16 %v5651
    %v6000 = vunpack.c.h.b16 %v5651
    %v6001 = vunpack.c.l.b16 %v5652
    %v6002 = vunpack.c.h.b16 %v5652
    %v6003 = vunpack.c.l.b16 %v5653
    %v6004 = vunpack.c.h.b16 %v5653
    %v6005 = vunpack.c.l.b16 %v5654
    %v6006 = vunpack.c.h.b16 %v5654
    %v6007 = vunpack.c.l.b16 %v5655
    %v6008 = vunpack.c.h.b16 %v5655
    %v6009 = vunpack.c.l.b16 %v5656
    %v6010 = vunpack.c.h.b16 %v5656
    %v6011 = vunpack.c.l.b16 %v5657
    %v6012 = vunpack.c.h.b16 %v5657
    %v6013 = vunpack.c.l.b16 %v5658
    %v6014 = vunpack.c.h.b16 %v5658
    %v6015 = vunpack.c.l.b16 %v5659
    %v6016 = vunpack.c.h.b16 %v5659
    %v6017 = vunpack.c.l.b16 %v5660
    %v6018 = vunpack.c.h.b16 %v5660
    %v6019 = vunpack.c.l.b16 %v5661
    %v6020 = vunpack.c.h.b16 %v5661
    %v6021 = vunpack.c.l.b16 %v5662
    %v6022 = vunpack.c.h.b16 %v5662
    %v6023 = vunpack.c.l.b16 %v5663
    %v6024 = vunpack.c.h.b16 %v5663
    %v6025 = vunpack.c.l.b16 %v5664
    %v6026 = vunpack.c.h.b16 %v5664
    %v6027 = vunpack.c.l.b16 %v5665
    %v6028 = vunpack.c.h.b16 %v5665
    %v6029 = vunpack.c.l.b16 %v5666
    %v6030 = vunpack.c.h.b16 %v5666
    %v6031 = vunpack.c.l.b16 %v5667
    %v6032 = vunpack.c.h.b16 %v5667
    %v6033 = vunpack.c.l.b16 %v5668
    %v6034 = vunpack.c.h.b16 %v5668
    %v6035 = vunpack.c.l.b16 %v5669
    %v6036 = vunpack.c.h.b16 %v5669
    %v6037 = vunpack.c.l.b16 %v5670
    %v6038 = vunpack.c.h.b16 %v5670
    %v6039 = vunpack.c.l.b16 %v5671
    %v6040 = vunpack.c.h.b16 %v5671
    %v6041 = vunpack.c.l.b16 %v5672
    %v6042 = vunpack.c.h.b16 %v5672
    %v6043 = vunpack.c.l.b16 %v5673
    %v6044 = vunpack.c.h.b16 %v5673
    %v6045 = vunpack.c.l.b16 %v5674
    %v6046 = vunpack.c.h.b16 %v5674
    %v6047 = vunpack.c.l.b16 %v5675
    %v6048 = vunpack.c.h.b16 %v5675
    %v6049 = vunpack.c.l.b16 %v5676
    %v6050 = vunpack.c.h.b16 %v5676
    %v6051 = vunpack.c.l.b16 %v5677
    %v6052 = vunpack.c.h.b16 %v5677
    %v6053 = vunpack.c.l.b16 %v5678
    %v6054 = vunpack.c.h.b16 %v5678
    %v6055 = vunpack.c.l.b16 %v5679
    %v6056 = vunpack.c.h.b16 %v5679
    %v6057 = vunpack.c.l.b16 %v5680
    %v6058 = vunpack.c.h.b16 %v5680
    %v6059 = vunpack.c.l.b16 %v5681
    %v6060 = vunpack.c.h.b16 %v5681
    %v6061 = vunpack.c.l.b16 %v5682
    %v6062 = vunpack.c.h.b16 %v5682
    %v6063 = vunpack.c.l.b16 %v5683
    %v6064 = vunpack.c.h.b16 %v5683
    %v6065 = vunpack.c.l.b16 %v5684
    %v6066 = vunpack.c.h.b16 %v5684
    %v6067 = vunpack.c.l.b16 %v5685
    %v6068 = vunpack.c.h.b16 %v5685
    %v6069 = vunpack.c.l.b16 %v5686
    %v6070 = vunpack.c.h.b16 %v5686
    %v6071 = vunpack.c.l.b16 %v5687
    %v6072 = vunpack.c.h.b16 %v5687
    %v6073 = vunpack.c.l.b16 %v5688
    %v6074 = vunpack.c.h.b16 %v5688
    %v6075 = vunpack.c.l.b16 %v5689
    %v6076 = vunpack.c.h.b16 %v5689
    %v6077 = vunpack.c.l.b16 %v5690
    %v6078 = vunpack.c.h.b16 %v5690
    %v6079 = vunpack.c.l.b16 %v5691
    %v6080 = vunpack.c.h.b16 %v5691
    %v6081 = vunpack.c.l.b16 %v5692
    %v6082 = vunpack.c.h.b16 %v5692
    %v6083 = vunpack.c.l.b16 %v5693
    %v6084 = vunpack.c.h.b16 %v5693
    %v6085 = vunpack.c.l.b16 %v5694
    %v6086 = vunpack.c.h.b16 %v5694
    %v6087 = vunpack.c.l.b16 %v5695
    %v6088 = vunpack.c.h.b16 %v5695
    %v6089 = vunpack.c.l.b16 %v5696
    %v6090 = vunpack.c.h.b16 %v5696
    %v6091 = vunpack.c.l.b16 %v5697
    %v6092 = vunpack.c.h.b16 %v5697
    %v6093 = vpack.c.b16 %v5841, %v5837
    %v6094 = vpack.c.b16 %v5842, %v5838
    %v6095 = vpack.c.b16 %v5843, %v5839
    %v6096 = vpack.c.b16 %v5844, %v5840
    %v6097 = vpack.c.b16 %v5849, %v5845
    %v6098 = vpack.c.b16 %v5850, %v5846
    %v6099 = vpack.c.b16 %v5851, %v5847
    %v6100 = vpack.c.b16 %v5852, %v5848
    %v6101 = vpack.c.b16 %v5857, %v5853
    %v6102 = vpack.c.b16 %v5858, %v5854
    %v6103 = vpack.c.b16 %v5859, %v5855
    %v6104 = vpack.c.b16 %v5860, %v5856
    %v6105 = vpack.c.b16 %v5865, %v5861
    %v6106 = vpack.c.b16 %v5866, %v5862
    %v6107 = vpack.c.b16 %v5867, %v5863
    %v6108 = vpack.c.b16 %v5868, %v5864
    %v6109 = vpack.c.b16 %v5873, %v5869
    %v6110 = vpack.c.b16 %v5874, %v5870
    %v6111 = vpack.c.b16 %v5875, %v5871
    %v6112 = vpack.c.b16 %v5876, %v5872
    %v6113 = vpack.c.b16 %v5881, %v5877
    %v6114 = vpack.c.b16 %v5882, %v5878
    %v6115 = vpack.c.b16 %v5883, %v5879
    %v6116 = vpack.c.b16 %v5884, %v5880
    %v6117 = vpack.c.b16 %v5889, %v5885
    %v6118 = vpack.c.b16 %v5890, %v5886
    %v6119 = vpack.c.b16 %v5891, %v5887
    %v6120 = vpack.c.b16 %v5892, %v5888
    %v6121 = vpack.c.b16 %v5897, %v5893
    %v6122 = vpack.c.b16 %v5898, %v5894
    %v6123 = vpack.c.b16 %v5899, %v5895
    %v6124 = vpack.c.b16 %v5900, %v5896
    %v6125 = vpack.c.b16 %v5905, %v5901
    %v6126 = vpack.c.b16 %v5906, %v5902
    %v6127 = vpack.c.b16 %v5907, %v5903
    %v6128 = vpack.c.b16 %v5908, %v5904
    %v6129 = vpack.c.b16 %v5913, %v5909
    %v6130 = vpack.c.b16 %v5914, %v5910
    %v6131 = vpack.c.b16 %v5915, %v5911
    %v6132 = vpack.c.b16 %v5916, %v5912
    %v6133 = vpack.c.b16 %v5921, %v5917
    %v6134 = vpack.c.b16 %v5922, %v5918
    %v6135 = vpack.c.b16 %v5923, %v5919
    %v6136 = vpack.c.b16 %v5924, %v5920
    %v6137 = vpack.c.b16 %v5929, %v5925
    %v6138 = vpack.c.b16 %v5930, %v5926
    %v6139 = vpack.c.b16 %v5931, %v5927
    %v6140 = vpack.c.b16 %v5932, %v5928
    %v6141 = vpack.c.b16 %v5937, %v5933
    %v6142 = vpack.c.b16 %v5938, %v5934
    %v6143 = vpack.c.b16 %v5939, %v5935
    %v6144 = vpack.c.b16 %v5940, %v5936
    %v6145 = vpack.c.b16 %v5945, %v5941
    %v6146 = vpack.c.b16 %v5946, %v5942
    %v6147 = vpack.c.b16 %v5947, %v5943
    %v6148 = vpack.c.b16 %v5948, %v5944
    %v6149 = vpack.c.b16 %v5953, %v5949
    %v6150 = vpack.c.b16 %v5954, %v5950
    %v6151 = vpack.c.b16 %v5955, %v5951
    %v6152 = vpack.c.b16 %v5956, %v5952
    %v6153 = vpack.c.b16 %v5961, %v5957
    %v6154 = vpack.c.b16 %v5962, %v5958
    %v6155 = vpack.c.b16 %v5963, %v5959
    %v6156 = vpack.c.b16 %v5964, %v5960
    %v6157 = vpack.c.b16 %v5969, %v5965
    %v6158 = vpack.c.b16 %v5970, %v5966
    %v6159 = vpack.c.b16 %v5971, %v5967
    %v6160 = vpack.c.b16 %v5972, %v5968
    %v6161 = vpack.c.b16 %v5977, %v5973
    %v6162 = vpack.c.b16 %v5978, %v5974
    %v6163 = vpack.c.b16 %v5979, %v5975
    %v6164 = vpack.c.b16 %v5980, %v5976
    %v6165 = vpack.c.b16 %v5985, %v5981
    %v6166 = vpack.c.b16 %v5986, %v5982
    %v6167 = vpack.c.b16 %v5987, %v5983
    %v6168 = vpack.c.b16 %v5988, %v5984
    %v6169 = vpack.c.b16 %v5993, %v5989
    %v6170 = vpack.c.b16 %v5994, %v5990
    %v6171 = vpack.c.b16 %v5995, %v5991
    %v6172 = vpack.c.b16 %v5996, %v5992
    %v6173 = vpack.c.b16 %v6001, %v5997
    %v6174 = vpack.c.b16 %v6002, %v5998
    %v6175 = vpack.c.b16 %v6003, %v5999
    %v6176 = vpack.c.b16 %v6004, %v6000
    %v6177 = vpack.c.b16 %v6009, %v6005
    %v6178 = vpack.c.b16 %v6010, %v6006
    %v6179 = vpack.c.b16 %v6011, %v6007
    %v6180 = vpack.c.b16 %v6012, %v6008
    %v6181 = vpack.c.b16 %v6017, %v6013
    %v6182 = vpack.c.b16 %v6018, %v6014
    %v6183 = vpack.c.b16 %v6019, %v6015
    %v6184 = vpack.c.b16 %v6020, %v6016
    %v6185 = vpack.c.b16 %v6025, %v6021
    %v6186 = vpack.c.b16 %v6026, %v6022
    %v6187 = vpack.c.b16 %v6027, %v6023
    %v6188 = vpack.c.b16 %v6028, %v6024
    %v6189 = vpack.c.b16 %v6033, %v6029
    %v6190 = vpack.c.b16 %v6034, %v6030
    %v6191 = vpack.c.b16 %v6035, %v6031
    %v6192 = vpack.c.b16 %v6036, %v6032
    %v6193 = vpack.c.b16 %v6041, %v6037
    %v6194 = vpack.c.b16 %v6042, %v6038
    %v6195 = vpack.c.b16 %v6043, %v6039
    %v6196 = vpack.c.b16 %v6044, %v6040
    %v6197 = vpack.c.b16 %v6049, %v6045
    %v6198 = vpack.c.b16 %v6050, %v6046
    %v6199 = vpack.c.b16 %v6051, %v6047
    %v6200 = vpack.c.b16 %v6052, %v6048
    %v6201 = vpack.c.b16 %v6057, %v6053
    %v6202 = vpack.c.b16 %v6058, %v6054
    %v6203 = vpack.c.b16 %v6059, %v6055
    %v6204 = vpack.c.b16 %v6060, %v6056
    %v6205 = vpack.c.b16 %v6065, %v6061
    %v6206 = vpack.c.b16 %v6066, %v6062
    %v6207 = vpack.c.b16 %v6067, %v6063
    %v6208 = vpack.c.b16 %v6068, %v6064
    %v6209 = vpack.c.b16 %v6073, %v6069
    %v6210 = vpack.c.b16 %v6074, %v6070
    %v6211 = vpack.c.b16 %v6075, %v6071
    %v6212 = vpack.c.b16 %v6076, %v6072
    %v6213 = vpack.c.b16 %v6081, %v6077
    %v6214 = vpack.c.b16 %v6082, %v6078
    %v6215 = vpack.c.b16 %v6083, %v6079
    %v6216 = vpack.c.b16 %v6084, %v6080
    %v6217 = vpack.c.b16 %v6089, %v6085
    %v6218 = vpack.c.b16 %v6090, %v6086
    %v6219 = vpack.c.b16 %v6091, %v6087
    %v6220 = vpack.c.b16 %v6092, %v6088
    %6349 = vmatpush.bf16.msra.mxu0 %v6121
    %6350 = vmatpush.bf16.msra.mxu0 %v6117
    %6351 = vmatpush.bf16.msra.mxu0 %v6113
    %6352 = vmatpush.bf16.msra.mxu0 %v6109
    %6353 = vmatpush.bf16.msra.mxu0 %v6105
    %6354 = vmatpush.bf16.msra.mxu0 %v6101
    %6355 = vmatpush.bf16.msra.mxu0 %v6097
    %6356 = vmatpush.bf16.msra.mxu0 %v6093
    %6357 = vmatmul.bf16.gmra.mxu0 %v5565
    %v6358 = vpop.f32.mrf.mxu0
    %v6359 = vadd.f32 %v5701, %v6358
    %v6360 = vpop.f32.mrf.mxu0
    %6361 = vdwg.mxu0
    %6362 = vmatpush.bf16.msra.mxu0 %v6153
    %6363 = vmatpush.bf16.msra.mxu0 %v6149
    %6364 = vmatpush.bf16.msra.mxu0 %v6145
    %6365 = vmatpush.bf16.msra.mxu0 %v6141
    %6366 = vmatpush.bf16.msra.mxu0 %v6137
    %6367 = vmatpush.bf16.msra.mxu0 %v6133
    %6368 = vmatpush.bf16.msra.mxu0 %v6129
    %6369 = vmatpush.bf16.msra.mxu0 %v6125
    %6370 = vmatmul.bf16.gmra.mxu0 %v5566
    %v6371 = vpop.f32.mrf.mxu0
    %v6372 = vadd.f32 %v6359, %v6371
    %v6373 = vpop.f32.mrf.mxu0
    %6374 = vdwg.mxu0
    %6375 = vmatpush.bf16.msra.mxu0 %v6185
    %6376 = vmatpush.bf16.msra.mxu0 %v6181
    %6377 = vmatpush.bf16.msra.mxu0 %v6177
    %6378 = vmatpush.bf16.msra.mxu0 %v6173
    %6379 = vmatpush.bf16.msra.mxu0 %v6169
    %6380 = vmatpush.bf16.msra.mxu0 %v6165
    %6381 = vmatpush.bf16.msra.mxu0 %v6161
    %6382 = vmatpush.bf16.msra.mxu0 %v6157
    %6383 = vmatmul.bf16.gmra.mxu0 %v5567
    %v6384 = vpop.f32.mrf.mxu0
    %v6385 = vadd.f32 %v6372, %v6384
    %v6386 = vpop.f32.mrf.mxu0
    %6387 = vdwg.mxu0
    %6388 = vmatpush.bf16.msra.mxu0 %v6217
    %6389 = vmatpush.bf16.msra.mxu0 %v6213
    %6390 = vmatpush.bf16.msra.mxu0 %v6209
    %6391 = vmatpush.bf16.msra.mxu0 %v6205
    %6392 = vmatpush.bf16.msra.mxu0 %v6201
    %6393 = vmatpush.bf16.msra.mxu0 %v6197
    %6394 = vmatpush.bf16.msra.mxu0 %v6193
    %6395 = vmatpush.bf16.msra.mxu0 %v6189
    %6396 = vmatmul.bf16.gmra.mxu0 %v5568
    %v6397 = vpop.f32.mrf.mxu0
    %v6398 = vadd.f32 %v6385, %v6397
    %v6399 = vpop.f32.mrf.mxu0
    %6400 = vdwg.mxu0
    %6401 = vmatpush.bf16.msra.mxu0 %v6122
    %6402 = vmatpush.bf16.msra.mxu0 %v6118
    %6403 = vmatpush.bf16.msra.mxu0 %v6114
    %6404 = vmatpush.bf16.msra.mxu0 %v6110
    %6405 = vmatpush.bf16.msra.mxu0 %v6106
    %6406 = vmatpush.bf16.msra.mxu0 %v6102
    %6407 = vmatpush.bf16.msra.mxu0 %v6098
    %6408 = vmatpush.bf16.msra.mxu0 %v6094
    %6409 = vmatmul.bf16.gmra.mxu0 %v5565
    %v6410 = vpop.f32.mrf.mxu0
    %v6411 = vadd.f32 %v5702, %v6410
    %v6412 = vpop.f32.mrf.mxu0
    %6413 = vdwg.mxu0
    %6414 = vmatpush.bf16.msra.mxu0 %v6154
    %6415 = vmatpush.bf16.msra.mxu0 %v6150
    %6416 = vmatpush.bf16.msra.mxu0 %v6146
    %6417 = vmatpush.bf16.msra.mxu0 %v6142
    %6418 = vmatpush.bf16.msra.mxu0 %v6138
    %6419 = vmatpush.bf16.msra.mxu0 %v6134
    %6420 = vmatpush.bf16.msra.mxu0 %v6130
    %6421 = vmatpush.bf16.msra.mxu0 %v6126
    %6422 = vmatmul.bf16.gmra.mxu0 %v5566
    %v6423 = vpop.f32.mrf.mxu0
    %v6424 = vadd.f32 %v6411, %v6423
    %v6425 = vpop.f32.mrf.mxu0
    %6426 = vdwg.mxu0
    %6427 = vmatpush.bf16.msra.mxu0 %v6186
    %6428 = vmatpush.bf16.msra.mxu0 %v6182
    %6429 = vmatpush.bf16.msra.mxu0 %v6178
    %6430 = vmatpush.bf16.msra.mxu0 %v6174
    %6431 = vmatpush.bf16.msra.mxu0 %v6170
    %6432 = vmatpush.bf16.msra.mxu0 %v6166
    %6433 = vmatpush.bf16.msra.mxu0 %v6162
    %6434 = vmatpush.bf16.msra.mxu0 %v6158
    %6435 = vmatmul.bf16.gmra.mxu0 %v5567
    %v6436 = vpop.f32.mrf.mxu0
    %v6437 = vadd.f32 %v6424, %v6436
    %v6438 = vpop.f32.mrf.mxu0
    %6439 = vdwg.mxu0
    %6440 = vmatpush.bf16.msra.mxu0 %v6218
    %6441 = vmatpush.bf16.msra.mxu0 %v6214
    %6442 = vmatpush.bf16.msra.mxu0 %v6210
    %6443 = vmatpush.bf16.msra.mxu0 %v6206
    %6444 = vmatpush.bf16.msra.mxu0 %v6202
    %6445 = vmatpush.bf16.msra.mxu0 %v6198
    %6446 = vmatpush.bf16.msra.mxu0 %v6194
    %6447 = vmatpush.bf16.msra.mxu0 %v6190
    %6448 = vmatmul.bf16.gmra.mxu0 %v5568
    %v6449 = vpop.f32.mrf.mxu0
    %v6450 = vadd.f32 %v6437, %v6449
    %v6451 = vpop.f32.mrf.mxu0
    %6452 = vdwg.mxu0
    %6453 = vmatpush.bf16.msra.mxu0 %v6123
    %6454 = vmatpush.bf16.msra.mxu0 %v6119
    %6455 = vmatpush.bf16.msra.mxu0 %v6115
    %6456 = vmatpush.bf16.msra.mxu0 %v6111
    %6457 = vmatpush.bf16.msra.mxu0 %v6107
    %6458 = vmatpush.bf16.msra.mxu0 %v6103
    %6459 = vmatpush.bf16.msra.mxu0 %v6099
    %6460 = vmatpush.bf16.msra.mxu0 %v6095
    %6461 = vmatmul.bf16.gmra.mxu0 %v5565
    %v6462 = vpop.f32.mrf.mxu0
    %v6463 = vadd.f32 %v5703, %v6462
    %v6464 = vpop.f32.mrf.mxu0
    %6465 = vdwg.mxu0
    %6466 = vmatpush.bf16.msra.mxu0 %v6155
    %6467 = vmatpush.bf16.msra.mxu0 %v6151
    %6468 = vmatpush.bf16.msra.mxu0 %v6147
    %6469 = vmatpush.bf16.msra.mxu0 %v6143
    %6470 = vmatpush.bf16.msra.mxu0 %v6139
    %6471 = vmatpush.bf16.msra.mxu0 %v6135
    %6472 = vmatpush.bf16.msra.mxu0 %v6131
    %6473 = vmatpush.bf16.msra.mxu0 %v6127
    %6474 = vmatmul.bf16.gmra.mxu0 %v5566
    %v6475 = vpop.f32.mrf.mxu0
    %v6476 = vadd.f32 %v6463, %v6475
    %v6477 = vpop.f32.mrf.mxu0
    %6478 = vdwg.mxu0
    %6479 = vmatpush.bf16.msra.mxu0 %v6187
    %6480 = vmatpush.bf16.msra.mxu0 %v6183
    %6481 = vmatpush.bf16.msra.mxu0 %v6179
    %6482 = vmatpush.bf16.msra.mxu0 %v6175
    %6483 = vmatpush.bf16.msra.mxu0 %v6171
    %6484 = vmatpush.bf16.msra.mxu0 %v6167
    %6485 = vmatpush.bf16.msra.mxu0 %v6163
    %6486 = vmatpush.bf16.msra.mxu0 %v6159
    %6487 = vmatmul.bf16.gmra.mxu0 %v5567
    %v6488 = vpop.f32.mrf.mxu0
    %v6489 = vadd.f32 %v6476, %v6488
    %v6490 = vpop.f32.mrf.mxu0
    %6491 = vdwg.mxu0
    %6492 = vmatpush.bf16.msra.mxu0 %v6219
    %6493 = vmatpush.bf16.msra.mxu0 %v6215
    %6494 = vmatpush.bf16.msra.mxu0 %v6211
    %6495 = vmatpush.bf16.msra.mxu0 %v6207
    %6496 = vmatpush.bf16.msra.mxu0 %v6203
    %6497 = vmatpush.bf16.msra.mxu0 %v6199
    %6498 = vmatpush.bf16.msra.mxu0 %v6195
    %6499 = vmatpush.bf16.msra.mxu0 %v6191
    %6500 = vmatmul.bf16.gmra.mxu0 %v5568
    %v6501 = vpop.f32.mrf.mxu0
    %v6502 = vadd.f32 %v6489, %v6501
    %v6503 = vpop.f32.mrf.mxu0
    %6504 = vdwg.mxu0
    %6505 = vmatpush.bf16.msra.mxu0 %v6124
    %6506 = vmatpush.bf16.msra.mxu0 %v6120
    %6507 = vmatpush.bf16.msra.mxu0 %v6116
    %6508 = vmatpush.bf16.msra.mxu0 %v6112
    %6509 = vmatpush.bf16.msra.mxu0 %v6108
    %6510 = vmatpush.bf16.msra.mxu0 %v6104
    %6511 = vmatpush.bf16.msra.mxu0 %v6100
    %6512 = vmatpush.bf16.msra.mxu0 %v6096
    %6513 = vmatmul.bf16.gmra.mxu0 %v5565
    %v6514 = vpop.f32.mrf.mxu0
    %v6515 = vadd.f32 %v5704, %v6514
    %v6516 = vpop.f32.mrf.mxu0
    %6517 = vdwg.mxu0
    %6518 = vmatpush.bf16.msra.mxu0 %v6156
    %6519 = vmatpush.bf16.msra.mxu0 %v6152
    %6520 = vmatpush.bf16.msra.mxu0 %v6148
    %6521 = vmatpush.bf16.msra.mxu0 %v6144
    %6522 = vmatpush.bf16.msra.mxu0 %v6140
    %6523 = vmatpush.bf16.msra.mxu0 %v6136
    %6524 = vmatpush.bf16.msra.mxu0 %v6132
    %6525 = vmatpush.bf16.msra.mxu0 %v6128
    %6526 = vmatmul.bf16.gmra.mxu0 %v5566
    %v6527 = vpop.f32.mrf.mxu0
    %v6528 = vadd.f32 %v6515, %v6527
    %v6529 = vpop.f32.mrf.mxu0
    %6530 = vdwg.mxu0
    %6531 = vmatpush.bf16.msra.mxu0 %v6188
    %6532 = vmatpush.bf16.msra.mxu0 %v6184
    %6533 = vmatpush.bf16.msra.mxu0 %v6180
    %6534 = vmatpush.bf16.msra.mxu0 %v6176
    %6535 = vmatpush.bf16.msra.mxu0 %v6172
    %6536 = vmatpush.bf16.msra.mxu0 %v6168
    %6537 = vmatpush.bf16.msra.mxu0 %v6164
    %6538 = vmatpush.bf16.msra.mxu0 %v6160
    %6539 = vmatmul.bf16.gmra.mxu0 %v5567
    %v6540 = vpop.f32.mrf.mxu0
    %v6541 = vadd.f32 %v6528, %v6540
    %v6542 = vpop.f32.mrf.mxu0
    %6543 = vdwg.mxu0
    %6544 = vmatpush.bf16.msra.mxu0 %v6220
    %6545 = vmatpush.bf16.msra.mxu0 %v6216
    %6546 = vmatpush.bf16.msra.mxu0 %v6212
    %6547 = vmatpush.bf16.msra.mxu0 %v6208
    %6548 = vmatpush.bf16.msra.mxu0 %v6204
    %6549 = vmatpush.bf16.msra.mxu0 %v6200
    %6550 = vmatpush.bf16.msra.mxu0 %v6196
    %6551 = vmatpush.bf16.msra.mxu0 %v6192
    %6552 = vmatmul.bf16.gmra.mxu0 %v5568
    %v6553 = vpop.f32.mrf.mxu0
    %v6554 = vadd.f32 %v6541, %v6553
    %v6555 = vpop.f32.mrf.mxu0
    %6556 = vdwg.mxu0
    %v6557 = vtanh.pop %v6398
    %v6558 = vtanh.pop %v6450
    %v6559 = vtanh.pop %v6502
    %v6560 = vtanh.pop %v6554
    %v6561 = vpack.c.bf16 %v6557, %v6557
    %v6562 = vpack.c.bf16 %v6558, %v6558
    %v6563 = vpack.c.bf16 %v6559, %v6559
    %v6564 = vpack.c.bf16 %v6560, %v6560
    %s6565 = scalar_lea.vmem [#allocation4], 1024
    %v6566 = vld [vmem:[%s6565] sm:$0xff]
    %v6567 = vld [vmem:[%s6565 + $0x8] sm:$0xff]
    %v6568 = vld [vmem:[%s6565 + $0x10] sm:$0xff]
    %v6569 = vld [vmem:[%s6565 + $0x18] sm:$0xff]
    %v6570 = vld [vmem:[%s6565 + $0x20] sm:$0xff]
    %v6571 = vld [vmem:[%s6565 + $0x28] sm:$0xff]
    %v6572 = vld [vmem:[%s6565 + $0x30] sm:$0xff]
    %v6573 = vld [vmem:[%s6565 + $0x38] sm:$0xff]
    %v6574 = vld [vmem:[%s6565 + $0x40] sm:$0xff]
    %v6575 = vld [vmem:[%s6565 + $0x48] sm:$0xff]
    %v6576 = vld [vmem:[%s6565 + $0x50] sm:$0xff]
    %v6577 = vld [vmem:[%s6565 + $0x58] sm:$0xff]
    %v6578 = vld [vmem:[%s6565 + $0x60] sm:$0xff]
    %v6579 = vld [vmem:[%s6565 + $0x68] sm:$0xff]
    %v6580 = vld [vmem:[%s6565 + $0x70] sm:$0xff]
    %v6581 = vld [vmem:[%s6565 + $0x78] sm:$0xff]
    %v6582 = vld [vmem:[%s6565 + $0x80] sm:$0xff]
    %v6583 = vld [vmem:[%s6565 + $0x88] sm:$0xff]
    %v6584 = vld [vmem:[%s6565 + $0x90] sm:$0xff]
    %v6585 = vld [vmem:[%s6565 + $0x98] sm:$0xff]
    %v6586 = vld [vmem:[%s6565 + $0xa0] sm:$0xff]
    %v6587 = vld [vmem:[%s6565 + $0xa8] sm:$0xff]
    %v6588 = vld [vmem:[%s6565 + $0xb0] sm:$0xff]
    %v6589 = vld [vmem:[%s6565 + $0xb8] sm:$0xff]
    %v6590 = vld [vmem:[%s6565 + $0xc0] sm:$0xff]
    %v6591 = vld [vmem:[%s6565 + $0xc8] sm:$0xff]
    %v6592 = vld [vmem:[%s6565 + $0xd0] sm:$0xff]
    %v6593 = vld [vmem:[%s6565 + $0xd8] sm:$0xff]
    %v6594 = vld [vmem:[%s6565 + $0xe0] sm:$0xff]
    %v6595 = vld [vmem:[%s6565 + $0xe8] sm:$0xff]
    %v6596 = vld [vmem:[%s6565 + $0xf0] sm:$0xff]
    %v6597 = vld [vmem:[%s6565 + $0xf8] sm:$0xff]
    %v6598 = vld [vmem:[%s6565 + $0x100] sm:$0xff]
    %v6599 = vld [vmem:[%s6565 + $0x108] sm:$0xff]
    %v6600 = vld [vmem:[%s6565 + $0x110] sm:$0xff]
    %v6601 = vld [vmem:[%s6565 + $0x118] sm:$0xff]
    %v6602 = vld [vmem:[%s6565 + $0x120] sm:$0xff]
    %v6603 = vld [vmem:[%s6565 + $0x128] sm:$0xff]
    %v6604 = vld [vmem:[%s6565 + $0x130] sm:$0xff]
    %v6605 = vld [vmem:[%s6565 + $0x138] sm:$0xff]
    %v6606 = vld [vmem:[%s6565 + $0x140] sm:$0xff]
    %v6607 = vld [vmem:[%s6565 + $0x148] sm:$0xff]
    %v6608 = vld [vmem:[%s6565 + $0x150] sm:$0xff]
    %v6609 = vld [vmem:[%s6565 + $0x158] sm:$0xff]
    %v6610 = vld [vmem:[%s6565 + $0x160] sm:$0xff]
    %v6611 = vld [vmem:[%s6565 + $0x168] sm:$0xff]
    %v6612 = vld [vmem:[%s6565 + $0x170] sm:$0xff]
    %v6613 = vld [vmem:[%s6565 + $0x178] sm:$0xff]
    %v6614 = vld [vmem:[%s6565 + $0x180] sm:$0xff]
    %v6615 = vld [vmem:[%s6565 + $0x188] sm:$0xff]
    %v6616 = vld [vmem:[%s6565 + $0x190] sm:$0xff]
    %v6617 = vld [vmem:[%s6565 + $0x198] sm:$0xff]
    %v6618 = vld [vmem:[%s6565 + $0x1a0] sm:$0xff]
    %v6619 = vld [vmem:[%s6565 + $0x1a8] sm:$0xff]
    %v6620 = vld [vmem:[%s6565 + $0x1b0] sm:$0xff]
    %v6621 = vld [vmem:[%s6565 + $0x1b8] sm:$0xff]
    %v6622 = vld [vmem:[%s6565 + $0x1c0] sm:$0xff]
    %v6623 = vld [vmem:[%s6565 + $0x1c8] sm:$0xff]
    %v6624 = vld [vmem:[%s6565 + $0x1d0] sm:$0xff]
    %v6625 = vld [vmem:[%s6565 + $0x1d8] sm:$0xff]
    %v6626 = vld [vmem:[%s6565 + $0x1e0] sm:$0xff]
    %v6627 = vld [vmem:[%s6565 + $0x1e8] sm:$0xff]
    %v6628 = vld [vmem:[%s6565 + $0x1f0] sm:$0xff]
    %v6629 = vld [vmem:[%s6565 + $0x1f8] sm:$0xff]
    %v6630 = vld [vmem:[%s6565 + $0x200] sm:$0xff]
    %v6631 = vld [vmem:[%s6565 + $0x208] sm:$0xff]
    %v6632 = vld [vmem:[%s6565 + $0x210] sm:$0xff]
    %v6633 = vld [vmem:[%s6565 + $0x218] sm:$0xff]
    %v6634 = vld [vmem:[%s6565 + $0x220] sm:$0xff]
    %v6635 = vld [vmem:[%s6565 + $0x228] sm:$0xff]
    %v6636 = vld [vmem:[%s6565 + $0x230] sm:$0xff]
    %v6637 = vld [vmem:[%s6565 + $0x238] sm:$0xff]
    %v6638 = vld [vmem:[%s6565 + $0x240] sm:$0xff]
    %v6639 = vld [vmem:[%s6565 + $0x248] sm:$0xff]
    %v6640 = vld [vmem:[%s6565 + $0x250] sm:$0xff]
    %v6641 = vld [vmem:[%s6565 + $0x258] sm:$0xff]
    %v6642 = vld [vmem:[%s6565 + $0x260] sm:$0xff]
    %v6643 = vld [vmem:[%s6565 + $0x268] sm:$0xff]
    %v6644 = vld [vmem:[%s6565 + $0x270] sm:$0xff]
    %v6645 = vld [vmem:[%s6565 + $0x278] sm:$0xff]
    %v6646 = vld [vmem:[%s6565 + $0x280] sm:$0xff]
    %v6647 = vld [vmem:[%s6565 + $0x288] sm:$0xff]
    %v6648 = vld [vmem:[%s6565 + $0x290] sm:$0xff]
    %v6649 = vld [vmem:[%s6565 + $0x298] sm:$0xff]
    %v6650 = vld [vmem:[%s6565 + $0x2a0] sm:$0xff]
    %v6651 = vld [vmem:[%s6565 + $0x2a8] sm:$0xff]
    %v6652 = vld [vmem:[%s6565 + $0x2b0] sm:$0xff]
    %v6653 = vld [vmem:[%s6565 + $0x2b8] sm:$0xff]
    %v6654 = vld [vmem:[%s6565 + $0x2c0] sm:$0xff]
    %v6655 = vld [vmem:[%s6565 + $0x2c8] sm:$0xff]
    %v6656 = vld [vmem:[%s6565 + $0x2d0] sm:$0xff]
    %v6657 = vld [vmem:[%s6565 + $0x2d8] sm:$0xff]
    %v6658 = vld [vmem:[%s6565 + $0x2e0] sm:$0xff]
    %v6659 = vld [vmem:[%s6565 + $0x2e8] sm:$0xff]
    %v6660 = vld [vmem:[%s6565 + $0x2f0] sm:$0xff]
    %v6661 = vld [vmem:[%s6565 + $0x2f8] sm:$0xff]
    %v6662 = vld [vmem:[%s6565 + $0x300] sm:$0xff]
    %v6663 = vld [vmem:[%s6565 + $0x308] sm:$0xff]
    %v6664 = vld [vmem:[%s6565 + $0x310] sm:$0xff]
    %v6665 = vld [vmem:[%s6565 + $0x318] sm:$0xff]
    %v6666 = vld [vmem:[%s6565 + $0x320] sm:$0xff]
    %v6667 = vld [vmem:[%s6565 + $0x328] sm:$0xff]
    %v6668 = vld [vmem:[%s6565 + $0x330] sm:$0xff]
    %v6669 = vld [vmem:[%s6565 + $0x338] sm:$0xff]
    %v6670 = vld [vmem:[%s6565 + $0x340] sm:$0xff]
    %v6671 = vld [vmem:[%s6565 + $0x348] sm:$0xff]
    %v6672 = vld [vmem:[%s6565 + $0x350] sm:$0xff]
    %v6673 = vld [vmem:[%s6565 + $0x358] sm:$0xff]
    %v6674 = vld [vmem:[%s6565 + $0x360] sm:$0xff]
    %v6675 = vld [vmem:[%s6565 + $0x368] sm:$0xff]
    %v6676 = vld [vmem:[%s6565 + $0x370] sm:$0xff]
    %v6677 = vld [vmem:[%s6565 + $0x378] sm:$0xff]
    %v6678 = vld [vmem:[%s6565 + $0x380] sm:$0xff]
    %v6679 = vld [vmem:[%s6565 + $0x388] sm:$0xff]
    %v6680 = vld [vmem:[%s6565 + $0x390] sm:$0xff]
    %v6681 = vld [vmem:[%s6565 + $0x398] sm:$0xff]
    %v6682 = vld [vmem:[%s6565 + $0x3a0] sm:$0xff]
    %v6683 = vld [vmem:[%s6565 + $0x3a8] sm:$0xff]
    %v6684 = vld [vmem:[%s6565 + $0x3b0] sm:$0xff]
    %v6685 = vld [vmem:[%s6565 + $0x3b8] sm:$0xff]
    %v6686 = vld [vmem:[%s6565 + $0x3c0] sm:$0xff]
    %v6687 = vld [vmem:[%s6565 + $0x3c8] sm:$0xff]
    %v6688 = vld [vmem:[%s6565 + $0x3d0] sm:$0xff]
    %v6689 = vld [vmem:[%s6565 + $0x3d8] sm:$0xff]
    %v6690 = vld [vmem:[%s6565 + $0x3e0] sm:$0xff]
    %v6691 = vld [vmem:[%s6565 + $0x3e8] sm:$0xff]
    %v6692 = vld [vmem:[%s6565 + $0x3f0] sm:$0xff]
    %v6693 = vld [vmem:[%s6565 + $0x3f8] sm:$0xff]
    %s6694 = scalar_lea.vmem %s14, 4
    %v6695 = vld [vmem:[%s6694] sm:$0xf]
    %v6697 = vperm.slane %v6695, 0
    %v6698 = vperm.slane %v6695, 1
    %v6699 = vperm.slane %v6695, 2
    %v6700 = vperm.slane %v6695, 3
    %v6833 = vunpack.c.l.b16 %v6566
    %v6834 = vunpack.c.h.b16 %v6566
    %v6835 = vunpack.c.l.b16 %v6567
    %v6836 = vunpack.c.h.b16 %v6567
    %v6837 = vunpack.c.l.b16 %v6568
    %v6838 = vunpack.c.h.b16 %v6568
    %v6839 = vunpack.c.l.b16 %v6569
    %v6840 = vunpack.c.h.b16 %v6569
    %v6841 = vunpack.c.l.b16 %v6570
    %v6842 = vunpack.c.h.b16 %v6570
    %v6843 = vunpack.c.l.b16 %v6571
    %v6844 = vunpack.c.h.b16 %v6571
    %v6845 = vunpack.c.l.b16 %v6572
    %v6846 = vunpack.c.h.b16 %v6572
    %v6847 = vunpack.c.l.b16 %v6573
    %v6848 = vunpack.c.h.b16 %v6573
    %v6849 = vunpack.c.l.b16 %v6574
    %v6850 = vunpack.c.h.b16 %v6574
    %v6851 = vunpack.c.l.b16 %v6575
    %v6852 = vunpack.c.h.b16 %v6575
    %v6853 = vunpack.c.l.b16 %v6576
    %v6854 = vunpack.c.h.b16 %v6576
    %v6855 = vunpack.c.l.b16 %v6577
    %v6856 = vunpack.c.h.b16 %v6577
    %v6857 = vunpack.c.l.b16 %v6578
    %v6858 = vunpack.c.h.b16 %v6578
    %v6859 = vunpack.c.l.b16 %v6579
    %v6860 = vunpack.c.h.b16 %v6579
    %v6861 = vunpack.c.l.b16 %v6580
    %v6862 = vunpack.c.h.b16 %v6580
    %v6863 = vunpack.c.l.b16 %v6581
    %v6864 = vunpack.c.h.b16 %v6581
    %v6865 = vunpack.c.l.b16 %v6582
    %v6866 = vunpack.c.h.b16 %v6582
    %v6867 = vunpack.c.l.b16 %v6583
    %v6868 = vunpack.c.h.b16 %v6583
    %v6869 = vunpack.c.l.b16 %v6584
    %v6870 = vunpack.c.h.b16 %v6584
    %v6871 = vunpack.c.l.b16 %v6585
    %v6872 = vunpack.c.h.b16 %v6585
    %v6873 = vunpack.c.l.b16 %v6586
    %v6874 = vunpack.c.h.b16 %v6586
    %v6875 = vunpack.c.l.b16 %v6587
    %v6876 = vunpack.c.h.b16 %v6587
    %v6877 = vunpack.c.l.b16 %v6588
    %v6878 = vunpack.c.h.b16 %v6588
    %v6879 = vunpack.c.l.b16 %v6589
    %v6880 = vunpack.c.h.b16 %v6589
    %v6881 = vunpack.c.l.b16 %v6590
    %v6882 = vunpack.c.h.b16 %v6590
    %v6883 = vunpack.c.l.b16 %v6591
    %v6884 = vunpack.c.h.b16 %v6591
    %v6885 = vunpack.c.l.b16 %v6592
    %v6886 = vunpack.c.h.b16 %v6592
    %v6887 = vunpack.c.l.b16 %v6593
    %v6888 = vunpack.c.h.b16 %v6593
    %v6889 = vunpack.c.l.b16 %v6594
    %v6890 = vunpack.c.h.b16 %v6594
    %v6891 = vunpack.c.l.b16 %v6595
    %v6892 = vunpack.c.h.b16 %v6595
    %v6893 = vunpack.c.l.b16 %v6596
    %v6894 = vunpack.c.h.b16 %v6596
    %v6895 = vunpack.c.l.b16 %v6597
    %v6896 = vunpack.c.h.b16 %v6597
    %v6897 = vunpack.c.l.b16 %v6598
    %v6898 = vunpack.c.h.b16 %v6598
    %v6899 = vunpack.c.l.b16 %v6599
    %v6900 = vunpack.c.h.b16 %v6599
    %v6901 = vunpack.c.l.b16 %v6600
    %v6902 = vunpack.c.h.b16 %v6600
    %v6903 = vunpack.c.l.b16 %v6601
    %v6904 = vunpack.c.h.b16 %v6601
    %v6905 = vunpack.c.l.b16 %v6602
    %v6906 = vunpack.c.h.b16 %v6602
    %v6907 = vunpack.c.l.b16 %v6603
    %v6908 = vunpack.c.h.b16 %v6603
    %v6909 = vunpack.c.l.b16 %v6604
    %v6910 = vunpack.c.h.b16 %v6604
    %v6911 = vunpack.c.l.b16 %v6605
    %v6912 = vunpack.c.h.b16 %v6605
    %v6913 = vunpack.c.l.b16 %v6606
    %v6914 = vunpack.c.h.b16 %v6606
    %v6915 = vunpack.c.l.b16 %v6607
    %v6916 = vunpack.c.h.b16 %v6607
    %v6917 = vunpack.c.l.b16 %v6608
    %v6918 = vunpack.c.h.b16 %v6608
    %v6919 = vunpack.c.l.b16 %v6609
    %v6920 = vunpack.c.h.b16 %v6609
    %v6921 = vunpack.c.l.b16 %v6610
    %v6922 = vunpack.c.h.b16 %v6610
    %v6923 = vunpack.c.l.b16 %v6611
    %v6924 = vunpack.c.h.b16 %v6611
    %v6925 = vunpack.c.l.b16 %v6612
    %v6926 = vunpack.c.h.b16 %v6612
    %v6927 = vunpack.c.l.b16 %v6613
    %v6928 = vunpack.c.h.b16 %v6613
    %v6929 = vunpack.c.l.b16 %v6614
    %v6930 = vunpack.c.h.b16 %v6614
    %v6931 = vunpack.c.l.b16 %v6615
    %v6932 = vunpack.c.h.b16 %v6615
    %v6933 = vunpack.c.l.b16 %v6616
    %v6934 = vunpack.c.h.b16 %v6616
    %v6935 = vunpack.c.l.b16 %v6617
    %v6936 = vunpack.c.h.b16 %v6617
    %v6937 = vunpack.c.l.b16 %v6618
    %v6938 = vunpack.c.h.b16 %v6618
    %v6939 = vunpack.c.l.b16 %v6619
    %v6940 = vunpack.c.h.b16 %v6619
    %v6941 = vunpack.c.l.b16 %v6620
    %v6942 = vunpack.c.h.b16 %v6620
    %v6943 = vunpack.c.l.b16 %v6621
    %v6944 = vunpack.c.h.b16 %v6621
    %v6945 = vunpack.c.l.b16 %v6622
    %v6946 = vunpack.c.h.b16 %v6622
    %v6947 = vunpack.c.l.b16 %v6623
    %v6948 = vunpack.c.h.b16 %v6623
    %v6949 = vunpack.c.l.b16 %v6624
    %v6950 = vunpack.c.h.b16 %v6624
    %v6951 = vunpack.c.l.b16 %v6625
    %v6952 = vunpack.c.h.b16 %v6625
    %v6953 = vunpack.c.l.b16 %v6626
    %v6954 = vunpack.c.h.b16 %v6626
    %v6955 = vunpack.c.l.b16 %v6627
    %v6956 = vunpack.c.h.b16 %v6627
    %v6957 = vunpack.c.l.b16 %v6628
    %v6958 = vunpack.c.h.b16 %v6628
    %v6959 = vunpack.c.l.b16 %v6629
    %v6960 = vunpack.c.h.b16 %v6629
    %v6961 = vunpack.c.l.b16 %v6630
    %v6962 = vunpack.c.h.b16 %v6630
    %v6963 = vunpack.c.l.b16 %v6631
    %v6964 = vunpack.c.h.b16 %v6631
    %v6965 = vunpack.c.l.b16 %v6632
    %v6966 = vunpack.c.h.b16 %v6632
    %v6967 = vunpack.c.l.b16 %v6633
    %v6968 = vunpack.c.h.b16 %v6633
    %v6969 = vunpack.c.l.b16 %v6634
    %v6970 = vunpack.c.h.b16 %v6634
    %v6971 = vunpack.c.l.b16 %v6635
    %v6972 = vunpack.c.h.b16 %v6635
    %v6973 = vunpack.c.l.b16 %v6636
    %v6974 = vunpack.c.h.b16 %v6636
    %v6975 = vunpack.c.l.b16 %v6637
    %v6976 = vunpack.c.h.b16 %v6637
    %v6977 = vunpack.c.l.b16 %v6638
    %v6978 = vunpack.c.h.b16 %v6638
    %v6979 = vunpack.c.l.b16 %v6639
    %v6980 = vunpack.c.h.b16 %v6639
    %v6981 = vunpack.c.l.b16 %v6640
    %v6982 = vunpack.c.h.b16 %v6640
    %v6983 = vunpack.c.l.b16 %v6641
    %v6984 = vunpack.c.h.b16 %v6641
    %v6985 = vunpack.c.l.b16 %v6642
    %v6986 = vunpack.c.h.b16 %v6642
    %v6987 = vunpack.c.l.b16 %v6643
    %v6988 = vunpack.c.h.b16 %v6643
    %v6989 = vunpack.c.l.b16 %v6644
    %v6990 = vunpack.c.h.b16 %v6644
    %v6991 = vunpack.c.l.b16 %v6645
    %v6992 = vunpack.c.h.b16 %v6645
    %v6993 = vunpack.c.l.b16 %v6646
    %v6994 = vunpack.c.h.b16 %v6646
    %v6995 = vunpack.c.l.b16 %v6647
    %v6996 = vunpack.c.h.b16 %v6647
    %v6997 = vunpack.c.l.b16 %v6648
    %v6998 = vunpack.c.h.b16 %v6648
    %v6999 = vunpack.c.l.b16 %v6649
    %v7000 = vunpack.c.h.b16 %v6649
    %v7001 = vunpack.c.l.b16 %v6650
    %v7002 = vunpack.c.h.b16 %v6650
    %v7003 = vunpack.c.l.b16 %v6651
    %v7004 = vunpack.c.h.b16 %v6651
    %v7005 = vunpack.c.l.b16 %v6652
    %v7006 = vunpack.c.h.b16 %v6652
    %v7007 = vunpack.c.l.b16 %v6653
    %v7008 = vunpack.c.h.b16 %v6653
    %v7009 = vunpack.c.l.b16 %v6654
    %v7010 = vunpack.c.h.b16 %v6654
    %v7011 = vunpack.c.l.b16 %v6655
    %v7012 = vunpack.c.h.b16 %v6655
    %v7013 = vunpack.c.l.b16 %v6656
    %v7014 = vunpack.c.h.b16 %v6656
    %v7015 = vunpack.c.l.b16 %v6657
    %v7016 = vunpack.c.h.b16 %v6657
    %v7017 = vunpack.c.l.b16 %v6658
    %v7018 = vunpack.c.h.b16 %v6658
    %v7019 = vunpack.c.l.b16 %v6659
    %v7020 = vunpack.c.h.b16 %v6659
    %v7021 = vunpack.c.l.b16 %v6660
    %v7022 = vunpack.c.h.b16 %v6660
    %v7023 = vunpack.c.l.b16 %v6661
    %v7024 = vunpack.c.h.b16 %v6661
    %v7025 = vunpack.c.l.b16 %v6662
    %v7026 = vunpack.c.h.b16 %v6662
    %v7027 = vunpack.c.l.b16 %v6663
    %v7028 = vunpack.c.h.b16 %v6663
    %v7029 = vunpack.c.l.b16 %v6664
    %v7030 = vunpack.c.h.b16 %v6664
    %v7031 = vunpack.c.l.b16 %v6665
    %v7032 = vunpack.c.h.b16 %v6665
    %v7033 = vunpack.c.l.b16 %v6666
    %v7034 = vunpack.c.h.b16 %v6666
    %v7035 = vunpack.c.l.b16 %v6667
    %v7036 = vunpack.c.h.b16 %v6667
    %v7037 = vunpack.c.l.b16 %v6668
    %v7038 = vunpack.c.h.b16 %v6668
    %v7039 = vunpack.c.l.b16 %v6669
    %v7040 = vunpack.c.h.b16 %v6669
    %v7041 = vunpack.c.l.b16 %v6670
    %v7042 = vunpack.c.h.b16 %v6670
    %v7043 = vunpack.c.l.b16 %v6671
    %v7044 = vunpack.c.h.b16 %v6671
    %v7045 = vunpack.c.l.b16 %v6672
    %v7046 = vunpack.c.h.b16 %v6672
    %v7047 = vunpack.c.l.b16 %v6673
    %v7048 = vunpack.c.h.b16 %v6673
    %v7049 = vunpack.c.l.b16 %v6674
    %v7050 = vunpack.c.h.b16 %v6674
    %v7051 = vunpack.c.l.b16 %v6675
    %v7052 = vunpack.c.h.b16 %v6675
    %v7053 = vunpack.c.l.b16 %v6676
    %v7054 = vunpack.c.h.b16 %v6676
    %v7055 = vunpack.c.l.b16 %v6677
    %v7056 = vunpack.c.h.b16 %v6677
    %v7057 = vunpack.c.l.b16 %v6678
    %v7058 = vunpack.c.h.b16 %v6678
    %v7059 = vunpack.c.l.b16 %v6679
    %v7060 = vunpack.c.h.b16 %v6679
    %v7061 = vunpack.c.l.b16 %v6680
    %v7062 = vunpack.c.h.b16 %v6680
    %v7063 = vunpack.c.l.b16 %v6681
    %v7064 = vunpack.c.h.b16 %v6681
    %v7065 = vunpack.c.l.b16 %v6682
    %v7066 = vunpack.c.h.b16 %v6682
    %v7067 = vunpack.c.l.b16 %v6683
    %v7068 = vunpack.c.h.b16 %v6683
    %v7069 = vunpack.c.l.b16 %v6684
    %v7070 = vunpack.c.h.b16 %v6684
    %v7071 = vunpack.c.l.b16 %v6685
    %v7072 = vunpack.c.h.b16 %v6685
    %v7073 = vunpack.c.l.b16 %v6686
    %v7074 = vunpack.c.h.b16 %v6686
    %v7075 = vunpack.c.l.b16 %v6687
    %v7076 = vunpack.c.h.b16 %v6687
    %v7077 = vunpack.c.l.b16 %v6688
    %v7078 = vunpack.c.h.b16 %v6688
    %v7079 = vunpack.c.l.b16 %v6689
    %v7080 = vunpack.c.h.b16 %v6689
    %v7081 = vunpack.c.l.b16 %v6690
    %v7082 = vunpack.c.h.b16 %v6690
    %v7083 = vunpack.c.l.b16 %v6691
    %v7084 = vunpack.c.h.b16 %v6691
    %v7085 = vunpack.c.l.b16 %v6692
    %v7086 = vunpack.c.h.b16 %v6692
    %v7087 = vunpack.c.l.b16 %v6693
    %v7088 = vunpack.c.h.b16 %v6693
    %v7089 = vpack.c.b16 %v6837, %v6833
    %v7090 = vpack.c.b16 %v6838, %v6834
    %v7091 = vpack.c.b16 %v6839, %v6835
    %v7092 = vpack.c.b16 %v6840, %v6836
    %v7093 = vpack.c.b16 %v6845, %v6841
    %v7094 = vpack.c.b16 %v6846, %v6842
    %v7095 = vpack.c.b16 %v6847, %v6843
    %v7096 = vpack.c.b16 %v6848, %v6844
    %v7097 = vpack.c.b16 %v6853, %v6849
    %v7098 = vpack.c.b16 %v6854, %v6850
    %v7099 = vpack.c.b16 %v6855, %v6851
    %v7100 = vpack.c.b16 %v6856, %v6852
    %v7101 = vpack.c.b16 %v6861, %v6857
    %v7102 = vpack.c.b16 %v6862, %v6858
    %v7103 = vpack.c.b16 %v6863, %v6859
    %v7104 = vpack.c.b16 %v6864, %v6860
    %v7105 = vpack.c.b16 %v6869, %v6865
    %v7106 = vpack.c.b16 %v6870, %v6866
    %v7107 = vpack.c.b16 %v6871, %v6867
    %v7108 = vpack.c.b16 %v6872, %v6868
    %v7109 = vpack.c.b16 %v6877, %v6873
    %v7110 = vpack.c.b16 %v6878, %v6874
    %v7111 = vpack.c.b16 %v6879, %v6875
    %v7112 = vpack.c.b16 %v6880, %v6876
    %v7113 = vpack.c.b16 %v6885, %v6881
    %v7114 = vpack.c.b16 %v6886, %v6882
    %v7115 = vpack.c.b16 %v6887, %v6883
    %v7116 = vpack.c.b16 %v6888, %v6884
    %v7117 = vpack.c.b16 %v6893, %v6889
    %v7118 = vpack.c.b16 %v6894, %v6890
    %v7119 = vpack.c.b16 %v6895, %v6891
    %v7120 = vpack.c.b16 %v6896, %v6892
    %v7121 = vpack.c.b16 %v6901, %v6897
    %v7122 = vpack.c.b16 %v6902, %v6898
    %v7123 = vpack.c.b16 %v6903, %v6899
    %v7124 = vpack.c.b16 %v6904, %v6900
    %v7125 = vpack.c.b16 %v6909, %v6905
    %v7126 = vpack.c.b16 %v6910, %v6906
    %v7127 = vpack.c.b16 %v6911, %v6907
    %v7128 = vpack.c.b16 %v6912, %v6908
    %v7129 = vpack.c.b16 %v6917, %v6913
    %v7130 = vpack.c.b16 %v6918, %v6914
    %v7131 = vpack.c.b16 %v6919, %v6915
    %v7132 = vpack.c.b16 %v6920, %v6916
    %v7133 = vpack.c.b16 %v6925, %v6921
    %v7134 = vpack.c.b16 %v6926, %v6922
    %v7135 = vpack.c.b16 %v6927, %v6923
    %v7136 = vpack.c.b16 %v6928, %v6924
    %v7137 = vpack.c.b16 %v6933, %v6929
    %v7138 = vpack.c.b16 %v6934, %v6930
    %v7139 = vpack.c.b16 %v6935, %v6931
    %v7140 = vpack.c.b16 %v6936, %v6932
    %v7141 = vpack.c.b16 %v6941, %v6937
    %v7142 = vpack.c.b16 %v6942, %v6938
    %v7143 = vpack.c.b16 %v6943, %v6939
    %v7144 = vpack.c.b16 %v6944, %v6940
    %v7145 = vpack.c.b16 %v6949, %v6945
    %v7146 = vpack.c.b16 %v6950, %v6946
    %v7147 = vpack.c.b16 %v6951, %v6947
    %v7148 = vpack.c.b16 %v6952, %v6948
    %v7149 = vpack.c.b16 %v6957, %v6953
    %v7150 = vpack.c.b16 %v6958, %v6954
    %v7151 = vpack.c.b16 %v6959, %v6955
    %v7152 = vpack.c.b16 %v6960, %v6956
    %v7153 = vpack.c.b16 %v6965, %v6961
    %v7154 = vpack.c.b16 %v6966, %v6962
    %v7155 = vpack.c.b16 %v6967, %v6963
    %v7156 = vpack.c.b16 %v6968, %v6964
    %v7157 = vpack.c.b16 %v6973, %v6969
    %v7158 = vpack.c.b16 %v6974, %v6970
    %v7159 = vpack.c.b16 %v6975, %v6971
    %v7160 = vpack.c.b16 %v6976, %v6972
    %v7161 = vpack.c.b16 %v6981, %v6977
    %v7162 = vpack.c.b16 %v6982, %v6978
    %v7163 = vpack.c.b16 %v6983, %v6979
    %v7164 = vpack.c.b16 %v6984, %v6980
    %v7165 = vpack.c.b16 %v6989, %v6985
    %v7166 = vpack.c.b16 %v6990, %v6986
    %v7167 = vpack.c.b16 %v6991, %v6987
    %v7168 = vpack.c.b16 %v6992, %v6988
    %v7169 = vpack.c.b16 %v6997, %v6993
    %v7170 = vpack.c.b16 %v6998, %v6994
    %v7171 = vpack.c.b16 %v6999, %v6995
    %v7172 = vpack.c.b16 %v7000, %v6996
    %v7173 = vpack.c.b16 %v7005, %v7001
    %v7174 = vpack.c.b16 %v7006, %v7002
    %v7175 = vpack.c.b16 %v7007, %v7003
    %v7176 = vpack.c.b16 %v7008, %v7004
    %v7177 = vpack.c.b16 %v7013, %v7009
    %v7178 = vpack.c.b16 %v7014, %v7010
    %v7179 = vpack.c.b16 %v7015, %v7011
    %v7180 = vpack.c.b16 %v7016, %v7012
    %v7181 = vpack.c.b16 %v7021, %v7017
    %v7182 = vpack.c.b16 %v7022, %v7018
    %v7183 = vpack.c.b16 %v7023, %v7019
    %v7184 = vpack.c.b16 %v7024, %v7020
    %v7185 = vpack.c.b16 %v7029, %v7025
    %v7186 = vpack.c.b16 %v7030, %v7026
    %v7187 = vpack.c.b16 %v7031, %v7027
    %v7188 = vpack.c.b16 %v7032, %v7028
    %v7189 = vpack.c.b16 %v7037, %v7033
    %v7190 = vpack.c.b16 %v7038, %v7034
    %v7191 = vpack.c.b16 %v7039, %v7035
    %v7192 = vpack.c.b16 %v7040, %v7036
    %v7193 = vpack.c.b16 %v7045, %v7041
    %v7194 = vpack.c.b16 %v7046, %v7042
    %v7195 = vpack.c.b16 %v7047, %v7043
    %v7196 = vpack.c.b16 %v7048, %v7044
    %v7197 = vpack.c.b16 %v7053, %v7049
    %v7198 = vpack.c.b16 %v7054, %v7050
    %v7199 = vpack.c.b16 %v7055, %v7051
    %v7200 = vpack.c.b16 %v7056, %v7052
    %v7201 = vpack.c.b16 %v7061, %v7057
    %v7202 = vpack.c.b16 %v7062, %v7058
    %v7203 = vpack.c.b16 %v7063, %v7059
    %v7204 = vpack.c.b16 %v7064, %v7060
    %v7205 = vpack.c.b16 %v7069, %v7065
    %v7206 = vpack.c.b16 %v7070, %v7066
    %v7207 = vpack.c.b16 %v7071, %v7067
    %v7208 = vpack.c.b16 %v7072, %v7068
    %v7209 = vpack.c.b16 %v7077, %v7073
    %v7210 = vpack.c.b16 %v7078, %v7074
    %v7211 = vpack.c.b16 %v7079, %v7075
    %v7212 = vpack.c.b16 %v7080, %v7076
    %v7213 = vpack.c.b16 %v7085, %v7081
    %v7214 = vpack.c.b16 %v7086, %v7082
    %v7215 = vpack.c.b16 %v7087, %v7083
    %v7216 = vpack.c.b16 %v7088, %v7084
    %7345 = vmatpush.bf16.msra.mxu0 %v7117
    %7346 = vmatpush.bf16.msra.mxu0 %v7113
    %7347 = vmatpush.bf16.msra.mxu0 %v7109
    %7348 = vmatpush.bf16.msra.mxu0 %v7105
    %7349 = vmatpush.bf16.msra.mxu0 %v7101
    %7350 = vmatpush.bf16.msra.mxu0 %v7097
    %7351 = vmatpush.bf16.msra.mxu0 %v7093
    %7352 = vmatpush.bf16.msra.mxu0 %v7089
    %7353 = vmatmul.bf16.gmra.mxu0 %v6561
    %v7354 = vpop.f32.mrf.mxu0
    %v7355 = vadd.f32 %v6697, %v7354
    %v7356 = vpop.f32.mrf.mxu0
    %7357 = vdwg.mxu0
    %7358 = vmatpush.bf16.msra.mxu0 %v7149
    %7359 = vmatpush.bf16.msra.mxu0 %v7145
    %7360 = vmatpush.bf16.msra.mxu0 %v7141
    %7361 = vmatpush.bf16.msra.mxu0 %v7137
    %7362 = vmatpush.bf16.msra.mxu0 %v7133
    %7363 = vmatpush.bf16.msra.mxu0 %v7129
    %7364 = vmatpush.bf16.msra.mxu0 %v7125
    %7365 = vmatpush.bf16.msra.mxu0 %v7121
    %7366 = vmatmul.bf16.gmra.mxu0 %v6562
    %v7367 = vpop.f32.mrf.mxu0
    %v7368 = vadd.f32 %v7355, %v7367
    %v7369 = vpop.f32.mrf.mxu0
    %7370 = vdwg.mxu0
    %7371 = vmatpush.bf16.msra.mxu0 %v7181
    %7372 = vmatpush.bf16.msra.mxu0 %v7177
    %7373 = vmatpush.bf16.msra.mxu0 %v7173
    %7374 = vmatpush.bf16.msra.mxu0 %v7169
    %7375 = vmatpush.bf16.msra.mxu0 %v7165
    %7376 = vmatpush.bf16.msra.mxu0 %v7161
    %7377 = vmatpush.bf16.msra.mxu0 %v7157
    %7378 = vmatpush.bf16.msra.mxu0 %v7153
    %7379 = vmatmul.bf16.gmra.mxu0 %v6563
    %v7380 = vpop.f32.mrf.mxu0
    %v7381 = vadd.f32 %v7368, %v7380
    %v7382 = vpop.f32.mrf.mxu0
    %7383 = vdwg.mxu0
    %7384 = vmatpush.bf16.msra.mxu0 %v7213
    %7385 = vmatpush.bf16.msra.mxu0 %v7209
    %7386 = vmatpush.bf16.msra.mxu0 %v7205
    %7387 = vmatpush.bf16.msra.mxu0 %v7201
    %7388 = vmatpush.bf16.msra.mxu0 %v7197
    %7389 = vmatpush.bf16.msra.mxu0 %v7193
    %7390 = vmatpush.bf16.msra.mxu0 %v7189
    %7391 = vmatpush.bf16.msra.mxu0 %v7185
    %7392 = vmatmul.bf16.gmra.mxu0 %v6564
    %v7393 = vpop.f32.mrf.mxu0
    %v7394 = vadd.f32 %v7381, %v7393
    %v7395 = vpop.f32.mrf.mxu0
    %7396 = vdwg.mxu0
    %7397 = vmatpush.bf16.msra.mxu0 %v7118
    %7398 = vmatpush.bf16.msra.mxu0 %v7114
    %7399 = vmatpush.bf16.msra.mxu0 %v7110
    %7400 = vmatpush.bf16.msra.mxu0 %v7106
    %7401 = vmatpush.bf16.msra.mxu0 %v7102
    %7402 = vmatpush.bf16.msra.mxu0 %v7098
    %7403 = vmatpush.bf16.msra.mxu0 %v7094
    %7404 = vmatpush.bf16.msra.mxu0 %v7090
    %7405 = vmatmul.bf16.gmra.mxu0 %v6561
    %v7406 = vpop.f32.mrf.mxu0
    %v7407 = vadd.f32 %v6698, %v7406
    %v7408 = vpop.f32.mrf.mxu0
    %7409 = vdwg.mxu0
    %7410 = vmatpush.bf16.msra.mxu0 %v7150
    %7411 = vmatpush.bf16.msra.mxu0 %v7146
    %7412 = vmatpush.bf16.msra.mxu0 %v7142
    %7413 = vmatpush.bf16.msra.mxu0 %v7138
    %7414 = vmatpush.bf16.msra.mxu0 %v7134
    %7415 = vmatpush.bf16.msra.mxu0 %v7130
    %7416 = vmatpush.bf16.msra.mxu0 %v7126
    %7417 = vmatpush.bf16.msra.mxu0 %v7122
    %7418 = vmatmul.bf16.gmra.mxu0 %v6562
    %v7419 = vpop.f32.mrf.mxu0
    %v7420 = vadd.f32 %v7407, %v7419
    %v7421 = vpop.f32.mrf.mxu0
    %7422 = vdwg.mxu0
    %7423 = vmatpush.bf16.msra.mxu0 %v7182
    %7424 = vmatpush.bf16.msra.mxu0 %v7178
    %7425 = vmatpush.bf16.msra.mxu0 %v7174
    %7426 = vmatpush.bf16.msra.mxu0 %v7170
    %7427 = vmatpush.bf16.msra.mxu0 %v7166
    %7428 = vmatpush.bf16.msra.mxu0 %v7162
    %7429 = vmatpush.bf16.msra.mxu0 %v7158
    %7430 = vmatpush.bf16.msra.mxu0 %v7154
    %7431 = vmatmul.bf16.gmra.mxu0 %v6563
    %v7432 = vpop.f32.mrf.mxu0
    %v7433 = vadd.f32 %v7420, %v7432
    %v7434 = vpop.f32.mrf.mxu0
    %7435 = vdwg.mxu0
    %7436 = vmatpush.bf16.msra.mxu0 %v7214
    %7437 = vmatpush.bf16.msra.mxu0 %v7210
    %7438 = vmatpush.bf16.msra.mxu0 %v7206
    %7439 = vmatpush.bf16.msra.mxu0 %v7202
    %7440 = vmatpush.bf16.msra.mxu0 %v7198
    %7441 = vmatpush.bf16.msra.mxu0 %v7194
    %7442 = vmatpush.bf16.msra.mxu0 %v7190
    %7443 = vmatpush.bf16.msra.mxu0 %v7186
    %7444 = vmatmul.bf16.gmra.mxu0 %v6564
    %v7445 = vpop.f32.mrf.mxu0
    %v7446 = vadd.f32 %v7433, %v7445
    %v7447 = vpop.f32.mrf.mxu0
    %7448 = vdwg.mxu0
    %7449 = vmatpush.bf16.msra.mxu0 %v7119
    %7450 = vmatpush.bf16.msra.mxu0 %v7115
    %7451 = vmatpush.bf16.msra.mxu0 %v7111
    %7452 = vmatpush.bf16.msra.mxu0 %v7107
    %7453 = vmatpush.bf16.msra.mxu0 %v7103
    %7454 = vmatpush.bf16.msra.mxu0 %v7099
    %7455 = vmatpush.bf16.msra.mxu0 %v7095
    %7456 = vmatpush.bf16.msra.mxu0 %v7091
    %7457 = vmatmul.bf16.gmra.mxu0 %v6561
    %v7458 = vpop.f32.mrf.mxu0
    %v7459 = vadd.f32 %v6699, %v7458
    %v7460 = vpop.f32.mrf.mxu0
    %7461 = vdwg.mxu0
    %7462 = vmatpush.bf16.msra.mxu0 %v7151
    %7463 = vmatpush.bf16.msra.mxu0 %v7147
    %7464 = vmatpush.bf16.msra.mxu0 %v7143
    %7465 = vmatpush.bf16.msra.mxu0 %v7139
    %7466 = vmatpush.bf16.msra.mxu0 %v7135
    %7467 = vmatpush.bf16.msra.mxu0 %v7131
    %7468 = vmatpush.bf16.msra.mxu0 %v7127
    %7469 = vmatpush.bf16.msra.mxu0 %v7123
    %7470 = vmatmul.bf16.gmra.mxu0 %v6562
    %v7471 = vpop.f32.mrf.mxu0
    %v7472 = vadd.f32 %v7459, %v7471
    %v7473 = vpop.f32.mrf.mxu0
    %7474 = vdwg.mxu0
    %7475 = vmatpush.bf16.msra.mxu0 %v7183
    %7476 = vmatpush.bf16.msra.mxu0 %v7179
    %7477 = vmatpush.bf16.msra.mxu0 %v7175
    %7478 = vmatpush.bf16.msra.mxu0 %v7171
    %7479 = vmatpush.bf16.msra.mxu0 %v7167
    %7480 = vmatpush.bf16.msra.mxu0 %v7163
    %7481 = vmatpush.bf16.msra.mxu0 %v7159
    %7482 = vmatpush.bf16.msra.mxu0 %v7155
    %7483 = vmatmul.bf16.gmra.mxu0 %v6563
    %v7484 = vpop.f32.mrf.mxu0
    %v7485 = vadd.f32 %v7472, %v7484
    %v7486 = vpop.f32.mrf.mxu0
    %7487 = vdwg.mxu0
    %7488 = vmatpush.bf16.msra.mxu0 %v7215
    %7489 = vmatpush.bf16.msra.mxu0 %v7211
    %7490 = vmatpush.bf16.msra.mxu0 %v7207
    %7491 = vmatpush.bf16.msra.mxu0 %v7203
    %7492 = vmatpush.bf16.msra.mxu0 %v7199
    %7493 = vmatpush.bf16.msra.mxu0 %v7195
    %7494 = vmatpush.bf16.msra.mxu0 %v7191
    %7495 = vmatpush.bf16.msra.mxu0 %v7187
    %7496 = vmatmul.bf16.gmra.mxu0 %v6564
    %v7497 = vpop.f32.mrf.mxu0
    %v7498 = vadd.f32 %v7485, %v7497
    %v7499 = vpop.f32.mrf.mxu0
    %7500 = vdwg.mxu0
    %7501 = vmatpush.bf16.msra.mxu0 %v7120
    %7502 = vmatpush.bf16.msra.mxu0 %v7116
    %7503 = vmatpush.bf16.msra.mxu0 %v7112
    %7504 = vmatpush.bf16.msra.mxu0 %v7108
    %7505 = vmatpush.bf16.msra.mxu0 %v7104
    %7506 = vmatpush.bf16.msra.mxu0 %v7100
    %7507 = vmatpush.bf16.msra.mxu0 %v7096
    %7508 = vmatpush.bf16.msra.mxu0 %v7092
    %7509 = vmatmul.bf16.gmra.mxu0 %v6561
    %v7510 = vpop.f32.mrf.mxu0
    %v7511 = vadd.f32 %v6700, %v7510
    %v7512 = vpop.f32.mrf.mxu0
    %7513 = vdwg.mxu0
    %7514 = vmatpush.bf16.msra.mxu0 %v7152
    %7515 = vmatpush.bf16.msra.mxu0 %v7148
    %7516 = vmatpush.bf16.msra.mxu0 %v7144
    %7517 = vmatpush.bf16.msra.mxu0 %v7140
    %7518 = vmatpush.bf16.msra.mxu0 %v7136
    %7519 = vmatpush.bf16.msra.mxu0 %v7132
    %7520 = vmatpush.bf16.msra.mxu0 %v7128
    %7521 = vmatpush.bf16.msra.mxu0 %v7124
    %7522 = vmatmul.bf16.gmra.mxu0 %v6562
    %v7523 = vpop.f32.mrf.mxu0
    %v7524 = vadd.f32 %v7511, %v7523
    %v7525 = vpop.f32.mrf.mxu0
    %7526 = vdwg.mxu0
    %7527 = vmatpush.bf16.msra.mxu0 %v7184
    %7528 = vmatpush.bf16.msra.mxu0 %v7180
    %7529 = vmatpush.bf16.msra.mxu0 %v7176
    %7530 = vmatpush.bf16.msra.mxu0 %v7172
    %7531 = vmatpush.bf16.msra.mxu0 %v7168
    %7532 = vmatpush.bf16.msra.mxu0 %v7164
    %7533 = vmatpush.bf16.msra.mxu0 %v7160
    %7534 = vmatpush.bf16.msra.mxu0 %v7156
    %7535 = vmatmul.bf16.gmra.mxu0 %v6563
    %v7536 = vpop.f32.mrf.mxu0
    %v7537 = vadd.f32 %v7524, %v7536
    %v7538 = vpop.f32.mrf.mxu0
    %7539 = vdwg.mxu0
    %7540 = vmatpush.bf16.msra.mxu0 %v7216
    %7541 = vmatpush.bf16.msra.mxu0 %v7212
    %7542 = vmatpush.bf16.msra.mxu0 %v7208
    %7543 = vmatpush.bf16.msra.mxu0 %v7204
    %7544 = vmatpush.bf16.msra.mxu0 %v7200
    %7545 = vmatpush.bf16.msra.mxu0 %v7196
    %7546 = vmatpush.bf16.msra.mxu0 %v7192
    %7547 = vmatpush.bf16.msra.mxu0 %v7188
    %7548 = vmatmul.bf16.gmra.mxu0 %v6564
    %v7549 = vpop.f32.mrf.mxu0
    %v7550 = vadd.f32 %v7537, %v7549
    %v7551 = vpop.f32.mrf.mxu0
    %7552 = vdwg.mxu0
    %v7553 = vpack.c.bf16 %v7394, %v7394
    %v7554 = vpack.c.bf16 %v7446, %v7446
    %v7555 = vpack.c.bf16 %v7498, %v7498
    %v7556 = vpack.c.bf16 %v7550, %v7550
    %v7557 = vld [vmem:[%s15] sm:$0xf]
    %v7558 = vld [vmem:[%s15 + $0x4] sm:$0xf]
    %v7559 = vld [vmem:[%s15 + $0x8] sm:$0xf]
    %v7560 = vld [vmem:[%s15 + $0xc] sm:$0xf]
    %v7561 = vld [vmem:[%s15 + $0x10] sm:$0xf]
    %v7562 = vld [vmem:[%s15 + $0x14] sm:$0xf]
    %v7563 = vld [vmem:[%s15 + $0x18] sm:$0xf]
    %v7564 = vld [vmem:[%s15 + $0x1c] sm:$0xf]
    %v7565 = vld [vmem:[%s15 + $0x20] sm:$0xf]
    %v7566 = vld [vmem:[%s15 + $0x24] sm:$0xf]
    %v7567 = vld [vmem:[%s15 + $0x28] sm:$0xf]
    %v7568 = vld [vmem:[%s15 + $0x2c] sm:$0xf]
    %v7569 = vld [vmem:[%s15 + $0x30] sm:$0xf]
    %v7570 = vld [vmem:[%s15 + $0x34] sm:$0xf]
    %v7571 = vld [vmem:[%s15 + $0x38] sm:$0xf]
    %v7572 = vld [vmem:[%s15 + $0x3c] sm:$0xf]
    %v7573 = vld [vmem:[%s15 + $0x40] sm:$0xf]
    %v7574 = vld [vmem:[%s15 + $0x44] sm:$0xf]
    %v7575 = vld [vmem:[%s15 + $0x48] sm:$0xf]
    %v7576 = vld [vmem:[%s15 + $0x4c] sm:$0xf]
    %v7577 = vld [vmem:[%s15 + $0x50] sm:$0xf]
    %v7578 = vld [vmem:[%s15 + $0x54] sm:$0xf]
    %v7579 = vld [vmem:[%s15 + $0x58] sm:$0xf]
    %v7580 = vld [vmem:[%s15 + $0x5c] sm:$0xf]
    %v7581 = vld [vmem:[%s15 + $0x60] sm:$0xf]
    %v7582 = vld [vmem:[%s15 + $0x64] sm:$0xf]
    %v7583 = vld [vmem:[%s15 + $0x68] sm:$0xf]
    %v7584 = vld [vmem:[%s15 + $0x6c] sm:$0xf]
    %v7585 = vld [vmem:[%s15 + $0x70] sm:$0xf]
    %v7586 = vld [vmem:[%s15 + $0x74] sm:$0xf]
    %v7587 = vld [vmem:[%s15 + $0x78] sm:$0xf]
    %v7588 = vld [vmem:[%s15 + $0x7c] sm:$0xf]
    %v7589 = vld [vmem:[%s15 + $0x80] sm:$0xf]
    %v7590 = vld [vmem:[%s15 + $0x84] sm:$0xf]
    %v7591 = vld [vmem:[%s15 + $0x88] sm:$0xf]
    %v7592 = vld [vmem:[%s15 + $0x8c] sm:$0xf]
    %v7593 = vld [vmem:[%s15 + $0x90] sm:$0xf]
    %v7594 = vld [vmem:[%s15 + $0x94] sm:$0xf]
    %v7595 = vld [vmem:[%s15 + $0x98] sm:$0xf]
    %v7596 = vld [vmem:[%s15 + $0x9c] sm:$0xf]
    %v7597 = vld [vmem:[%s15 + $0xa0] sm:$0xf]
    %v7598 = vld [vmem:[%s15 + $0xa4] sm:$0xf]
    %v7599 = vld [vmem:[%s15 + $0xa8] sm:$0xf]
    %v7600 = vld [vmem:[%s15 + $0xac] sm:$0xf]
    %v7601 = vld [vmem:[%s15 + $0xb0] sm:$0xf]
    %v7602 = vld [vmem:[%s15 + $0xb4] sm:$0xf]
    %v7603 = vld [vmem:[%s15 + $0xb8] sm:$0xf]
    %v7604 = vld [vmem:[%s15 + $0xbc] sm:$0xf]
    %v7605 = vld [vmem:[%s15 + $0xc0] sm:$0xf]
    %v7606 = vld [vmem:[%s15 + $0xc4] sm:$0xf]
    %v7607 = vld [vmem:[%s15 + $0xc8] sm:$0xf]
    %v7608 = vld [vmem:[%s15 + $0xcc] sm:$0xf]
    %v7609 = vld [vmem:[%s15 + $0xd0] sm:$0xf]
    %v7610 = vld [vmem:[%s15 + $0xd4] sm:$0xf]
    %v7611 = vld [vmem:[%s15 + $0xd8] sm:$0xf]
    %v7612 = vld [vmem:[%s15 + $0xdc] sm:$0xf]
    %v7613 = vld [vmem:[%s15 + $0xe0] sm:$0xf]
    %v7614 = vld [vmem:[%s15 + $0xe4] sm:$0xf]
    %v7615 = vld [vmem:[%s15 + $0xe8] sm:$0xf]
    %v7616 = vld [vmem:[%s15 + $0xec] sm:$0xf]
    %v7617 = vld [vmem:[%s15 + $0xf0] sm:$0xf]
    %v7618 = vld [vmem:[%s15 + $0xf4] sm:$0xf]
    %v7619 = vld [vmem:[%s15 + $0xf8] sm:$0xf]
    %v7620 = vld [vmem:[%s15 + $0xfc] sm:$0xf]
    %s7621 = scalar_lea.vmem %s15, 256
    %v7622 = vld [vmem:[%s7621] sm:$0xf]
    %v7623 = vld [vmem:[%s7621 + $0x4] sm:$0xf]
    %v7624 = vld [vmem:[%s7621 + $0x8] sm:$0xf]
    %v7625 = vld [vmem:[%s7621 + $0xc] sm:$0xf]
    %v7626 = vld [vmem:[%s7621 + $0x10] sm:$0xf]
    %v7627 = vld [vmem:[%s7621 + $0x14] sm:$0xf]
    %v7628 = vld [vmem:[%s7621 + $0x18] sm:$0xf]
    %v7629 = vld [vmem:[%s7621 + $0x1c] sm:$0xf]
    %v7630 = vld [vmem:[%s7621 + $0x20] sm:$0xf]
    %v7631 = vld [vmem:[%s7621 + $0x24] sm:$0xf]
    %v7632 = vld [vmem:[%s7621 + $0x28] sm:$0xf]
    %v7633 = vld [vmem:[%s7621 + $0x2c] sm:$0xf]
    %v7634 = vld [vmem:[%s7621 + $0x30] sm:$0xf]
    %v7635 = vld [vmem:[%s7621 + $0x34] sm:$0xf]
    %v7636 = vld [vmem:[%s7621 + $0x38] sm:$0xf]
    %v7637 = vld [vmem:[%s7621 + $0x3c] sm:$0xf]
    %v7638 = vld [vmem:[%s7621 + $0x40] sm:$0xf]
    %v7639 = vld [vmem:[%s7621 + $0x44] sm:$0xf]
    %v7640 = vld [vmem:[%s7621 + $0x48] sm:$0xf]
    %v7641 = vld [vmem:[%s7621 + $0x4c] sm:$0xf]
    %v7642 = vld [vmem:[%s7621 + $0x50] sm:$0xf]
    %v7643 = vld [vmem:[%s7621 + $0x54] sm:$0xf]
    %v7644 = vld [vmem:[%s7621 + $0x58] sm:$0xf]
    %v7645 = vld [vmem:[%s7621 + $0x5c] sm:$0xf]
    %v7646 = vld [vmem:[%s7621 + $0x60] sm:$0xf]
    %v7647 = vld [vmem:[%s7621 + $0x64] sm:$0xf]
    %v7648 = vld [vmem:[%s7621 + $0x68] sm:$0xf]
    %v7649 = vld [vmem:[%s7621 + $0x6c] sm:$0xf]
    %v7650 = vld [vmem:[%s7621 + $0x70] sm:$0xf]
    %v7651 = vld [vmem:[%s7621 + $0x74] sm:$0xf]
    %v7652 = vld [vmem:[%s7621 + $0x78] sm:$0xf]
    %v7653 = vld [vmem:[%s7621 + $0x7c] sm:$0xf]
    %v7654 = vld [vmem:[%s7621 + $0x80] sm:$0xf]
    %v7655 = vld [vmem:[%s7621 + $0x84] sm:$0xf]
    %v7656 = vld [vmem:[%s7621 + $0x88] sm:$0xf]
    %v7657 = vld [vmem:[%s7621 + $0x8c] sm:$0xf]
    %v7658 = vld [vmem:[%s7621 + $0x90] sm:$0xf]
    %v7659 = vld [vmem:[%s7621 + $0x94] sm:$0xf]
    %v7660 = vld [vmem:[%s7621 + $0x98] sm:$0xf]
    %v7661 = vld [vmem:[%s7621 + $0x9c] sm:$0xf]
    %v7662 = vld [vmem:[%s7621 + $0xa0] sm:$0xf]
    %v7663 = vld [vmem:[%s7621 + $0xa4] sm:$0xf]
    %v7664 = vld [vmem:[%s7621 + $0xa8] sm:$0xf]
    %v7665 = vld [vmem:[%s7621 + $0xac] sm:$0xf]
    %v7666 = vld [vmem:[%s7621 + $0xb0] sm:$0xf]
    %v7667 = vld [vmem:[%s7621 + $0xb4] sm:$0xf]
    %v7668 = vld [vmem:[%s7621 + $0xb8] sm:$0xf]
    %v7669 = vld [vmem:[%s7621 + $0xbc] sm:$0xf]
    %v7670 = vld [vmem:[%s7621 + $0xc0] sm:$0xf]
    %v7671 = vld [vmem:[%s7621 + $0xc4] sm:$0xf]
    %v7672 = vld [vmem:[%s7621 + $0xc8] sm:$0xf]
    %v7673 = vld [vmem:[%s7621 + $0xcc] sm:$0xf]
    %v7674 = vld [vmem:[%s7621 + $0xd0] sm:$0xf]
    %v7675 = vld [vmem:[%s7621 + $0xd4] sm:$0xf]
    %v7676 = vld [vmem:[%s7621 + $0xd8] sm:$0xf]
    %v7677 = vld [vmem:[%s7621 + $0xdc] sm:$0xf]
    %v7678 = vld [vmem:[%s7621 + $0xe0] sm:$0xf]
    %v7679 = vld [vmem:[%s7621 + $0xe4] sm:$0xf]
    %v7680 = vld [vmem:[%s7621 + $0xe8] sm:$0xf]
    %v7681 = vld [vmem:[%s7621 + $0xec] sm:$0xf]
    %v7682 = vld [vmem:[%s7621 + $0xf0] sm:$0xf]
    %v7683 = vld [vmem:[%s7621 + $0xf4] sm:$0xf]
    %v7684 = vld [vmem:[%s7621 + $0xf8] sm:$0xf]
    %v7685 = vld [vmem:[%s7621 + $0xfc] sm:$0xf]
    %v7750 = vunpack.c.l.b16 %v7622
    %v7751 = vunpack.c.l.b16 %v7623
    %v7752 = vunpack.c.l.b16 %v7624
    %v7753 = vunpack.c.l.b16 %v7625
    %v7754 = vunpack.c.l.b16 %v7626
    %v7755 = vunpack.c.l.b16 %v7627
    %v7756 = vunpack.c.l.b16 %v7628
    %v7757 = vunpack.c.l.b16 %v7629
    %v7758 = vunpack.c.l.b16 %v7630
    %v7759 = vunpack.c.l.b16 %v7631
    %v7760 = vunpack.c.l.b16 %v7632
    %v7761 = vunpack.c.l.b16 %v7633
    %v7762 = vunpack.c.l.b16 %v7634
    %v7763 = vunpack.c.l.b16 %v7635
    %v7764 = vunpack.c.l.b16 %v7636
    %v7765 = vunpack.c.l.b16 %v7637
    %v7766 = vunpack.c.l.b16 %v7638
    %v7767 = vunpack.c.l.b16 %v7639
    %v7768 = vunpack.c.l.b16 %v7640
    %v7769 = vunpack.c.l.b16 %v7641
    %v7770 = vunpack.c.l.b16 %v7642
    %v7771 = vunpack.c.l.b16 %v7643
    %v7772 = vunpack.c.l.b16 %v7644
    %v7773 = vunpack.c.l.b16 %v7645
    %v7774 = vunpack.c.l.b16 %v7646
    %v7775 = vunpack.c.l.b16 %v7647
    %v7776 = vunpack.c.l.b16 %v7648
    %v7777 = vunpack.c.l.b16 %v7649
    %v7778 = vunpack.c.l.b16 %v7650
    %v7779 = vunpack.c.l.b16 %v7651
    %v7780 = vunpack.c.l.b16 %v7652
    %v7781 = vunpack.c.l.b16 %v7653
    %v7782 = vunpack.c.l.b16 %v7654
    %v7783 = vunpack.c.l.b16 %v7655
    %v7784 = vunpack.c.l.b16 %v7656
    %v7785 = vunpack.c.l.b16 %v7657
    %v7786 = vunpack.c.l.b16 %v7658
    %v7787 = vunpack.c.l.b16 %v7659
    %v7788 = vunpack.c.l.b16 %v7660
    %v7789 = vunpack.c.l.b16 %v7661
    %v7790 = vunpack.c.l.b16 %v7662
    %v7791 = vunpack.c.l.b16 %v7663
    %v7792 = vunpack.c.l.b16 %v7664
    %v7793 = vunpack.c.l.b16 %v7665
    %v7794 = vunpack.c.l.b16 %v7666
    %v7795 = vunpack.c.l.b16 %v7667
    %v7796 = vunpack.c.l.b16 %v7668
    %v7797 = vunpack.c.l.b16 %v7669
    %v7798 = vunpack.c.l.b16 %v7670
    %v7799 = vunpack.c.l.b16 %v7671
    %v7800 = vunpack.c.l.b16 %v7672
    %v7801 = vunpack.c.l.b16 %v7673
    %v7802 = vunpack.c.l.b16 %v7674
    %v7803 = vunpack.c.l.b16 %v7675
    %v7804 = vunpack.c.l.b16 %v7676
    %v7805 = vunpack.c.l.b16 %v7677
    %v7806 = vunpack.c.l.b16 %v7678
    %v7807 = vunpack.c.l.b16 %v7679
    %v7808 = vunpack.c.l.b16 %v7680
    %v7809 = vunpack.c.l.b16 %v7681
    %v7810 = vunpack.c.l.b16 %v7682
    %v7811 = vunpack.c.l.b16 %v7683
    %v7812 = vunpack.c.l.b16 %v7684
    %v7813 = vunpack.c.l.b16 %v7685
    %v7814 = vpack.c.b16 %v7751, %v7750
    %v7815 = vpack.c.b16 %v7753, %v7752
    %v7816 = vpack.c.b16 %v7755, %v7754
    %v7817 = vpack.c.b16 %v7757, %v7756
    %v7818 = vpack.c.b16 %v7759, %v7758
    %v7819 = vpack.c.b16 %v7761, %v7760
    %v7820 = vpack.c.b16 %v7763, %v7762
    %v7821 = vpack.c.b16 %v7765, %v7764
    %v7822 = vpack.c.b16 %v7767, %v7766
    %v7823 = vpack.c.b16 %v7769, %v7768
    %v7824 = vpack.c.b16 %v7771, %v7770
    %v7825 = vpack.c.b16 %v7773, %v7772
    %v7826 = vpack.c.b16 %v7775, %v7774
    %v7827 = vpack.c.b16 %v7777, %v7776
    %v7828 = vpack.c.b16 %v7779, %v7778
    %v7829 = vpack.c.b16 %v7781, %v7780
    %v7830 = vpack.c.b16 %v7783, %v7782
    %v7831 = vpack.c.b16 %v7785, %v7784
    %v7832 = vpack.c.b16 %v7787, %v7786
    %v7833 = vpack.c.b16 %v7789, %v7788
    %v7834 = vpack.c.b16 %v7791, %v7790
    %v7835 = vpack.c.b16 %v7793, %v7792
    %v7836 = vpack.c.b16 %v7795, %v7794
    %v7837 = vpack.c.b16 %v7797, %v7796
    %v7838 = vpack.c.b16 %v7799, %v7798
    %v7839 = vpack.c.b16 %v7801, %v7800
    %v7840 = vpack.c.b16 %v7803, %v7802
    %v7841 = vpack.c.b16 %v7805, %v7804
    %v7842 = vpack.c.b16 %v7807, %v7806
    %v7843 = vpack.c.b16 %v7809, %v7808
    %v7844 = vpack.c.b16 %v7811, %v7810
    %v7845 = vpack.c.b16 %v7813, %v7812
    %7878 = vmatpush.bf16.msra.mxu0 %v7821
    %7879 = vmatpush.bf16.msra.mxu0 %v7820
    %7880 = vmatpush.bf16.msra.mxu0 %v7819
    %7881 = vmatpush.bf16.msra.mxu0 %v7818
    %7882 = vmatpush.bf16.msra.mxu0 %v7817
    %7883 = vmatpush.bf16.msra.mxu0 %v7816
    %7884 = vmatpush.bf16.msra.mxu0 %v7815
    %7885 = vmatpush.bf16.msra.mxu0 %v7814
    %7886 = vmatmul.bf16.gmra.mxu0 %v7553
    %v7887 = vpop.f32.mrf.mxu0
    %v7888 = vadd.f32 0.0, %v7887
    %v7889 = vpop.f32.mrf.mxu0
    %7890 = vdwg.mxu0
    %7891 = vmatpush.bf16.msra.mxu0 %v7829
    %7892 = vmatpush.bf16.msra.mxu0 %v7828
    %7893 = vmatpush.bf16.msra.mxu0 %v7827
    %7894 = vmatpush.bf16.msra.mxu0 %v7826
    %7895 = vmatpush.bf16.msra.mxu0 %v7825
    %7896 = vmatpush.bf16.msra.mxu0 %v7824
    %7897 = vmatpush.bf16.msra.mxu0 %v7823
    %7898 = vmatpush.bf16.msra.mxu0 %v7822
    %7899 = vmatmul.bf16.gmra.mxu0 %v7554
    %v7900 = vpop.f32.mrf.mxu0
    %v7901 = vadd.f32 %v7888, %v7900
    %v7902 = vpop.f32.mrf.mxu0
    %7903 = vdwg.mxu0
    %7904 = vmatpush.bf16.msra.mxu0 %v7837
    %7905 = vmatpush.bf16.msra.mxu0 %v7836
    %7906 = vmatpush.bf16.msra.mxu0 %v7835
    %7907 = vmatpush.bf16.msra.mxu0 %v7834
    %7908 = vmatpush.bf16.msra.mxu0 %v7833
    %7909 = vmatpush.bf16.msra.mxu0 %v7832
    %7910 = vmatpush.bf16.msra.mxu0 %v7831
    %7911 = vmatpush.bf16.msra.mxu0 %v7830
    %7912 = vmatmul.bf16.gmra.mxu0 %v7555
    %v7913 = vpop.f32.mrf.mxu0
    %v7914 = vadd.f32 %v7901, %v7913
    %v7915 = vpop.f32.mrf.mxu0
    %7916 = vdwg.mxu0
    %7917 = vmatpush.bf16.msra.mxu0 %v7845
    %7918 = vmatpush.bf16.msra.mxu0 %v7844
    %7919 = vmatpush.bf16.msra.mxu0 %v7843
    %7920 = vmatpush.bf16.msra.mxu0 %v7842
    %7921 = vmatpush.bf16.msra.mxu0 %v7841
    %7922 = vmatpush.bf16.msra.mxu0 %v7840
    %7923 = vmatpush.bf16.msra.mxu0 %v7839
    %7924 = vmatpush.bf16.msra.mxu0 %v7838
    %7925 = vmatmul.bf16.gmra.mxu0 %v7556
    %v7926 = vpop.f32.mrf.mxu0
    %v7927 = vadd.f32 %v7914, %v7926
    %v7928 = vpop.f32.mrf.mxu0
    %7929 = vdwg.mxu0
    %v7994 = vunpack.c.l.b16 %v7557
    %v7995 = vunpack.c.l.b16 %v7558
    %v7996 = vunpack.c.l.b16 %v7559
    %v7997 = vunpack.c.l.b16 %v7560
    %v7998 = vunpack.c.l.b16 %v7561
    %v7999 = vunpack.c.l.b16 %v7562
    %v8000 = vunpack.c.l.b16 %v7563
    %v8001 = vunpack.c.l.b16 %v7564
    %v8002 = vunpack.c.l.b16 %v7565
    %v8003 = vunpack.c.l.b16 %v7566
    %v8004 = vunpack.c.l.b16 %v7567
    %v8005 = vunpack.c.l.b16 %v7568
    %v8006 = vunpack.c.l.b16 %v7569
    %v8007 = vunpack.c.l.b16 %v7570
    %v8008 = vunpack.c.l.b16 %v7571
    %v8009 = vunpack.c.l.b16 %v7572
    %v8010 = vunpack.c.l.b16 %v7573
    %v8011 = vunpack.c.l.b16 %v7574
    %v8012 = vunpack.c.l.b16 %v7575
    %v8013 = vunpack.c.l.b16 %v7576
    %v8014 = vunpack.c.l.b16 %v7577
    %v8015 = vunpack.c.l.b16 %v7578
    %v8016 = vunpack.c.l.b16 %v7579
    %v8017 = vunpack.c.l.b16 %v7580
    %v8018 = vunpack.c.l.b16 %v7581
    %v8019 = vunpack.c.l.b16 %v7582
    %v8020 = vunpack.c.l.b16 %v7583
    %v8021 = vunpack.c.l.b16 %v7584
    %v8022 = vunpack.c.l.b16 %v7585
    %v8023 = vunpack.c.l.b16 %v7586
    %v8024 = vunpack.c.l.b16 %v7587
    %v8025 = vunpack.c.l.b16 %v7588
    %v8026 = vunpack.c.l.b16 %v7589
    %v8027 = vunpack.c.l.b16 %v7590
    %v8028 = vunpack.c.l.b16 %v7591
    %v8029 = vunpack.c.l.b16 %v7592
    %v8030 = vunpack.c.l.b16 %v7593
    %v8031 = vunpack.c.l.b16 %v7594
    %v8032 = vunpack.c.l.b16 %v7595
    %v8033 = vunpack.c.l.b16 %v7596
    %v8034 = vunpack.c.l.b16 %v7597
    %v8035 = vunpack.c.l.b16 %v7598
    %v8036 = vunpack.c.l.b16 %v7599
    %v8037 = vunpack.c.l.b16 %v7600
    %v8038 = vunpack.c.l.b16 %v7601
    %v8039 = vunpack.c.l.b16 %v7602
    %v8040 = vunpack.c.l.b16 %v7603
    %v8041 = vunpack.c.l.b16 %v7604
    %v8042 = vunpack.c.l.b16 %v7605
    %v8043 = vunpack.c.l.b16 %v7606
    %v8044 = vunpack.c.l.b16 %v7607
    %v8045 = vunpack.c.l.b16 %v7608
    %v8046 = vunpack.c.l.b16 %v7609
    %v8047 = vunpack.c.l.b16 %v7610
    %v8048 = vunpack.c.l.b16 %v7611
    %v8049 = vunpack.c.l.b16 %v7612
    %v8050 = vunpack.c.l.b16 %v7613
    %v8051 = vunpack.c.l.b16 %v7614
    %v8052 = vunpack.c.l.b16 %v7615
    %v8053 = vunpack.c.l.b16 %v7616
    %v8054 = vunpack.c.l.b16 %v7617
    %v8055 = vunpack.c.l.b16 %v7618
    %v8056 = vunpack.c.l.b16 %v7619
    %v8057 = vunpack.c.l.b16 %v7620
    %v8058 = vpack.c.b16 %v7995, %v7994
    %v8059 = vpack.c.b16 %v7997, %v7996
    %v8060 = vpack.c.b16 %v7999, %v7998
    %v8061 = vpack.c.b16 %v8001, %v8000
    %v8062 = vpack.c.b16 %v8003, %v8002
    %v8063 = vpack.c.b16 %v8005, %v8004
    %v8064 = vpack.c.b16 %v8007, %v8006
    %v8065 = vpack.c.b16 %v8009, %v8008
    %v8066 = vpack.c.b16 %v8011, %v8010
    %v8067 = vpack.c.b16 %v8013, %v8012
    %v8068 = vpack.c.b16 %v8015, %v8014
    %v8069 = vpack.c.b16 %v8017, %v8016
    %v8070 = vpack.c.b16 %v8019, %v8018
    %v8071 = vpack.c.b16 %v8021, %v8020
    %v8072 = vpack.c.b16 %v8023, %v8022
    %v8073 = vpack.c.b16 %v8025, %v8024
    %v8074 = vpack.c.b16 %v8027, %v8026
    %v8075 = vpack.c.b16 %v8029, %v8028
    %v8076 = vpack.c.b16 %v8031, %v8030
    %v8077 = vpack.c.b16 %v8033, %v8032
    %v8078 = vpack.c.b16 %v8035, %v8034
    %v8079 = vpack.c.b16 %v8037, %v8036
    %v8080 = vpack.c.b16 %v8039, %v8038
    %v8081 = vpack.c.b16 %v8041, %v8040
    %v8082 = vpack.c.b16 %v8043, %v8042
    %v8083 = vpack.c.b16 %v8045, %v8044
    %v8084 = vpack.c.b16 %v8047, %v8046
    %v8085 = vpack.c.b16 %v8049, %v8048
    %v8086 = vpack.c.b16 %v8051, %v8050
    %v8087 = vpack.c.b16 %v8053, %v8052
    %v8088 = vpack.c.b16 %v8055, %v8054
    %v8089 = vpack.c.b16 %v8057, %v8056
    %8122 = vmatpush.bf16.msra.mxu0 %v8065
    %8123 = vmatpush.bf16.msra.mxu0 %v8064
    %8124 = vmatpush.bf16.msra.mxu0 %v8063
    %8125 = vmatpush.bf16.msra.mxu0 %v8062
    %8126 = vmatpush.bf16.msra.mxu0 %v8061
    %8127 = vmatpush.bf16.msra.mxu0 %v8060
    %8128 = vmatpush.bf16.msra.mxu0 %v8059
    %8129 = vmatpush.bf16.msra.mxu0 %v8058
    %8130 = vmatmul.bf16.gmra.mxu0 %v4224
    %v8131 = vpop.f32.mrf.mxu0
    %v8132 = vadd.f32 %v7927, %v8131
    %v8133 = vpop.f32.mrf.mxu0
    %8134 = vdwg.mxu0
    %8135 = vmatpush.bf16.msra.mxu0 %v8073
    %8136 = vmatpush.bf16.msra.mxu0 %v8072
    %8137 = vmatpush.bf16.msra.mxu0 %v8071
    %8138 = vmatpush.bf16.msra.mxu0 %v8070
    %8139 = vmatpush.bf16.msra.mxu0 %v8069
    %8140 = vmatpush.bf16.msra.mxu0 %v8068
    %8141 = vmatpush.bf16.msra.mxu0 %v8067
    %8142 = vmatpush.bf16.msra.mxu0 %v8066
    %8143 = vmatmul.bf16.gmra.mxu0 %v4225
    %v8144 = vpop.f32.mrf.mxu0
    %v8145 = vadd.f32 %v8132, %v8144
    %v8146 = vpop.f32.mrf.mxu0
    %8147 = vdwg.mxu0
    %8148 = vmatpush.bf16.msra.mxu0 %v8081
    %8149 = vmatpush.bf16.msra.mxu0 %v8080
    %8150 = vmatpush.bf16.msra.mxu0 %v8079
    %8151 = vmatpush.bf16.msra.mxu0 %v8078
    %8152 = vmatpush.bf16.msra.mxu0 %v8077
    %8153 = vmatpush.bf16.msra.mxu0 %v8076
    %8154 = vmatpush.bf16.msra.mxu0 %v8075
    %8155 = vmatpush.bf16.msra.mxu0 %v8074
    %8156 = vmatmul.bf16.gmra.mxu0 %v4226
    %v8157 = vpop.f32.mrf.mxu0
    %v8158 = vadd.f32 %v8145, %v8157
    %v8159 = vpop.f32.mrf.mxu0
    %8160 = vdwg.mxu0
    %8161 = vmatpush.bf16.msra.mxu0 %v8089
    %8162 = vmatpush.bf16.msra.mxu0 %v8088
    %8163 = vmatpush.bf16.msra.mxu0 %v8087
    %8164 = vmatpush.bf16.msra.mxu0 %v8086
    %8165 = vmatpush.bf16.msra.mxu0 %v8085
    %8166 = vmatpush.bf16.msra.mxu0 %v8084
    %8167 = vmatpush.bf16.msra.mxu0 %v8083
    %8168 = vmatpush.bf16.msra.mxu0 %v8082
    %8169 = vmatmul.bf16.gmra.mxu0 %v4227
    %v8170 = vpop.f32.mrf.mxu0
    %v8171 = vadd.f32 %v8158, %v8170
    %v8172 = vpop.f32.mrf.mxu0
    %8173 = vdwg.mxu0
    %v8174 = vld [vmem:[%s16] sm:$0x1]
    %v8176 = vperm.slane %v8174, 0
    %v8178 = vadd.f32 %v8171, %v8176
    %8179 = vst [vmem:[%s17] sm:$0xff] %v8178
    // Predicated region
    $region78: #{a2c_forward.1} parent=1 // pred_check
      _
    $region79: #{a2c_forward.1} parent=1 // pred_check_branch
      %8181 = sbr.rel (0) target = $region81
    $region80: #{a2c_forward.1} parent=1 // pred_region
      _
    $region81: #{a2c_forward.1} parent=1 // pred_fallthru
      _
    // Predicated region
    $region82: #{a2c_forward.1} parent=1 // pred_check
      _
    $region83: #{a2c_forward.1} parent=1 // pred_check_branch
      %8183 = sbr.rel (0) target = $region85
    $region84: #{a2c_forward.1} parent=1 // pred_region
      _
    $region85: #{a2c_forward.1} parent=1 // pred_fallthru
      _
    %8184 = vsyncpa [#allocation3], 1
    %8185 = vsyncpa [#allocation5], 1

</llo_original>
